<compile_context>
chip_gen: v7x
topology: tpu7x:2x2x1
jax: 0.10.0
libtpu: 0.0.40
codegen_flags: <defaults>
</compile_context>

<pallas_src>
import jax
import jax.numpy as jnp
from jax import lax
from jax.experimental import pallas as pl
from jax.experimental.pallas import tpu as pltpu

BN_EPS = 1e-5
L_SEQ = 128  # forced by fc1's 8192 = 64 * 128 input size


# ----------------------------------------------------------------------------
# Kernel 1: fused conv stack.
#   x(1,128) -> conv1/relu/bn1 (16,128) -> conv2/relu/bn2 (32,128)
#            -> conv3/relu/bn3 (64,128), all resident, grid over batch only.
#   Conv1d(k=3, pad=1): taps h[l-1], h[l], h[l+1] via two resident 128x128
#   shift matrices; conv2/conv3 do ONE matmul each against a (C_out, 3*C_in)
#   packed weight; conv1 (C_in=1) is a VPU broadcast sum.
# ----------------------------------------------------------------------------
def conv_stack_kernel(x_ref, sr_ref, sl_ref, w1_ref, p1_ref, w2_ref, p2_ref,
                      w3_ref, p3_ref, o_ref):
    sr = sr_ref[...]          # (L, L): (h @ sr)[:, l] = h[:, l-1], 0 at l=0
    sl = sl_ref[...]          # (L, L): (h @ sl)[:, l] = h[:, l+1], 0 at l=L-1

    def taps(h):
        hm1 = jnp.dot(h, sr, preferred_element_type=jnp.float32)
        hp1 = jnp.dot(h, sl, preferred_element_type=jnp.float32)
        return hm1, hp1

    def relu_bn(acc, p_ref):
        acc = jnp.maximum(acc + p_ref[0], 0.0)    # conv bias + ReLU
        return acc * p_ref[1] + p_ref[2]          # folded BatchNorm (inference)

    # conv1: C_in == 1 -> pure VPU broadcast, no tap matmuls.
    h = x_ref[0]                                              # (1, 128)
    hm1, hp1 = taps(h)
    w1 = w1_ref[...]                                          # (3, 16, 1)
    h = relu_bn(w1[0] * hm1 + w1[1] * h + w1[2] * hp1, p1_ref)  # (16, 128)

    # conv2: taps stacked along channels -> single MXU matmul (K = 48).
    hm1, hp1 = taps(h)
    stacked = jnp.concatenate([hm1, h, hp1], axis=0)          # (48, 128)
    h = relu_bn(jnp.dot(w2_ref[...], stacked,
                        preferred_element_type=jnp.float32), p2_ref)  # (32, 128)

    # conv3: single MXU matmul (K = 96).
    hm1, hp1 = taps(h)
    stacked = jnp.concatenate([hm1, h, hp1], axis=0)          # (96, 128)
    h = relu_bn(jnp.dot(w3_ref[...], stacked,
                        preferred_element_type=jnp.float32), p3_ref)  # (64, 128)

    o_ref[0] = h


def conv_stack(x, prep):
    # TODO(synk): if batch grows beyond a handful, block Bt samples per grid
    # step and batch the packed matmul to amortize the ~0.35 us per-step cost.
    B, C_in, L = x.shape
    c1, c2, c3 = prep["conv1"], prep["conv2"], prep["conv3"]

    def full(a):
        return pl.BlockSpec(a.shape, lambda b, _nd=a.ndim: (0,) * _nd)

    return pl.pallas_call(
        conv_stack_kernel,
        out_shape=jax.ShapeDtypeStruct((B, 64, L), jnp.float32),
        grid=(B,),
        in_specs=[
            pl.BlockSpec((1, C_in, L), lambda b: (b, 0, 0)),
            full(prep["sr"]), full(prep["sl"]),
            full(c1["w"]), full(c1["p"]),
            full(c2["w"]), full(c2["p"]),
            full(c3["w"]), full(c3["p"]),
        ],
        out_specs=pl.BlockSpec((1, 64, L), lambda b: (b, 0, 0)),
        compiler_params=pltpu.CompilerParams(dimension_semantics=("parallel",)),
    )(x, prep["sr"], prep["sl"],
      c1["w"], c1["p"], c2["w"], c2["p"], c3["w"], c3["p"])


# ----------------------------------------------------------------------------
# Kernel 2: fc1 (8192 -> 2048) + fused ReLU, int8 weight streaming.
#   grid = (N tiles = 2, K tiles = 4); N axis "parallel" (v7x megacore split),
#   K axis "arbitrary" (accumulation).  Output block index ignores k, so the
#   (B, tn) output tile is resident across the K axis and is the accumulator
#   (no scratch).  int8 weight tile -> bf16 (exact), matmul in bf16 with f32
#   accumulation; per-output-channel scale + bias + ReLU applied on the small
#   accumulator at the last K step.
#   VMEM/step: 2x2 MiB int8 tiles + ~4 MiB bf16 temp + 64 KiB resident x
#   -> fits every generation's default scoped VMEM (v5e 16 MiB) untouched.
# ----------------------------------------------------------------------------
def fc1_kernel(x_ref, w_ref, s_ref, b_ref, o_ref):
    k = pl.program_id(1)
    tk = w_ref.shape[0]

    @pl.when(k == 0)
    def _():
        o_ref[...] = jnp.zeros_like(o_ref)

    xk = x_ref[:, pl.ds(pl.multiple_of(k * tk, tk), tk)]
    o_ref[...] += jnp.dot(xk.astype(jnp.bfloat16),
                          w_ref[...].astype(jnp.bfloat16),   # exact int8->bf16
                          preferred_element_type=jnp.float32)

    @pl.when(k == pl.num_programs(1) - 1)
    def _():
        # Per-output-channel dequant scale, bias, ReLU -- all on (B, tn).
        o_ref[...] = jnp.maximum(o_ref[...] * s_ref[...] + b_ref[...], 0.0)


def fc1_linear(x, w_i8, scale, b):
    # x: (B, 8192) f32, w_i8: (8192, 2048) int8, scale/b: (1, 2048) f32
    B, K = x.shape
    N = w_i8.shape[1]
    tk, tn = 2048, 1024
    return pl.pallas_call(
        fc1_kernel,
        out_shape=jax.ShapeDtypeStruct((B, N), jnp.float32),
        grid=(N // tn, K // tk),
        in_specs=[
            pl.BlockSpec((B, K), lambda j, k: (0, 0)),     # resident activations
            pl.BlockSpec((tk, tn), lambda j, k: (k, j)),   # int8 weight stream
            pl.BlockSpec((1, tn), lambda j, k: (0, j)),    # per-channel scales
            pl.BlockSpec((1, tn), lambda j, k: (0, j)),    # bias
        ],
        out_specs=pl.BlockSpec((B, tn), lambda j, k: (0, j)),
        compiler_params=pltpu.CompilerParams(
            dimension_semantics=("parallel", "arbitrary")),
    )(x, w_i8, scale, b)


# ----------------------------------------------------------------------------
# Kernel 3: fused fc2 (2048->512, bf16 weight) + ReLU, fc3 (512->80, padded to
# 128) + ReLU, fc4 (80->4, padded to 128x128).  All weights resident in VMEM
# (<2.5 MiB), single launch; kept separate from fc1 so fc1's N axis stays
# "parallel" (2-TensorCore weight-stream split on v7x).  Zero padding is
# exact: relu(0)=0 feeds zero fc4 rows; padded output lanes stay 0.
# ----------------------------------------------------------------------------
def fc_tail_kernel(h_ref, w2_ref, b2_ref, w3_ref, b3_ref, w4_ref, b4_ref, o_ref):
    h = h_ref[...]                                                    # (B, 2048)
    h = jnp.dot(h.astype(jnp.bfloat16), w2_ref[...],
                preferred_element_type=jnp.float32)
    h = jnp.maximum(h + b2_ref[...], 0.0)                             # (B, 512)
    h = jnp.dot(h, w3_ref[...], preferred_element_type=jnp.float32)
    h = jnp.maximum(h + b3_ref[...], 0.0)                             # (B, 128)
    h = jnp.dot(h, w4_ref[...], preferred_element_type=jnp.float32)
    o_ref[...] = h + b4_ref[...]                                      # (B, 128)


def fc_tail(h, prep):
    B = h.shape[0]
    f2, f3, f4 = prep["fc2"], prep["fc3"], prep["fc4"]
    return pl.pallas_call(
        fc_tail_kernel,
        out_shape=jax.ShapeDtypeStruct((B, 128), jnp.float32),
        grid=(1,),
        in_specs=[
            pl.BlockSpec(h.shape, lambda i: (0, 0)),
            pl.BlockSpec(f2["w"].shape, lambda i: (0, 0)),
            pl.BlockSpec(f2["b"].shape, lambda i: (0, 0)),
            pl.BlockSpec(f3["w"].shape, lambda i: (0, 0)),
            pl.BlockSpec(f3["b"].shape, lambda i: (0, 0)),
            pl.BlockSpec(f4["w"].shape, lambda i: (0, 0)),
            pl.BlockSpec(f4["b"].shape, lambda i: (0, 0)),
        ],
        out_specs=pl.BlockSpec((B, 128), lambda i: (0, 0)),
    )(h, f2["w"], f2["b"], f3["w"], f3["b"], f4["w"], f4["b"])


# ----------------------------------------------------------------------------
# Parameters (deterministic, synthetic), one-time prep, forward, f32 reference.
# ----------------------------------------------------------------------------
def make_params(key):
    ks = iter(jax.random.split(key, 40))
    params = {}

    def conv_layer(c_in, c_out):
        w = jax.random.normal(next(ks), (c_out, c_in, 3), jnp.float32) * 0.2  # (O,I,K)
        cb = jax.random.normal(next(ks), (c_out,), jnp.float32) * 0.1
        gamma = 1.0 + 0.1 * jax.random.normal(next(ks), (c_out,), jnp.float32)
        beta = 0.1 * jax.random.normal(next(ks), (c_out,), jnp.float32)
        mean = 0.1 * jax.random.normal(next(ks), (c_out,), jnp.float32)
        var = jnp.abs(jax.random.normal(next(ks), (c_out,), jnp.float32)) + 0.5
        return dict(w=w, cb=cb, gamma=gamma, beta=beta, mean=mean, var=var)

    def fc_layer(k_in, n_out):
        w = jax.random.normal(next(ks), (k_in, n_out), jnp.float32) / jnp.sqrt(float(k_in))
        b = 0.01 * jax.random.normal(next(ks), (n_out,), jnp.float32)
        return dict(w=w, b=b)

    params["conv1"] = conv_layer(1, 16)
    params["conv2"] = conv_layer(16, 32)
    params["conv3"] = conv_layer(32, 64)
    params["fc1"] = fc_layer(8192, 2048)
    params["fc2"] = fc_layer(2048, 512)
    params["fc3"] = fc_layer(512, 80)
    params["fc4"] = fc_layer(80, 4)
    return params


def prepare_params(params):
    """One-time, out-of-hot-path parameter massaging."""
    prep = {}
    # conv1 kept as (3, C_out, 1) for the VPU broadcast path; conv2/conv3 are
    # packed to (C_out, 3*C_in) so each layer is a single MXU matmul:
    # packed column k*C_in + i multiplies tap k (h[l-1], h[l], h[l+1]) of ch i.
    for name, packed in (("conv1", False), ("conv2", True), ("conv3", True)):
        p = params[name]
        scale = p["gamma"] / jnp.sqrt(p["var"] + BN_EPS)
        shift = p["beta"] - p["mean"] * scale
        if packed:
            w = jnp.transpose(p["w"], (0, 2, 1)).reshape(p["w"].shape[0], -1)  # (O, 3*I)
        else:
            w = jnp.transpose(p["w"], (2, 0, 1))                               # (3, O, 1)
        pack = jnp.stack([p["cb"], scale, shift], axis=0)                      # (3, C_out)
        prep[name] = dict(w=w, p=pack.reshape(3, -1, 1))

    # One-off 128x128 shift matrices for the k=3 "same" conv (zero boundary).
    idx = jnp.arange(L_SEQ)
    sr = (idx[:, None] + 1 == idx[None, :]).astype(jnp.float32)   # h @ sr -> h[l-1]
    prep["sr"] = sr
    prep["sl"] = sr.T                                             # h @ sl -> h[l+1]

    # fc1: int8 weight with per-output-channel symmetric scales (halves the
    # dominant HBM stream vs bf16; dequant is exact int8->bf16 in-kernel, the
    # scale is applied once on the accumulator).
    w1 = params["fc1"]["w"]
    s1 = jnp.maximum(jnp.max(jnp.abs(w1), axis=0, keepdims=True), 1e-8) / 127.0
    w1_i8 = jnp.clip(jnp.round(w1 / s1), -127, 127).astype(jnp.int8)
    prep["fc1"] = dict(w=w1_i8, s=s1, b=params["fc1"]["b"].reshape(1, -1))

    # fc2 weight streamed as bf16; fc3/fc4 stay f32 (tiny) zero-padded to 128.
    prep["fc2"] = dict(w=params["fc2"]["w"].astype(jnp.bfloat16),
                       b=params["fc2"]["b"].reshape(1, -1))
    prep["fc3"] = dict(w=jnp.pad(params["fc3"]["w"], ((0, 0), (0, 48))),
                       b=jnp.pad(params["fc3"]["b"], ((0, 48),)).reshape(1, -1))
    prep["fc4"] = dict(w=jnp.pad(params["fc4"]["w"], ((0, 48), (0, 124))),
                       b=jnp.pad(params["fc4"]["b"], ((0, 124),)).reshape(1, -1))
    return prep


def gsr_forward_pallas(x, prep):
    # TODO(synk): Dropout(0.3) is stochastic in training; identity in eval mode.
    B = x.shape[0]
    h = conv_stack(x, prep)                       # (B, 64, 128)
    h = h.reshape(B, 64 * L_SEQ)                  # row-major flatten == torch .view
    h = fc1_linear(h, prep["fc1"]["w"], prep["fc1"]["s"], prep["fc1"]["b"])  # (B, 2048)
    out = fc_tail(h, prep)                        # (B, 128), lanes 4..127 are zero
    return out[:, :4]


def gsr_forward_reference(x, params):
    """Pure f32 reference matching the PyTorch module semantics (eval mode)."""
    h = x
    for name in ("conv1", "conv2", "conv3"):
        p = params[name]
        h = lax.conv_general_dilated(h, p["w"], window_strides=(1,),
                                     padding=((1, 1),),
                                     dimension_numbers=("NCH", "OIH", "NCH"))
        h = h + p["cb"][None, :, None]
        h = jnp.maximum(h, 0.0)
        h = ((h - p["mean"][None, :, None])
             / jnp.sqrt(p["var"][None, :, None] + BN_EPS)
             * p["gamma"][None, :, None] + p["beta"][None, :, None])
    B = h.shape[0]
    h = h.reshape(B, -1)
    h = jnp.maximum(h @ params["fc1"]["w"] + params["fc1"]["b"], 0.0)
    h = jnp.maximum(h @ params["fc2"]["w"] + params["fc2"]["b"], 0.0)
    h = jnp.maximum(h @ params["fc3"]["w"] + params["fc3"]["b"], 0.0)
    h = h @ params["fc4"]["w"] + params["fc4"]["b"]
    return h


if __name__ == "__main__":
    key = jax.random.PRNGKey(0)
    k_x, k_p = jax.random.split(key)

    B, C_in, L = 2, 1, L_SEQ   # L=128 is forced by fc1's 8192 = 64*128 input size
    x = jax.random.normal(k_x, (B, C_in, L), jnp.float32)
    params = make_params(k_p)
    prep = prepare_params(params)          # one-time prep, outside the hot path

    fwd = jax.jit(gsr_forward_pallas)
    out = jax.block_until_ready(fwd(x, prep))

    ref = jax.block_until_ready(gsr_forward_reference(x, params))
    assert out.shape == (B, 4), out.shape
    # int8 per-channel fc1 weights + bf16 activations/fc2 weight give ~1-2%
    # relative error vs the pure-f32 reference; 5e-2 still catches real bugs.
    assert jnp.allclose(out, ref, rtol=5e-2, atol=5e-2), (out, ref)

    print("KERNEL_OK")
</pallas_src>

<mosaic_0001>
module attributes {stable_mosaic.version = 11 : i64} {
  func.func @conv_stack_kernel(%arg0: i32, %arg1: memref<1x1x128xf32, #tpu.memory_space<vmem>>, %arg2: memref<128x128xf32, #tpu.memory_space<vmem>>, %arg3: memref<128x128xf32, #tpu.memory_space<vmem>>, %arg4: memref<3x16x1xf32, #tpu.memory_space<vmem>>, %arg5: memref<3x16x1xf32, #tpu.memory_space<vmem>>, %arg6: memref<32x48xf32, #tpu.memory_space<vmem>>, %arg7: memref<3x32x1xf32, #tpu.memory_space<vmem>>, %arg8: memref<64x96xf32, #tpu.memory_space<vmem>>, %arg9: memref<3x64x1xf32, #tpu.memory_space<vmem>>, %arg10: memref<1x64x128xf32, #tpu.memory_space<vmem>>) attributes {dimension_semantics = [#tpu.dimension_semantics<parallel>], iteration_bounds = array<i64: 2>, scalar_prefetch = 0 : i64, scratch_operands = 0 : i64, tpu.core_type = #tpu.core_type<tc>, window_params = [{transform_indices = @transform_0, window_bounds = array<i64: 1, 1, 128>}, {pipeline_mode = #tpu.pipeline_mode<synchronous>, transform_indices = @transform_1, window_bounds = array<i64: 128, 128>}, {pipeline_mode = #tpu.pipeline_mode<synchronous>, transform_indices = @transform_2, window_bounds = array<i64: 128, 128>}, {pipeline_mode = #tpu.pipeline_mode<synchronous>, transform_indices = @transform_3, window_bounds = array<i64: 3, 16, 1>}, {pipeline_mode = #tpu.pipeline_mode<synchronous>, transform_indices = @transform_4, window_bounds = array<i64: 3, 16, 1>}, {pipeline_mode = #tpu.pipeline_mode<synchronous>, transform_indices = @transform_5, window_bounds = array<i64: 32, 48>}, {pipeline_mode = #tpu.pipeline_mode<synchronous>, transform_indices = @transform_6, window_bounds = array<i64: 3, 32, 1>}, {pipeline_mode = #tpu.pipeline_mode<synchronous>, transform_indices = @transform_7, window_bounds = array<i64: 64, 96>}, {pipeline_mode = #tpu.pipeline_mode<synchronous>, transform_indices = @transform_8, window_bounds = array<i64: 3, 64, 1>}, {transform_indices = @transform_9, window_bounds = array<i64: 1, 64, 128>}]} {
    %c0 = arith.constant 0 : index
    %c0_0 = arith.constant 0 : index
    %0 = vector.load %arg2[%c0, %c0_0] : memref<128x128xf32, #tpu.memory_space<vmem>>, vector<128x128xf32>
    %c0_1 = arith.constant 0 : index
    %c0_2 = arith.constant 0 : index
    %1 = vector.load %arg3[%c0_1, %c0_2] : memref<128x128xf32, #tpu.memory_space<vmem>>, vector<128x128xf32>
    %c0_3 = arith.constant 0 : index
    %c0_4 = arith.constant 0 : index
    %c0_5 = arith.constant 0 : index
    %2 = vector.load %arg1[%c0_3, %c0_4, %c0_5] : memref<1x1x128xf32, #tpu.memory_space<vmem>>, vector<1x1x128xf32>
    %3 = vector.shape_cast %2 : vector<1x1x128xf32> to vector<1x128xf32>
    %cst = arith.constant dense<0.000000e+00> : vector<1x128xf32>
    %4 = tpu.matmul %3, %0, %cst {dimension_numbers = #tpu.dot_dimension_numbers<[1], [0], [0], [1], [0, 0, 1, 1], [], []>} : vector<1x128xf32>, vector<128x128xf32>, vector<1x128xf32> -> vector<1x128xf32>
    %cst_6 = arith.constant dense<0.000000e+00> : vector<1x128xf32>
    %5 = tpu.matmul %3, %1, %cst_6 {dimension_numbers = #tpu.dot_dimension_numbers<[1], [0], [0], [1], [0, 0, 1, 1], [], []>} : vector<1x128xf32>, vector<128x128xf32>, vector<1x128xf32> -> vector<1x128xf32>
    %c0_7 = arith.constant 0 : index
    %c0_8 = arith.constant 0 : index
    %c0_9 = arith.constant 0 : index
    %6 = vector.load %arg4[%c0_7, %c0_8, %c0_9] : memref<3x16x1xf32, #tpu.memory_space<vmem>>, vector<3x16x1xf32>
    %7 = vector.extract_strided_slice %6 {offsets = [0, 0, 0], sizes = [1, 16, 1], strides = [1, 1, 1]} : vector<3x16x1xf32> to vector<1x16x1xf32>
    %8 = vector.shape_cast %7 : vector<1x16x1xf32> to vector<16x1xf32>
    %9 = vector.broadcast %8 : vector<16x1xf32> to vector<16x128xf32>
    %10 = vector.broadcast %4 : vector<1x128xf32> to vector<16x128xf32>
    %11 = arith.mulf %9, %10 : vector<16x128xf32>
    %12 = vector.extract_strided_slice %6 {offsets = [1, 0, 0], sizes = [1, 16, 1], strides = [1, 1, 1]} : vector<3x16x1xf32> to vector<1x16x1xf32>
    %13 = vector.shape_cast %12 : vector<1x16x1xf32> to vector<16x1xf32>
    %14 = vector.broadcast %13 : vector<16x1xf32> to vector<16x128xf32>
    %15 = vector.broadcast %3 : vector<1x128xf32> to vector<16x128xf32>
    %16 = arith.mulf %14, %15 : vector<16x128xf32>
    %17 = arith.addf %11, %16 : vector<16x128xf32>
    %18 = vector.extract_strided_slice %6 {offsets = [2, 0, 0], sizes = [1, 16, 1], strides = [1, 1, 1]} : vector<3x16x1xf32> to vector<1x16x1xf32>
    %19 = vector.shape_cast %18 : vector<1x16x1xf32> to vector<16x1xf32>
    %20 = vector.broadcast %19 : vector<16x1xf32> to vector<16x128xf32>
    %21 = vector.broadcast %5 : vector<1x128xf32> to vector<16x128xf32>
    %22 = arith.mulf %20, %21 : vector<16x128xf32>
    %23 = arith.addf %17, %22 : vector<16x128xf32>
    %c0_10 = arith.constant 0 : index
    %c0_11 = arith.constant 0 : index
    %c0_12 = arith.constant 0 : index
    %24 = vector.load %arg5[%c0_10, %c0_11, %c0_12] : memref<3x16x1xf32, #tpu.memory_space<vmem>>, vector<1x16x1xf32>
    %25 = vector.shape_cast %24 : vector<1x16x1xf32> to vector<16x1xf32>
    %26 = vector.broadcast %25 : vector<16x1xf32> to vector<16x128xf32>
    %27 = arith.addf %23, %26 : vector<16x128xf32>
    %cst_13 = arith.constant 0.000000e+00 : f32
    %28 = vector.broadcast %cst_13 : f32 to vector<16x128xf32>
    %29 = arith.maximumf %27, %28 : vector<16x128xf32>
    %c1 = arith.constant 1 : index
    %c0_14 = arith.constant 0 : index
    %c0_15 = arith.constant 0 : index
    %30 = vector.load %arg5[%c1, %c0_14, %c0_15] : memref<3x16x1xf32, #tpu.memory_space<vmem>>, vector<1x16x1xf32>
    %31 = vector.shape_cast %30 : vector<1x16x1xf32> to vector<16x1xf32>
    %32 = vector.broadcast %31 : vector<16x1xf32> to vector<16x128xf32>
    %33 = arith.mulf %29, %32 : vector<16x128xf32>
    %c2 = arith.constant 2 : index
    %c0_16 = arith.constant 0 : index
    %c0_17 = arith.constant 0 : index
    %34 = vector.load %arg5[%c2, %c0_16, %c0_17] : memref<3x16x1xf32, #tpu.memory_space<vmem>>, vector<1x16x1xf32>
    %35 = vector.shape_cast %34 : vector<1x16x1xf32> to vector<16x1xf32>
    %36 = vector.broadcast %35 : vector<16x1xf32> to vector<16x128xf32>
    %37 = arith.addf %33, %36 : vector<16x128xf32>
    %cst_18 = arith.constant dense<0.000000e+00> : vector<16x128xf32>
    %38 = tpu.matmul %37, %0, %cst_18 {dimension_numbers = #tpu.dot_dimension_numbers<[1], [0], [0], [1], [0, 0, 1, 1], [], []>} : vector<16x128xf32>, vector<128x128xf32>, vector<16x128xf32> -> vector<16x128xf32>
    %cst_19 = arith.constant dense<0.000000e+00> : vector<16x128xf32>
    %39 = tpu.matmul %37, %1, %cst_19 {dimension_numbers = #tpu.dot_dimension_numbers<[1], [0], [0], [1], [0, 0, 1, 1], [], []>} : vector<16x128xf32>, vector<128x128xf32>, vector<16x128xf32> -> vector<16x128xf32>
    %40 = tpu.concatenate %38, %37, %39 in 0 : vector<16x128xf32>, vector<16x128xf32>, vector<16x128xf32> -> vector<48x128xf32>
    %c0_20 = arith.constant 0 : index
    %c0_21 = arith.constant 0 : index
    %41 = vector.load %arg6[%c0_20, %c0_21] : memref<32x48xf32, #tpu.memory_space<vmem>>, vector<32x48xf32>
    %cst_22 = arith.constant dense<0.000000e+00> : vector<32x128xf32>
    %42 = tpu.matmul %41, %40, %cst_22 {dimension_numbers = #tpu.dot_dimension_numbers<[1], [0], [0], [1], [0, 0, 1, 1], [], []>} : vector<32x48xf32>, vector<48x128xf32>, vector<32x128xf32> -> vector<32x128xf32>
    %c0_23 = arith.constant 0 : index
    %c0_24 = arith.constant 0 : index
    %c0_25 = arith.constant 0 : index
    %43 = vector.load %arg7[%c0_23, %c0_24, %c0_25] : memref<3x32x1xf32, #tpu.memory_space<vmem>>, vector<1x32x1xf32>
    %44 = vector.shape_cast %43 : vector<1x32x1xf32> to vector<32x1xf32>
    %45 = vector.broadcast %44 : vector<32x1xf32> to vector<32x128xf32>
    %46 = arith.addf %42, %45 : vector<32x128xf32>
    %cst_26 = arith.constant 0.000000e+00 : f32
    %47 = vector.broadcast %cst_26 : f32 to vector<32x128xf32>
    %48 = arith.maximumf %46, %47 : vector<32x128xf32>
    %c1_27 = arith.constant 1 : index
    %c0_28 = arith.constant 0 : index
    %c0_29 = arith.constant 0 : index
    %49 = vector.load %arg7[%c1_27, %c0_28, %c0_29] : memref<3x32x1xf32, #tpu.memory_space<vmem>>, vector<1x32x1xf32>
    %50 = vector.shape_cast %49 : vector<1x32x1xf32> to vector<32x1xf32>
    %51 = vector.broadcast %50 : vector<32x1xf32> to vector<32x128xf32>
    %52 = arith.mulf %48, %51 : vector<32x128xf32>
    %c2_30 = arith.constant 2 : index
    %c0_31 = arith.constant 0 : index
    %c0_32 = arith.constant 0 : index
    %53 = vector.load %arg7[%c2_30, %c0_31, %c0_32] : memref<3x32x1xf32, #tpu.memory_space<vmem>>, vector<1x32x1xf32>
    %54 = vector.shape_cast %53 : vector<1x32x1xf32> to vector<32x1xf32>
    %55 = vector.broadcast %54 : vector<32x1xf32> to vector<32x128xf32>
    %56 = arith.addf %52, %55 : vector<32x128xf32>
    %cst_33 = arith.constant dense<0.000000e+00> : vector<32x128xf32>
    %57 = tpu.matmul %56, %0, %cst_33 {dimension_numbers = #tpu.dot_dimension_numbers<[1], [0], [0], [1], [0, 0, 1, 1], [], []>} : vector<32x128xf32>, vector<128x128xf32>, vector<32x128xf32> -> vector<32x128xf32>
    %cst_34 = arith.constant dense<0.000000e+00> : vector<32x128xf32>
    %58 = tpu.matmul %56, %1, %cst_34 {dimension_numbers = #tpu.dot_dimension_numbers<[1], [0], [0], [1], [0, 0, 1, 1], [], []>} : vector<32x128xf32>, vector<128x128xf32>, vector<32x128xf32> -> vector<32x128xf32>
    %59 = tpu.concatenate %57, %56, %58 in 0 : vector<32x128xf32>, vector<32x128xf32>, vector<32x128xf32> -> vector<96x128xf32>
    %c0_35 = arith.constant 0 : index
    %c0_36 = arith.constant 0 : index
    %60 = vector.load %arg8[%c0_35, %c0_36] : memref<64x96xf32, #tpu.memory_space<vmem>>, vector<64x96xf32>
    %cst_37 = arith.constant dense<0.000000e+00> : vector<64x128xf32>
    %61 = tpu.matmul %60, %59, %cst_37 {dimension_numbers = #tpu.dot_dimension_numbers<[1], [0], [0], [1], [0, 0, 1, 1], [], []>} : vector<64x96xf32>, vector<96x128xf32>, vector<64x128xf32> -> vector<64x128xf32>
    %c0_38 = arith.constant 0 : index
    %c0_39 = arith.constant 0 : index
    %c0_40 = arith.constant 0 : index
    %62 = vector.load %arg9[%c0_38, %c0_39, %c0_40] : memref<3x64x1xf32, #tpu.memory_space<vmem>>, vector<1x64x1xf32>
    %63 = vector.shape_cast %62 : vector<1x64x1xf32> to vector<64x1xf32>
    %64 = vector.broadcast %63 : vector<64x1xf32> to vector<64x128xf32>
    %65 = arith.addf %61, %64 : vector<64x128xf32>
    %cst_41 = arith.constant 0.000000e+00 : f32
    %66 = vector.broadcast %cst_41 : f32 to vector<64x128xf32>
    %67 = arith.maximumf %65, %66 : vector<64x128xf32>
    %c1_42 = arith.constant 1 : index
    %c0_43 = arith.constant 0 : index
    %c0_44 = arith.constant 0 : index
    %68 = vector.load %arg9[%c1_42, %c0_43, %c0_44] : memref<3x64x1xf32, #tpu.memory_space<vmem>>, vector<1x64x1xf32>
    %69 = vector.shape_cast %68 : vector<1x64x1xf32> to vector<64x1xf32>
    %70 = vector.broadcast %69 : vector<64x1xf32> to vector<64x128xf32>
    %71 = arith.mulf %67, %70 : vector<64x128xf32>
    %c2_45 = arith.constant 2 : index
    %c0_46 = arith.constant 0 : index
    %c0_47 = arith.constant 0 : index
    %72 = vector.load %arg9[%c2_45, %c0_46, %c0_47] : memref<3x64x1xf32, #tpu.memory_space<vmem>>, vector<1x64x1xf32>
    %73 = vector.shape_cast %72 : vector<1x64x1xf32> to vector<64x1xf32>
    %74 = vector.broadcast %73 : vector<64x1xf32> to vector<64x128xf32>
    %75 = arith.addf %71, %74 : vector<64x128xf32>
    %c0_48 = arith.constant 0 : index
    %c0_49 = arith.constant 0 : index
    %c0_50 = arith.constant 0 : index
    %76 = vector.load %arg10[%c0_48, %c0_49, %c0_50] : memref<1x64x128xf32, #tpu.memory_space<vmem>>, vector<1x64x128xf32>
    %77 = vector.shape_cast %76 : vector<1x64x128xf32> to vector<64x128xf32>
    %78 = vector.shape_cast %75 : vector<64x128xf32> to vector<1x64x128xf32>
    tpu.vector_store %arg10[%c0_48, %c0_49, %c0_50], %78 {strides = array<i32>} : memref<1x64x128xf32, #tpu.memory_space<vmem>>, vector<1x64x128xf32>,
    return
  }
  func.func @transform_0(%arg0: i32) -> (i32, i32, i32) {
    %c0_i32 = arith.constant 0 : i32
    %c0_i32_0 = arith.constant 0 : i32
    %c0_i32_1 = arith.constant 0 : i32
    return %arg0, %c0_i32, %c0_i32_0 : i32, i32, i32
  }
  func.func @transform_1(%arg0: i32) -> (i32, i32) {
    %c0_i32 = arith.constant 0 : i32
    %c0_i32_0 = arith.constant 0 : i32
    %c0_i32_1 = arith.constant 0 : i32
    return %c0_i32, %c0_i32_0 : i32, i32
  }
  func.func @transform_2(%arg0: i32) -> (i32, i32) {
    %c0_i32 = arith.constant 0 : i32
    %c0_i32_0 = arith.constant 0 : i32
    %c0_i32_1 = arith.constant 0 : i32
    return %c0_i32, %c0_i32_0 : i32, i32
  }
  func.func @transform_3(%arg0: i32) -> (i32, i32, i32) {
    %c0_i32 = arith.constant 0 : i32
    %c0_i32_0 = arith.constant 0 : i32
    %c0_i32_1 = arith.constant 0 : i32
    %c0_i32_2 = arith.constant 0 : i32
    return %c0_i32, %c0_i32_0, %c0_i32_1 : i32, i32, i32
  }
  func.func @transform_4(%arg0: i32) -> (i32, i32, i32) {
    %c0_i32 = arith.constant 0 : i32
    %c0_i32_0 = arith.constant 0 : i32
    %c0_i32_1 = arith.constant 0 : i32
    %c0_i32_2 = arith.constant 0 : i32
    return %c0_i32, %c0_i32_0, %c0_i32_1 : i32, i32, i32
  }
  func.func @transform_5(%arg0: i32) -> (i32, i32) {
    %c0_i32 = arith.constant 0 : i32
    %c0_i32_0 = arith.constant 0 : i32
    %c0_i32_1 = arith.constant 0 : i32
    return %c0_i32, %c0_i32_0 : i32, i32
  }
  func.func @transform_6(%arg0: i32) -> (i32, i32, i32) {
    %c0_i32 = arith.constant 0 : i32
    %c0_i32_0 = arith.constant 0 : i32
    %c0_i32_1 = arith.constant 0 : i32
    %c0_i32_2 = arith.constant 0 : i32
    return %c0_i32, %c0_i32_0, %c0_i32_1 : i32, i32, i32
  }
  func.func @transform_7(%arg0: i32) -> (i32, i32) {
    %c0_i32 = arith.constant 0 : i32
    %c0_i32_0 = arith.constant 0 : i32
    %c0_i32_1 = arith.constant 0 : i32
    return %c0_i32, %c0_i32_0 : i32, i32
  }
  func.func @transform_8(%arg0: i32) -> (i32, i32, i32) {
    %c0_i32 = arith.constant 0 : i32
    %c0_i32_0 = arith.constant 0 : i32
    %c0_i32_1 = arith.constant 0 : i32
    %c0_i32_2 = arith.constant 0 : i32
    return %c0_i32, %c0_i32_0, %c0_i32_1 : i32, i32, i32
  }
  func.func @transform_9(%arg0: i32) -> (i32, i32, i32) {
    %c0_i32 = arith.constant 0 : i32
    %c0_i32_0 = arith.constant 0 : i32
    %c0_i32_1 = arith.constant 0 : i32
    return %arg0, %c0_i32, %c0_i32_0 : i32, i32, i32
  }
}

module attributes {stable_mosaic.version = 11 : i64} {
  func.func @fc1_kernel(%arg0: i32, %arg1: i32, %arg2: memref<2x8192xf32, #tpu.memory_space<vmem>>, %arg3: memref<2048x1024xi8, #tpu.memory_space<vmem>>, %arg4: memref<1x1024xf32, #tpu.memory_space<vmem>>, %arg5: memref<1x1024xf32, #tpu.memory_space<vmem>>, %arg6: memref<2x1024xf32, #tpu.memory_space<vmem>>) attributes {dimension_semantics = [#tpu.dimension_semantics<parallel>, #tpu.dimension_semantics<arbitrary>], iteration_bounds = array<i64: 2, 4>, scalar_prefetch = 0 : i64, scratch_operands = 0 : i64, tpu.core_type = #tpu.core_type<tc>, window_params = [{pipeline_mode = #tpu.pipeline_mode<synchronous>, transform_indices = @transform_0, window_bounds = array<i64: 2, 8192>}, {transform_indices = @transform_1, window_bounds = array<i64: 2048, 1024>}, {transform_indices = @transform_2, window_bounds = array<i64: 1, 1024>}, {transform_indices = @transform_3, window_bounds = array<i64: 1, 1024>}, {transform_indices = @transform_4, window_bounds = array<i64: 2, 1024>}]} {
    %c0_i32 = arith.constant 0 : i32
    %0 = arith.cmpi eq, %arg1, %c0_i32 : i32
    %1 = arith.extui %0 : i1 to i32
    %c0_i32_0 = arith.constant 0 : i32
    %2 = arith.cmpi ne, %1, %c0_i32_0 : i32
    scf.if %2 {
      %cst_8 = arith.constant 0.000000e+00 : f32
      %17 = vector.broadcast %cst_8 : f32 to vector<2x1024xf32>
      %c0_9 = arith.constant 0 : index
      %c0_10 = arith.constant 0 : index
      %18 = vector.load %arg6[%c0_9, %c0_10] : memref<2x1024xf32, #tpu.memory_space<vmem>>, vector<2x1024xf32>
      tpu.vector_store %arg6[%c0_9, %c0_10], %17 {strides = array<i32>} : memref<2x1024xf32, #tpu.memory_space<vmem>>, vector<2x1024xf32>,
    } else {
    }
    %c2048_i32 = arith.constant 2048 : i32
    %3 = arith.muli %arg1, %c2048_i32 : i32
    %4 = tpu.assume_multiple %3, 2048 : i32
    %c0 = arith.constant 0 : index
    %5 = arith.index_cast %4 : i32 to index
    %6 = vector.load %arg2[%c0, %5] : memref<2x8192xf32, #tpu.memory_space<vmem>>, vector<2x2048xf32>
    %c0_1 = arith.constant 0 : index
    %c0_2 = arith.constant 0 : index
    %7 = vector.load %arg6[%c0_1, %c0_2] : memref<2x1024xf32, #tpu.memory_space<vmem>>, vector<2x1024xf32>
    %8 = arith.truncf %6 : vector<2x2048xf32> to vector<2x2048xbf16>
    %c0_3 = arith.constant 0 : index
    %c0_4 = arith.constant 0 : index
    %9 = vector.load %arg3[%c0_3, %c0_4] : memref<2048x1024xi8, #tpu.memory_space<vmem>>, vector<2048x1024xi8>
    %10 = arith.sitofp %9 : vector<2048x1024xi8> to vector<2048x1024xbf16>
    %cst = arith.constant dense<0.000000e+00> : vector<2x1024xf32>
    %11 = tpu.matmul %8, %10, %cst {dimension_numbers = #tpu.dot_dimension_numbers<[1], [0], [0], [1], [0, 0, 1, 1], [], []>} : vector<2x2048xbf16>, vector<2048x1024xbf16>, vector<2x1024xf32> -> vector<2x1024xf32>
    %12 = arith.addf %7, %11 : vector<2x1024xf32>
    %c0_5 = arith.constant 0 : index
    %c0_6 = arith.constant 0 : index
    %13 = vector.load %arg6[%c0_5, %c0_6] : memref<2x1024xf32, #tpu.memory_space<vmem>>, vector<2x1024xf32>
    tpu.vector_store %arg6[%c0_5, %c0_6], %12 {strides = array<i32>} : memref<2x1024xf32, #tpu.memory_space<vmem>>, vector<2x1024xf32>,
    %c3_i32 = arith.constant 3 : i32
    %14 = arith.cmpi eq, %arg1, %c3_i32 : i32
    %15 = arith.extui %14 : i1 to i32
    %c0_i32_7 = arith.constant 0 : i32
    %16 = arith.cmpi ne, %15, %c0_i32_7 : i32
    scf.if %16 {
      %c0_8 = arith.constant 0 : index
      %c0_9 = arith.constant 0 : index
      %17 = vector.load %arg6[%c0_8, %c0_9] : memref<2x1024xf32, #tpu.memory_space<vmem>>, vector<2x1024xf32>
      %c0_10 = arith.constant 0 : index
      %c0_11 = arith.constant 0 : index
      %18 = vector.load %arg4[%c0_10, %c0_11] : memref<1x1024xf32, #tpu.memory_space<vmem>>, vector<1x1024xf32>
      %19 = vector.broadcast %18 : vector<1x1024xf32> to vector<2x1024xf32>
      %20 = arith.mulf %17, %19 : vector<2x1024xf32>
      %c0_12 = arith.constant 0 : index
      %c0_13 = arith.constant 0 : index
      %21 = vector.load %arg5[%c0_12, %c0_13] : memref<1x1024xf32, #tpu.memory_space<vmem>>, vector<1x1024xf32>
      %22 = vector.broadcast %21 : vector<1x1024xf32> to vector<2x1024xf32>
      %23 = arith.addf %20, %22 : vector<2x1024xf32>
      %cst_14 = arith.constant 0.000000e+00 : f32
      %24 = vector.broadcast %cst_14 : f32 to vector<2x1024xf32>
      %25 = arith.maximumf %23, %24 : vector<2x1024xf32>
      %c0_15 = arith.constant 0 : index
      %c0_16 = arith.constant 0 : index
      %26 = vector.load %arg6[%c0_15, %c0_16] : memref<2x1024xf32, #tpu.memory_space<vmem>>, vector<2x1024xf32>
      tpu.vector_store %arg6[%c0_15, %c0_16], %25 {strides = array<i32>} : memref<2x1024xf32, #tpu.memory_space<vmem>>, vector<2x1024xf32>,
    } else {
    }
    return
  }
  func.func @transform_0(%arg0: i32, %arg1: i32) -> (i32, i32) {
    %c0_i32 = arith.constant 0 : i32
    %c0_i32_0 = arith.constant 0 : i32
    %c0_i32_1 = arith.constant 0 : i32
    return %c0_i32, %c0_i32_0 : i32, i32
  }
  func.func @transform_1(%arg0: i32, %arg1: i32) -> (i32, i32) {
    %c0_i32 = arith.constant 0 : i32
    return %arg1, %arg0 : i32, i32
  }
  func.func @transform_2(%arg0: i32, %arg1: i32) -> (i32, i32) {
    %c0_i32 = arith.constant 0 : i32
    %c0_i32_0 = arith.constant 0 : i32
    return %c0_i32, %arg0 : i32, i32
  }
  func.func @transform_3(%arg0: i32, %arg1: i32) -> (i32, i32) {
    %c0_i32 = arith.constant 0 : i32
    %c0_i32_0 = arith.constant 0 : i32
    return %c0_i32, %arg0 : i32, i32
  }
  func.func @transform_4(%arg0: i32, %arg1: i32) -> (i32, i32) {
    %c0_i32 = arith.constant 0 : i32
    %c0_i32_0 = arith.constant 0 : i32
    return %c0_i32, %arg0 : i32, i32
  }
}

module attributes {stable_mosaic.version = 11 : i64} {
  func.func @fc_tail_kernel(%arg0: i32, %arg1: memref<2x2048xf32, #tpu.memory_space<vmem>>, %arg2: memref<2048x512xbf16, #tpu.memory_space<vmem>>, %arg3: memref<1x512xf32, #tpu.memory_space<vmem>>, %arg4: memref<512x128xf32, #tpu.memory_space<vmem>>, %arg5: memref<1x128xf32, #tpu.memory_space<vmem>>, %arg6: memref<128x128xf32, #tpu.memory_space<vmem>>, %arg7: memref<1x128xf32, #tpu.memory_space<vmem>>, %arg8: memref<2x128xf32, #tpu.memory_space<vmem>>) attributes {dimension_semantics = [#tpu.dimension_semantics<arbitrary>], iteration_bounds = array<i64: 1>, scalar_prefetch = 0 : i64, scratch_operands = 0 : i64, tpu.core_type = #tpu.core_type<tc>, window_params = [{pipeline_mode = #tpu.pipeline_mode<synchronous>, transform_indices = @transform_0, window_bounds = array<i64: 2, 2048>}, {pipeline_mode = #tpu.pipeline_mode<synchronous>, transform_indices = @transform_1, window_bounds = array<i64: 2048, 512>}, {pipeline_mode = #tpu.pipeline_mode<synchronous>, transform_indices = @transform_2, window_bounds = array<i64: 1, 512>}, {pipeline_mode = #tpu.pipeline_mode<synchronous>, transform_indices = @transform_3, window_bounds = array<i64: 512, 128>}, {pipeline_mode = #tpu.pipeline_mode<synchronous>, transform_indices = @transform_4, window_bounds = array<i64: 1, 128>}, {pipeline_mode = #tpu.pipeline_mode<synchronous>, transform_indices = @transform_5, window_bounds = array<i64: 128, 128>}, {pipeline_mode = #tpu.pipeline_mode<synchronous>, transform_indices = @transform_6, window_bounds = array<i64: 1, 128>}, {pipeline_mode = #tpu.pipeline_mode<synchronous>, transform_indices = @transform_7, window_bounds = array<i64: 2, 128>}]} {
    %c0 = arith.constant 0 : index
    %c0_0 = arith.constant 0 : index
    %0 = vector.load %arg1[%c0, %c0_0] : memref<2x2048xf32, #tpu.memory_space<vmem>>, vector<2x2048xf32>
    %1 = arith.truncf %0 : vector<2x2048xf32> to vector<2x2048xbf16>
    %c0_1 = arith.constant 0 : index
    %c0_2 = arith.constant 0 : index
    %2 = vector.load %arg2[%c0_1, %c0_2] : memref<2048x512xbf16, #tpu.memory_space<vmem>>, vector<2048x512xbf16>
    %cst = arith.constant dense<0.000000e+00> : vector<2x512xf32>
    %3 = tpu.matmul %1, %2, %cst {dimension_numbers = #tpu.dot_dimension_numbers<[1], [0], [0], [1], [0, 0, 1, 1], [], []>} : vector<2x2048xbf16>, vector<2048x512xbf16>, vector<2x512xf32> -> vector<2x512xf32>
    %c0_3 = arith.constant 0 : index
    %c0_4 = arith.constant 0 : index
    %4 = vector.load %arg3[%c0_3, %c0_4] : memref<1x512xf32, #tpu.memory_space<vmem>>, vector<1x512xf32>
    %5 = vector.broadcast %4 : vector<1x512xf32> to vector<2x512xf32>
    %6 = arith.addf %3, %5 : vector<2x512xf32>
    %cst_5 = arith.constant 0.000000e+00 : f32
    %7 = vector.broadcast %cst_5 : f32 to vector<2x512xf32>
    %8 = arith.maximumf %6, %7 : vector<2x512xf32>
    %c0_6 = arith.constant 0 : index
    %c0_7 = arith.constant 0 : index
    %9 = vector.load %arg4[%c0_6, %c0_7] : memref<512x128xf32, #tpu.memory_space<vmem>>, vector<512x128xf32>
    %cst_8 = arith.constant dense<0.000000e+00> : vector<2x128xf32>
    %10 = tpu.matmul %8, %9, %cst_8 {dimension_numbers = #tpu.dot_dimension_numbers<[1], [0], [0], [1], [0, 0, 1, 1], [], []>} : vector<2x512xf32>, vector<512x128xf32>, vector<2x128xf32> -> vector<2x128xf32>
    %c0_9 = arith.constant 0 : index
    %c0_10 = arith.constant 0 : index
    %11 = vector.load %arg5[%c0_9, %c0_10] : memref<1x128xf32, #tpu.memory_space<vmem>>, vector<1x128xf32>
    %12 = vector.broadcast %11 : vector<1x128xf32> to vector<2x128xf32>
    %13 = arith.addf %10, %12 : vector<2x128xf32>
    %cst_11 = arith.constant 0.000000e+00 : f32
    %14 = vector.broadcast %cst_11 : f32 to vector<2x128xf32>
    %15 = arith.maximumf %13, %14 : vector<2x128xf32>
    %c0_12 = arith.constant 0 : index
    %c0_13 = arith.constant 0 : index
    %16 = vector.load %arg6[%c0_12, %c0_13] : memref<128x128xf32, #tpu.memory_space<vmem>>, vector<128x128xf32>
    %cst_14 = arith.constant dense<0.000000e+00> : vector<2x128xf32>
    %17 = tpu.matmul %15, %16, %cst_14 {dimension_numbers = #tpu.dot_dimension_numbers<[1], [0], [0], [1], [0, 0, 1, 1], [], []>} : vector<2x128xf32>, vector<128x128xf32>, vector<2x128xf32> -> vector<2x128xf32>
    %c0_15 = arith.constant 0 : index
    %c0_16 = arith.constant 0 : index
    %18 = vector.load %arg7[%c0_15, %c0_16] : memref<1x128xf32, #tpu.memory_space<vmem>>, vector<1x128xf32>
    %19 = vector.broadcast %18 : vector<1x128xf32> to vector<2x128xf32>
    %20 = arith.addf %17, %19 : vector<2x128xf32>
    %c0_17 = arith.constant 0 : index
    %c0_18 = arith.constant 0 : index
    %21 = vector.load %arg8[%c0_17, %c0_18] : memref<2x128xf32, #tpu.memory_space<vmem>>, vector<2x128xf32>
    tpu.vector_store %arg8[%c0_17, %c0_18], %20 {strides = array<i32>} : memref<2x128xf32, #tpu.memory_space<vmem>>, vector<2x128xf32>,
    return
  }
  func.func @transform_0(%arg0: i32) -> (i32, i32) {
    %c0_i32 = arith.constant 0 : i32
    %c0_i32_0 = arith.constant 0 : i32
    %c0_i32_1 = arith.constant 0 : i32
    return %c0_i32, %c0_i32_0 : i32, i32
  }
  func.func @transform_1(%arg0: i32) -> (i32, i32) {
    %c0_i32 = arith.constant 0 : i32
    %c0_i32_0 = arith.constant 0 : i32
    %c0_i32_1 = arith.constant 0 : i32
    return %c0_i32, %c0_i32_0 : i32, i32
  }
  func.func @transform_2(%arg0: i32) -> (i32, i32) {
    %c0_i32 = arith.constant 0 : i32
    %c0_i32_0 = arith.constant 0 : i32
    %c0_i32_1 = arith.constant 0 : i32
    return %c0_i32, %c0_i32_0 : i32, i32
  }
  func.func @transform_3(%arg0: i32) -> (i32, i32) {
    %c0_i32 = arith.constant 0 : i32
    %c0_i32_0 = arith.constant 0 : i32
    %c0_i32_1 = arith.constant 0 : i32
    return %c0_i32, %c0_i32_0 : i32, i32
  }
  func.func @transform_4(%arg0: i32) -> (i32, i32) {
    %c0_i32 = arith.constant 0 : i32
    %c0_i32_0 = arith.constant 0 : i32
    %c0_i32_1 = arith.constant 0 : i32
    return %c0_i32, %c0_i32_0 : i32, i32
  }
  func.func @transform_5(%arg0: i32) -> (i32, i32) {
    %c0_i32 = arith.constant 0 : i32
    %c0_i32_0 = arith.constant 0 : i32
    %c0_i32_1 = arith.constant 0 : i32
    return %c0_i32, %c0_i32_0 : i32, i32
  }
  func.func @transform_6(%arg0: i32) -> (i32, i32) {
    %c0_i32 = arith.constant 0 : i32
    %c0_i32_0 = arith.constant 0 : i32
    %c0_i32_1 = arith.constant 0 : i32
    return %c0_i32, %c0_i32_0 : i32, i32
  }
  func.func @transform_7(%arg0: i32) -> (i32, i32) {
    %c0_i32 = arith.constant 0 : i32
    %c0_i32_0 = arith.constant 0 : i32
    %c0_i32_1 = arith.constant 0 : i32
    return %c0_i32, %c0_i32_0 : i32, i32
  }
}

</mosaic_0001>

<llo_original>
// kernel: gsr_forward_pallas.3
$region0: #{gsr_forward_pallas.3}
  #allocation0 [shape = 'u32[]', space=smem, size = 0x4, offset = 0x4, fixed_abs, tag = 'smem constant byte address 0x4 - core index']
  #allocation1 [shape = 'u32[144,128]{1,0:T(1,128)}', space=vmem, size = 0x12000, scoped, tag = 'internal scratch']
  %s0 = inlined_call_operand.hbm [shape: f32[2,1,128], index: 0, kind: input, shape index: {}]
  %s1 = inlined_call_operand.hbm [shape: f32[128,128], index: 1, kind: input, shape index: {}]
  %s2 = inlined_call_operand.hbm [shape: f32[128,128], index: 2, kind: input, shape index: {}]
  %s3 = inlined_call_operand.vmem [shape: f32[3,16,1], index: 3, kind: input, shape index: {}]
  %s4 = inlined_call_operand.vmem [shape: f32[3,16,1], index: 4, kind: input, shape index: {}]
  %s5 = inlined_call_operand.hbm [shape: f32[32,48], index: 5, kind: input, shape index: {}]
  %s6 = inlined_call_operand.vmem [shape: f32[3,32,1], index: 6, kind: input, shape index: {}]
  %s7 = inlined_call_operand.hbm [shape: f32[64,96], index: 7, kind: input, shape index: {}]
  %s8 = inlined_call_operand.vmem [shape: f32[3,64,1], index: 8, kind: input, shape index: {}]
  %s9 = inlined_call_operand.vmem [shape: f32[2,64,128], index: 9, kind: output, shape index: {}]
  %s10 = sld [smem:[#allocation0]]
  $region89: #{gsr_forward_pallas.3} parent=0
    _
  %s12 = ssub.s32 1, %s10
  %s13 = scalar_select 0, %s12, %s10
  $region1: #{gsr_forward_pallas.3} parent=0
    #allocation2 [shape = 'u8[1024]{0}', space=vmem, size = 0x400, scoped, tag = 'input window, operand 0']
    #allocation3 [shape = 's32[2]{0}', space=sflag, size = 0x8, scoped, tag = 'scoped memory for gsr_forward_pallas.3']
    #allocation4 [shape = 'u8[65536]{0}', space=vmem, size = 0x10000, scoped, tag = 'input window, operand 1, single buffered']
    #allocation5 [shape = 's32[1]{0}', space=sflag, size = 0x4, scoped, tag = 'scoped memory for gsr_forward_pallas.3']
    #allocation6 [shape = 'u8[65536]{0}', space=vmem, size = 0x10000, scoped, tag = 'input window, operand 2, single buffered']
    #allocation7 [shape = 'u8[16384]{0}', space=vmem, size = 0x4000, scoped, tag = 'input window, operand 5, single buffered']
    #allocation8 [shape = 's32[1]{0}', space=sflag, size = 0x4, scoped, tag = 'scoped memory for gsr_forward_pallas.3']
    #allocation9 [shape = 'u8[32768]{0}', space=vmem, size = 0x8000, scoped, tag = 'input window, operand 7, single buffered']
    %14 = vsyncpa [#allocation3], 0
    %s15 = scalar_lea.sflag [#allocation3], 1
    %16 = vsyncpa %s15, 0
    %17 = vsyncpa [#allocation5], 0
    %18 = vsyncpa [#allocation8], 0
    loop: start=0, step=1, limit=4
    $region2: #{gsr_forward_pallas.3} parent=1 // loop_pre_header
      _
    $region3: #{gsr_forward_pallas.3} parent=1 // loop_header
      %s20 = sphi 0, %s24
      %p21 = scmp.ge.s32.totalorder %s20, 4
      %s30 = sphi 0, %s32
      %s33 = sphi 0, %s30
      %s34 = sphi 0, %s33
      %s50 = sphi 0, %s34
      %s54 = sphi 0, %s54
      %s56 = sphi 0, %s54
      %s57 = sphi 0, %s56
      %s71 = sphi 0, %s57
      %s75 = sphi 0, %s75
      %s77 = sphi 0, %s75
      %s78 = sphi 0, %s77
      %s92 = sphi 0, %s78
      %s96 = sphi 0, %s96
      %s98 = sphi 0, %s96
      %s99 = sphi 0, %s98
      %s113 = sphi 0, %s99
      %s117 = sphi 0, %s117
      %s119 = sphi 0, %s117
      %s120 = sphi 0, %s119
      %s134 = sphi 0, %s120
      %s138 = sphi 0, %s138
      %s140 = sphi 0, %s138
      %s141 = sphi 0, %s140
      %s155 = sphi 0, %s141
      %s159 = sphi 0, %s159
      %s161 = sphi 0, %s159
      %s162 = sphi 0, %s161
      %s176 = sphi 0, %s162
      %s180 = sphi 0, %s180
      %s182 = sphi 0, %s180
      %s183 = sphi 0, %s182
      %s197 = sphi 0, %s183
      %s201 = sphi 0, %s201
      %s203 = sphi 0, %s201
      %s204 = sphi 0, %s203
      %s218 = sphi 0, %s204
      %s224 = sphi 0, %s226
      %s227 = sphi 0, %s224
      %s228 = sphi 0, %s227
      %s244 = sphi 0, %s228
    $region4: #{gsr_forward_pallas.3} parent=1 // loop_header_branch
      %23 = sbr.rel (%p21) target = $region8
    $region5: #{gsr_forward_pallas.3} parent=1 // loop_body
      %s25 = ssub.s32 %s20, 1
      %s26 = ssub.s32 %s20, 2
      %s27 = sadd.s32 %s20, 1
      %s28 = ssub.s32 %s20, %s27
      %p29 = scmp.eq.s32.totalorder %s28, 0
      %s31 = sadd.s32 %s30, 1
      %s32 = scalar_select %p29, %s30, %s31
      %p35 = pneg %p29
      %p36 = scmp.eq.s32.totalorder %s20, 1
      %p37 = por %p35, %p36
      %p38 = scmp.ne.s32.totalorder %s30, %s33
      %p39 = scmp.eq.s32.totalorder %s20, 0
      %p40 = por %p38, %p39
      %p41 = scmp.ne.s32.totalorder %s30, %s33
      %p42 = scmp.eq.s32.totalorder %s25, 1
      %p43 = por %p41, %p42
      %p44 = scmp.ne.s32.totalorder %s33, %s34
      %p45 = scmp.eq.s32.totalorder %s25, 0
      %p46 = por %p44, %p45
      %p47 = scmp.ne.s32.totalorder %s33, %s34
      %p48 = scmp.eq.s32.totalorder %s26, 1
      %p49 = por %p47, %p48
      %p51 = scmp.ne.s32.totalorder %s34, %s50
      %p52 = scmp.eq.s32.totalorder %s26, 0
      %p53 = por %p51, %p52
      %s55 = sadd.s32 %s54, 1
      %p58 = scmp.eq.s32.totalorder %s20, 1
      %p59 = scmp.ne.s32.totalorder %s54, %s56
      %p60 = scmp.eq.s32.totalorder %s20, 0
      %p61 = por %p59, %p60
      %p62 = scmp.ne.s32.totalorder %s54, %s56
      %p63 = scmp.eq.s32.totalorder %s25, 1
      %p64 = por %p62, %p63
      %p65 = scmp.ne.s32.totalorder %s56, %s57
      %p66 = scmp.eq.s32.totalorder %s25, 0
      %p67 = por %p65, %p66
      %p68 = scmp.ne.s32.totalorder %s56, %s57
      %p69 = scmp.eq.s32.totalorder %s26, 1
      %p70 = por %p68, %p69
      %p72 = scmp.ne.s32.totalorder %s57, %s71
      %p73 = scmp.eq.s32.totalorder %s26, 0
      %p74 = por %p72, %p73
      %s76 = sadd.s32 %s75, 1
      %p79 = scmp.eq.s32.totalorder %s20, 1
      %p80 = scmp.ne.s32.totalorder %s75, %s77
      %p81 = scmp.eq.s32.totalorder %s20, 0
      %p82 = por %p80, %p81
      %p83 = scmp.ne.s32.totalorder %s75, %s77
      %p84 = scmp.eq.s32.totalorder %s25, 1
      %p85 = por %p83, %p84
      %p86 = scmp.ne.s32.totalorder %s77, %s78
      %p87 = scmp.eq.s32.totalorder %s25, 0
      %p88 = por %p86, %p87
      %p89 = scmp.ne.s32.totalorder %s77, %s78
      %p90 = scmp.eq.s32.totalorder %s26, 1
      %p91 = por %p89, %p90
      %p93 = scmp.ne.s32.totalorder %s78, %s92
      %p94 = scmp.eq.s32.totalorder %s26, 0
      %p95 = por %p93, %p94
      %s97 = sadd.s32 %s96, 1
      %p100 = scmp.eq.s32.totalorder %s20, 1
      %p101 = scmp.ne.s32.totalorder %s96, %s98
      %p102 = scmp.eq.s32.totalorder %s20, 0
      %p103 = por %p101, %p102
      %p104 = scmp.ne.s32.totalorder %s96, %s98
      %p105 = scmp.eq.s32.totalorder %s25, 1
      %p106 = por %p104, %p105
      %p107 = scmp.ne.s32.totalorder %s98, %s99
      %p108 = scmp.eq.s32.totalorder %s25, 0
      %p109 = por %p107, %p108
      %p110 = scmp.ne.s32.totalorder %s98, %s99
      %p111 = scmp.eq.s32.totalorder %s26, 1
      %p112 = por %p110, %p111
      %p114 = scmp.ne.s32.totalorder %s99, %s113
      %p115 = scmp.eq.s32.totalorder %s26, 0
      %p116 = por %p114, %p115
      %s118 = sadd.s32 %s117, 1
      %p121 = scmp.eq.s32.totalorder %s20, 1
      %p122 = scmp.ne.s32.totalorder %s117, %s119
      %p123 = scmp.eq.s32.totalorder %s20, 0
      %p124 = por %p122, %p123
      %p125 = scmp.ne.s32.totalorder %s117, %s119
      %p126 = scmp.eq.s32.totalorder %s25, 1
      %p127 = por %p125, %p126
      %p128 = scmp.ne.s32.totalorder %s119, %s120
      %p129 = scmp.eq.s32.totalorder %s25, 0
      %p130 = por %p128, %p129
      %p131 = scmp.ne.s32.totalorder %s119, %s120
      %p132 = scmp.eq.s32.totalorder %s26, 1
      %p133 = por %p131, %p132
      %p135 = scmp.ne.s32.totalorder %s120, %s134
      %p136 = scmp.eq.s32.totalorder %s26, 0
      %p137 = por %p135, %p136
      %s139 = sadd.s32 %s138, 1
      %p142 = scmp.eq.s32.totalorder %s20, 1
      %p143 = scmp.ne.s32.totalorder %s138, %s140
      %p144 = scmp.eq.s32.totalorder %s20, 0
      %p145 = por %p143, %p144
      %p146 = scmp.ne.s32.totalorder %s138, %s140
      %p147 = scmp.eq.s32.totalorder %s25, 1
      %p148 = por %p146, %p147
      %p149 = scmp.ne.s32.totalorder %s140, %s141
      %p150 = scmp.eq.s32.totalorder %s25, 0
      %p151 = por %p149, %p150
      %p152 = scmp.ne.s32.totalorder %s140, %s141
      %p153 = scmp.eq.s32.totalorder %s26, 1
      %p154 = por %p152, %p153
      %p156 = scmp.ne.s32.totalorder %s141, %s155
      %p157 = scmp.eq.s32.totalorder %s26, 0
      %p158 = por %p156, %p157
      %s160 = sadd.s32 %s159, 1
      %p163 = scmp.eq.s32.totalorder %s20, 1
      %p164 = scmp.ne.s32.totalorder %s159, %s161
      %p165 = scmp.eq.s32.totalorder %s20, 0
      %p166 = por %p164, %p165
      %p167 = scmp.ne.s32.totalorder %s159, %s161
      %p168 = scmp.eq.s32.totalorder %s25, 1
      %p169 = por %p167, %p168
      %p170 = scmp.ne.s32.totalorder %s161, %s162
      %p171 = scmp.eq.s32.totalorder %s25, 0
      %p172 = por %p170, %p171
      %p173 = scmp.ne.s32.totalorder %s161, %s162
      %p174 = scmp.eq.s32.totalorder %s26, 1
      %p175 = por %p173, %p174
      %p177 = scmp.ne.s32.totalorder %s162, %s176
      %p178 = scmp.eq.s32.totalorder %s26, 0
      %p179 = por %p177, %p178
      %s181 = sadd.s32 %s180, 1
      %p184 = scmp.eq.s32.totalorder %s20, 1
      %p185 = scmp.ne.s32.totalorder %s180, %s182
      %p186 = scmp.eq.s32.totalorder %s20, 0
      %p187 = por %p185, %p186
      %p188 = scmp.ne.s32.totalorder %s180, %s182
      %p189 = scmp.eq.s32.totalorder %s25, 1
      %p190 = por %p188, %p189
      %p191 = scmp.ne.s32.totalorder %s182, %s183
      %p192 = scmp.eq.s32.totalorder %s25, 0
      %p193 = por %p191, %p192
      %p194 = scmp.ne.s32.totalorder %s182, %s183
      %p195 = scmp.eq.s32.totalorder %s26, 1
      %p196 = por %p194, %p195
      %p198 = scmp.ne.s32.totalorder %s183, %s197
      %p199 = scmp.eq.s32.totalorder %s26, 0
      %p200 = por %p198, %p199
      %s202 = sadd.s32 %s201, 1
      %p205 = scmp.eq.s32.totalorder %s20, 1
      %p206 = scmp.ne.s32.totalorder %s201, %s203
      %p207 = scmp.eq.s32.totalorder %s20, 0
      %p208 = por %p206, %p207
      %p209 = scmp.ne.s32.totalorder %s201, %s203
      %p210 = scmp.eq.s32.totalorder %s25, 1
      %p211 = por %p209, %p210
      %p212 = scmp.ne.s32.totalorder %s203, %s204
      %p213 = scmp.eq.s32.totalorder %s25, 0
      %p214 = por %p212, %p213
      %p215 = scmp.ne.s32.totalorder %s203, %s204
      %p216 = scmp.eq.s32.totalorder %s26, 1
      %p217 = por %p215, %p216
      %p219 = scmp.ne.s32.totalorder %s204, %s218
      %p220 = scmp.eq.s32.totalorder %s26, 0
      %p221 = por %p219, %p220
      %s222 = ssub.s32 %s20, %s27
      %p223 = scmp.eq.s32.totalorder %s222, 0
      %s225 = sadd.s32 %s224, 1
      %s226 = scalar_select %p223, %s224, %s225
      %p229 = pneg %p223
      %p230 = scmp.eq.s32.totalorder %s20, 1
      %p231 = por %p229, %p230
      %p232 = scmp.ne.s32.totalorder %s224, %s227
      %p233 = scmp.eq.s32.totalorder %s20, 0
      %p234 = por %p232, %p233
      %p235 = scmp.ne.s32.totalorder %s224, %s227
      %p236 = scmp.eq.s32.totalorder %s25, 1
      %p237 = por %p235, %p236
      %p238 = scmp.ne.s32.totalorder %s227, %s228
      %p239 = scmp.eq.s32.totalorder %s25, 0
      %p240 = por %p238, %p239
      %p241 = scmp.ne.s32.totalorder %s227, %s228
      %p242 = scmp.eq.s32.totalorder %s26, 1
      %p243 = por %p241, %p242
      %p245 = scmp.ne.s32.totalorder %s228, %s244
      %p246 = scmp.eq.s32.totalorder %s26, 0
      %p247 = por %p245, %p246
      %p248 = scmp.le.s32.totalorder 1, %s20
      %p249 = scmp.lt.s32.totalorder %s20, 3
      %p250 = pnand %p248, %p249
      %p251 = pneg %p250
      // Predicated region
      $region9: #{gsr_forward_pallas.3} parent=5 // pred_check
        _
      $region10: #{gsr_forward_pallas.3} parent=5 // pred_check_branch
        %253 = sbr.rel (%p250) target = $region12
      $region11: #{gsr_forward_pallas.3} parent=5 // pred_region
        %s254 = ssub.s32 %s20, 1
        // Predicated region
        $region13: #{gsr_forward_pallas.3} parent=11 // pred_check
          %p255 = pneg %p67
        $region14: #{gsr_forward_pallas.3} parent=11 // pred_check_branch
          %257 = sbr.rel (%p255) target = $region16
        $region15: #{gsr_forward_pallas.3} parent=11 // pred_region
          %s259 = ssub.s32 2048, 2048
          %260 = vsyncadd [#allocation5], %s259
          %s261 = sshll.u32 [#allocation4], 4
          %s262 = int_to_ptr.vmem [resolvable:$true] %s261
          %267 = dma.hbm_to_vmem [thread:$0]  %s1, 2048, %s262, [#allocation5], 128, 128, 8
        $region16: #{gsr_forward_pallas.3} parent=11 // pred_fallthru
          _
        // Predicated region
        $region17: #{gsr_forward_pallas.3} parent=11 // pred_check
          %p268 = pneg %p88
        $region18: #{gsr_forward_pallas.3} parent=11 // pred_check_branch
          %270 = sbr.rel (%p268) target = $region20
        $region19: #{gsr_forward_pallas.3} parent=11 // pred_region
          %s272 = ssub.s32 2048, 2048
          %273 = vsyncadd [#allocation5], %s272
          %s274 = sshll.u32 [#allocation6], 4
          %s275 = int_to_ptr.vmem [resolvable:$true] %s274
          %280 = dma.hbm_to_vmem [thread:$0]  %s2, 2048, %s275, [#allocation5], 128, 128, 8
        $region20: #{gsr_forward_pallas.3} parent=11 // pred_fallthru
          _
        // Predicated region
        $region21: #{gsr_forward_pallas.3} parent=11 // pred_check
          %p281 = pneg %p109
        $region22: #{gsr_forward_pallas.3} parent=11 // pred_check_branch
          %283 = sbr.rel (%p281) target = $region24
        $region23: #{gsr_forward_pallas.3} parent=11 // pred_region
          _
        $region24: #{gsr_forward_pallas.3} parent=11 // pred_fallthru
          _
        // Predicated region
        $region25: #{gsr_forward_pallas.3} parent=11 // pred_check
          %p284 = pneg %p130
        $region26: #{gsr_forward_pallas.3} parent=11 // pred_check_branch
          %286 = sbr.rel (%p284) target = $region28
        $region27: #{gsr_forward_pallas.3} parent=11 // pred_region
          _
        $region28: #{gsr_forward_pallas.3} parent=11 // pred_fallthru
          _
        // Predicated region
        $region29: #{gsr_forward_pallas.3} parent=11 // pred_check
          %p287 = pneg %p151
        $region30: #{gsr_forward_pallas.3} parent=11 // pred_check_branch
          %289 = sbr.rel (%p287) target = $region32
        $region31: #{gsr_forward_pallas.3} parent=11 // pred_region
          %s291 = ssub.s32 512, 512
          %292 = vsyncadd [#allocation8], %s291
          %s293 = sshll.u32 [#allocation7], 4
          %s294 = int_to_ptr.vmem [resolvable:$true] %s293
          %299 = dma.hbm_to_vmem [thread:$0]  %s5, 512, %s294, [#allocation8], 128, 128, 8
        $region32: #{gsr_forward_pallas.3} parent=11 // pred_fallthru
          _
        // Predicated region
        $region33: #{gsr_forward_pallas.3} parent=11 // pred_check
          %p300 = pneg %p172
        $region34: #{gsr_forward_pallas.3} parent=11 // pred_check_branch
          %302 = sbr.rel (%p300) target = $region36
        $region35: #{gsr_forward_pallas.3} parent=11 // pred_region
          _
        $region36: #{gsr_forward_pallas.3} parent=11 // pred_fallthru
          _
        // Predicated region
        $region37: #{gsr_forward_pallas.3} parent=11 // pred_check
          %p303 = pneg %p193
        $region38: #{gsr_forward_pallas.3} parent=11 // pred_check_branch
          %305 = sbr.rel (%p303) target = $region40
        $region39: #{gsr_forward_pallas.3} parent=11 // pred_region
          %s307 = ssub.s32 1024, 1024
          %308 = vsyncadd [#allocation8], %s307
          %s309 = sshll.u32 [#allocation9], 4
          %s310 = int_to_ptr.vmem [resolvable:$true] %s309
          %315 = dma.hbm_to_vmem [thread:$0]  %s7, 1024, %s310, [#allocation8], 128, 128, 8
        $region40: #{gsr_forward_pallas.3} parent=11 // pred_fallthru
          _
        // Predicated region
        $region41: #{gsr_forward_pallas.3} parent=11 // pred_check
          %p316 = pneg %p214
        $region42: #{gsr_forward_pallas.3} parent=11 // pred_check_branch
          %318 = sbr.rel (%p316) target = $region44
        $region43: #{gsr_forward_pallas.3} parent=11 // pred_region
          _
        $region44: #{gsr_forward_pallas.3} parent=11 // pred_fallthru
          _
      $region12: #{gsr_forward_pallas.3} parent=5 // pred_fallthru
        _
      %p319 = scmp.lt.s32.totalorder %s20, 2
      // Predicated region
      $region45: #{gsr_forward_pallas.3} parent=5 // pred_check
        %p320 = pneg %p319
      $region46: #{gsr_forward_pallas.3} parent=5 // pred_check_branch
        %322 = sbr.rel (%p320) target = $region48
      $region47: #{gsr_forward_pallas.3} parent=5 // pred_region
        // Predicated region
        $region49: #{gsr_forward_pallas.3} parent=47 // pred_check
          %p323 = pneg %p40
        $region50: #{gsr_forward_pallas.3} parent=47 // pred_check_branch
          %325 = sbr.rel (%p323) target = $region52
        $region51: #{gsr_forward_pallas.3} parent=47 // pred_region
          %s326 = sand.u32 %s30, 1
          %s327 = scalar_lea.sflag [#allocation3], %s326
          %s328 = sand.u32 %s30, 1
          %s329 = scalar_lea.vmem [#allocation2], %s328
          %s331 = ssub.s32 16, 16
          %332 = vsyncadd %s327, %s331
          %s333 = smul.addr %s20, 16
          %s334 = scalar_lea.hbm %s0, %s333
          %s336 = sshll.u32 %s329, 4
          %s337 = int_to_ptr.vmem [resolvable:$true] %s336
          %339 = dma.hbm_to_vmem [thread:$0]  %s334, 16, %s337, %s327
        $region52: #{gsr_forward_pallas.3} parent=47 // pred_fallthru
          _
      $region48: #{gsr_forward_pallas.3} parent=5 // pred_fallthru
        _
      %p340 = scmp.le.s32.totalorder 1, %s20
      %p341 = scmp.lt.s32.totalorder %s20, 3
      %p342 = pnand %p340, %p341
      %p343 = pneg %p342
      // Predicated region
      $region53: #{gsr_forward_pallas.3} parent=5 // pred_check
        _
      $region54: #{gsr_forward_pallas.3} parent=5 // pred_check_branch
        %345 = sbr.rel (%p342) target = $region56
      $region55: #{gsr_forward_pallas.3} parent=5 // pred_region
        %s346 = ssub.s32 %s20, 1
        %s347 = sand.u32 %s33, 1
        %s348 = scalar_lea.sflag [#allocation3], %s347
        %s349 = sand.u32 %s33, 1
        %s350 = scalar_lea.vmem [#allocation2], %s349
        // Predicated region
        $region57: #{gsr_forward_pallas.3} parent=55 // pred_check
          %p351 = pneg %p46
        $region58: #{gsr_forward_pallas.3} parent=55 // pred_check_branch
          %353 = sbr.rel (%p351) target = $region60
        $region59: #{gsr_forward_pallas.3} parent=55 // pred_region
          %354 = dma.done %s348, 16
        $region60: #{gsr_forward_pallas.3} parent=55 // pred_fallthru
          _
        // Predicated region
        $region61: #{gsr_forward_pallas.3} parent=55 // pred_check
          %p355 = pneg %p67
        $region62: #{gsr_forward_pallas.3} parent=55 // pred_check_branch
          %357 = sbr.rel (%p355) target = $region64
        $region63: #{gsr_forward_pallas.3} parent=55 // pred_region
          %358 = dma.done [#allocation5], 2048
        $region64: #{gsr_forward_pallas.3} parent=55 // pred_fallthru
          _
        // Predicated region
        $region65: #{gsr_forward_pallas.3} parent=55 // pred_check
          %p359 = pneg %p88
        $region66: #{gsr_forward_pallas.3} parent=55 // pred_check_branch
          %361 = sbr.rel (%p359) target = $region68
        $region67: #{gsr_forward_pallas.3} parent=55 // pred_region
          %362 = dma.done [#allocation5], 2048
        $region68: #{gsr_forward_pallas.3} parent=55 // pred_fallthru
          _
        // Predicated region
        $region69: #{gsr_forward_pallas.3} parent=55 // pred_check
          %p363 = pneg %p151
        $region70: #{gsr_forward_pallas.3} parent=55 // pred_check_branch
          %365 = sbr.rel (%p363) target = $region72
        $region71: #{gsr_forward_pallas.3} parent=55 // pred_region
          %366 = dma.done [#allocation8], 512
        $region72: #{gsr_forward_pallas.3} parent=55 // pred_fallthru
          _
        // Predicated region
        $region73: #{gsr_forward_pallas.3} parent=55 // pred_check
          %p367 = pneg %p193
        $region74: #{gsr_forward_pallas.3} parent=55 // pred_check_branch
          %369 = sbr.rel (%p367) target = $region76
        $region75: #{gsr_forward_pallas.3} parent=55 // pred_region
          %370 = dma.done [#allocation8], 1024
        $region76: #{gsr_forward_pallas.3} parent=55 // pred_fallthru
          _
        %s371 = sand.u32 %s33, 1
        %s372 = scalar_lea.sflag [#allocation3], %s371
        %s373 = sand.u32 %s33, 1
        %s374 = scalar_lea.vmem [#allocation2], %s373
        %p375 = pneg %p46
        %p376 = pneg %p43
        %p377 = pneg %p67
        %p378 = pneg %p64
        %p379 = pneg %p88
        %p380 = pneg %p85
        %p381 = pneg %p109
        %p382 = pneg %p106
        %p383 = pneg %p130
        %p384 = pneg %p127
        %p385 = pneg %p151
        %p386 = pneg %p148
        %p387 = pneg %p172
        %p388 = pneg %p169
        %p389 = pneg %p193
        %p390 = pneg %p190
        %p391 = pneg %p214
        %p392 = pneg %p211
        %p393 = pneg %p240
        %p394 = pneg %p237
        %p395 = scmp.lt.s32.totalorder %s25, 1
        %s396 = scalar_select %p395, %s25, 1
        %s397 = smul.addr %s396, 8
        %s398 = smul.addr %s397, 8
        %s399 = scalar_lea.vmem %s9, %s398
        %p400 = scmp.lt.s32.totalorder %s25, 1
        %s401 = scalar_select %p400, %s25, 1
        %s402 = smul.addr %s401, 8
        %s403 = smul.addr %s402, 8
        %s404 = scalar_lea.vmem %s9, %s403
        %v405 = vld [vmem:[#allocation4] sm:$0xff]
        %v406 = vld [vmem:[#allocation4 + $0x8] sm:$0xff]
        %v407 = vld [vmem:[#allocation4 + $0x10] sm:$0xff]
        %v408 = vld [vmem:[#allocation4 + $0x18] sm:$0xff]
        %v409 = vld [vmem:[#allocation4 + $0x20] sm:$0xff]
        %v410 = vld [vmem:[#allocation4 + $0x28] sm:$0xff]
        %v411 = vld [vmem:[#allocation4 + $0x30] sm:$0xff]
        %v412 = vld [vmem:[#allocation4 + $0x38] sm:$0xff]
        %v413 = vld [vmem:[#allocation4 + $0x40] sm:$0xff]
        %v414 = vld [vmem:[#allocation4 + $0x48] sm:$0xff]
        %v415 = vld [vmem:[#allocation4 + $0x50] sm:$0xff]
        %v416 = vld [vmem:[#allocation4 + $0x58] sm:$0xff]
        %v417 = vld [vmem:[#allocation4 + $0x60] sm:$0xff]
        %v418 = vld [vmem:[#allocation4 + $0x68] sm:$0xff]
        %v419 = vld [vmem:[#allocation4 + $0x70] sm:$0xff]
        %v420 = vld [vmem:[#allocation4 + $0x78] sm:$0xff]
        %v421 = vld [vmem:[#allocation6] sm:$0xff]
        %v422 = vld [vmem:[#allocation6 + $0x8] sm:$0xff]
        %v423 = vld [vmem:[#allocation6 + $0x10] sm:$0xff]
        %v424 = vld [vmem:[#allocation6 + $0x18] sm:$0xff]
        %v425 = vld [vmem:[#allocation6 + $0x20] sm:$0xff]
        %v426 = vld [vmem:[#allocation6 + $0x28] sm:$0xff]
        %v427 = vld [vmem:[#allocation6 + $0x30] sm:$0xff]
        %v428 = vld [vmem:[#allocation6 + $0x38] sm:$0xff]
        %v429 = vld [vmem:[#allocation6 + $0x40] sm:$0xff]
        %v430 = vld [vmem:[#allocation6 + $0x48] sm:$0xff]
        %v431 = vld [vmem:[#allocation6 + $0x50] sm:$0xff]
        %v432 = vld [vmem:[#allocation6 + $0x58] sm:$0xff]
        %v433 = vld [vmem:[#allocation6 + $0x60] sm:$0xff]
        %v434 = vld [vmem:[#allocation6 + $0x68] sm:$0xff]
        %v435 = vld [vmem:[#allocation6 + $0x70] sm:$0xff]
        %v436 = vld [vmem:[#allocation6 + $0x78] sm:$0xff]
        %v437 = vld [vmem:[%s350] sm:$0x1]
        %438 = vmatprep.subr.mxu0 0.0
        %439 = vmatpush1.msra.mxu0 %v405
        %440 = vmatprep.subr.mxu0 0.0
        %441 = vmatpush1.msra.mxu0 %v406
        %442 = vmatprep.subr.mxu0 0.0
        %443 = vmatpush1.msra.mxu0 %v407
        %444 = vmatprep.subr.mxu0 0.0
        %445 = vmatpush1.msra.mxu0 %v408
        %446 = vmatprep.subr.mxu0 0.0
        %447 = vmatpush1.msra.mxu0 %v409
        %448 = vmatprep.subr.mxu0 0.0
        %449 = vmatpush1.msra.mxu0 %v410
        %450 = vmatprep.subr.mxu0 0.0
        %451 = vmatpush1.msra.mxu0 %v411
        %452 = vmatprep.subr.mxu0 0.0
        %453 = vmatpush1.msra.mxu0 %v412
        %454 = vmatprep.subr.mxu0 0.0
        %455 = vmatpush1.msra.mxu0 %v413
        %456 = vmatprep.subr.mxu0 0.0
        %457 = vmatpush1.msra.mxu0 %v414
        %458 = vmatprep.subr.mxu0 0.0
        %459 = vmatpush1.msra.mxu0 %v415
        %460 = vmatprep.subr.mxu0 0.0
        %461 = vmatpush1.msra.mxu0 %v416
        %462 = vmatprep.subr.mxu0 0.0
        %463 = vmatpush1.msra.mxu0 %v417
        %464 = vmatprep.subr.mxu0 0.0
        %465 = vmatpush1.msra.mxu0 %v418
        %466 = vmatprep.subr.mxu0 0.0
        %467 = vmatpush1.msra.mxu0 %v419
        %468 = vmatprep.subr.mxu0 0.0
        %469 = vmatpush1.msra.mxu0 %v420
        %470 = vmatprep.subr.mxu0 0.0
        %471 = vmatpush1.msra.mxu0 0.0
        %472 = vmatprep.subr.mxu0 0.0
        %473 = vmatpush1.msra.mxu0 0.0
        %474 = vmatprep.subr.mxu0 0.0
        %475 = vmatpush1.msra.mxu0 0.0
        %476 = vmatprep.subr.mxu0 0.0
        %477 = vmatpush1.msra.mxu0 0.0
        %478 = vmatprep.subr.mxu0 0.0
        %479 = vmatpush1.msra.mxu0 0.0
        %480 = vmatprep.subr.mxu0 0.0
        %481 = vmatpush1.msra.mxu0 0.0
        %482 = vmatprep.subr.mxu0 0.0
        %483 = vmatpush1.msra.mxu0 0.0
        %484 = vmatprep.subr.mxu0 0.0
        %485 = vmatpush1.msra.mxu0 0.0
        %486 = vmatprep.subr.mxu0 0.0
        %487 = vmatpush1.msra.mxu0 0.0
        %488 = vmatprep.subr.mxu0 0.0
        %489 = vmatpush1.msra.mxu0 0.0
        %490 = vmatprep.subr.mxu0 0.0
        %491 = vmatpush1.msra.mxu0 0.0
        %492 = vmatprep.subr.mxu0 0.0
        %493 = vmatpush1.msra.mxu0 0.0
        %494 = vmatprep.subr.mxu0 0.0
        %495 = vmatpush1.msra.mxu0 0.0
        %496 = vmatprep.subr.mxu0 0.0
        %497 = vmatpush1.msra.mxu0 0.0
        %498 = vmatprep.subr.mxu0 0.0
        %499 = vmatpush1.msra.mxu0 0.0
        %500 = vmatprep.subr.mxu0 0.0
        %501 = vmatpush1.msra.mxu0 0.0
        %502 = vmatprep.mubr.f32.mxu0 0.0
        %503 = vmatmul.mubr.f32.gmra.mrb[0].mxu0 %v437
        %v504 = vpop.f32.mrb[0].mxu0
        %v505 = vadd.f32 0.0, %v504
        %v506 = vpop.f32.mrb[0].mxu0
        %507 = vdwg.mxu0
        %508 = vmatprep.subr.mxu0 0.0
        %509 = vmatpush1.msra.mxu0 %v421
        %510 = vmatprep.subr.mxu0 0.0
        %511 = vmatpush1.msra.mxu0 %v422
        %512 = vmatprep.subr.mxu0 0.0
        %513 = vmatpush1.msra.mxu0 %v423
        %514 = vmatprep.subr.mxu0 0.0
        %515 = vmatpush1.msra.mxu0 %v424
        %516 = vmatprep.subr.mxu0 0.0
        %517 = vmatpush1.msra.mxu0 %v425
        %518 = vmatprep.subr.mxu0 0.0
        %519 = vmatpush1.msra.mxu0 %v426
        %520 = vmatprep.subr.mxu0 0.0
        %521 = vmatpush1.msra.mxu0 %v427
        %522 = vmatprep.subr.mxu0 0.0
        %523 = vmatpush1.msra.mxu0 %v428
        %524 = vmatprep.subr.mxu0 0.0
        %525 = vmatpush1.msra.mxu0 %v429
        %526 = vmatprep.subr.mxu0 0.0
        %527 = vmatpush1.msra.mxu0 %v430
        %528 = vmatprep.subr.mxu0 0.0
        %529 = vmatpush1.msra.mxu0 %v431
        %530 = vmatprep.subr.mxu0 0.0
        %531 = vmatpush1.msra.mxu0 %v432
        %532 = vmatprep.subr.mxu0 0.0
        %533 = vmatpush1.msra.mxu0 %v433
        %534 = vmatprep.subr.mxu0 0.0
        %535 = vmatpush1.msra.mxu0 %v434
        %536 = vmatprep.subr.mxu0 0.0
        %537 = vmatpush1.msra.mxu0 %v435
        %538 = vmatprep.subr.mxu0 0.0
        %539 = vmatpush1.msra.mxu0 %v436
        %540 = vmatprep.subr.mxu0 0.0
        %541 = vmatpush1.msra.mxu0 0.0
        %542 = vmatprep.subr.mxu0 0.0
        %543 = vmatpush1.msra.mxu0 0.0
        %544 = vmatprep.subr.mxu0 0.0
        %545 = vmatpush1.msra.mxu0 0.0
        %546 = vmatprep.subr.mxu0 0.0
        %547 = vmatpush1.msra.mxu0 0.0
        %548 = vmatprep.subr.mxu0 0.0
        %549 = vmatpush1.msra.mxu0 0.0
        %550 = vmatprep.subr.mxu0 0.0
        %551 = vmatpush1.msra.mxu0 0.0
        %552 = vmatprep.subr.mxu0 0.0
        %553 = vmatpush1.msra.mxu0 0.0
        %554 = vmatprep.subr.mxu0 0.0
        %555 = vmatpush1.msra.mxu0 0.0
        %556 = vmatprep.subr.mxu0 0.0
        %557 = vmatpush1.msra.mxu0 0.0
        %558 = vmatprep.subr.mxu0 0.0
        %559 = vmatpush1.msra.mxu0 0.0
        %560 = vmatprep.subr.mxu0 0.0
        %561 = vmatpush1.msra.mxu0 0.0
        %562 = vmatprep.subr.mxu0 0.0
        %563 = vmatpush1.msra.mxu0 0.0
        %564 = vmatprep.subr.mxu0 0.0
        %565 = vmatpush1.msra.mxu0 0.0
        %566 = vmatprep.subr.mxu0 0.0
        %567 = vmatpush1.msra.mxu0 0.0
        %568 = vmatprep.subr.mxu0 0.0
        %569 = vmatpush1.msra.mxu0 0.0
        %570 = vmatprep.subr.mxu0 0.0
        %571 = vmatpush1.msra.mxu0 0.0
        %572 = vmatprep.mubr.f32.mxu0 0.0
        %573 = vmatmul.mubr.f32.gmra.mrb[0].mxu0 %v437
        %v574 = vpop.f32.mrb[0].mxu0
        %v575 = vadd.f32 0.0, %v574
        %v576 = vpop.f32.mrb[0].mxu0
        %577 = vdwg.mxu0
        %v578 = vld [vmem:[%s3] sm:$0xff]
        %v579 = vld [vmem:[%s3 + $0x8] sm:$0xff]
        %v580 = vld [vmem:[%s3 + $0x10] sm:$0xff]
        %v581 = vld [vmem:[%s3 + $0x18] sm:$0xff]
        %v582 = vld [vmem:[%s3 + $0x20] sm:$0xff]
        %v583 = vld [vmem:[%s3 + $0x28] sm:$0xff]
        %585 = vset.pattern.permute.xlu0 0
        %586 = vperm.xlu0 %585, %v578
        %v587 = vpop.permute.xlu0 %586
        %590 = vset.pattern.permute.xlu0 0
        %591 = vperm.xlu0 %590, %v579
        %v592 = vpop.permute.xlu0 %591
        %v594 = vlaneseq
        %v595 = vshrl.u32 %v594, 7
        %v596 = vsub.s32 0, %v595
        %v597 = vrot.slane %v505, %v596
        %v598 = vmul.f32 %v587, %v597
        %v599 = vmul.f32 %v592, %v597
        %601 = vset.pattern.permute.xlu0 0
        %602 = vperm.xlu0 %601, %v580
        %v603 = vpop.permute.xlu0 %602
        %606 = vset.pattern.permute.xlu0 0
        %607 = vperm.xlu0 %606, %v581
        %v608 = vpop.permute.xlu0 %607
        %v611 = vlaneseq
        %v612 = vshrl.u32 %v611, 7
        %v613 = vsub.s32 0, %v612
        %v614 = vrot.slane %v437, %v613
        %v616 = vmul.f32 %v603, %v614
        %v617 = vmul.f32 %v608, %v614
        %v618 = vadd.f32 %v598, %v616
        %v619 = vadd.f32 %v599, %v617
        %621 = vset.pattern.permute.xlu0 0
        %622 = vperm.xlu0 %621, %v582
        %v623 = vpop.permute.xlu0 %622
        %626 = vset.pattern.permute.xlu0 0
        %627 = vperm.xlu0 %626, %v583
        %v628 = vpop.permute.xlu0 %627
        %v630 = vlaneseq
        %v631 = vshrl.u32 %v630, 7
        %v632 = vsub.s32 0, %v631
        %v633 = vrot.slane %v575, %v632
        %v634 = vmul.f32 %v623, %v633
        %v635 = vmul.f32 %v628, %v633
        %v636 = vadd.f32 %v618, %v634
        %v637 = vadd.f32 %v619, %v635
        %v638 = vld [vmem:[%s4] sm:$0xff]
        %v639 = vld [vmem:[%s4 + $0x8] sm:$0xff]
        %641 = vset.pattern.permute.xlu0 0
        %642 = vperm.xlu0 %641, %v638
        %v643 = vpop.permute.xlu0 %642
        %646 = vset.pattern.permute.xlu0 0
        %647 = vperm.xlu0 %646, %v639
        %v648 = vpop.permute.xlu0 %647
        %v650 = vadd.f32 %v636, %v643
        %v651 = vadd.f32 %v637, %v648
        %v652 = vmax.f32 %v650, 0.0
        %v653 = vmax.f32 %v651, 0.0
        %s654 = scalar_lea.vmem %s4, 16
        %v655 = vld [vmem:[%s654] sm:$0xff]
        %v656 = vld [vmem:[%s654 + $0x8] sm:$0xff]
        %658 = vset.pattern.permute.xlu0 0
        %659 = vperm.xlu0 %658, %v655
        %v660 = vpop.permute.xlu0 %659
        %663 = vset.pattern.permute.xlu0 0
        %664 = vperm.xlu0 %663, %v656
        %v665 = vpop.permute.xlu0 %664
        %v667 = vmul.f32 %v652, %v660
        %v668 = vmul.f32 %v653, %v665
        %s669 = scalar_lea.vmem %s4, 32
        %v670 = vld [vmem:[%s669] sm:$0xff]
        %v671 = vld [vmem:[%s669 + $0x8] sm:$0xff]
        %673 = vset.pattern.permute.xlu0 0
        %674 = vperm.xlu0 %673, %v670
        %v675 = vpop.permute.xlu0 %674
        %678 = vset.pattern.permute.xlu0 0
        %679 = vperm.xlu0 %678, %v671
        %v680 = vpop.permute.xlu0 %679
        %v682 = vadd.f32 %v667, %v675
        %v683 = vadd.f32 %v668, %v680
        %684 = vmatprep.subr.mxu0 0.0
        %685 = vmatpush1.msra.mxu0 %v405
        %686 = vmatprep.subr.mxu0 0.0
        %687 = vmatpush1.msra.mxu0 %v406
        %688 = vmatprep.subr.mxu0 0.0
        %689 = vmatpush1.msra.mxu0 %v407
        %690 = vmatprep.subr.mxu0 0.0
        %691 = vmatpush1.msra.mxu0 %v408
        %692 = vmatprep.subr.mxu0 0.0
        %693 = vmatpush1.msra.mxu0 %v409
        %694 = vmatprep.subr.mxu0 0.0
        %695 = vmatpush1.msra.mxu0 %v410
        %696 = vmatprep.subr.mxu0 0.0
        %697 = vmatpush1.msra.mxu0 %v411
        %698 = vmatprep.subr.mxu0 0.0
        %699 = vmatpush1.msra.mxu0 %v412
        %700 = vmatprep.subr.mxu0 0.0
        %701 = vmatpush1.msra.mxu0 %v413
        %702 = vmatprep.subr.mxu0 0.0
        %703 = vmatpush1.msra.mxu0 %v414
        %704 = vmatprep.subr.mxu0 0.0
        %705 = vmatpush1.msra.mxu0 %v415
        %706 = vmatprep.subr.mxu0 0.0
        %707 = vmatpush1.msra.mxu0 %v416
        %708 = vmatprep.subr.mxu0 0.0
        %709 = vmatpush1.msra.mxu0 %v417
        %710 = vmatprep.subr.mxu0 0.0
        %711 = vmatpush1.msra.mxu0 %v418
        %712 = vmatprep.subr.mxu0 0.0
        %713 = vmatpush1.msra.mxu0 %v419
        %714 = vmatprep.subr.mxu0 0.0
        %715 = vmatpush1.msra.mxu0 %v420
        %716 = vmatprep.subr.mxu0 0.0
        %717 = vmatpush1.msra.mxu0 0.0
        %718 = vmatprep.subr.mxu0 0.0
        %719 = vmatpush1.msra.mxu0 0.0
        %720 = vmatprep.subr.mxu0 0.0
        %721 = vmatpush1.msra.mxu0 0.0
        %722 = vmatprep.subr.mxu0 0.0
        %723 = vmatpush1.msra.mxu0 0.0
        %724 = vmatprep.subr.mxu0 0.0
        %725 = vmatpush1.msra.mxu0 0.0
        %726 = vmatprep.subr.mxu0 0.0
        %727 = vmatpush1.msra.mxu0 0.0
        %728 = vmatprep.subr.mxu0 0.0
        %729 = vmatpush1.msra.mxu0 0.0
        %730 = vmatprep.subr.mxu0 0.0
        %731 = vmatpush1.msra.mxu0 0.0
        %732 = vmatprep.subr.mxu0 0.0
        %733 = vmatpush1.msra.mxu0 0.0
        %734 = vmatprep.subr.mxu0 0.0
        %735 = vmatpush1.msra.mxu0 0.0
        %736 = vmatprep.subr.mxu0 0.0
        %737 = vmatpush1.msra.mxu0 0.0
        %738 = vmatprep.subr.mxu0 0.0
        %739 = vmatpush1.msra.mxu0 0.0
        %740 = vmatprep.subr.mxu0 0.0
        %741 = vmatpush1.msra.mxu0 0.0
        %742 = vmatprep.subr.mxu0 0.0
        %743 = vmatpush1.msra.mxu0 0.0
        %744 = vmatprep.subr.mxu0 0.0
        %745 = vmatpush1.msra.mxu0 0.0
        %746 = vmatprep.subr.mxu0 0.0
        %747 = vmatpush1.msra.mxu0 0.0
        %748 = vmatprep.mubr.f32.mxu0 0.0
        %749 = vmatmul.mubr.f32.gmra.mrb[0].mxu0 %v682
        %v750 = vpop.f32.mrb[0].mxu0
        %v751 = vadd.f32 0.0, %v750
        %v752 = vpop.f32.mrb[0].mxu0
        %753 = vmatprep.mubr.f32.mxu0 0.0
        %754 = vmatmul.mubr.f32.gmra.mrb[0].mxu0 %v683
        %v755 = vpop.f32.mrb[0].mxu0
        %v756 = vadd.f32 0.0, %v755
        %v757 = vpop.f32.mrb[0].mxu0
        %758 = vdwg.mxu0
        %759 = vmatprep.subr.mxu0 0.0
        %760 = vmatpush1.msra.mxu0 %v421
        %761 = vmatprep.subr.mxu0 0.0
        %762 = vmatpush1.msra.mxu0 %v422
        %763 = vmatprep.subr.mxu0 0.0
        %764 = vmatpush1.msra.mxu0 %v423
        %765 = vmatprep.subr.mxu0 0.0
        %766 = vmatpush1.msra.mxu0 %v424
        %767 = vmatprep.subr.mxu0 0.0
        %768 = vmatpush1.msra.mxu0 %v425
        %769 = vmatprep.subr.mxu0 0.0
        %770 = vmatpush1.msra.mxu0 %v426
        %771 = vmatprep.subr.mxu0 0.0
        %772 = vmatpush1.msra.mxu0 %v427
        %773 = vmatprep.subr.mxu0 0.0
        %774 = vmatpush1.msra.mxu0 %v428
        %775 = vmatprep.subr.mxu0 0.0
        %776 = vmatpush1.msra.mxu0 %v429
        %777 = vmatprep.subr.mxu0 0.0
        %778 = vmatpush1.msra.mxu0 %v430
        %779 = vmatprep.subr.mxu0 0.0
        %780 = vmatpush1.msra.mxu0 %v431
        %781 = vmatprep.subr.mxu0 0.0
        %782 = vmatpush1.msra.mxu0 %v432
        %783 = vmatprep.subr.mxu0 0.0
        %784 = vmatpush1.msra.mxu0 %v433
        %785 = vmatprep.subr.mxu0 0.0
        %786 = vmatpush1.msra.mxu0 %v434
        %787 = vmatprep.subr.mxu0 0.0
        %788 = vmatpush1.msra.mxu0 %v435
        %789 = vmatprep.subr.mxu0 0.0
        %790 = vmatpush1.msra.mxu0 %v436
        %791 = vmatprep.subr.mxu0 0.0
        %792 = vmatpush1.msra.mxu0 0.0
        %793 = vmatprep.subr.mxu0 0.0
        %794 = vmatpush1.msra.mxu0 0.0
        %795 = vmatprep.subr.mxu0 0.0
        %796 = vmatpush1.msra.mxu0 0.0
        %797 = vmatprep.subr.mxu0 0.0
        %798 = vmatpush1.msra.mxu0 0.0
        %799 = vmatprep.subr.mxu0 0.0
        %800 = vmatpush1.msra.mxu0 0.0
        %801 = vmatprep.subr.mxu0 0.0
        %802 = vmatpush1.msra.mxu0 0.0
        %803 = vmatprep.subr.mxu0 0.0
        %804 = vmatpush1.msra.mxu0 0.0
        %805 = vmatprep.subr.mxu0 0.0
        %806 = vmatpush1.msra.mxu0 0.0
        %807 = vmatprep.subr.mxu0 0.0
        %808 = vmatpush1.msra.mxu0 0.0
        %809 = vmatprep.subr.mxu0 0.0
        %810 = vmatpush1.msra.mxu0 0.0
        %811 = vmatprep.subr.mxu0 0.0
        %812 = vmatpush1.msra.mxu0 0.0
        %813 = vmatprep.subr.mxu0 0.0
        %814 = vmatpush1.msra.mxu0 0.0
        %815 = vmatprep.subr.mxu0 0.0
        %816 = vmatpush1.msra.mxu0 0.0
        %817 = vmatprep.subr.mxu0 0.0
        %818 = vmatpush1.msra.mxu0 0.0
        %819 = vmatprep.subr.mxu0 0.0
        %820 = vmatpush1.msra.mxu0 0.0
        %821 = vmatprep.subr.mxu0 0.0
        %822 = vmatpush1.msra.mxu0 0.0
        %823 = vmatprep.mubr.f32.mxu0 0.0
        %824 = vmatmul.mubr.f32.gmra.mrb[0].mxu0 %v682
        %v825 = vpop.f32.mrb[0].mxu0
        %v826 = vadd.f32 0.0, %v825
        %v827 = vpop.f32.mrb[0].mxu0
        %828 = vmatprep.mubr.f32.mxu0 0.0
        %829 = vmatmul.mubr.f32.gmra.mrb[0].mxu0 %v683
        %v830 = vpop.f32.mrb[0].mxu0
        %v831 = vadd.f32 0.0, %v830
        %v832 = vpop.f32.mrb[0].mxu0
        %833 = vdwg.mxu0
        %v834 = vld [vmem:[#allocation7] sm:$0xff]
        %v835 = vld [vmem:[#allocation7 + $0x8] sm:$0xff]
        %v836 = vld [vmem:[#allocation7 + $0x10] sm:$0xff]
        %v837 = vld [vmem:[#allocation7 + $0x18] sm:$0xff]
        %v838 = vld [vmem:[%s6] sm:$0xff]
        %v839 = vld [vmem:[%s6 + $0x8] sm:$0xff]
        %v840 = vld [vmem:[%s6 + $0x10] sm:$0xff]
        %v841 = vld [vmem:[%s6 + $0x18] sm:$0xff]
        %843 = vset.pattern.permute.xlu0 0
        %844 = vperm.xlu0 %843, %v838
        %v845 = vpop.permute.xlu0 %844
        %848 = vset.pattern.permute.xlu0 0
        %849 = vperm.xlu0 %848, %v839
        %v850 = vpop.permute.xlu0 %849
        %853 = vset.pattern.permute.xlu0 0
        %854 = vperm.xlu0 %853, %v840
        %v855 = vpop.permute.xlu0 %854
        %858 = vset.pattern.permute.xlu0 0
        %859 = vperm.xlu0 %858, %v841
        %v860 = vpop.permute.xlu0 %859
        %vm862 = vcmask 392192
        %v864 = vsel %vm862, %v834, 0
        %v867 = vsel %vm862, %v835, 0
        %v870 = vsel %vm862, %v836, 0
        %v873 = vsel %vm862, %v837, 0
        %875 = vmatprep.subr.mxu0 0.0
        %876 = vmatpush1.msra.mxu0 %v751
        %877 = vmatprep.subr.mxu0 0.0
        %878 = vmatpush1.msra.mxu0 %v756
        %879 = vmatprep.subr.mxu0 0.0
        %880 = vmatpush1.msra.mxu0 %v682
        %881 = vmatprep.subr.mxu0 0.0
        %882 = vmatpush1.msra.mxu0 %v683
        %883 = vmatprep.subr.mxu0 0.0
        %884 = vmatpush1.msra.mxu0 %v826
        %885 = vmatprep.subr.mxu0 0.0
        %886 = vmatpush1.msra.mxu0 %v831
        %887 = vmatprep.subr.mxu0 0.0
        %888 = vmatpush1.msra.mxu0 0.0
        %889 = vmatprep.subr.mxu0 0.0
        %890 = vmatpush1.msra.mxu0 0.0
        %891 = vmatprep.subr.mxu0 0.0
        %892 = vmatpush1.msra.mxu0 0.0
        %893 = vmatprep.subr.mxu0 0.0
        %894 = vmatpush1.msra.mxu0 0.0
        %895 = vmatprep.subr.mxu0 0.0
        %896 = vmatpush1.msra.mxu0 0.0
        %897 = vmatprep.subr.mxu0 0.0
        %898 = vmatpush1.msra.mxu0 0.0
        %899 = vmatprep.subr.mxu0 0.0
        %900 = vmatpush1.msra.mxu0 0.0
        %901 = vmatprep.subr.mxu0 0.0
        %902 = vmatpush1.msra.mxu0 0.0
        %903 = vmatprep.subr.mxu0 0.0
        %904 = vmatpush1.msra.mxu0 0.0
        %905 = vmatprep.subr.mxu0 0.0
        %906 = vmatpush1.msra.mxu0 0.0
        %907 = vmatprep.subr.mxu0 0.0
        %908 = vmatpush1.msra.mxu0 0.0
        %909 = vmatprep.subr.mxu0 0.0
        %910 = vmatpush1.msra.mxu0 0.0
        %911 = vmatprep.subr.mxu0 0.0
        %912 = vmatpush1.msra.mxu0 0.0
        %913 = vmatprep.subr.mxu0 0.0
        %914 = vmatpush1.msra.mxu0 0.0
        %915 = vmatprep.subr.mxu0 0.0
        %916 = vmatpush1.msra.mxu0 0.0
        %917 = vmatprep.subr.mxu0 0.0
        %918 = vmatpush1.msra.mxu0 0.0
        %919 = vmatprep.subr.mxu0 0.0
        %920 = vmatpush1.msra.mxu0 0.0
        %921 = vmatprep.subr.mxu0 0.0
        %922 = vmatpush1.msra.mxu0 0.0
        %923 = vmatprep.subr.mxu0 0.0
        %924 = vmatpush1.msra.mxu0 0.0
        %925 = vmatprep.subr.mxu0 0.0
        %926 = vmatpush1.msra.mxu0 0.0
        %927 = vmatprep.subr.mxu0 0.0
        %928 = vmatpush1.msra.mxu0 0.0
        %929 = vmatprep.subr.mxu0 0.0
        %930 = vmatpush1.msra.mxu0 0.0
        %931 = vmatprep.subr.mxu0 0.0
        %932 = vmatpush1.msra.mxu0 0.0
        %933 = vmatprep.subr.mxu0 0.0
        %934 = vmatpush1.msra.mxu0 0.0
        %935 = vmatprep.subr.mxu0 0.0
        %936 = vmatpush1.msra.mxu0 0.0
        %937 = vmatprep.subr.mxu0 0.0
        %938 = vmatpush1.msra.mxu0 0.0
        %939 = vmatprep.mubr.f32.mxu0 0.0
        %940 = vmatmul.mubr.f32.gmra.mrb[0].mxu0 %v864
        %v941 = vpop.f32.mrb[0].mxu0
        %v942 = vadd.f32 %v845, %v941
        %v943 = vpop.f32.mrb[0].mxu0
        %944 = vmatprep.mubr.f32.mxu0 0.0
        %945 = vmatmul.mubr.f32.gmra.mrb[0].mxu0 %v867
        %v946 = vpop.f32.mrb[0].mxu0
        %v947 = vadd.f32 %v850, %v946
        %v948 = vpop.f32.mrb[0].mxu0
        %949 = vmatprep.mubr.f32.mxu0 0.0
        %950 = vmatmul.mubr.f32.gmra.mrb[0].mxu0 %v870
        %v951 = vpop.f32.mrb[0].mxu0
        %v952 = vadd.f32 %v855, %v951
        %v953 = vpop.f32.mrb[0].mxu0
        %954 = vmatprep.mubr.f32.mxu0 0.0
        %955 = vmatmul.mubr.f32.gmra.mrb[0].mxu0 %v873
        %v956 = vpop.f32.mrb[0].mxu0
        %v957 = vadd.f32 %v860, %v956
        %v958 = vpop.f32.mrb[0].mxu0
        %959 = vdwg.mxu0
        %v960 = vmax.f32 %v942, 0.0
        %v961 = vmax.f32 %v947, 0.0
        %v962 = vmax.f32 %v952, 0.0
        %v963 = vmax.f32 %v957, 0.0
        %s964 = scalar_lea.vmem %s6, 32
        %v965 = vld [vmem:[%s964] sm:$0xff]
        %v966 = vld [vmem:[%s964 + $0x8] sm:$0xff]
        %v967 = vld [vmem:[%s964 + $0x10] sm:$0xff]
        %v968 = vld [vmem:[%s964 + $0x18] sm:$0xff]
        %970 = vset.pattern.permute.xlu0 0
        %971 = vperm.xlu0 %970, %v965
        %v972 = vpop.permute.xlu0 %971
        %975 = vset.pattern.permute.xlu0 0
        %976 = vperm.xlu0 %975, %v966
        %v977 = vpop.permute.xlu0 %976
        %980 = vset.pattern.permute.xlu0 0
        %981 = vperm.xlu0 %980, %v967
        %v982 = vpop.permute.xlu0 %981
        %985 = vset.pattern.permute.xlu0 0
        %986 = vperm.xlu0 %985, %v968
        %v987 = vpop.permute.xlu0 %986
        %v989 = vmul.f32 %v960, %v972
        %v990 = vmul.f32 %v961, %v977
        %v991 = vmul.f32 %v962, %v982
        %v992 = vmul.f32 %v963, %v987
        %s993 = scalar_lea.vmem %s6, 64
        %v994 = vld [vmem:[%s993] sm:$0xff]
        %v995 = vld [vmem:[%s993 + $0x8] sm:$0xff]
        %v996 = vld [vmem:[%s993 + $0x10] sm:$0xff]
        %v997 = vld [vmem:[%s993 + $0x18] sm:$0xff]
        %999 = vset.pattern.permute.xlu0 0
        %1000 = vperm.xlu0 %999, %v994
        %v1001 = vpop.permute.xlu0 %1000
        %1004 = vset.pattern.permute.xlu0 0
        %1005 = vperm.xlu0 %1004, %v995
        %v1006 = vpop.permute.xlu0 %1005
        %1009 = vset.pattern.permute.xlu0 0
        %1010 = vperm.xlu0 %1009, %v996
        %v1011 = vpop.permute.xlu0 %1010
        %1014 = vset.pattern.permute.xlu0 0
        %1015 = vperm.xlu0 %1014, %v997
        %v1016 = vpop.permute.xlu0 %1015
        %v1018 = vadd.f32 %v989, %v1001
        %v1019 = vadd.f32 %v990, %v1006
        %v1020 = vadd.f32 %v991, %v1011
        %v1021 = vadd.f32 %v992, %v1016
        %1022 = vmatprep.subr.mxu0 0.0
        %1023 = vmatpush1.msra.mxu0 %v405
        %1024 = vmatprep.subr.mxu0 0.0
        %1025 = vmatpush1.msra.mxu0 %v406
        %1026 = vmatprep.subr.mxu0 0.0
        %1027 = vmatpush1.msra.mxu0 %v407
        %1028 = vmatprep.subr.mxu0 0.0
        %1029 = vmatpush1.msra.mxu0 %v408
        %1030 = vmatprep.subr.mxu0 0.0
        %1031 = vmatpush1.msra.mxu0 %v409
        %1032 = vmatprep.subr.mxu0 0.0
        %1033 = vmatpush1.msra.mxu0 %v410
        %1034 = vmatprep.subr.mxu0 0.0
        %1035 = vmatpush1.msra.mxu0 %v411
        %1036 = vmatprep.subr.mxu0 0.0
        %1037 = vmatpush1.msra.mxu0 %v412
        %1038 = vmatprep.subr.mxu0 0.0
        %1039 = vmatpush1.msra.mxu0 %v413
        %1040 = vmatprep.subr.mxu0 0.0
        %1041 = vmatpush1.msra.mxu0 %v414
        %1042 = vmatprep.subr.mxu0 0.0
        %1043 = vmatpush1.msra.mxu0 %v415
        %1044 = vmatprep.subr.mxu0 0.0
        %1045 = vmatpush1.msra.mxu0 %v416
        %1046 = vmatprep.subr.mxu0 0.0
        %1047 = vmatpush1.msra.mxu0 %v417
        %1048 = vmatprep.subr.mxu0 0.0
        %1049 = vmatpush1.msra.mxu0 %v418
        %1050 = vmatprep.subr.mxu0 0.0
        %1051 = vmatpush1.msra.mxu0 %v419
        %1052 = vmatprep.subr.mxu0 0.0
        %1053 = vmatpush1.msra.mxu0 %v420
        %1054 = vmatprep.subr.mxu0 0.0
        %1055 = vmatpush1.msra.mxu0 0.0
        %1056 = vmatprep.subr.mxu0 0.0
        %1057 = vmatpush1.msra.mxu0 0.0
        %1058 = vmatprep.subr.mxu0 0.0
        %1059 = vmatpush1.msra.mxu0 0.0
        %1060 = vmatprep.subr.mxu0 0.0
        %1061 = vmatpush1.msra.mxu0 0.0
        %1062 = vmatprep.subr.mxu0 0.0
        %1063 = vmatpush1.msra.mxu0 0.0
        %1064 = vmatprep.subr.mxu0 0.0
        %1065 = vmatpush1.msra.mxu0 0.0
        %1066 = vmatprep.subr.mxu0 0.0
        %1067 = vmatpush1.msra.mxu0 0.0
        %1068 = vmatprep.subr.mxu0 0.0
        %1069 = vmatpush1.msra.mxu0 0.0
        %1070 = vmatprep.subr.mxu0 0.0
        %1071 = vmatpush1.msra.mxu0 0.0
        %1072 = vmatprep.subr.mxu0 0.0
        %1073 = vmatpush1.msra.mxu0 0.0
        %1074 = vmatprep.subr.mxu0 0.0
        %1075 = vmatpush1.msra.mxu0 0.0
        %1076 = vmatprep.subr.mxu0 0.0
        %1077 = vmatpush1.msra.mxu0 0.0
        %1078 = vmatprep.subr.mxu0 0.0
        %1079 = vmatpush1.msra.mxu0 0.0
        %1080 = vmatprep.subr.mxu0 0.0
        %1081 = vmatpush1.msra.mxu0 0.0
        %1082 = vmatprep.subr.mxu0 0.0
        %1083 = vmatpush1.msra.mxu0 0.0
        %1084 = vmatprep.subr.mxu0 0.0
        %1085 = vmatpush1.msra.mxu0 0.0
        %1086 = vmatprep.mubr.f32.mxu0 0.0
        %1087 = vmatmul.mubr.f32.gmra.mrb[0].mxu0 %v1018
        %v1088 = vpop.f32.mrb[0].mxu0
        %v1089 = vadd.f32 0.0, %v1088
        %v1090 = vpop.f32.mrb[0].mxu0
        %1091 = vmatprep.mubr.f32.mxu0 0.0
        %1092 = vmatmul.mubr.f32.gmra.mrb[0].mxu0 %v1019
        %v1093 = vpop.f32.mrb[0].mxu0
        %v1094 = vadd.f32 0.0, %v1093
        %v1095 = vpop.f32.mrb[0].mxu0
        %1096 = vmatprep.mubr.f32.mxu0 0.0
        %1097 = vmatmul.mubr.f32.gmra.mrb[0].mxu0 %v1020
        %v1098 = vpop.f32.mrb[0].mxu0
        %v1099 = vadd.f32 0.0, %v1098
        %v1100 = vpop.f32.mrb[0].mxu0
        %1101 = vmatprep.mubr.f32.mxu0 0.0
        %1102 = vmatmul.mubr.f32.gmra.mrb[0].mxu0 %v1021
        %v1103 = vpop.f32.mrb[0].mxu0
        %v1104 = vadd.f32 0.0, %v1103
        %v1105 = vpop.f32.mrb[0].mxu0
        %1106 = vdwg.mxu0
        %1107 = vmatprep.subr.mxu0 0.0
        %1108 = vmatpush1.msra.mxu0 %v421
        %1109 = vmatprep.subr.mxu0 0.0
        %1110 = vmatpush1.msra.mxu0 %v422
        %1111 = vmatprep.subr.mxu0 0.0
        %1112 = vmatpush1.msra.mxu0 %v423
        %1113 = vmatprep.subr.mxu0 0.0
        %1114 = vmatpush1.msra.mxu0 %v424
        %1115 = vmatprep.subr.mxu0 0.0
        %1116 = vmatpush1.msra.mxu0 %v425
        %1117 = vmatprep.subr.mxu0 0.0
        %1118 = vmatpush1.msra.mxu0 %v426
        %1119 = vmatprep.subr.mxu0 0.0
        %1120 = vmatpush1.msra.mxu0 %v427
        %1121 = vmatprep.subr.mxu0 0.0
        %1122 = vmatpush1.msra.mxu0 %v428
        %1123 = vmatprep.subr.mxu0 0.0
        %1124 = vmatpush1.msra.mxu0 %v429
        %1125 = vmatprep.subr.mxu0 0.0
        %1126 = vmatpush1.msra.mxu0 %v430
        %1127 = vmatprep.subr.mxu0 0.0
        %1128 = vmatpush1.msra.mxu0 %v431
        %1129 = vmatprep.subr.mxu0 0.0
        %1130 = vmatpush1.msra.mxu0 %v432
        %1131 = vmatprep.subr.mxu0 0.0
        %1132 = vmatpush1.msra.mxu0 %v433
        %1133 = vmatprep.subr.mxu0 0.0
        %1134 = vmatpush1.msra.mxu0 %v434
        %1135 = vmatprep.subr.mxu0 0.0
        %1136 = vmatpush1.msra.mxu0 %v435
        %1137 = vmatprep.subr.mxu0 0.0
        %1138 = vmatpush1.msra.mxu0 %v436
        %1139 = vmatprep.subr.mxu0 0.0
        %1140 = vmatpush1.msra.mxu0 0.0
        %1141 = vmatprep.subr.mxu0 0.0
        %1142 = vmatpush1.msra.mxu0 0.0
        %1143 = vmatprep.subr.mxu0 0.0
        %1144 = vmatpush1.msra.mxu0 0.0
        %1145 = vmatprep.subr.mxu0 0.0
        %1146 = vmatpush1.msra.mxu0 0.0
        %1147 = vmatprep.subr.mxu0 0.0
        %1148 = vmatpush1.msra.mxu0 0.0
        %1149 = vmatprep.subr.mxu0 0.0
        %1150 = vmatpush1.msra.mxu0 0.0
        %1151 = vmatprep.subr.mxu0 0.0
        %1152 = vmatpush1.msra.mxu0 0.0
        %1153 = vmatprep.subr.mxu0 0.0
        %1154 = vmatpush1.msra.mxu0 0.0
        %1155 = vmatprep.subr.mxu0 0.0
        %1156 = vmatpush1.msra.mxu0 0.0
        %1157 = vmatprep.subr.mxu0 0.0
        %1158 = vmatpush1.msra.mxu0 0.0
        %1159 = vmatprep.subr.mxu0 0.0
        %1160 = vmatpush1.msra.mxu0 0.0
        %1161 = vmatprep.subr.mxu0 0.0
        %1162 = vmatpush1.msra.mxu0 0.0
        %1163 = vmatprep.subr.mxu0 0.0
        %1164 = vmatpush1.msra.mxu0 0.0
        %1165 = vmatprep.subr.mxu0 0.0
        %1166 = vmatpush1.msra.mxu0 0.0
        %1167 = vmatprep.subr.mxu0 0.0
        %1168 = vmatpush1.msra.mxu0 0.0
        %1169 = vmatprep.subr.mxu0 0.0
        %1170 = vmatpush1.msra.mxu0 0.0
        %1171 = vmatprep.mubr.f32.mxu0 0.0
        %1172 = vmatmul.mubr.f32.gmra.mrb[0].mxu0 %v1018
        %v1173 = vpop.f32.mrb[0].mxu0
        %v1174 = vadd.f32 0.0, %v1173
        %v1175 = vpop.f32.mrb[0].mxu0
        %1176 = vmatprep.mubr.f32.mxu0 0.0
        %1177 = vmatmul.mubr.f32.gmra.mrb[0].mxu0 %v1019
        %v1178 = vpop.f32.mrb[0].mxu0
        %v1179 = vadd.f32 0.0, %v1178
        %v1180 = vpop.f32.mrb[0].mxu0
        %1181 = vmatprep.mubr.f32.mxu0 0.0
        %1182 = vmatmul.mubr.f32.gmra.mrb[0].mxu0 %v1020
        %v1183 = vpop.f32.mrb[0].mxu0
        %v1184 = vadd.f32 0.0, %v1183
        %v1185 = vpop.f32.mrb[0].mxu0
        %1186 = vmatprep.mubr.f32.mxu0 0.0
        %1187 = vmatmul.mubr.f32.gmra.mrb[0].mxu0 %v1021
        %v1188 = vpop.f32.mrb[0].mxu0
        %v1189 = vadd.f32 0.0, %v1188
        %v1190 = vpop.f32.mrb[0].mxu0
        %1191 = vdwg.mxu0
        %v1192 = vld [vmem:[#allocation9] sm:$0xff]
        %v1193 = vld [vmem:[#allocation9 + $0x8] sm:$0xff]
        %v1194 = vld [vmem:[#allocation9 + $0x10] sm:$0xff]
        %v1195 = vld [vmem:[#allocation9 + $0x18] sm:$0xff]
        %v1196 = vld [vmem:[#allocation9 + $0x20] sm:$0xff]
        %v1197 = vld [vmem:[#allocation9 + $0x28] sm:$0xff]
        %v1198 = vld [vmem:[#allocation9 + $0x30] sm:$0xff]
        %v1199 = vld [vmem:[#allocation9 + $0x38] sm:$0xff]
        %v1200 = vld [vmem:[%s8] sm:$0xff]
        %v1201 = vld [vmem:[%s8 + $0x8] sm:$0xff]
        %v1202 = vld [vmem:[%s8 + $0x10] sm:$0xff]
        %v1203 = vld [vmem:[%s8 + $0x18] sm:$0xff]
        %v1204 = vld [vmem:[%s8 + $0x20] sm:$0xff]
        %v1205 = vld [vmem:[%s8 + $0x28] sm:$0xff]
        %v1206 = vld [vmem:[%s8 + $0x30] sm:$0xff]
        %v1207 = vld [vmem:[%s8 + $0x38] sm:$0xff]
        %1209 = vset.pattern.permute.xlu0 0
        %1210 = vperm.xlu0 %1209, %v1200
        %v1211 = vpop.permute.xlu0 %1210
        %1214 = vset.pattern.permute.xlu0 0
        %1215 = vperm.xlu0 %1214, %v1201
        %v1216 = vpop.permute.xlu0 %1215
        %1219 = vset.pattern.permute.xlu0 0
        %1220 = vperm.xlu0 %1219, %v1202
        %v1221 = vpop.permute.xlu0 %1220
        %1224 = vset.pattern.permute.xlu0 0
        %1225 = vperm.xlu0 %1224, %v1203
        %v1226 = vpop.permute.xlu0 %1225
        %1229 = vset.pattern.permute.xlu0 0
        %1230 = vperm.xlu0 %1229, %v1204
        %v1231 = vpop.permute.xlu0 %1230
        %1234 = vset.pattern.permute.xlu0 0
        %1235 = vperm.xlu0 %1234, %v1205
        %v1236 = vpop.permute.xlu0 %1235
        %1239 = vset.pattern.permute.xlu0 0
        %1240 = vperm.xlu0 %1239, %v1206
        %v1241 = vpop.permute.xlu0 %1240
        %1244 = vset.pattern.permute.xlu0 0
        %1245 = vperm.xlu0 %1244, %v1207
        %v1246 = vpop.permute.xlu0 %1245
        %vm1248 = vcmask 785408
        %v1250 = vsel %vm1248, %v1192, 0
        %v1253 = vsel %vm1248, %v1193, 0
        %v1256 = vsel %vm1248, %v1194, 0
        %v1259 = vsel %vm1248, %v1195, 0
        %v1262 = vsel %vm1248, %v1196, 0
        %v1265 = vsel %vm1248, %v1197, 0
        %v1268 = vsel %vm1248, %v1198, 0
        %v1271 = vsel %vm1248, %v1199, 0
        %1273 = vmatprep.subr.mxu0 0.0
        %1274 = vmatpush1.msra.mxu0 %v1089
        %1275 = vmatprep.subr.mxu0 0.0
        %1276 = vmatpush1.msra.mxu0 %v1094
        %1277 = vmatprep.subr.mxu0 0.0
        %1278 = vmatpush1.msra.mxu0 %v1099
        %1279 = vmatprep.subr.mxu0 0.0
        %1280 = vmatpush1.msra.mxu0 %v1104
        %1281 = vmatprep.subr.mxu0 0.0
        %1282 = vmatpush1.msra.mxu0 %v1018
        %1283 = vmatprep.subr.mxu0 0.0
        %1284 = vmatpush1.msra.mxu0 %v1019
        %1285 = vmatprep.subr.mxu0 0.0
        %1286 = vmatpush1.msra.mxu0 %v1020
        %1287 = vmatprep.subr.mxu0 0.0
        %1288 = vmatpush1.msra.mxu0 %v1021
        %1289 = vmatprep.subr.mxu0 0.0
        %1290 = vmatpush1.msra.mxu0 %v1174
        %1291 = vmatprep.subr.mxu0 0.0
        %1292 = vmatpush1.msra.mxu0 %v1179
        %1293 = vmatprep.subr.mxu0 0.0
        %1294 = vmatpush1.msra.mxu0 %v1184
        %1295 = vmatprep.subr.mxu0 0.0
        %1296 = vmatpush1.msra.mxu0 %v1189
        %1297 = vmatprep.subr.mxu0 0.0
        %1298 = vmatpush1.msra.mxu0 0.0
        %1299 = vmatprep.subr.mxu0 0.0
        %1300 = vmatpush1.msra.mxu0 0.0
        %1301 = vmatprep.subr.mxu0 0.0
        %1302 = vmatpush1.msra.mxu0 0.0
        %1303 = vmatprep.subr.mxu0 0.0
        %1304 = vmatpush1.msra.mxu0 0.0
        %1305 = vmatprep.subr.mxu0 0.0
        %1306 = vmatpush1.msra.mxu0 0.0
        %1307 = vmatprep.subr.mxu0 0.0
        %1308 = vmatpush1.msra.mxu0 0.0
        %1309 = vmatprep.subr.mxu0 0.0
        %1310 = vmatpush1.msra.mxu0 0.0
        %1311 = vmatprep.subr.mxu0 0.0
        %1312 = vmatpush1.msra.mxu0 0.0
        %1313 = vmatprep.subr.mxu0 0.0
        %1314 = vmatpush1.msra.mxu0 0.0
        %1315 = vmatprep.subr.mxu0 0.0
        %1316 = vmatpush1.msra.mxu0 0.0
        %1317 = vmatprep.subr.mxu0 0.0
        %1318 = vmatpush1.msra.mxu0 0.0
        %1319 = vmatprep.subr.mxu0 0.0
        %1320 = vmatpush1.msra.mxu0 0.0
        %1321 = vmatprep.subr.mxu0 0.0
        %1322 = vmatpush1.msra.mxu0 0.0
        %1323 = vmatprep.subr.mxu0 0.0
        %1324 = vmatpush1.msra.mxu0 0.0
        %1325 = vmatprep.subr.mxu0 0.0
        %1326 = vmatpush1.msra.mxu0 0.0
        %1327 = vmatprep.subr.mxu0 0.0
        %1328 = vmatpush1.msra.mxu0 0.0
        %1329 = vmatprep.subr.mxu0 0.0
        %1330 = vmatpush1.msra.mxu0 0.0
        %1331 = vmatprep.subr.mxu0 0.0
        %1332 = vmatpush1.msra.mxu0 0.0
        %1333 = vmatprep.subr.mxu0 0.0
        %1334 = vmatpush1.msra.mxu0 0.0
        %1335 = vmatprep.subr.mxu0 0.0
        %1336 = vmatpush1.msra.mxu0 0.0
        %1337 = vmatprep.mubr.f32.mxu0 0.0
        %1338 = vmatmul.mubr.f32.gmra.mrb[0].mxu0 %v1250
        %v1339 = vpop.f32.mrb[0].mxu0
        %v1340 = vadd.f32 %v1211, %v1339
        %v1341 = vpop.f32.mrb[0].mxu0
        %1342 = vmatprep.mubr.f32.mxu0 0.0
        %1343 = vmatmul.mubr.f32.gmra.mrb[0].mxu0 %v1253
        %v1344 = vpop.f32.mrb[0].mxu0
        %v1345 = vadd.f32 %v1216, %v1344
        %v1346 = vpop.f32.mrb[0].mxu0
        %1347 = vmatprep.mubr.f32.mxu0 0.0
        %1348 = vmatmul.mubr.f32.gmra.mrb[0].mxu0 %v1256
        %v1349 = vpop.f32.mrb[0].mxu0
        %v1350 = vadd.f32 %v1221, %v1349
        %v1351 = vpop.f32.mrb[0].mxu0
        %1352 = vmatprep.mubr.f32.mxu0 0.0
        %1353 = vmatmul.mubr.f32.gmra.mrb[0].mxu0 %v1259
        %v1354 = vpop.f32.mrb[0].mxu0
        %v1355 = vadd.f32 %v1226, %v1354
        %v1356 = vpop.f32.mrb[0].mxu0
        %1357 = vmatprep.mubr.f32.mxu0 0.0
        %1358 = vmatmul.mubr.f32.gmra.mrb[0].mxu0 %v1262
        %v1359 = vpop.f32.mrb[0].mxu0
        %v1360 = vadd.f32 %v1231, %v1359
        %v1361 = vpop.f32.mrb[0].mxu0
        %1362 = vmatprep.mubr.f32.mxu0 0.0
        %1363 = vmatmul.mubr.f32.gmra.mrb[0].mxu0 %v1265
        %v1364 = vpop.f32.mrb[0].mxu0
        %v1365 = vadd.f32 %v1236, %v1364
        %v1366 = vpop.f32.mrb[0].mxu0
        %1367 = vmatprep.mubr.f32.mxu0 0.0
        %1368 = vmatmul.mubr.f32.gmra.mrb[0].mxu0 %v1268
        %v1369 = vpop.f32.mrb[0].mxu0
        %v1370 = vadd.f32 %v1241, %v1369
        %v1371 = vpop.f32.mrb[0].mxu0
        %1372 = vmatprep.mubr.f32.mxu0 0.0
        %1373 = vmatmul.mubr.f32.gmra.mrb[0].mxu0 %v1271
        %v1374 = vpop.f32.mrb[0].mxu0
        %v1375 = vadd.f32 %v1246, %v1374
        %v1376 = vpop.f32.mrb[0].mxu0
        %1377 = vdwg.mxu0
        %v1378 = vmax.f32 %v1340, 0.0
        %v1379 = vmax.f32 %v1345, 0.0
        %v1380 = vmax.f32 %v1350, 0.0
        %v1381 = vmax.f32 %v1355, 0.0
        %v1382 = vmax.f32 %v1360, 0.0
        %v1383 = vmax.f32 %v1365, 0.0
        %v1384 = vmax.f32 %v1370, 0.0
        %v1385 = vmax.f32 %v1375, 0.0
        %s1386 = scalar_lea.vmem %s8, 64
        %v1387 = vld [vmem:[%s1386] sm:$0xff]
        %v1388 = vld [vmem:[%s1386 + $0x8] sm:$0xff]
        %v1389 = vld [vmem:[%s1386 + $0x10] sm:$0xff]
        %v1390 = vld [vmem:[%s1386 + $0x18] sm:$0xff]
        %v1391 = vld [vmem:[%s1386 + $0x20] sm:$0xff]
        %v1392 = vld [vmem:[%s1386 + $0x28] sm:$0xff]
        %v1393 = vld [vmem:[%s1386 + $0x30] sm:$0xff]
        %v1394 = vld [vmem:[%s1386 + $0x38] sm:$0xff]
        %1396 = vset.pattern.permute.xlu0 0
        %1397 = vperm.xlu0 %1396, %v1387
        %v1398 = vpop.permute.xlu0 %1397
        %1401 = vset.pattern.permute.xlu0 0
        %1402 = vperm.xlu0 %1401, %v1388
        %v1403 = vpop.permute.xlu0 %1402
        %1406 = vset.pattern.permute.xlu0 0
        %1407 = vperm.xlu0 %1406, %v1389
        %v1408 = vpop.permute.xlu0 %1407
        %1411 = vset.pattern.permute.xlu0 0
        %1412 = vperm.xlu0 %1411, %v1390
        %v1413 = vpop.permute.xlu0 %1412
        %1416 = vset.pattern.permute.xlu0 0
        %1417 = vperm.xlu0 %1416, %v1391
        %v1418 = vpop.permute.xlu0 %1417
        %1421 = vset.pattern.permute.xlu0 0
        %1422 = vperm.xlu0 %1421, %v1392
        %v1423 = vpop.permute.xlu0 %1422
        %1426 = vset.pattern.permute.xlu0 0
        %1427 = vperm.xlu0 %1426, %v1393
        %v1428 = vpop.permute.xlu0 %1427
        %1431 = vset.pattern.permute.xlu0 0
        %1432 = vperm.xlu0 %1431, %v1394
        %v1433 = vpop.permute.xlu0 %1432
        %v1435 = vmul.f32 %v1378, %v1398
        %v1436 = vmul.f32 %v1379, %v1403
        %v1437 = vmul.f32 %v1380, %v1408
        %v1438 = vmul.f32 %v1381, %v1413
        %v1439 = vmul.f32 %v1382, %v1418
        %v1440 = vmul.f32 %v1383, %v1423
        %v1441 = vmul.f32 %v1384, %v1428
        %v1442 = vmul.f32 %v1385, %v1433
        %s1443 = scalar_lea.vmem %s8, 128
        %v1444 = vld [vmem:[%s1443] sm:$0xff]
        %v1445 = vld [vmem:[%s1443 + $0x8] sm:$0xff]
        %v1446 = vld [vmem:[%s1443 + $0x10] sm:$0xff]
        %v1447 = vld [vmem:[%s1443 + $0x18] sm:$0xff]
        %v1448 = vld [vmem:[%s1443 + $0x20] sm:$0xff]
        %v1449 = vld [vmem:[%s1443 + $0x28] sm:$0xff]
        %v1450 = vld [vmem:[%s1443 + $0x30] sm:$0xff]
        %v1451 = vld [vmem:[%s1443 + $0x38] sm:$0xff]
        %1453 = vset.pattern.permute.xlu0 0
        %1454 = vperm.xlu0 %1453, %v1444
        %v1455 = vpop.permute.xlu0 %1454
        %1458 = vset.pattern.permute.xlu0 0
        %1459 = vperm.xlu0 %1458, %v1445
        %v1460 = vpop.permute.xlu0 %1459
        %1463 = vset.pattern.permute.xlu0 0
        %1464 = vperm.xlu0 %1463, %v1446
        %v1465 = vpop.permute.xlu0 %1464
        %1468 = vset.pattern.permute.xlu0 0
        %1469 = vperm.xlu0 %1468, %v1447
        %v1470 = vpop.permute.xlu0 %1469
        %1473 = vset.pattern.permute.xlu0 0
        %1474 = vperm.xlu0 %1473, %v1448
        %v1475 = vpop.permute.xlu0 %1474
        %1478 = vset.pattern.permute.xlu0 0
        %1479 = vperm.xlu0 %1478, %v1449
        %v1480 = vpop.permute.xlu0 %1479
        %1483 = vset.pattern.permute.xlu0 0
        %1484 = vperm.xlu0 %1483, %v1450
        %v1485 = vpop.permute.xlu0 %1484
        %1488 = vset.pattern.permute.xlu0 0
        %1489 = vperm.xlu0 %1488, %v1451
        %v1490 = vpop.permute.xlu0 %1489
        %v1492 = vadd.f32 %v1435, %v1455
        %v1493 = vadd.f32 %v1436, %v1460
        %v1494 = vadd.f32 %v1437, %v1465
        %v1495 = vadd.f32 %v1438, %v1470
        %v1496 = vadd.f32 %v1439, %v1475
        %v1497 = vadd.f32 %v1440, %v1480
        %v1498 = vadd.f32 %v1441, %v1485
        %v1499 = vadd.f32 %v1442, %v1490
        %1500 = vst [vmem:[%s404] sm:$0xff] %v1492
        %1501 = vst [vmem:[%s404 + $0x8] sm:$0xff] %v1493
        %1502 = vst [vmem:[%s404 + $0x10] sm:$0xff] %v1494
        %1503 = vst [vmem:[%s404 + $0x18] sm:$0xff] %v1495
        %1504 = vst [vmem:[%s404 + $0x20] sm:$0xff] %v1496
        %1505 = vst [vmem:[%s404 + $0x28] sm:$0xff] %v1497
        %1506 = vst [vmem:[%s404 + $0x30] sm:$0xff] %v1498
        %1507 = vst [vmem:[%s404 + $0x38] sm:$0xff] %v1499
        %p1508 = scmp.lt.s32.totalorder %s25, 1
        %s1509 = scalar_select %p1508, %s25, 1
        %s1510 = smul.addr %s1509, 8
        %s1511 = smul.addr %s1510, 8
        %s1512 = scalar_lea.vmem %s9, %s1511
        // Predicated region
        $region77: #{gsr_forward_pallas.3} parent=55 // pred_check
          %p1513 = pneg %p237
        $region78: #{gsr_forward_pallas.3} parent=55 // pred_check_branch
          %1515 = sbr.rel (%p1513) target = $region80
        $region79: #{gsr_forward_pallas.3} parent=55 // pred_region
          _
        $region80: #{gsr_forward_pallas.3} parent=55 // pred_fallthru
          _
      $region56: #{gsr_forward_pallas.3} parent=5 // pred_fallthru
        _
      %p1516 = scmp.le.s32.totalorder 2, %s20
      // Predicated region
      $region81: #{gsr_forward_pallas.3} parent=5 // pred_check
        %p1517 = pneg %p1516
      $region82: #{gsr_forward_pallas.3} parent=5 // pred_check_branch
        %1519 = sbr.rel (%p1517) target = $region84
      $region83: #{gsr_forward_pallas.3} parent=5 // pred_region
        %s1520 = ssub.s32 %s20, 2
        // Predicated region
        $region85: #{gsr_forward_pallas.3} parent=83 // pred_check
          %p1521 = pneg %p243
        $region86: #{gsr_forward_pallas.3} parent=83 // pred_check_branch
          %1523 = sbr.rel (%p1521) target = $region88
        $region87: #{gsr_forward_pallas.3} parent=83 // pred_region
          %p1524 = scmp.lt.s32.totalorder %s26, 1
          %s1525 = scalar_select %p1524, %s26, 1
          %s1526 = smul.addr %s1525, 8
          %s1527 = smul.addr %s1526, 8
          %s1528 = scalar_lea.vmem %s9, %s1527
        $region88: #{gsr_forward_pallas.3} parent=83 // pred_fallthru
          _
      $region84: #{gsr_forward_pallas.3} parent=5 // pred_fallthru
        _
    $region6: #{gsr_forward_pallas.3} parent=1 // loop_footer
      %s24 = sadd.s32 1, %s20
    $region7: #{gsr_forward_pallas.3} parent=1 // loop_footer_branch
      %19 = sbr.rel target = $region3
    $region8: #{gsr_forward_pallas.3} parent=1 // loop_exit
      _
    %1529 = vsyncpa [#allocation3], 1
    %s1530 = scalar_lea.sflag [#allocation3], 1
    %1531 = vsyncpa %s1530, 1
    %1532 = vsyncpa [#allocation5], 1
    %1533 = vsyncpa [#allocation8], 1

// kernel: gsr_forward_pallas.4
$region0: #{gsr_forward_pallas.4}
  #allocation0 [shape = 'u32[]', space=smem, size = 0x4, offset = 0x4, fixed_abs, tag = 'smem constant byte address 0x4 - core index']
  #allocation1 [shape = 'u32[144,128]{1,0:T(1,128)}', space=vmem, size = 0x12000, scoped, tag = 'internal scratch']
  %s0 = inlined_call_operand.vmem [shape: f32[2,8192], index: 0, kind: input, shape index: {}]
  %s1 = inlined_call_operand.hbm [shape: s8[8192,2048], index: 1, kind: input, shape index: {}]
  %s2 = inlined_call_operand.hbm [shape: f32[1,2048], index: 2, kind: input, shape index: {}]
  %s3 = inlined_call_operand.hbm [shape: f32[1,2048], index: 3, kind: input, shape index: {}]
  %s4 = inlined_call_operand.vmem [shape: f32[2,2048], index: 4, kind: output, shape index: {}]
  %s5 = sld [smem:[#allocation0]]
  $region69: #{gsr_forward_pallas.4} parent=0
    _
  %s7 = ssub.s32 1, %s5
  %s8 = scalar_select 0, %s7, %s5
  $region1: #{gsr_forward_pallas.4} parent=0
    #allocation2 [shape = 'u8[4194304]{0}', space=vmem, size = 0x400000, scoped, tag = 'input window, operand 1']
    #allocation3 [shape = 's32[2]{0}', space=sflag, size = 0x8, scoped, tag = 'scoped memory for gsr_forward_pallas.4']
    #allocation4 [shape = 'u8[8192]{0}', space=vmem, size = 0x2000, scoped, tag = 'input window, operand 2']
    #allocation5 [shape = 's32[2]{0}', space=sflag, size = 0x8, scoped, tag = 'scoped memory for gsr_forward_pallas.4']
    #allocation6 [shape = 'u8[8192]{0}', space=vmem, size = 0x2000, scoped, tag = 'input window, operand 3']
    %9 = vsyncpa [#allocation3], 0
    %s10 = scalar_lea.sflag [#allocation3], 1
    %11 = vsyncpa %s10, 0
    %12 = vsyncpa [#allocation5], 0
    %s13 = scalar_lea.sflag [#allocation5], 1
    %14 = vsyncpa %s13, 0
    loop: start=0, step=1, limit=10
    $region2: #{gsr_forward_pallas.4} parent=1 // loop_pre_header
      _
    $region3: #{gsr_forward_pallas.4} parent=1 // loop_header
      %s16 = sphi 0, %s20
      %p17 = scmp.ge.s32.totalorder %s16, 10
      %s23 = sphi 0, %s35
      %s24 = sphi 0, %s31
      %s25 = sphi 0, %s23
      %s26 = sphi 0, %s24
      %s27 = sphi 0, %s25
      %s28 = sphi 0, %s26
      %s36 = sphi 0, %s36
      %s38 = sphi 0, %s36
      %s39 = sphi 0, %s38
      %s53 = sphi 0, %s39
      %s61 = sphi 0, %s63
      %s64 = sphi 0, %s61
      %s65 = sphi 0, %s64
      %s81 = sphi 0, %s65
      %s87 = sphi 0, %s89
      %s90 = sphi 0, %s87
      %s91 = sphi 0, %s90
      %s107 = sphi 0, %s91
      %s113 = sphi 0, %s115
      %s116 = sphi 0, %s113
      %s117 = sphi 0, %s116
      %s133 = sphi 0, %s117
      %s139 = sphi 0, %s141
      %s142 = sphi 0, %s139
      %s143 = sphi 0, %s142
      %s159 = sphi 0, %s143
    $region4: #{gsr_forward_pallas.4} parent=1 // loop_header_branch
      %19 = sbr.rel (%p17) target = $region8
    $region5: #{gsr_forward_pallas.4} parent=1 // loop_body
      %s21 = ssub.s32 %s16, 1
      %s22 = ssub.s32 %s16, 2
      %s29 = sadd.s32 1, %s24
      %p30 = scmp.ge.s32.totalorder %s29, 4
      %s31 = scalar_select %p30, 0, %s29
      %s32 = sadd.s32 1, %s23
      %s33 = scalar_select %p30, %s32, %s23
      %p34 = scmp.ge.s32.totalorder %s33, 2
      %s35 = scalar_select %p34, 0, %s33
      %s37 = sadd.s32 %s36, 1
      %p40 = scmp.eq.s32.totalorder %s16, 7
      %p41 = scmp.ne.s32.totalorder %s36, %s38
      %p42 = scmp.eq.s32.totalorder %s16, 0
      %p43 = por %p41, %p42
      %p44 = scmp.ne.s32.totalorder %s36, %s38
      %p45 = scmp.eq.s32.totalorder %s21, 7
      %p46 = por %p44, %p45
      %p47 = scmp.ne.s32.totalorder %s38, %s39
      %p48 = scmp.eq.s32.totalorder %s21, 0
      %p49 = por %p47, %p48
      %p50 = scmp.ne.s32.totalorder %s38, %s39
      %p51 = scmp.eq.s32.totalorder %s22, 7
      %p52 = por %p50, %p51
      %p54 = scmp.ne.s32.totalorder %s39, %s53
      %p55 = scmp.eq.s32.totalorder %s22, 0
      %p56 = por %p54, %p55
      %s57 = ssub.s32 %s24, %s31
      %s58 = ssub.s32 %s23, %s35
      %s59 = sor.u32 %s57, %s58
      %p60 = scmp.eq.s32.totalorder %s59, 0
      %s62 = sadd.s32 %s61, 1
      %s63 = scalar_select %p60, %s61, %s62
      %p66 = pneg %p60
      %p67 = scmp.eq.s32.totalorder %s16, 7
      %p68 = por %p66, %p67
      %p69 = scmp.ne.s32.totalorder %s61, %s64
      %p70 = scmp.eq.s32.totalorder %s16, 0
      %p71 = por %p69, %p70
      %p72 = scmp.ne.s32.totalorder %s61, %s64
      %p73 = scmp.eq.s32.totalorder %s21, 7
      %p74 = por %p72, %p73
      %p75 = scmp.ne.s32.totalorder %s64, %s65
      %p76 = scmp.eq.s32.totalorder %s21, 0
      %p77 = por %p75, %p76
      %p78 = scmp.ne.s32.totalorder %s64, %s65
      %p79 = scmp.eq.s32.totalorder %s22, 7
      %p80 = por %p78, %p79
      %p82 = scmp.ne.s32.totalorder %s65, %s81
      %p83 = scmp.eq.s32.totalorder %s22, 0
      %p84 = por %p82, %p83
      %s85 = ssub.s32 %s23, %s35
      %p86 = scmp.eq.s32.totalorder %s85, 0
      %s88 = sadd.s32 %s87, 1
      %s89 = scalar_select %p86, %s87, %s88
      %p92 = pneg %p86
      %p93 = scmp.eq.s32.totalorder %s16, 7
      %p94 = por %p92, %p93
      %p95 = scmp.ne.s32.totalorder %s87, %s90
      %p96 = scmp.eq.s32.totalorder %s16, 0
      %p97 = por %p95, %p96
      %p98 = scmp.ne.s32.totalorder %s87, %s90
      %p99 = scmp.eq.s32.totalorder %s21, 7
      %p100 = por %p98, %p99
      %p101 = scmp.ne.s32.totalorder %s90, %s91
      %p102 = scmp.eq.s32.totalorder %s21, 0
      %p103 = por %p101, %p102
      %p104 = scmp.ne.s32.totalorder %s90, %s91
      %p105 = scmp.eq.s32.totalorder %s22, 7
      %p106 = por %p104, %p105
      %p108 = scmp.ne.s32.totalorder %s91, %s107
      %p109 = scmp.eq.s32.totalorder %s22, 0
      %p110 = por %p108, %p109
      %s111 = ssub.s32 %s23, %s35
      %p112 = scmp.eq.s32.totalorder %s111, 0
      %s114 = sadd.s32 %s113, 1
      %s115 = scalar_select %p112, %s113, %s114
      %p118 = pneg %p112
      %p119 = scmp.eq.s32.totalorder %s16, 7
      %p120 = por %p118, %p119
      %p121 = scmp.ne.s32.totalorder %s113, %s116
      %p122 = scmp.eq.s32.totalorder %s16, 0
      %p123 = por %p121, %p122
      %p124 = scmp.ne.s32.totalorder %s113, %s116
      %p125 = scmp.eq.s32.totalorder %s21, 7
      %p126 = por %p124, %p125
      %p127 = scmp.ne.s32.totalorder %s116, %s117
      %p128 = scmp.eq.s32.totalorder %s21, 0
      %p129 = por %p127, %p128
      %p130 = scmp.ne.s32.totalorder %s116, %s117
      %p131 = scmp.eq.s32.totalorder %s22, 7
      %p132 = por %p130, %p131
      %p134 = scmp.ne.s32.totalorder %s117, %s133
      %p135 = scmp.eq.s32.totalorder %s22, 0
      %p136 = por %p134, %p135
      %s137 = ssub.s32 %s23, %s35
      %p138 = scmp.eq.s32.totalorder %s137, 0
      %s140 = sadd.s32 %s139, 1
      %s141 = scalar_select %p138, %s139, %s140
      %p144 = pneg %p138
      %p145 = scmp.eq.s32.totalorder %s16, 7
      %p146 = por %p144, %p145
      %p147 = scmp.ne.s32.totalorder %s139, %s142
      %p148 = scmp.eq.s32.totalorder %s16, 0
      %p149 = por %p147, %p148
      %p150 = scmp.ne.s32.totalorder %s139, %s142
      %p151 = scmp.eq.s32.totalorder %s21, 7
      %p152 = por %p150, %p151
      %p153 = scmp.ne.s32.totalorder %s142, %s143
      %p154 = scmp.eq.s32.totalorder %s21, 0
      %p155 = por %p153, %p154
      %p156 = scmp.ne.s32.totalorder %s142, %s143
      %p157 = scmp.eq.s32.totalorder %s22, 7
      %p158 = por %p156, %p157
      %p160 = scmp.ne.s32.totalorder %s143, %s159
      %p161 = scmp.eq.s32.totalorder %s22, 0
      %p162 = por %p160, %p161
      %p163 = scmp.le.s32.totalorder 1, %s16
      %p164 = scmp.lt.s32.totalorder %s16, 9
      %p165 = pnand %p163, %p164
      %p166 = pneg %p165
      // Predicated region
      $region9: #{gsr_forward_pallas.4} parent=5 // pred_check
        _
      $region10: #{gsr_forward_pallas.4} parent=5 // pred_check_branch
        %168 = sbr.rel (%p165) target = $region12
      $region11: #{gsr_forward_pallas.4} parent=5 // pred_region
        %s169 = ssub.s32 %s16, 1
        // Predicated region
        $region13: #{gsr_forward_pallas.4} parent=11 // pred_check
          %p170 = pneg %p49
        $region14: #{gsr_forward_pallas.4} parent=11 // pred_check_branch
          %172 = sbr.rel (%p170) target = $region16
        $region15: #{gsr_forward_pallas.4} parent=11 // pred_region
          _
        $region16: #{gsr_forward_pallas.4} parent=11 // pred_fallthru
          _
      $region12: #{gsr_forward_pallas.4} parent=5 // pred_fallthru
        _
      %p173 = scmp.lt.s32.totalorder %s16, 8
      // Predicated region
      $region17: #{gsr_forward_pallas.4} parent=5 // pred_check
        %p174 = pneg %p173
      $region18: #{gsr_forward_pallas.4} parent=5 // pred_check_branch
        %176 = sbr.rel (%p174) target = $region20
      $region19: #{gsr_forward_pallas.4} parent=5 // pred_region
        // Predicated region
        $region21: #{gsr_forward_pallas.4} parent=19 // pred_check
          %p177 = pneg %p71
        $region22: #{gsr_forward_pallas.4} parent=19 // pred_check_branch
          %179 = sbr.rel (%p177) target = $region24
        $region23: #{gsr_forward_pallas.4} parent=19 // pred_region
          %s180 = sand.u32 %s61, 1
          %s181 = scalar_lea.sflag [#allocation3], %s180
          %s182 = sand.u32 %s61, 1
          %s183 = smul.addr %s182, 4096
          %s184 = scalar_lea.vmem [#allocation2], %s183
          %s185 = smul.u32 64, %s24
          %s186 = smul.u32 8, %s23
          %s188 = ssub.s32 65536, 65536
          %189 = vsyncadd %s181, %s188
          %s190 = smul.addr %s185, 16
          %s191 = sadd.s32 %s186, %s190
          %s192 = smul.addr %s191, 128
          %s193 = scalar_lea.hbm %s1, %s192
          %s194 = sshll.u32 %s184, 4
          %s195 = int_to_ptr.vmem [resolvable:$true] %s194
          %200 = dma.hbm_to_vmem [thread:$0]  %s193, 65536, %s195, %s181, 2048, 1024, 64
        $region24: #{gsr_forward_pallas.4} parent=19 // pred_fallthru
          _
        // Predicated region
        $region25: #{gsr_forward_pallas.4} parent=19 // pred_check
          %p201 = pneg %p97
        $region26: #{gsr_forward_pallas.4} parent=19 // pred_check_branch
          %203 = sbr.rel (%p201) target = $region28
        $region27: #{gsr_forward_pallas.4} parent=19 // pred_region
          %s204 = sand.u32 %s16, 1
          %s205 = scalar_lea.sflag [#allocation5], %s204
          %s206 = sand.u32 %s87, 1
          %s207 = smul.addr %s206, 8
          %s208 = scalar_lea.vmem [#allocation4], %s207
          %s209 = smul.u32 8, %s23
          %s211 = ssub.s32 128, 128
          %212 = vsyncadd %s205, %s211
          %s213 = smul.addr %s209, 16
          %s214 = scalar_lea.hbm %s2, %s213
          %s216 = sshll.u32 %s208, 4
          %s217 = int_to_ptr.vmem [resolvable:$true] %s216
          %219 = dma.hbm_to_vmem [thread:$0]  %s214, 128, %s217, %s205
        $region28: #{gsr_forward_pallas.4} parent=19 // pred_fallthru
          _
        // Predicated region
        $region29: #{gsr_forward_pallas.4} parent=19 // pred_check
          %p220 = pneg %p123
        $region30: #{gsr_forward_pallas.4} parent=19 // pred_check_branch
          %222 = sbr.rel (%p220) target = $region32
        $region31: #{gsr_forward_pallas.4} parent=19 // pred_region
          %s223 = sand.u32 %s16, 1
          %s224 = scalar_lea.sflag [#allocation5], %s223
          %s225 = sand.u32 %s113, 1
          %s226 = smul.addr %s225, 8
          %s227 = scalar_lea.vmem [#allocation6], %s226
          %s228 = smul.u32 8, %s23
          %s230 = ssub.s32 128, 128
          %231 = vsyncadd %s224, %s230
          %s232 = smul.addr %s228, 16
          %s233 = scalar_lea.hbm %s3, %s232
          %s235 = sshll.u32 %s227, 4
          %s236 = int_to_ptr.vmem [resolvable:$true] %s235
          %238 = dma.hbm_to_vmem [thread:$0]  %s233, 128, %s236, %s224
        $region32: #{gsr_forward_pallas.4} parent=19 // pred_fallthru
          _
      $region20: #{gsr_forward_pallas.4} parent=5 // pred_fallthru
        _
      %p239 = scmp.le.s32.totalorder 1, %s16
      %p240 = scmp.lt.s32.totalorder %s16, 9
      %p241 = pnand %p239, %p240
      %p242 = pneg %p241
      // Predicated region
      $region33: #{gsr_forward_pallas.4} parent=5 // pred_check
        _
      $region34: #{gsr_forward_pallas.4} parent=5 // pred_check_branch
        %244 = sbr.rel (%p241) target = $region36
      $region35: #{gsr_forward_pallas.4} parent=5 // pred_region
        %s245 = ssub.s32 %s16, 1
        %s246 = sand.u32 %s64, 1
        %s247 = scalar_lea.sflag [#allocation3], %s246
        %s248 = sand.u32 %s64, 1
        %s249 = smul.addr %s248, 4096
        %s250 = scalar_lea.vmem [#allocation2], %s249
        // Predicated region
        $region37: #{gsr_forward_pallas.4} parent=35 // pred_check
          %p251 = pneg %p77
        $region38: #{gsr_forward_pallas.4} parent=35 // pred_check_branch
          %253 = sbr.rel (%p251) target = $region40
        $region39: #{gsr_forward_pallas.4} parent=35 // pred_region
          %254 = dma.done %s247, 65536
        $region40: #{gsr_forward_pallas.4} parent=35 // pred_fallthru
          _
        %s255 = sand.u32 %s21, 1
        %s256 = scalar_lea.sflag [#allocation5], %s255
        %s257 = sand.u32 %s90, 1
        %s258 = smul.addr %s257, 8
        %s259 = scalar_lea.vmem [#allocation4], %s258
        // Predicated region
        $region41: #{gsr_forward_pallas.4} parent=35 // pred_check
          %p260 = pneg %p103
        $region42: #{gsr_forward_pallas.4} parent=35 // pred_check_branch
          %262 = sbr.rel (%p260) target = $region44
        $region43: #{gsr_forward_pallas.4} parent=35 // pred_region
          %263 = dma.done %s256, 128
        $region44: #{gsr_forward_pallas.4} parent=35 // pred_fallthru
          _
        %s264 = sand.u32 %s21, 1
        %s265 = scalar_lea.sflag [#allocation5], %s264
        %s266 = sand.u32 %s116, 1
        %s267 = smul.addr %s266, 8
        %s268 = scalar_lea.vmem [#allocation6], %s267
        // Predicated region
        $region45: #{gsr_forward_pallas.4} parent=35 // pred_check
          %p269 = pneg %p129
        $region46: #{gsr_forward_pallas.4} parent=35 // pred_check_branch
          %271 = sbr.rel (%p269) target = $region48
        $region47: #{gsr_forward_pallas.4} parent=35 // pred_region
          %272 = dma.done %s265, 128
        $region48: #{gsr_forward_pallas.4} parent=35 // pred_fallthru
          _
        %p273 = pneg %p49
        %p274 = pneg %p46
        %s275 = sand.u32 %s64, 1
        %s276 = scalar_lea.sflag [#allocation3], %s275
        %s277 = sand.u32 %s64, 1
        %s278 = smul.addr %s277, 4096
        %s279 = scalar_lea.vmem [#allocation2], %s278
        %p280 = pneg %p77
        %p281 = pneg %p74
        %s282 = sand.u32 %s21, 1
        %s283 = scalar_lea.sflag [#allocation5], %s282
        %s284 = sand.u32 %s90, 1
        %s285 = smul.addr %s284, 8
        %s286 = scalar_lea.vmem [#allocation4], %s285
        %p287 = pneg %p103
        %p288 = pneg %p100
        %s289 = sand.u32 %s21, 1
        %s290 = scalar_lea.sflag [#allocation5], %s289
        %s291 = sand.u32 %s116, 1
        %s292 = smul.addr %s291, 8
        %s293 = scalar_lea.vmem [#allocation6], %s292
        %p294 = pneg %p129
        %p295 = pneg %p126
        %p296 = pneg %p155
        %p297 = pneg %p152
        %s298 = smul.u32 8, %s25
        %p299 = scmp.lt.s32.totalorder %s298, 15
        %s300 = scalar_select %p299, %s298, 15
        %s301 = smul.addr %s300, 2
        %s302 = scalar_lea.vmem %s4, %s301
        %s303 = smul.u32 64, %s26
        %s304 = smul.u32 8, %s25
        %s305 = smul.u32 8, %s25
        %s306 = smul.u32 8, %s25
        %s307 = smul.u32 8, %s25
        %p308 = scmp.lt.s32.totalorder %s307, 15
        %s309 = scalar_select %p308, %s307, 15
        %s310 = smul.addr %s309, 2
        %s311 = scalar_lea.vmem %s4, %s310
        %s312 = smul.u32 8, %s25
        %p313 = scmp.eq.s32.totalorder %s26, 0
        // Predicated region
        $region49: #{gsr_forward_pallas.4} parent=35 // pred_check
          %p314 = pneg %p313
        $region50: #{gsr_forward_pallas.4} parent=35 // pred_check_branch
          %316 = sbr.rel (%p314) target = $region52
        $region51: #{gsr_forward_pallas.4} parent=35 // pred_region
          %317 = vst [vmem:[%s311] sm:$0xff] 0.0
          %318 = vst [vmem:[%s311 + $0x8] sm:$0xff] 0.0
        $region52: #{gsr_forward_pallas.4} parent=35 // pred_fallthru
          _
        %s319 = smul.u32 %s26, 2048
        %s320 = sshra.s32 %s319, 7
        %s321 = sand.u32 %s319, 127
        %s322 = smul.addr %s320, 2
        %s323 = scalar_lea.vmem %s0, %s322
        %v324 = vld [vmem:[%s323] sm:$0xff]
        %v325 = vld [vmem:[%s323 + $0x8] sm:$0xff]
        %v326 = vld [vmem:[%s323 + $0x10] sm:$0xff]
        %v327 = vld [vmem:[%s323 + $0x18] sm:$0xff]
        %v328 = vld [vmem:[%s311] sm:$0xff]
        %v329 = vld [vmem:[%s311 + $0x8] sm:$0xff]
        %v334 = vcombine.high %v324, %v324
        %v336 = vunpack.c.l.s4 1983009808
        %v337 = vunpack.c.0.s8 %v336
        %v338 = vlaneseq
        %v339 = vshrl.u32 %v338, 7
        %v340 = vsub.s32 %v337, %v339
        %v341 = vrot.slane %v324, %v340
        %v343 = vunpack.c.l.s4 1983009808
        %v344 = vunpack.c.0.s8 %v343
        %v345 = vlaneseq
        %v346 = vshrl.u32 %v345, 7
        %v347 = vsub.s32 %v344, %v346
        %v348 = vrot.slane %v334, %v347
        %v349 = vcombine.high %v341, %v341
        %v350 = vcombine.high %v348, %v348
        %v351 = vcombine.high %v325, %v325
        %v353 = vunpack.c.l.s4 1983009808
        %v354 = vunpack.c.0.s8 %v353
        %v355 = vlaneseq
        %v356 = vshrl.u32 %v355, 7
        %v357 = vsub.s32 %v354, %v356
        %v358 = vrot.slane %v325, %v357
        %v360 = vunpack.c.l.s4 1983009808
        %v361 = vunpack.c.0.s8 %v360
        %v362 = vlaneseq
        %v363 = vshrl.u32 %v362, 7
        %v364 = vsub.s32 %v361, %v363
        %v365 = vrot.slane %v351, %v364
        %v366 = vcombine.high %v358, %v358
        %v367 = vcombine.high %v365, %v365
        %v368 = vcombine.high %v326, %v326
        %v370 = vunpack.c.l.s4 1983009808
        %v371 = vunpack.c.0.s8 %v370
        %v372 = vlaneseq
        %v373 = vshrl.u32 %v372, 7
        %v374 = vsub.s32 %v371, %v373
        %v375 = vrot.slane %v326, %v374
        %v377 = vunpack.c.l.s4 1983009808
        %v378 = vunpack.c.0.s8 %v377
        %v379 = vlaneseq
        %v380 = vshrl.u32 %v379, 7
        %v381 = vsub.s32 %v378, %v380
        %v382 = vrot.slane %v368, %v381
        %v383 = vcombine.high %v375, %v375
        %v384 = vcombine.high %v382, %v382
        %v385 = vcombine.high %v327, %v327
        %v387 = vunpack.c.l.s4 1983009808
        %v388 = vunpack.c.0.s8 %v387
        %v389 = vlaneseq
        %v390 = vshrl.u32 %v389, 7
        %v391 = vsub.s32 %v388, %v390
        %v392 = vrot.slane %v327, %v391
        %v394 = vunpack.c.l.s4 1983009808
        %v395 = vunpack.c.0.s8 %v394
        %v396 = vlaneseq
        %v397 = vshrl.u32 %v396, 7
        %v398 = vsub.s32 %v395, %v397
        %v399 = vrot.slane %v385, %v398
        %v400 = vcombine.high %v392, %v392
        %v401 = vcombine.high %v399, %v399
        %v418 = vpack.c.bf16 %v341, %v341
        %v419 = vpack.c.bf16 %v349, %v349
        %v420 = vpack.c.bf16 %v348, %v348
        %v421 = vpack.c.bf16 %v350, %v350
        %v422 = vpack.c.bf16 %v358, %v358
        %v423 = vpack.c.bf16 %v366, %v366
        %v424 = vpack.c.bf16 %v365, %v365
        %v425 = vpack.c.bf16 %v367, %v367
        %v426 = vpack.c.bf16 %v375, %v375
        %v427 = vpack.c.bf16 %v383, %v383
        %v428 = vpack.c.bf16 %v382, %v382
        %v429 = vpack.c.bf16 %v384, %v384
        %v430 = vpack.c.bf16 %v392, %v392
        %v431 = vpack.c.bf16 %v400, %v400
        %v432 = vpack.c.bf16 %v399, %v399
        %v433 = vpack.c.bf16 %v401, %v401
        %v434 = vld [vmem:[%s250] sm:$0xff]
        %v435 = vld [vmem:[%s250 + $0x8] sm:$0xff]
        %v436 = vld [vmem:[%s250 + $0x10] sm:$0xff]
        %v437 = vld [vmem:[%s250 + $0x18] sm:$0xff]
        %v438 = vld [vmem:[%s250 + $0x20] sm:$0xff]
        %v439 = vld [vmem:[%s250 + $0x28] sm:$0xff]
        %v440 = vld [vmem:[%s250 + $0x30] sm:$0xff]
        %v441 = vld [vmem:[%s250 + $0x38] sm:$0xff]
        %v442 = vld [vmem:[%s250 + $0x40] sm:$0xff]
        %v443 = vld [vmem:[%s250 + $0x48] sm:$0xff]
        %v444 = vld [vmem:[%s250 + $0x50] sm:$0xff]
        %v445 = vld [vmem:[%s250 + $0x58] sm:$0xff]
        %v446 = vld [vmem:[%s250 + $0x60] sm:$0xff]
        %v447 = vld [vmem:[%s250 + $0x68] sm:$0xff]
        %v448 = vld [vmem:[%s250 + $0x70] sm:$0xff]
        %v449 = vld [vmem:[%s250 + $0x78] sm:$0xff]
        %v450 = vld [vmem:[%s250 + $0x80] sm:$0xff]
        %v451 = vld [vmem:[%s250 + $0x88] sm:$0xff]
        %v452 = vld [vmem:[%s250 + $0x90] sm:$0xff]
        %v453 = vld [vmem:[%s250 + $0x98] sm:$0xff]
        %v454 = vld [vmem:[%s250 + $0xa0] sm:$0xff]
        %v455 = vld [vmem:[%s250 + $0xa8] sm:$0xff]
        %v456 = vld [vmem:[%s250 + $0xb0] sm:$0xff]
        %v457 = vld [vmem:[%s250 + $0xb8] sm:$0xff]
        %v458 = vld [vmem:[%s250 + $0xc0] sm:$0xff]
        %v459 = vld [vmem:[%s250 + $0xc8] sm:$0xff]
        %v460 = vld [vmem:[%s250 + $0xd0] sm:$0xff]
        %v461 = vld [vmem:[%s250 + $0xd8] sm:$0xff]
        %v462 = vld [vmem:[%s250 + $0xe0] sm:$0xff]
        %v463 = vld [vmem:[%s250 + $0xe8] sm:$0xff]
        %v464 = vld [vmem:[%s250 + $0xf0] sm:$0xff]
        %v465 = vld [vmem:[%s250 + $0xf8] sm:$0xff]
        %v466 = vld [vmem:[%s250 + $0x100] sm:$0xff]
        %v467 = vld [vmem:[%s250 + $0x108] sm:$0xff]
        %v468 = vld [vmem:[%s250 + $0x110] sm:$0xff]
        %v469 = vld [vmem:[%s250 + $0x118] sm:$0xff]
        %v470 = vld [vmem:[%s250 + $0x120] sm:$0xff]
        %v471 = vld [vmem:[%s250 + $0x128] sm:$0xff]
        %v472 = vld [vmem:[%s250 + $0x130] sm:$0xff]
        %v473 = vld [vmem:[%s250 + $0x138] sm:$0xff]
        %v474 = vld [vmem:[%s250 + $0x140] sm:$0xff]
        %v475 = vld [vmem:[%s250 + $0x148] sm:$0xff]
        %v476 = vld [vmem:[%s250 + $0x150] sm:$0xff]
        %v477 = vld [vmem:[%s250 + $0x158] sm:$0xff]
        %v478 = vld [vmem:[%s250 + $0x160] sm:$0xff]
        %v479 = vld [vmem:[%s250 + $0x168] sm:$0xff]
        %v480 = vld [vmem:[%s250 + $0x170] sm:$0xff]
        %v481 = vld [vmem:[%s250 + $0x178] sm:$0xff]
        %v482 = vld [vmem:[%s250 + $0x180] sm:$0xff]
        %v483 = vld [vmem:[%s250 + $0x188] sm:$0xff]
        %v484 = vld [vmem:[%s250 + $0x190] sm:$0xff]
        %v485 = vld [vmem:[%s250 + $0x198] sm:$0xff]
        %v486 = vld [vmem:[%s250 + $0x1a0] sm:$0xff]
        %v487 = vld [vmem:[%s250 + $0x1a8] sm:$0xff]
        %v488 = vld [vmem:[%s250 + $0x1b0] sm:$0xff]
        %v489 = vld [vmem:[%s250 + $0x1b8] sm:$0xff]
        %v490 = vld [vmem:[%s250 + $0x1c0] sm:$0xff]
        %v491 = vld [vmem:[%s250 + $0x1c8] sm:$0xff]
        %v492 = vld [vmem:[%s250 + $0x1d0] sm:$0xff]
        %v493 = vld [vmem:[%s250 + $0x1d8] sm:$0xff]
        %v494 = vld [vmem:[%s250 + $0x1e0] sm:$0xff]
        %v495 = vld [vmem:[%s250 + $0x1e8] sm:$0xff]
        %v496 = vld [vmem:[%s250 + $0x1f0] sm:$0xff]
        %v497 = vld [vmem:[%s250 + $0x1f8] sm:$0xff]
        %v498 = vld [vmem:[%s250 + $0x200] sm:$0xff]
        %v499 = vld [vmem:[%s250 + $0x208] sm:$0xff]
        %v500 = vld [vmem:[%s250 + $0x210] sm:$0xff]
        %v501 = vld [vmem:[%s250 + $0x218] sm:$0xff]
        %v502 = vld [vmem:[%s250 + $0x220] sm:$0xff]
        %v503 = vld [vmem:[%s250 + $0x228] sm:$0xff]
        %v504 = vld [vmem:[%s250 + $0x230] sm:$0xff]
        %v505 = vld [vmem:[%s250 + $0x238] sm:$0xff]
        %v506 = vld [vmem:[%s250 + $0x240] sm:$0xff]
        %v507 = vld [vmem:[%s250 + $0x248] sm:$0xff]
        %v508 = vld [vmem:[%s250 + $0x250] sm:$0xff]
        %v509 = vld [vmem:[%s250 + $0x258] sm:$0xff]
        %v510 = vld [vmem:[%s250 + $0x260] sm:$0xff]
        %v511 = vld [vmem:[%s250 + $0x268] sm:$0xff]
        %v512 = vld [vmem:[%s250 + $0x270] sm:$0xff]
        %v513 = vld [vmem:[%s250 + $0x278] sm:$0xff]
        %v514 = vld [vmem:[%s250 + $0x280] sm:$0xff]
        %v515 = vld [vmem:[%s250 + $0x288] sm:$0xff]
        %v516 = vld [vmem:[%s250 + $0x290] sm:$0xff]
        %v517 = vld [vmem:[%s250 + $0x298] sm:$0xff]
        %v518 = vld [vmem:[%s250 + $0x2a0] sm:$0xff]
        %v519 = vld [vmem:[%s250 + $0x2a8] sm:$0xff]
        %v520 = vld [vmem:[%s250 + $0x2b0] sm:$0xff]
        %v521 = vld [vmem:[%s250 + $0x2b8] sm:$0xff]
        %v522 = vld [vmem:[%s250 + $0x2c0] sm:$0xff]
        %v523 = vld [vmem:[%s250 + $0x2c8] sm:$0xff]
        %v524 = vld [vmem:[%s250 + $0x2d0] sm:$0xff]
        %v525 = vld [vmem:[%s250 + $0x2d8] sm:$0xff]
        %v526 = vld [vmem:[%s250 + $0x2e0] sm:$0xff]
        %v527 = vld [vmem:[%s250 + $0x2e8] sm:$0xff]
        %v528 = vld [vmem:[%s250 + $0x2f0] sm:$0xff]
        %v529 = vld [vmem:[%s250 + $0x2f8] sm:$0xff]
        %v530 = vld [vmem:[%s250 + $0x300] sm:$0xff]
        %v531 = vld [vmem:[%s250 + $0x308] sm:$0xff]
        %v532 = vld [vmem:[%s250 + $0x310] sm:$0xff]
        %v533 = vld [vmem:[%s250 + $0x318] sm:$0xff]
        %v534 = vld [vmem:[%s250 + $0x320] sm:$0xff]
        %v535 = vld [vmem:[%s250 + $0x328] sm:$0xff]
        %v536 = vld [vmem:[%s250 + $0x330] sm:$0xff]
        %v537 = vld [vmem:[%s250 + $0x338] sm:$0xff]
        %v538 = vld [vmem:[%s250 + $0x340] sm:$0xff]
        %v539 = vld [vmem:[%s250 + $0x348] sm:$0xff]
        %v540 = vld [vmem:[%s250 + $0x350] sm:$0xff]
        %v541 = vld [vmem:[%s250 + $0x358] sm:$0xff]
        %v542 = vld [vmem:[%s250 + $0x360] sm:$0xff]
        %v543 = vld [vmem:[%s250 + $0x368] sm:$0xff]
        %v544 = vld [vmem:[%s250 + $0x370] sm:$0xff]
        %v545 = vld [vmem:[%s250 + $0x378] sm:$0xff]
        %v546 = vld [vmem:[%s250 + $0x380] sm:$0xff]
        %v547 = vld [vmem:[%s250 + $0x388] sm:$0xff]
        %v548 = vld [vmem:[%s250 + $0x390] sm:$0xff]
        %v549 = vld [vmem:[%s250 + $0x398] sm:$0xff]
        %v550 = vld [vmem:[%s250 + $0x3a0] sm:$0xff]
        %v551 = vld [vmem:[%s250 + $0x3a8] sm:$0xff]
        %v552 = vld [vmem:[%s250 + $0x3b0] sm:$0xff]
        %v553 = vld [vmem:[%s250 + $0x3b8] sm:$0xff]
        %v554 = vld [vmem:[%s250 + $0x3c0] sm:$0xff]
        %v555 = vld [vmem:[%s250 + $0x3c8] sm:$0xff]
        %v556 = vld [vmem:[%s250 + $0x3d0] sm:$0xff]
        %v557 = vld [vmem:[%s250 + $0x3d8] sm:$0xff]
        %v558 = vld [vmem:[%s250 + $0x3e0] sm:$0xff]
        %v559 = vld [vmem:[%s250 + $0x3e8] sm:$0xff]
        %v560 = vld [vmem:[%s250 + $0x3f0] sm:$0xff]
        %v561 = vld [vmem:[%s250 + $0x3f8] sm:$0xff]
        %v562 = vld [vmem:[%s250 + $0x400] sm:$0xff]
        %v563 = vld [vmem:[%s250 + $0x408] sm:$0xff]
        %v564 = vld [vmem:[%s250 + $0x410] sm:$0xff]
        %v565 = vld [vmem:[%s250 + $0x418] sm:$0xff]
        %v566 = vld [vmem:[%s250 + $0x420] sm:$0xff]
        %v567 = vld [vmem:[%s250 + $0x428] sm:$0xff]
        %v568 = vld [vmem:[%s250 + $0x430] sm:$0xff]
        %v569 = vld [vmem:[%s250 + $0x438] sm:$0xff]
        %v570 = vld [vmem:[%s250 + $0x440] sm:$0xff]
        %v571 = vld [vmem:[%s250 + $0x448] sm:$0xff]
        %v572 = vld [vmem:[%s250 + $0x450] sm:$0xff]
        %v573 = vld [vmem:[%s250 + $0x458] sm:$0xff]
        %v574 = vld [vmem:[%s250 + $0x460] sm:$0xff]
        %v575 = vld [vmem:[%s250 + $0x468] sm:$0xff]
        %v576 = vld [vmem:[%s250 + $0x470] sm:$0xff]
        %v577 = vld [vmem:[%s250 + $0x478] sm:$0xff]
        %v578 = vld [vmem:[%s250 + $0x480] sm:$0xff]
        %v579 = vld [vmem:[%s250 + $0x488] sm:$0xff]
        %v580 = vld [vmem:[%s250 + $0x490] sm:$0xff]
        %v581 = vld [vmem:[%s250 + $0x498] sm:$0xff]
        %v582 = vld [vmem:[%s250 + $0x4a0] sm:$0xff]
        %v583 = vld [vmem:[%s250 + $0x4a8] sm:$0xff]
        %v584 = vld [vmem:[%s250 + $0x4b0] sm:$0xff]
        %v585 = vld [vmem:[%s250 + $0x4b8] sm:$0xff]
        %v586 = vld [vmem:[%s250 + $0x4c0] sm:$0xff]
        %v587 = vld [vmem:[%s250 + $0x4c8] sm:$0xff]
        %v588 = vld [vmem:[%s250 + $0x4d0] sm:$0xff]
        %v589 = vld [vmem:[%s250 + $0x4d8] sm:$0xff]
        %v590 = vld [vmem:[%s250 + $0x4e0] sm:$0xff]
        %v591 = vld [vmem:[%s250 + $0x4e8] sm:$0xff]
        %v592 = vld [vmem:[%s250 + $0x4f0] sm:$0xff]
        %v593 = vld [vmem:[%s250 + $0x4f8] sm:$0xff]
        %v594 = vld [vmem:[%s250 + $0x500] sm:$0xff]
        %v595 = vld [vmem:[%s250 + $0x508] sm:$0xff]
        %v596 = vld [vmem:[%s250 + $0x510] sm:$0xff]
        %v597 = vld [vmem:[%s250 + $0x518] sm:$0xff]
        %v598 = vld [vmem:[%s250 + $0x520] sm:$0xff]
        %v599 = vld [vmem:[%s250 + $0x528] sm:$0xff]
        %v600 = vld [vmem:[%s250 + $0x530] sm:$0xff]
        %v601 = vld [vmem:[%s250 + $0x538] sm:$0xff]
        %v602 = vld [vmem:[%s250 + $0x540] sm:$0xff]
        %v603 = vld [vmem:[%s250 + $0x548] sm:$0xff]
        %v604 = vld [vmem:[%s250 + $0x550] sm:$0xff]
        %v605 = vld [vmem:[%s250 + $0x558] sm:$0xff]
        %v606 = vld [vmem:[%s250 + $0x560] sm:$0xff]
        %v607 = vld [vmem:[%s250 + $0x568] sm:$0xff]
        %v608 = vld [vmem:[%s250 + $0x570] sm:$0xff]
        %v609 = vld [vmem:[%s250 + $0x578] sm:$0xff]
        %v610 = vld [vmem:[%s250 + $0x580] sm:$0xff]
        %v611 = vld [vmem:[%s250 + $0x588] sm:$0xff]
        %v612 = vld [vmem:[%s250 + $0x590] sm:$0xff]
        %v613 = vld [vmem:[%s250 + $0x598] sm:$0xff]
        %v614 = vld [vmem:[%s250 + $0x5a0] sm:$0xff]
        %v615 = vld [vmem:[%s250 + $0x5a8] sm:$0xff]
        %v616 = vld [vmem:[%s250 + $0x5b0] sm:$0xff]
        %v617 = vld [vmem:[%s250 + $0x5b8] sm:$0xff]
        %v618 = vld [vmem:[%s250 + $0x5c0] sm:$0xff]
        %v619 = vld [vmem:[%s250 + $0x5c8] sm:$0xff]
        %v620 = vld [vmem:[%s250 + $0x5d0] sm:$0xff]
        %v621 = vld [vmem:[%s250 + $0x5d8] sm:$0xff]
        %v622 = vld [vmem:[%s250 + $0x5e0] sm:$0xff]
        %v623 = vld [vmem:[%s250 + $0x5e8] sm:$0xff]
        %v624 = vld [vmem:[%s250 + $0x5f0] sm:$0xff]
        %v625 = vld [vmem:[%s250 + $0x5f8] sm:$0xff]
        %v626 = vld [vmem:[%s250 + $0x600] sm:$0xff]
        %v627 = vld [vmem:[%s250 + $0x608] sm:$0xff]
        %v628 = vld [vmem:[%s250 + $0x610] sm:$0xff]
        %v629 = vld [vmem:[%s250 + $0x618] sm:$0xff]
        %v630 = vld [vmem:[%s250 + $0x620] sm:$0xff]
        %v631 = vld [vmem:[%s250 + $0x628] sm:$0xff]
        %v632 = vld [vmem:[%s250 + $0x630] sm:$0xff]
        %v633 = vld [vmem:[%s250 + $0x638] sm:$0xff]
        %v634 = vld [vmem:[%s250 + $0x640] sm:$0xff]
        %v635 = vld [vmem:[%s250 + $0x648] sm:$0xff]
        %v636 = vld [vmem:[%s250 + $0x650] sm:$0xff]
        %v637 = vld [vmem:[%s250 + $0x658] sm:$0xff]
        %v638 = vld [vmem:[%s250 + $0x660] sm:$0xff]
        %v639 = vld [vmem:[%s250 + $0x668] sm:$0xff]
        %v640 = vld [vmem:[%s250 + $0x670] sm:$0xff]
        %v641 = vld [vmem:[%s250 + $0x678] sm:$0xff]
        %v642 = vld [vmem:[%s250 + $0x680] sm:$0xff]
        %v643 = vld [vmem:[%s250 + $0x688] sm:$0xff]
        %v644 = vld [vmem:[%s250 + $0x690] sm:$0xff]
        %v645 = vld [vmem:[%s250 + $0x698] sm:$0xff]
        %v646 = vld [vmem:[%s250 + $0x6a0] sm:$0xff]
        %v647 = vld [vmem:[%s250 + $0x6a8] sm:$0xff]
        %v648 = vld [vmem:[%s250 + $0x6b0] sm:$0xff]
        %v649 = vld [vmem:[%s250 + $0x6b8] sm:$0xff]
        %v650 = vld [vmem:[%s250 + $0x6c0] sm:$0xff]
        %v651 = vld [vmem:[%s250 + $0x6c8] sm:$0xff]
        %v652 = vld [vmem:[%s250 + $0x6d0] sm:$0xff]
        %v653 = vld [vmem:[%s250 + $0x6d8] sm:$0xff]
        %v654 = vld [vmem:[%s250 + $0x6e0] sm:$0xff]
        %v655 = vld [vmem:[%s250 + $0x6e8] sm:$0xff]
        %v656 = vld [vmem:[%s250 + $0x6f0] sm:$0xff]
        %v657 = vld [vmem:[%s250 + $0x6f8] sm:$0xff]
        %v658 = vld [vmem:[%s250 + $0x700] sm:$0xff]
        %v659 = vld [vmem:[%s250 + $0x708] sm:$0xff]
        %v660 = vld [vmem:[%s250 + $0x710] sm:$0xff]
        %v661 = vld [vmem:[%s250 + $0x718] sm:$0xff]
        %v662 = vld [vmem:[%s250 + $0x720] sm:$0xff]
        %v663 = vld [vmem:[%s250 + $0x728] sm:$0xff]
        %v664 = vld [vmem:[%s250 + $0x730] sm:$0xff]
        %v665 = vld [vmem:[%s250 + $0x738] sm:$0xff]
        %v666 = vld [vmem:[%s250 + $0x740] sm:$0xff]
        %v667 = vld [vmem:[%s250 + $0x748] sm:$0xff]
        %v668 = vld [vmem:[%s250 + $0x750] sm:$0xff]
        %v669 = vld [vmem:[%s250 + $0x758] sm:$0xff]
        %v670 = vld [vmem:[%s250 + $0x760] sm:$0xff]
        %v671 = vld [vmem:[%s250 + $0x768] sm:$0xff]
        %v672 = vld [vmem:[%s250 + $0x770] sm:$0xff]
        %v673 = vld [vmem:[%s250 + $0x778] sm:$0xff]
        %v674 = vld [vmem:[%s250 + $0x780] sm:$0xff]
        %v675 = vld [vmem:[%s250 + $0x788] sm:$0xff]
        %v676 = vld [vmem:[%s250 + $0x790] sm:$0xff]
        %v677 = vld [vmem:[%s250 + $0x798] sm:$0xff]
        %v678 = vld [vmem:[%s250 + $0x7a0] sm:$0xff]
        %v679 = vld [vmem:[%s250 + $0x7a8] sm:$0xff]
        %v680 = vld [vmem:[%s250 + $0x7b0] sm:$0xff]
        %v681 = vld [vmem:[%s250 + $0x7b8] sm:$0xff]
        %v682 = vld [vmem:[%s250 + $0x7c0] sm:$0xff]
        %v683 = vld [vmem:[%s250 + $0x7c8] sm:$0xff]
        %v684 = vld [vmem:[%s250 + $0x7d0] sm:$0xff]
        %v685 = vld [vmem:[%s250 + $0x7d8] sm:$0xff]
        %v686 = vld [vmem:[%s250 + $0x7e0] sm:$0xff]
        %v687 = vld [vmem:[%s250 + $0x7e8] sm:$0xff]
        %v688 = vld [vmem:[%s250 + $0x7f0] sm:$0xff]
        %v689 = vld [vmem:[%s250 + $0x7f8] sm:$0xff]
        %v690 = vld [vmem:[%s250 + $0x800] sm:$0xff]
        %v691 = vld [vmem:[%s250 + $0x808] sm:$0xff]
        %v692 = vld [vmem:[%s250 + $0x810] sm:$0xff]
        %v693 = vld [vmem:[%s250 + $0x818] sm:$0xff]
        %v694 = vld [vmem:[%s250 + $0x820] sm:$0xff]
        %v695 = vld [vmem:[%s250 + $0x828] sm:$0xff]
        %v696 = vld [vmem:[%s250 + $0x830] sm:$0xff]
        %v697 = vld [vmem:[%s250 + $0x838] sm:$0xff]
        %v698 = vld [vmem:[%s250 + $0x840] sm:$0xff]
        %v699 = vld [vmem:[%s250 + $0x848] sm:$0xff]
        %v700 = vld [vmem:[%s250 + $0x850] sm:$0xff]
        %v701 = vld [vmem:[%s250 + $0x858] sm:$0xff]
        %v702 = vld [vmem:[%s250 + $0x860] sm:$0xff]
        %v703 = vld [vmem:[%s250 + $0x868] sm:$0xff]
        %v704 = vld [vmem:[%s250 + $0x870] sm:$0xff]
        %v705 = vld [vmem:[%s250 + $0x878] sm:$0xff]
        %v706 = vld [vmem:[%s250 + $0x880] sm:$0xff]
        %v707 = vld [vmem:[%s250 + $0x888] sm:$0xff]
        %v708 = vld [vmem:[%s250 + $0x890] sm:$0xff]
        %v709 = vld [vmem:[%s250 + $0x898] sm:$0xff]
        %v710 = vld [vmem:[%s250 + $0x8a0] sm:$0xff]
        %v711 = vld [vmem:[%s250 + $0x8a8] sm:$0xff]
        %v712 = vld [vmem:[%s250 + $0x8b0] sm:$0xff]
        %v713 = vld [vmem:[%s250 + $0x8b8] sm:$0xff]
        %v714 = vld [vmem:[%s250 + $0x8c0] sm:$0xff]
        %v715 = vld [vmem:[%s250 + $0x8c8] sm:$0xff]
        %v716 = vld [vmem:[%s250 + $0x8d0] sm:$0xff]
        %v717 = vld [vmem:[%s250 + $0x8d8] sm:$0xff]
        %v718 = vld [vmem:[%s250 + $0x8e0] sm:$0xff]
        %v719 = vld [vmem:[%s250 + $0x8e8] sm:$0xff]
        %v720 = vld [vmem:[%s250 + $0x8f0] sm:$0xff]
        %v721 = vld [vmem:[%s250 + $0x8f8] sm:$0xff]
        %v722 = vld [vmem:[%s250 + $0x900] sm:$0xff]
        %v723 = vld [vmem:[%s250 + $0x908] sm:$0xff]
        %v724 = vld [vmem:[%s250 + $0x910] sm:$0xff]
        %v725 = vld [vmem:[%s250 + $0x918] sm:$0xff]
        %v726 = vld [vmem:[%s250 + $0x920] sm:$0xff]
        %v727 = vld [vmem:[%s250 + $0x928] sm:$0xff]
        %v728 = vld [vmem:[%s250 + $0x930] sm:$0xff]
        %v729 = vld [vmem:[%s250 + $0x938] sm:$0xff]
        %v730 = vld [vmem:[%s250 + $0x940] sm:$0xff]
        %v731 = vld [vmem:[%s250 + $0x948] sm:$0xff]
        %v732 = vld [vmem:[%s250 + $0x950] sm:$0xff]
        %v733 = vld [vmem:[%s250 + $0x958] sm:$0xff]
        %v734 = vld [vmem:[%s250 + $0x960] sm:$0xff]
        %v735 = vld [vmem:[%s250 + $0x968] sm:$0xff]
        %v736 = vld [vmem:[%s250 + $0x970] sm:$0xff]
        %v737 = vld [vmem:[%s250 + $0x978] sm:$0xff]
        %v738 = vld [vmem:[%s250 + $0x980] sm:$0xff]
        %v739 = vld [vmem:[%s250 + $0x988] sm:$0xff]
        %v740 = vld [vmem:[%s250 + $0x990] sm:$0xff]
        %v741 = vld [vmem:[%s250 + $0x998] sm:$0xff]
        %v742 = vld [vmem:[%s250 + $0x9a0] sm:$0xff]
        %v743 = vld [vmem:[%s250 + $0x9a8] sm:$0xff]
        %v744 = vld [vmem:[%s250 + $0x9b0] sm:$0xff]
        %v745 = vld [vmem:[%s250 + $0x9b8] sm:$0xff]
        %v746 = vld [vmem:[%s250 + $0x9c0] sm:$0xff]
        %v747 = vld [vmem:[%s250 + $0x9c8] sm:$0xff]
        %v748 = vld [vmem:[%s250 + $0x9d0] sm:$0xff]
        %v749 = vld [vmem:[%s250 + $0x9d8] sm:$0xff]
        %v750 = vld [vmem:[%s250 + $0x9e0] sm:$0xff]
        %v751 = vld [vmem:[%s250 + $0x9e8] sm:$0xff]
        %v752 = vld [vmem:[%s250 + $0x9f0] sm:$0xff]
        %v753 = vld [vmem:[%s250 + $0x9f8] sm:$0xff]
        %v754 = vld [vmem:[%s250 + $0xa00] sm:$0xff]
        %v755 = vld [vmem:[%s250 + $0xa08] sm:$0xff]
        %v756 = vld [vmem:[%s250 + $0xa10] sm:$0xff]
        %v757 = vld [vmem:[%s250 + $0xa18] sm:$0xff]
        %v758 = vld [vmem:[%s250 + $0xa20] sm:$0xff]
        %v759 = vld [vmem:[%s250 + $0xa28] sm:$0xff]
        %v760 = vld [vmem:[%s250 + $0xa30] sm:$0xff]
        %v761 = vld [vmem:[%s250 + $0xa38] sm:$0xff]
        %v762 = vld [vmem:[%s250 + $0xa40] sm:$0xff]
        %v763 = vld [vmem:[%s250 + $0xa48] sm:$0xff]
        %v764 = vld [vmem:[%s250 + $0xa50] sm:$0xff]
        %v765 = vld [vmem:[%s250 + $0xa58] sm:$0xff]
        %v766 = vld [vmem:[%s250 + $0xa60] sm:$0xff]
        %v767 = vld [vmem:[%s250 + $0xa68] sm:$0xff]
        %v768 = vld [vmem:[%s250 + $0xa70] sm:$0xff]
        %v769 = vld [vmem:[%s250 + $0xa78] sm:$0xff]
        %v770 = vld [vmem:[%s250 + $0xa80] sm:$0xff]
        %v771 = vld [vmem:[%s250 + $0xa88] sm:$0xff]
        %v772 = vld [vmem:[%s250 + $0xa90] sm:$0xff]
        %v773 = vld [vmem:[%s250 + $0xa98] sm:$0xff]
        %v774 = vld [vmem:[%s250 + $0xaa0] sm:$0xff]
        %v775 = vld [vmem:[%s250 + $0xaa8] sm:$0xff]
        %v776 = vld [vmem:[%s250 + $0xab0] sm:$0xff]
        %v777 = vld [vmem:[%s250 + $0xab8] sm:$0xff]
        %v778 = vld [vmem:[%s250 + $0xac0] sm:$0xff]
        %v779 = vld [vmem:[%s250 + $0xac8] sm:$0xff]
        %v780 = vld [vmem:[%s250 + $0xad0] sm:$0xff]
        %v781 = vld [vmem:[%s250 + $0xad8] sm:$0xff]
        %v782 = vld [vmem:[%s250 + $0xae0] sm:$0xff]
        %v783 = vld [vmem:[%s250 + $0xae8] sm:$0xff]
        %v784 = vld [vmem:[%s250 + $0xaf0] sm:$0xff]
        %v785 = vld [vmem:[%s250 + $0xaf8] sm:$0xff]
        %v786 = vld [vmem:[%s250 + $0xb00] sm:$0xff]
        %v787 = vld [vmem:[%s250 + $0xb08] sm:$0xff]
        %v788 = vld [vmem:[%s250 + $0xb10] sm:$0xff]
        %v789 = vld [vmem:[%s250 + $0xb18] sm:$0xff]
        %v790 = vld [vmem:[%s250 + $0xb20] sm:$0xff]
        %v791 = vld [vmem:[%s250 + $0xb28] sm:$0xff]
        %v792 = vld [vmem:[%s250 + $0xb30] sm:$0xff]
        %v793 = vld [vmem:[%s250 + $0xb38] sm:$0xff]
        %v794 = vld [vmem:[%s250 + $0xb40] sm:$0xff]
        %v795 = vld [vmem:[%s250 + $0xb48] sm:$0xff]
        %v796 = vld [vmem:[%s250 + $0xb50] sm:$0xff]
        %v797 = vld [vmem:[%s250 + $0xb58] sm:$0xff]
        %v798 = vld [vmem:[%s250 + $0xb60] sm:$0xff]
        %v799 = vld [vmem:[%s250 + $0xb68] sm:$0xff]
        %v800 = vld [vmem:[%s250 + $0xb70] sm:$0xff]
        %v801 = vld [vmem:[%s250 + $0xb78] sm:$0xff]
        %v802 = vld [vmem:[%s250 + $0xb80] sm:$0xff]
        %v803 = vld [vmem:[%s250 + $0xb88] sm:$0xff]
        %v804 = vld [vmem:[%s250 + $0xb90] sm:$0xff]
        %v805 = vld [vmem:[%s250 + $0xb98] sm:$0xff]
        %v806 = vld [vmem:[%s250 + $0xba0] sm:$0xff]
        %v807 = vld [vmem:[%s250 + $0xba8] sm:$0xff]
        %v808 = vld [vmem:[%s250 + $0xbb0] sm:$0xff]
        %v809 = vld [vmem:[%s250 + $0xbb8] sm:$0xff]
        %v810 = vld [vmem:[%s250 + $0xbc0] sm:$0xff]
        %v811 = vld [vmem:[%s250 + $0xbc8] sm:$0xff]
        %v812 = vld [vmem:[%s250 + $0xbd0] sm:$0xff]
        %v813 = vld [vmem:[%s250 + $0xbd8] sm:$0xff]
        %v814 = vld [vmem:[%s250 + $0xbe0] sm:$0xff]
        %v815 = vld [vmem:[%s250 + $0xbe8] sm:$0xff]
        %v816 = vld [vmem:[%s250 + $0xbf0] sm:$0xff]
        %v817 = vld [vmem:[%s250 + $0xbf8] sm:$0xff]
        %v818 = vld [vmem:[%s250 + $0xc00] sm:$0xff]
        %v819 = vld [vmem:[%s250 + $0xc08] sm:$0xff]
        %v820 = vld [vmem:[%s250 + $0xc10] sm:$0xff]
        %v821 = vld [vmem:[%s250 + $0xc18] sm:$0xff]
        %v822 = vld [vmem:[%s250 + $0xc20] sm:$0xff]
        %v823 = vld [vmem:[%s250 + $0xc28] sm:$0xff]
        %v824 = vld [vmem:[%s250 + $0xc30] sm:$0xff]
        %v825 = vld [vmem:[%s250 + $0xc38] sm:$0xff]
        %v826 = vld [vmem:[%s250 + $0xc40] sm:$0xff]
        %v827 = vld [vmem:[%s250 + $0xc48] sm:$0xff]
        %v828 = vld [vmem:[%s250 + $0xc50] sm:$0xff]
        %v829 = vld [vmem:[%s250 + $0xc58] sm:$0xff]
        %v830 = vld [vmem:[%s250 + $0xc60] sm:$0xff]
        %v831 = vld [vmem:[%s250 + $0xc68] sm:$0xff]
        %v832 = vld [vmem:[%s250 + $0xc70] sm:$0xff]
        %v833 = vld [vmem:[%s250 + $0xc78] sm:$0xff]
        %v834 = vld [vmem:[%s250 + $0xc80] sm:$0xff]
        %v835 = vld [vmem:[%s250 + $0xc88] sm:$0xff]
        %v836 = vld [vmem:[%s250 + $0xc90] sm:$0xff]
        %v837 = vld [vmem:[%s250 + $0xc98] sm:$0xff]
        %v838 = vld [vmem:[%s250 + $0xca0] sm:$0xff]
        %v839 = vld [vmem:[%s250 + $0xca8] sm:$0xff]
        %v840 = vld [vmem:[%s250 + $0xcb0] sm:$0xff]
        %v841 = vld [vmem:[%s250 + $0xcb8] sm:$0xff]
        %v842 = vld [vmem:[%s250 + $0xcc0] sm:$0xff]
        %v843 = vld [vmem:[%s250 + $0xcc8] sm:$0xff]
        %v844 = vld [vmem:[%s250 + $0xcd0] sm:$0xff]
        %v845 = vld [vmem:[%s250 + $0xcd8] sm:$0xff]
        %v846 = vld [vmem:[%s250 + $0xce0] sm:$0xff]
        %v847 = vld [vmem:[%s250 + $0xce8] sm:$0xff]
        %v848 = vld [vmem:[%s250 + $0xcf0] sm:$0xff]
        %v849 = vld [vmem:[%s250 + $0xcf8] sm:$0xff]
        %v850 = vld [vmem:[%s250 + $0xd00] sm:$0xff]
        %v851 = vld [vmem:[%s250 + $0xd08] sm:$0xff]
        %v852 = vld [vmem:[%s250 + $0xd10] sm:$0xff]
        %v853 = vld [vmem:[%s250 + $0xd18] sm:$0xff]
        %v854 = vld [vmem:[%s250 + $0xd20] sm:$0xff]
        %v855 = vld [vmem:[%s250 + $0xd28] sm:$0xff]
        %v856 = vld [vmem:[%s250 + $0xd30] sm:$0xff]
        %v857 = vld [vmem:[%s250 + $0xd38] sm:$0xff]
        %v858 = vld [vmem:[%s250 + $0xd40] sm:$0xff]
        %v859 = vld [vmem:[%s250 + $0xd48] sm:$0xff]
        %v860 = vld [vmem:[%s250 + $0xd50] sm:$0xff]
        %v861 = vld [vmem:[%s250 + $0xd58] sm:$0xff]
        %v862 = vld [vmem:[%s250 + $0xd60] sm:$0xff]
        %v863 = vld [vmem:[%s250 + $0xd68] sm:$0xff]
        %v864 = vld [vmem:[%s250 + $0xd70] sm:$0xff]
        %v865 = vld [vmem:[%s250 + $0xd78] sm:$0xff]
        %v866 = vld [vmem:[%s250 + $0xd80] sm:$0xff]
        %v867 = vld [vmem:[%s250 + $0xd88] sm:$0xff]
        %v868 = vld [vmem:[%s250 + $0xd90] sm:$0xff]
        %v869 = vld [vmem:[%s250 + $0xd98] sm:$0xff]
        %v870 = vld [vmem:[%s250 + $0xda0] sm:$0xff]
        %v871 = vld [vmem:[%s250 + $0xda8] sm:$0xff]
        %v872 = vld [vmem:[%s250 + $0xdb0] sm:$0xff]
        %v873 = vld [vmem:[%s250 + $0xdb8] sm:$0xff]
        %v874 = vld [vmem:[%s250 + $0xdc0] sm:$0xff]
        %v875 = vld [vmem:[%s250 + $0xdc8] sm:$0xff]
        %v876 = vld [vmem:[%s250 + $0xdd0] sm:$0xff]
        %v877 = vld [vmem:[%s250 + $0xdd8] sm:$0xff]
        %v878 = vld [vmem:[%s250 + $0xde0] sm:$0xff]
        %v879 = vld [vmem:[%s250 + $0xde8] sm:$0xff]
        %v880 = vld [vmem:[%s250 + $0xdf0] sm:$0xff]
        %v881 = vld [vmem:[%s250 + $0xdf8] sm:$0xff]
        %v882 = vld [vmem:[%s250 + $0xe00] sm:$0xff]
        %v883 = vld [vmem:[%s250 + $0xe08] sm:$0xff]
        %v884 = vld [vmem:[%s250 + $0xe10] sm:$0xff]
        %v885 = vld [vmem:[%s250 + $0xe18] sm:$0xff]
        %v886 = vld [vmem:[%s250 + $0xe20] sm:$0xff]
        %v887 = vld [vmem:[%s250 + $0xe28] sm:$0xff]
        %v888 = vld [vmem:[%s250 + $0xe30] sm:$0xff]
        %v889 = vld [vmem:[%s250 + $0xe38] sm:$0xff]
        %v890 = vld [vmem:[%s250 + $0xe40] sm:$0xff]
        %v891 = vld [vmem:[%s250 + $0xe48] sm:$0xff]
        %v892 = vld [vmem:[%s250 + $0xe50] sm:$0xff]
        %v893 = vld [vmem:[%s250 + $0xe58] sm:$0xff]
        %v894 = vld [vmem:[%s250 + $0xe60] sm:$0xff]
        %v895 = vld [vmem:[%s250 + $0xe68] sm:$0xff]
        %v896 = vld [vmem:[%s250 + $0xe70] sm:$0xff]
        %v897 = vld [vmem:[%s250 + $0xe78] sm:$0xff]
        %v898 = vld [vmem:[%s250 + $0xe80] sm:$0xff]
        %v899 = vld [vmem:[%s250 + $0xe88] sm:$0xff]
        %v900 = vld [vmem:[%s250 + $0xe90] sm:$0xff]
        %v901 = vld [vmem:[%s250 + $0xe98] sm:$0xff]
        %v902 = vld [vmem:[%s250 + $0xea0] sm:$0xff]
        %v903 = vld [vmem:[%s250 + $0xea8] sm:$0xff]
        %v904 = vld [vmem:[%s250 + $0xeb0] sm:$0xff]
        %v905 = vld [vmem:[%s250 + $0xeb8] sm:$0xff]
        %v906 = vld [vmem:[%s250 + $0xec0] sm:$0xff]
        %v907 = vld [vmem:[%s250 + $0xec8] sm:$0xff]
        %v908 = vld [vmem:[%s250 + $0xed0] sm:$0xff]
        %v909 = vld [vmem:[%s250 + $0xed8] sm:$0xff]
        %v910 = vld [vmem:[%s250 + $0xee0] sm:$0xff]
        %v911 = vld [vmem:[%s250 + $0xee8] sm:$0xff]
        %v912 = vld [vmem:[%s250 + $0xef0] sm:$0xff]
        %v913 = vld [vmem:[%s250 + $0xef8] sm:$0xff]
        %v914 = vld [vmem:[%s250 + $0xf00] sm:$0xff]
        %v915 = vld [vmem:[%s250 + $0xf08] sm:$0xff]
        %v916 = vld [vmem:[%s250 + $0xf10] sm:$0xff]
        %v917 = vld [vmem:[%s250 + $0xf18] sm:$0xff]
        %v918 = vld [vmem:[%s250 + $0xf20] sm:$0xff]
        %v919 = vld [vmem:[%s250 + $0xf28] sm:$0xff]
        %v920 = vld [vmem:[%s250 + $0xf30] sm:$0xff]
        %v921 = vld [vmem:[%s250 + $0xf38] sm:$0xff]
        %v922 = vld [vmem:[%s250 + $0xf40] sm:$0xff]
        %v923 = vld [vmem:[%s250 + $0xf48] sm:$0xff]
        %v924 = vld [vmem:[%s250 + $0xf50] sm:$0xff]
        %v925 = vld [vmem:[%s250 + $0xf58] sm:$0xff]
        %v926 = vld [vmem:[%s250 + $0xf60] sm:$0xff]
        %v927 = vld [vmem:[%s250 + $0xf68] sm:$0xff]
        %v928 = vld [vmem:[%s250 + $0xf70] sm:$0xff]
        %v929 = vld [vmem:[%s250 + $0xf78] sm:$0xff]
        %v930 = vld [vmem:[%s250 + $0xf80] sm:$0xff]
        %v931 = vld [vmem:[%s250 + $0xf88] sm:$0xff]
        %v932 = vld [vmem:[%s250 + $0xf90] sm:$0xff]
        %v933 = vld [vmem:[%s250 + $0xf98] sm:$0xff]
        %v934 = vld [vmem:[%s250 + $0xfa0] sm:$0xff]
        %v935 = vld [vmem:[%s250 + $0xfa8] sm:$0xff]
        %v936 = vld [vmem:[%s250 + $0xfb0] sm:$0xff]
        %v937 = vld [vmem:[%s250 + $0xfb8] sm:$0xff]
        %v938 = vld [vmem:[%s250 + $0xfc0] sm:$0xff]
        %v939 = vld [vmem:[%s250 + $0xfc8] sm:$0xff]
        %v940 = vld [vmem:[%s250 + $0xfd0] sm:$0xff]
        %v941 = vld [vmem:[%s250 + $0xfd8] sm:$0xff]
        %v942 = vld [vmem:[%s250 + $0xfe0] sm:$0xff]
        %v943 = vld [vmem:[%s250 + $0xfe8] sm:$0xff]
        %v944 = vld [vmem:[%s250 + $0xff0] sm:$0xff]
        %v945 = vld [vmem:[%s250 + $0xff8] sm:$0xff]
        %v946 = vunpack.c.l.s8.bf16 %v434
        %v947 = vunpack.c.l.s8.bf16 %v435
        %v948 = vunpack.c.l.s8.bf16 %v436
        %v949 = vunpack.c.l.s8.bf16 %v437
        %v950 = vunpack.c.l.s8.bf16 %v438
        %v951 = vunpack.c.l.s8.bf16 %v439
        %v952 = vunpack.c.l.s8.bf16 %v440
        %v953 = vunpack.c.l.s8.bf16 %v441
        %v954 = vunpack.c.h.s8.bf16 %v434
        %v955 = vunpack.c.h.s8.bf16 %v435
        %v956 = vunpack.c.h.s8.bf16 %v436
        %v957 = vunpack.c.h.s8.bf16 %v437
        %v958 = vunpack.c.h.s8.bf16 %v438
        %v959 = vunpack.c.h.s8.bf16 %v439
        %v960 = vunpack.c.h.s8.bf16 %v440
        %v961 = vunpack.c.h.s8.bf16 %v441
        %v962 = vunpack.c.l.s8.bf16 %v442
        %v963 = vunpack.c.l.s8.bf16 %v443
        %v964 = vunpack.c.l.s8.bf16 %v444
        %v965 = vunpack.c.l.s8.bf16 %v445
        %v966 = vunpack.c.l.s8.bf16 %v446
        %v967 = vunpack.c.l.s8.bf16 %v447
        %v968 = vunpack.c.l.s8.bf16 %v448
        %v969 = vunpack.c.l.s8.bf16 %v449
        %v970 = vunpack.c.h.s8.bf16 %v442
        %v971 = vunpack.c.h.s8.bf16 %v443
        %v972 = vunpack.c.h.s8.bf16 %v444
        %v973 = vunpack.c.h.s8.bf16 %v445
        %v974 = vunpack.c.h.s8.bf16 %v446
        %v975 = vunpack.c.h.s8.bf16 %v447
        %v976 = vunpack.c.h.s8.bf16 %v448
        %v977 = vunpack.c.h.s8.bf16 %v449
        %v978 = vunpack.c.l.s8.bf16 %v450
        %v979 = vunpack.c.l.s8.bf16 %v451
        %v980 = vunpack.c.l.s8.bf16 %v452
        %v981 = vunpack.c.l.s8.bf16 %v453
        %v982 = vunpack.c.l.s8.bf16 %v454
        %v983 = vunpack.c.l.s8.bf16 %v455
        %v984 = vunpack.c.l.s8.bf16 %v456
        %v985 = vunpack.c.l.s8.bf16 %v457
        %v986 = vunpack.c.h.s8.bf16 %v450
        %v987 = vunpack.c.h.s8.bf16 %v451
        %v988 = vunpack.c.h.s8.bf16 %v452
        %v989 = vunpack.c.h.s8.bf16 %v453
        %v990 = vunpack.c.h.s8.bf16 %v454
        %v991 = vunpack.c.h.s8.bf16 %v455
        %v992 = vunpack.c.h.s8.bf16 %v456
        %v993 = vunpack.c.h.s8.bf16 %v457
        %v994 = vunpack.c.l.s8.bf16 %v458
        %v995 = vunpack.c.l.s8.bf16 %v459
        %v996 = vunpack.c.l.s8.bf16 %v460
        %v997 = vunpack.c.l.s8.bf16 %v461
        %v998 = vunpack.c.l.s8.bf16 %v462
        %v999 = vunpack.c.l.s8.bf16 %v463
        %v1000 = vunpack.c.l.s8.bf16 %v464
        %v1001 = vunpack.c.l.s8.bf16 %v465
        %v1002 = vunpack.c.h.s8.bf16 %v458
        %v1003 = vunpack.c.h.s8.bf16 %v459
        %v1004 = vunpack.c.h.s8.bf16 %v460
        %v1005 = vunpack.c.h.s8.bf16 %v461
        %v1006 = vunpack.c.h.s8.bf16 %v462
        %v1007 = vunpack.c.h.s8.bf16 %v463
        %v1008 = vunpack.c.h.s8.bf16 %v464
        %v1009 = vunpack.c.h.s8.bf16 %v465
        %v1010 = vunpack.c.l.s8.bf16 %v466
        %v1011 = vunpack.c.l.s8.bf16 %v467
        %v1012 = vunpack.c.l.s8.bf16 %v468
        %v1013 = vunpack.c.l.s8.bf16 %v469
        %v1014 = vunpack.c.l.s8.bf16 %v470
        %v1015 = vunpack.c.l.s8.bf16 %v471
        %v1016 = vunpack.c.l.s8.bf16 %v472
        %v1017 = vunpack.c.l.s8.bf16 %v473
        %v1018 = vunpack.c.h.s8.bf16 %v466
        %v1019 = vunpack.c.h.s8.bf16 %v467
        %v1020 = vunpack.c.h.s8.bf16 %v468
        %v1021 = vunpack.c.h.s8.bf16 %v469
        %v1022 = vunpack.c.h.s8.bf16 %v470
        %v1023 = vunpack.c.h.s8.bf16 %v471
        %v1024 = vunpack.c.h.s8.bf16 %v472
        %v1025 = vunpack.c.h.s8.bf16 %v473
        %v1026 = vunpack.c.l.s8.bf16 %v474
        %v1027 = vunpack.c.l.s8.bf16 %v475
        %v1028 = vunpack.c.l.s8.bf16 %v476
        %v1029 = vunpack.c.l.s8.bf16 %v477
        %v1030 = vunpack.c.l.s8.bf16 %v478
        %v1031 = vunpack.c.l.s8.bf16 %v479
        %v1032 = vunpack.c.l.s8.bf16 %v480
        %v1033 = vunpack.c.l.s8.bf16 %v481
        %v1034 = vunpack.c.h.s8.bf16 %v474
        %v1035 = vunpack.c.h.s8.bf16 %v475
        %v1036 = vunpack.c.h.s8.bf16 %v476
        %v1037 = vunpack.c.h.s8.bf16 %v477
        %v1038 = vunpack.c.h.s8.bf16 %v478
        %v1039 = vunpack.c.h.s8.bf16 %v479
        %v1040 = vunpack.c.h.s8.bf16 %v480
        %v1041 = vunpack.c.h.s8.bf16 %v481
        %v1042 = vunpack.c.l.s8.bf16 %v482
        %v1043 = vunpack.c.l.s8.bf16 %v483
        %v1044 = vunpack.c.l.s8.bf16 %v484
        %v1045 = vunpack.c.l.s8.bf16 %v485
        %v1046 = vunpack.c.l.s8.bf16 %v486
        %v1047 = vunpack.c.l.s8.bf16 %v487
        %v1048 = vunpack.c.l.s8.bf16 %v488
        %v1049 = vunpack.c.l.s8.bf16 %v489
        %v1050 = vunpack.c.h.s8.bf16 %v482
        %v1051 = vunpack.c.h.s8.bf16 %v483
        %v1052 = vunpack.c.h.s8.bf16 %v484
        %v1053 = vunpack.c.h.s8.bf16 %v485
        %v1054 = vunpack.c.h.s8.bf16 %v486
        %v1055 = vunpack.c.h.s8.bf16 %v487
        %v1056 = vunpack.c.h.s8.bf16 %v488
        %v1057 = vunpack.c.h.s8.bf16 %v489
        %v1058 = vunpack.c.l.s8.bf16 %v490
        %v1059 = vunpack.c.l.s8.bf16 %v491
        %v1060 = vunpack.c.l.s8.bf16 %v492
        %v1061 = vunpack.c.l.s8.bf16 %v493
        %v1062 = vunpack.c.l.s8.bf16 %v494
        %v1063 = vunpack.c.l.s8.bf16 %v495
        %v1064 = vunpack.c.l.s8.bf16 %v496
        %v1065 = vunpack.c.l.s8.bf16 %v497
        %v1066 = vunpack.c.h.s8.bf16 %v490
        %v1067 = vunpack.c.h.s8.bf16 %v491
        %v1068 = vunpack.c.h.s8.bf16 %v492
        %v1069 = vunpack.c.h.s8.bf16 %v493
        %v1070 = vunpack.c.h.s8.bf16 %v494
        %v1071 = vunpack.c.h.s8.bf16 %v495
        %v1072 = vunpack.c.h.s8.bf16 %v496
        %v1073 = vunpack.c.h.s8.bf16 %v497
        %v1074 = vunpack.c.l.s8.bf16 %v498
        %v1075 = vunpack.c.l.s8.bf16 %v499
        %v1076 = vunpack.c.l.s8.bf16 %v500
        %v1077 = vunpack.c.l.s8.bf16 %v501
        %v1078 = vunpack.c.l.s8.bf16 %v502
        %v1079 = vunpack.c.l.s8.bf16 %v503
        %v1080 = vunpack.c.l.s8.bf16 %v504
        %v1081 = vunpack.c.l.s8.bf16 %v505
        %v1082 = vunpack.c.h.s8.bf16 %v498
        %v1083 = vunpack.c.h.s8.bf16 %v499
        %v1084 = vunpack.c.h.s8.bf16 %v500
        %v1085 = vunpack.c.h.s8.bf16 %v501
        %v1086 = vunpack.c.h.s8.bf16 %v502
        %v1087 = vunpack.c.h.s8.bf16 %v503
        %v1088 = vunpack.c.h.s8.bf16 %v504
        %v1089 = vunpack.c.h.s8.bf16 %v505
        %v1090 = vunpack.c.l.s8.bf16 %v506
        %v1091 = vunpack.c.l.s8.bf16 %v507
        %v1092 = vunpack.c.l.s8.bf16 %v508
        %v1093 = vunpack.c.l.s8.bf16 %v509
        %v1094 = vunpack.c.l.s8.bf16 %v510
        %v1095 = vunpack.c.l.s8.bf16 %v511
        %v1096 = vunpack.c.l.s8.bf16 %v512
        %v1097 = vunpack.c.l.s8.bf16 %v513
        %v1098 = vunpack.c.h.s8.bf16 %v506
        %v1099 = vunpack.c.h.s8.bf16 %v507
        %v1100 = vunpack.c.h.s8.bf16 %v508
        %v1101 = vunpack.c.h.s8.bf16 %v509
        %v1102 = vunpack.c.h.s8.bf16 %v510
        %v1103 = vunpack.c.h.s8.bf16 %v511
        %v1104 = vunpack.c.h.s8.bf16 %v512
        %v1105 = vunpack.c.h.s8.bf16 %v513
        %v1106 = vunpack.c.l.s8.bf16 %v514
        %v1107 = vunpack.c.l.s8.bf16 %v515
        %v1108 = vunpack.c.l.s8.bf16 %v516
        %v1109 = vunpack.c.l.s8.bf16 %v517
        %v1110 = vunpack.c.l.s8.bf16 %v518
        %v1111 = vunpack.c.l.s8.bf16 %v519
        %v1112 = vunpack.c.l.s8.bf16 %v520
        %v1113 = vunpack.c.l.s8.bf16 %v521
        %v1114 = vunpack.c.h.s8.bf16 %v514
        %v1115 = vunpack.c.h.s8.bf16 %v515
        %v1116 = vunpack.c.h.s8.bf16 %v516
        %v1117 = vunpack.c.h.s8.bf16 %v517
        %v1118 = vunpack.c.h.s8.bf16 %v518
        %v1119 = vunpack.c.h.s8.bf16 %v519
        %v1120 = vunpack.c.h.s8.bf16 %v520
        %v1121 = vunpack.c.h.s8.bf16 %v521
        %v1122 = vunpack.c.l.s8.bf16 %v522
        %v1123 = vunpack.c.l.s8.bf16 %v523
        %v1124 = vunpack.c.l.s8.bf16 %v524
        %v1125 = vunpack.c.l.s8.bf16 %v525
        %v1126 = vunpack.c.l.s8.bf16 %v526
        %v1127 = vunpack.c.l.s8.bf16 %v527
        %v1128 = vunpack.c.l.s8.bf16 %v528
        %v1129 = vunpack.c.l.s8.bf16 %v529
        %v1130 = vunpack.c.h.s8.bf16 %v522
        %v1131 = vunpack.c.h.s8.bf16 %v523
        %v1132 = vunpack.c.h.s8.bf16 %v524
        %v1133 = vunpack.c.h.s8.bf16 %v525
        %v1134 = vunpack.c.h.s8.bf16 %v526
        %v1135 = vunpack.c.h.s8.bf16 %v527
        %v1136 = vunpack.c.h.s8.bf16 %v528
        %v1137 = vunpack.c.h.s8.bf16 %v529
        %v1138 = vunpack.c.l.s8.bf16 %v530
        %v1139 = vunpack.c.l.s8.bf16 %v531
        %v1140 = vunpack.c.l.s8.bf16 %v532
        %v1141 = vunpack.c.l.s8.bf16 %v533
        %v1142 = vunpack.c.l.s8.bf16 %v534
        %v1143 = vunpack.c.l.s8.bf16 %v535
        %v1144 = vunpack.c.l.s8.bf16 %v536
        %v1145 = vunpack.c.l.s8.bf16 %v537
        %v1146 = vunpack.c.h.s8.bf16 %v530
        %v1147 = vunpack.c.h.s8.bf16 %v531
        %v1148 = vunpack.c.h.s8.bf16 %v532
        %v1149 = vunpack.c.h.s8.bf16 %v533
        %v1150 = vunpack.c.h.s8.bf16 %v534
        %v1151 = vunpack.c.h.s8.bf16 %v535
        %v1152 = vunpack.c.h.s8.bf16 %v536
        %v1153 = vunpack.c.h.s8.bf16 %v537
        %v1154 = vunpack.c.l.s8.bf16 %v538
        %v1155 = vunpack.c.l.s8.bf16 %v539
        %v1156 = vunpack.c.l.s8.bf16 %v540
        %v1157 = vunpack.c.l.s8.bf16 %v541
        %v1158 = vunpack.c.l.s8.bf16 %v542
        %v1159 = vunpack.c.l.s8.bf16 %v543
        %v1160 = vunpack.c.l.s8.bf16 %v544
        %v1161 = vunpack.c.l.s8.bf16 %v545
        %v1162 = vunpack.c.h.s8.bf16 %v538
        %v1163 = vunpack.c.h.s8.bf16 %v539
        %v1164 = vunpack.c.h.s8.bf16 %v540
        %v1165 = vunpack.c.h.s8.bf16 %v541
        %v1166 = vunpack.c.h.s8.bf16 %v542
        %v1167 = vunpack.c.h.s8.bf16 %v543
        %v1168 = vunpack.c.h.s8.bf16 %v544
        %v1169 = vunpack.c.h.s8.bf16 %v545
        %v1170 = vunpack.c.l.s8.bf16 %v546
        %v1171 = vunpack.c.l.s8.bf16 %v547
        %v1172 = vunpack.c.l.s8.bf16 %v548
        %v1173 = vunpack.c.l.s8.bf16 %v549
        %v1174 = vunpack.c.l.s8.bf16 %v550
        %v1175 = vunpack.c.l.s8.bf16 %v551
        %v1176 = vunpack.c.l.s8.bf16 %v552
        %v1177 = vunpack.c.l.s8.bf16 %v553
        %v1178 = vunpack.c.h.s8.bf16 %v546
        %v1179 = vunpack.c.h.s8.bf16 %v547
        %v1180 = vunpack.c.h.s8.bf16 %v548
        %v1181 = vunpack.c.h.s8.bf16 %v549
        %v1182 = vunpack.c.h.s8.bf16 %v550
        %v1183 = vunpack.c.h.s8.bf16 %v551
        %v1184 = vunpack.c.h.s8.bf16 %v552
        %v1185 = vunpack.c.h.s8.bf16 %v553
        %v1186 = vunpack.c.l.s8.bf16 %v554
        %v1187 = vunpack.c.l.s8.bf16 %v555
        %v1188 = vunpack.c.l.s8.bf16 %v556
        %v1189 = vunpack.c.l.s8.bf16 %v557
        %v1190 = vunpack.c.l.s8.bf16 %v558
        %v1191 = vunpack.c.l.s8.bf16 %v559
        %v1192 = vunpack.c.l.s8.bf16 %v560
        %v1193 = vunpack.c.l.s8.bf16 %v561
        %v1194 = vunpack.c.h.s8.bf16 %v554
        %v1195 = vunpack.c.h.s8.bf16 %v555
        %v1196 = vunpack.c.h.s8.bf16 %v556
        %v1197 = vunpack.c.h.s8.bf16 %v557
        %v1198 = vunpack.c.h.s8.bf16 %v558
        %v1199 = vunpack.c.h.s8.bf16 %v559
        %v1200 = vunpack.c.h.s8.bf16 %v560
        %v1201 = vunpack.c.h.s8.bf16 %v561
        %v1202 = vunpack.c.l.s8.bf16 %v562
        %v1203 = vunpack.c.l.s8.bf16 %v563
        %v1204 = vunpack.c.l.s8.bf16 %v564
        %v1205 = vunpack.c.l.s8.bf16 %v565
        %v1206 = vunpack.c.l.s8.bf16 %v566
        %v1207 = vunpack.c.l.s8.bf16 %v567
        %v1208 = vunpack.c.l.s8.bf16 %v568
        %v1209 = vunpack.c.l.s8.bf16 %v569
        %v1210 = vunpack.c.h.s8.bf16 %v562
        %v1211 = vunpack.c.h.s8.bf16 %v563
        %v1212 = vunpack.c.h.s8.bf16 %v564
        %v1213 = vunpack.c.h.s8.bf16 %v565
        %v1214 = vunpack.c.h.s8.bf16 %v566
        %v1215 = vunpack.c.h.s8.bf16 %v567
        %v1216 = vunpack.c.h.s8.bf16 %v568
        %v1217 = vunpack.c.h.s8.bf16 %v569
        %v1218 = vunpack.c.l.s8.bf16 %v570
        %v1219 = vunpack.c.l.s8.bf16 %v571
        %v1220 = vunpack.c.l.s8.bf16 %v572
        %v1221 = vunpack.c.l.s8.bf16 %v573
        %v1222 = vunpack.c.l.s8.bf16 %v574
        %v1223 = vunpack.c.l.s8.bf16 %v575
        %v1224 = vunpack.c.l.s8.bf16 %v576
        %v1225 = vunpack.c.l.s8.bf16 %v577
        %v1226 = vunpack.c.h.s8.bf16 %v570
        %v1227 = vunpack.c.h.s8.bf16 %v571
        %v1228 = vunpack.c.h.s8.bf16 %v572
        %v1229 = vunpack.c.h.s8.bf16 %v573
        %v1230 = vunpack.c.h.s8.bf16 %v574
        %v1231 = vunpack.c.h.s8.bf16 %v575
        %v1232 = vunpack.c.h.s8.bf16 %v576
        %v1233 = vunpack.c.h.s8.bf16 %v577
        %v1234 = vunpack.c.l.s8.bf16 %v578
        %v1235 = vunpack.c.l.s8.bf16 %v579
        %v1236 = vunpack.c.l.s8.bf16 %v580
        %v1237 = vunpack.c.l.s8.bf16 %v581
        %v1238 = vunpack.c.l.s8.bf16 %v582
        %v1239 = vunpack.c.l.s8.bf16 %v583
        %v1240 = vunpack.c.l.s8.bf16 %v584
        %v1241 = vunpack.c.l.s8.bf16 %v585
        %v1242 = vunpack.c.h.s8.bf16 %v578
        %v1243 = vunpack.c.h.s8.bf16 %v579
        %v1244 = vunpack.c.h.s8.bf16 %v580
        %v1245 = vunpack.c.h.s8.bf16 %v581
        %v1246 = vunpack.c.h.s8.bf16 %v582
        %v1247 = vunpack.c.h.s8.bf16 %v583
        %v1248 = vunpack.c.h.s8.bf16 %v584
        %v1249 = vunpack.c.h.s8.bf16 %v585
        %v1250 = vunpack.c.l.s8.bf16 %v586
        %v1251 = vunpack.c.l.s8.bf16 %v587
        %v1252 = vunpack.c.l.s8.bf16 %v588
        %v1253 = vunpack.c.l.s8.bf16 %v589
        %v1254 = vunpack.c.l.s8.bf16 %v590
        %v1255 = vunpack.c.l.s8.bf16 %v591
        %v1256 = vunpack.c.l.s8.bf16 %v592
        %v1257 = vunpack.c.l.s8.bf16 %v593
        %v1258 = vunpack.c.h.s8.bf16 %v586
        %v1259 = vunpack.c.h.s8.bf16 %v587
        %v1260 = vunpack.c.h.s8.bf16 %v588
        %v1261 = vunpack.c.h.s8.bf16 %v589
        %v1262 = vunpack.c.h.s8.bf16 %v590
        %v1263 = vunpack.c.h.s8.bf16 %v591
        %v1264 = vunpack.c.h.s8.bf16 %v592
        %v1265 = vunpack.c.h.s8.bf16 %v593
        %v1266 = vunpack.c.l.s8.bf16 %v594
        %v1267 = vunpack.c.l.s8.bf16 %v595
        %v1268 = vunpack.c.l.s8.bf16 %v596
        %v1269 = vunpack.c.l.s8.bf16 %v597
        %v1270 = vunpack.c.l.s8.bf16 %v598
        %v1271 = vunpack.c.l.s8.bf16 %v599
        %v1272 = vunpack.c.l.s8.bf16 %v600
        %v1273 = vunpack.c.l.s8.bf16 %v601
        %v1274 = vunpack.c.h.s8.bf16 %v594
        %v1275 = vunpack.c.h.s8.bf16 %v595
        %v1276 = vunpack.c.h.s8.bf16 %v596
        %v1277 = vunpack.c.h.s8.bf16 %v597
        %v1278 = vunpack.c.h.s8.bf16 %v598
        %v1279 = vunpack.c.h.s8.bf16 %v599
        %v1280 = vunpack.c.h.s8.bf16 %v600
        %v1281 = vunpack.c.h.s8.bf16 %v601
        %v1282 = vunpack.c.l.s8.bf16 %v602
        %v1283 = vunpack.c.l.s8.bf16 %v603
        %v1284 = vunpack.c.l.s8.bf16 %v604
        %v1285 = vunpack.c.l.s8.bf16 %v605
        %v1286 = vunpack.c.l.s8.bf16 %v606
        %v1287 = vunpack.c.l.s8.bf16 %v607
        %v1288 = vunpack.c.l.s8.bf16 %v608
        %v1289 = vunpack.c.l.s8.bf16 %v609
        %v1290 = vunpack.c.h.s8.bf16 %v602
        %v1291 = vunpack.c.h.s8.bf16 %v603
        %v1292 = vunpack.c.h.s8.bf16 %v604
        %v1293 = vunpack.c.h.s8.bf16 %v605
        %v1294 = vunpack.c.h.s8.bf16 %v606
        %v1295 = vunpack.c.h.s8.bf16 %v607
        %v1296 = vunpack.c.h.s8.bf16 %v608
        %v1297 = vunpack.c.h.s8.bf16 %v609
        %v1298 = vunpack.c.l.s8.bf16 %v610
        %v1299 = vunpack.c.l.s8.bf16 %v611
        %v1300 = vunpack.c.l.s8.bf16 %v612
        %v1301 = vunpack.c.l.s8.bf16 %v613
        %v1302 = vunpack.c.l.s8.bf16 %v614
        %v1303 = vunpack.c.l.s8.bf16 %v615
        %v1304 = vunpack.c.l.s8.bf16 %v616
        %v1305 = vunpack.c.l.s8.bf16 %v617
        %v1306 = vunpack.c.h.s8.bf16 %v610
        %v1307 = vunpack.c.h.s8.bf16 %v611
        %v1308 = vunpack.c.h.s8.bf16 %v612
        %v1309 = vunpack.c.h.s8.bf16 %v613
        %v1310 = vunpack.c.h.s8.bf16 %v614
        %v1311 = vunpack.c.h.s8.bf16 %v615
        %v1312 = vunpack.c.h.s8.bf16 %v616
        %v1313 = vunpack.c.h.s8.bf16 %v617
        %v1314 = vunpack.c.l.s8.bf16 %v618
        %v1315 = vunpack.c.l.s8.bf16 %v619
        %v1316 = vunpack.c.l.s8.bf16 %v620
        %v1317 = vunpack.c.l.s8.bf16 %v621
        %v1318 = vunpack.c.l.s8.bf16 %v622
        %v1319 = vunpack.c.l.s8.bf16 %v623
        %v1320 = vunpack.c.l.s8.bf16 %v624
        %v1321 = vunpack.c.l.s8.bf16 %v625
        %v1322 = vunpack.c.h.s8.bf16 %v618
        %v1323 = vunpack.c.h.s8.bf16 %v619
        %v1324 = vunpack.c.h.s8.bf16 %v620
        %v1325 = vunpack.c.h.s8.bf16 %v621
        %v1326 = vunpack.c.h.s8.bf16 %v622
        %v1327 = vunpack.c.h.s8.bf16 %v623
        %v1328 = vunpack.c.h.s8.bf16 %v624
        %v1329 = vunpack.c.h.s8.bf16 %v625
        %v1330 = vunpack.c.l.s8.bf16 %v626
        %v1331 = vunpack.c.l.s8.bf16 %v627
        %v1332 = vunpack.c.l.s8.bf16 %v628
        %v1333 = vunpack.c.l.s8.bf16 %v629
        %v1334 = vunpack.c.l.s8.bf16 %v630
        %v1335 = vunpack.c.l.s8.bf16 %v631
        %v1336 = vunpack.c.l.s8.bf16 %v632
        %v1337 = vunpack.c.l.s8.bf16 %v633
        %v1338 = vunpack.c.h.s8.bf16 %v626
        %v1339 = vunpack.c.h.s8.bf16 %v627
        %v1340 = vunpack.c.h.s8.bf16 %v628
        %v1341 = vunpack.c.h.s8.bf16 %v629
        %v1342 = vunpack.c.h.s8.bf16 %v630
        %v1343 = vunpack.c.h.s8.bf16 %v631
        %v1344 = vunpack.c.h.s8.bf16 %v632
        %v1345 = vunpack.c.h.s8.bf16 %v633
        %v1346 = vunpack.c.l.s8.bf16 %v634
        %v1347 = vunpack.c.l.s8.bf16 %v635
        %v1348 = vunpack.c.l.s8.bf16 %v636
        %v1349 = vunpack.c.l.s8.bf16 %v637
        %v1350 = vunpack.c.l.s8.bf16 %v638
        %v1351 = vunpack.c.l.s8.bf16 %v639
        %v1352 = vunpack.c.l.s8.bf16 %v640
        %v1353 = vunpack.c.l.s8.bf16 %v641
        %v1354 = vunpack.c.h.s8.bf16 %v634
        %v1355 = vunpack.c.h.s8.bf16 %v635
        %v1356 = vunpack.c.h.s8.bf16 %v636
        %v1357 = vunpack.c.h.s8.bf16 %v637
        %v1358 = vunpack.c.h.s8.bf16 %v638
        %v1359 = vunpack.c.h.s8.bf16 %v639
        %v1360 = vunpack.c.h.s8.bf16 %v640
        %v1361 = vunpack.c.h.s8.bf16 %v641
        %v1362 = vunpack.c.l.s8.bf16 %v642
        %v1363 = vunpack.c.l.s8.bf16 %v643
        %v1364 = vunpack.c.l.s8.bf16 %v644
        %v1365 = vunpack.c.l.s8.bf16 %v645
        %v1366 = vunpack.c.l.s8.bf16 %v646
        %v1367 = vunpack.c.l.s8.bf16 %v647
        %v1368 = vunpack.c.l.s8.bf16 %v648
        %v1369 = vunpack.c.l.s8.bf16 %v649
        %v1370 = vunpack.c.h.s8.bf16 %v642
        %v1371 = vunpack.c.h.s8.bf16 %v643
        %v1372 = vunpack.c.h.s8.bf16 %v644
        %v1373 = vunpack.c.h.s8.bf16 %v645
        %v1374 = vunpack.c.h.s8.bf16 %v646
        %v1375 = vunpack.c.h.s8.bf16 %v647
        %v1376 = vunpack.c.h.s8.bf16 %v648
        %v1377 = vunpack.c.h.s8.bf16 %v649
        %v1378 = vunpack.c.l.s8.bf16 %v650
        %v1379 = vunpack.c.l.s8.bf16 %v651
        %v1380 = vunpack.c.l.s8.bf16 %v652
        %v1381 = vunpack.c.l.s8.bf16 %v653
        %v1382 = vunpack.c.l.s8.bf16 %v654
        %v1383 = vunpack.c.l.s8.bf16 %v655
        %v1384 = vunpack.c.l.s8.bf16 %v656
        %v1385 = vunpack.c.l.s8.bf16 %v657
        %v1386 = vunpack.c.h.s8.bf16 %v650
        %v1387 = vunpack.c.h.s8.bf16 %v651
        %v1388 = vunpack.c.h.s8.bf16 %v652
        %v1389 = vunpack.c.h.s8.bf16 %v653
        %v1390 = vunpack.c.h.s8.bf16 %v654
        %v1391 = vunpack.c.h.s8.bf16 %v655
        %v1392 = vunpack.c.h.s8.bf16 %v656
        %v1393 = vunpack.c.h.s8.bf16 %v657
        %v1394 = vunpack.c.l.s8.bf16 %v658
        %v1395 = vunpack.c.l.s8.bf16 %v659
        %v1396 = vunpack.c.l.s8.bf16 %v660
        %v1397 = vunpack.c.l.s8.bf16 %v661
        %v1398 = vunpack.c.l.s8.bf16 %v662
        %v1399 = vunpack.c.l.s8.bf16 %v663
        %v1400 = vunpack.c.l.s8.bf16 %v664
        %v1401 = vunpack.c.l.s8.bf16 %v665
        %v1402 = vunpack.c.h.s8.bf16 %v658
        %v1403 = vunpack.c.h.s8.bf16 %v659
        %v1404 = vunpack.c.h.s8.bf16 %v660
        %v1405 = vunpack.c.h.s8.bf16 %v661
        %v1406 = vunpack.c.h.s8.bf16 %v662
        %v1407 = vunpack.c.h.s8.bf16 %v663
        %v1408 = vunpack.c.h.s8.bf16 %v664
        %v1409 = vunpack.c.h.s8.bf16 %v665
        %v1410 = vunpack.c.l.s8.bf16 %v666
        %v1411 = vunpack.c.l.s8.bf16 %v667
        %v1412 = vunpack.c.l.s8.bf16 %v668
        %v1413 = vunpack.c.l.s8.bf16 %v669
        %v1414 = vunpack.c.l.s8.bf16 %v670
        %v1415 = vunpack.c.l.s8.bf16 %v671
        %v1416 = vunpack.c.l.s8.bf16 %v672
        %v1417 = vunpack.c.l.s8.bf16 %v673
        %v1418 = vunpack.c.h.s8.bf16 %v666
        %v1419 = vunpack.c.h.s8.bf16 %v667
        %v1420 = vunpack.c.h.s8.bf16 %v668
        %v1421 = vunpack.c.h.s8.bf16 %v669
        %v1422 = vunpack.c.h.s8.bf16 %v670
        %v1423 = vunpack.c.h.s8.bf16 %v671
        %v1424 = vunpack.c.h.s8.bf16 %v672
        %v1425 = vunpack.c.h.s8.bf16 %v673
        %v1426 = vunpack.c.l.s8.bf16 %v674
        %v1427 = vunpack.c.l.s8.bf16 %v675
        %v1428 = vunpack.c.l.s8.bf16 %v676
        %v1429 = vunpack.c.l.s8.bf16 %v677
        %v1430 = vunpack.c.l.s8.bf16 %v678
        %v1431 = vunpack.c.l.s8.bf16 %v679
        %v1432 = vunpack.c.l.s8.bf16 %v680
        %v1433 = vunpack.c.l.s8.bf16 %v681
        %v1434 = vunpack.c.h.s8.bf16 %v674
        %v1435 = vunpack.c.h.s8.bf16 %v675
        %v1436 = vunpack.c.h.s8.bf16 %v676
        %v1437 = vunpack.c.h.s8.bf16 %v677
        %v1438 = vunpack.c.h.s8.bf16 %v678
        %v1439 = vunpack.c.h.s8.bf16 %v679
        %v1440 = vunpack.c.h.s8.bf16 %v680
        %v1441 = vunpack.c.h.s8.bf16 %v681
        %v1442 = vunpack.c.l.s8.bf16 %v682
        %v1443 = vunpack.c.l.s8.bf16 %v683
        %v1444 = vunpack.c.l.s8.bf16 %v684
        %v1445 = vunpack.c.l.s8.bf16 %v685
        %v1446 = vunpack.c.l.s8.bf16 %v686
        %v1447 = vunpack.c.l.s8.bf16 %v687
        %v1448 = vunpack.c.l.s8.bf16 %v688
        %v1449 = vunpack.c.l.s8.bf16 %v689
        %v1450 = vunpack.c.h.s8.bf16 %v682
        %v1451 = vunpack.c.h.s8.bf16 %v683
        %v1452 = vunpack.c.h.s8.bf16 %v684
        %v1453 = vunpack.c.h.s8.bf16 %v685
        %v1454 = vunpack.c.h.s8.bf16 %v686
        %v1455 = vunpack.c.h.s8.bf16 %v687
        %v1456 = vunpack.c.h.s8.bf16 %v688
        %v1457 = vunpack.c.h.s8.bf16 %v689
        %v1458 = vunpack.c.l.s8.bf16 %v690
        %v1459 = vunpack.c.l.s8.bf16 %v691
        %v1460 = vunpack.c.l.s8.bf16 %v692
        %v1461 = vunpack.c.l.s8.bf16 %v693
        %v1462 = vunpack.c.l.s8.bf16 %v694
        %v1463 = vunpack.c.l.s8.bf16 %v695
        %v1464 = vunpack.c.l.s8.bf16 %v696
        %v1465 = vunpack.c.l.s8.bf16 %v697
        %v1466 = vunpack.c.h.s8.bf16 %v690
        %v1467 = vunpack.c.h.s8.bf16 %v691
        %v1468 = vunpack.c.h.s8.bf16 %v692
        %v1469 = vunpack.c.h.s8.bf16 %v693
        %v1470 = vunpack.c.h.s8.bf16 %v694
        %v1471 = vunpack.c.h.s8.bf16 %v695
        %v1472 = vunpack.c.h.s8.bf16 %v696
        %v1473 = vunpack.c.h.s8.bf16 %v697
        %v1474 = vunpack.c.l.s8.bf16 %v698
        %v1475 = vunpack.c.l.s8.bf16 %v699
        %v1476 = vunpack.c.l.s8.bf16 %v700
        %v1477 = vunpack.c.l.s8.bf16 %v701
        %v1478 = vunpack.c.l.s8.bf16 %v702
        %v1479 = vunpack.c.l.s8.bf16 %v703
        %v1480 = vunpack.c.l.s8.bf16 %v704
        %v1481 = vunpack.c.l.s8.bf16 %v705
        %v1482 = vunpack.c.h.s8.bf16 %v698
        %v1483 = vunpack.c.h.s8.bf16 %v699
        %v1484 = vunpack.c.h.s8.bf16 %v700
        %v1485 = vunpack.c.h.s8.bf16 %v701
        %v1486 = vunpack.c.h.s8.bf16 %v702
        %v1487 = vunpack.c.h.s8.bf16 %v703
        %v1488 = vunpack.c.h.s8.bf16 %v704
        %v1489 = vunpack.c.h.s8.bf16 %v705
        %v1490 = vunpack.c.l.s8.bf16 %v706
        %v1491 = vunpack.c.l.s8.bf16 %v707
        %v1492 = vunpack.c.l.s8.bf16 %v708
        %v1493 = vunpack.c.l.s8.bf16 %v709
        %v1494 = vunpack.c.l.s8.bf16 %v710
        %v1495 = vunpack.c.l.s8.bf16 %v711
        %v1496 = vunpack.c.l.s8.bf16 %v712
        %v1497 = vunpack.c.l.s8.bf16 %v713
        %v1498 = vunpack.c.h.s8.bf16 %v706
        %v1499 = vunpack.c.h.s8.bf16 %v707
        %v1500 = vunpack.c.h.s8.bf16 %v708
        %v1501 = vunpack.c.h.s8.bf16 %v709
        %v1502 = vunpack.c.h.s8.bf16 %v710
        %v1503 = vunpack.c.h.s8.bf16 %v711
        %v1504 = vunpack.c.h.s8.bf16 %v712
        %v1505 = vunpack.c.h.s8.bf16 %v713
        %v1506 = vunpack.c.l.s8.bf16 %v714
        %v1507 = vunpack.c.l.s8.bf16 %v715
        %v1508 = vunpack.c.l.s8.bf16 %v716
        %v1509 = vunpack.c.l.s8.bf16 %v717
        %v1510 = vunpack.c.l.s8.bf16 %v718
        %v1511 = vunpack.c.l.s8.bf16 %v719
        %v1512 = vunpack.c.l.s8.bf16 %v720
        %v1513 = vunpack.c.l.s8.bf16 %v721
        %v1514 = vunpack.c.h.s8.bf16 %v714
        %v1515 = vunpack.c.h.s8.bf16 %v715
        %v1516 = vunpack.c.h.s8.bf16 %v716
        %v1517 = vunpack.c.h.s8.bf16 %v717
        %v1518 = vunpack.c.h.s8.bf16 %v718
        %v1519 = vunpack.c.h.s8.bf16 %v719
        %v1520 = vunpack.c.h.s8.bf16 %v720
        %v1521 = vunpack.c.h.s8.bf16 %v721
        %v1522 = vunpack.c.l.s8.bf16 %v722
        %v1523 = vunpack.c.l.s8.bf16 %v723
        %v1524 = vunpack.c.l.s8.bf16 %v724
        %v1525 = vunpack.c.l.s8.bf16 %v725
        %v1526 = vunpack.c.l.s8.bf16 %v726
        %v1527 = vunpack.c.l.s8.bf16 %v727
        %v1528 = vunpack.c.l.s8.bf16 %v728
        %v1529 = vunpack.c.l.s8.bf16 %v729
        %v1530 = vunpack.c.h.s8.bf16 %v722
        %v1531 = vunpack.c.h.s8.bf16 %v723
        %v1532 = vunpack.c.h.s8.bf16 %v724
        %v1533 = vunpack.c.h.s8.bf16 %v725
        %v1534 = vunpack.c.h.s8.bf16 %v726
        %v1535 = vunpack.c.h.s8.bf16 %v727
        %v1536 = vunpack.c.h.s8.bf16 %v728
        %v1537 = vunpack.c.h.s8.bf16 %v729
        %v1538 = vunpack.c.l.s8.bf16 %v730
        %v1539 = vunpack.c.l.s8.bf16 %v731
        %v1540 = vunpack.c.l.s8.bf16 %v732
        %v1541 = vunpack.c.l.s8.bf16 %v733
        %v1542 = vunpack.c.l.s8.bf16 %v734
        %v1543 = vunpack.c.l.s8.bf16 %v735
        %v1544 = vunpack.c.l.s8.bf16 %v736
        %v1545 = vunpack.c.l.s8.bf16 %v737
        %v1546 = vunpack.c.h.s8.bf16 %v730
        %v1547 = vunpack.c.h.s8.bf16 %v731
        %v1548 = vunpack.c.h.s8.bf16 %v732
        %v1549 = vunpack.c.h.s8.bf16 %v733
        %v1550 = vunpack.c.h.s8.bf16 %v734
        %v1551 = vunpack.c.h.s8.bf16 %v735
        %v1552 = vunpack.c.h.s8.bf16 %v736
        %v1553 = vunpack.c.h.s8.bf16 %v737
        %v1554 = vunpack.c.l.s8.bf16 %v738
        %v1555 = vunpack.c.l.s8.bf16 %v739
        %v1556 = vunpack.c.l.s8.bf16 %v740
        %v1557 = vunpack.c.l.s8.bf16 %v741
        %v1558 = vunpack.c.l.s8.bf16 %v742
        %v1559 = vunpack.c.l.s8.bf16 %v743
        %v1560 = vunpack.c.l.s8.bf16 %v744
        %v1561 = vunpack.c.l.s8.bf16 %v745
        %v1562 = vunpack.c.h.s8.bf16 %v738
        %v1563 = vunpack.c.h.s8.bf16 %v739
        %v1564 = vunpack.c.h.s8.bf16 %v740
        %v1565 = vunpack.c.h.s8.bf16 %v741
        %v1566 = vunpack.c.h.s8.bf16 %v742
        %v1567 = vunpack.c.h.s8.bf16 %v743
        %v1568 = vunpack.c.h.s8.bf16 %v744
        %v1569 = vunpack.c.h.s8.bf16 %v745
        %v1570 = vunpack.c.l.s8.bf16 %v746
        %v1571 = vunpack.c.l.s8.bf16 %v747
        %v1572 = vunpack.c.l.s8.bf16 %v748
        %v1573 = vunpack.c.l.s8.bf16 %v749
        %v1574 = vunpack.c.l.s8.bf16 %v750
        %v1575 = vunpack.c.l.s8.bf16 %v751
        %v1576 = vunpack.c.l.s8.bf16 %v752
        %v1577 = vunpack.c.l.s8.bf16 %v753
        %v1578 = vunpack.c.h.s8.bf16 %v746
        %v1579 = vunpack.c.h.s8.bf16 %v747
        %v1580 = vunpack.c.h.s8.bf16 %v748
        %v1581 = vunpack.c.h.s8.bf16 %v749
        %v1582 = vunpack.c.h.s8.bf16 %v750
        %v1583 = vunpack.c.h.s8.bf16 %v751
        %v1584 = vunpack.c.h.s8.bf16 %v752
        %v1585 = vunpack.c.h.s8.bf16 %v753
        %v1586 = vunpack.c.l.s8.bf16 %v754
        %v1587 = vunpack.c.l.s8.bf16 %v755
        %v1588 = vunpack.c.l.s8.bf16 %v756
        %v1589 = vunpack.c.l.s8.bf16 %v757
        %v1590 = vunpack.c.l.s8.bf16 %v758
        %v1591 = vunpack.c.l.s8.bf16 %v759
        %v1592 = vunpack.c.l.s8.bf16 %v760
        %v1593 = vunpack.c.l.s8.bf16 %v761
        %v1594 = vunpack.c.h.s8.bf16 %v754
        %v1595 = vunpack.c.h.s8.bf16 %v755
        %v1596 = vunpack.c.h.s8.bf16 %v756
        %v1597 = vunpack.c.h.s8.bf16 %v757
        %v1598 = vunpack.c.h.s8.bf16 %v758
        %v1599 = vunpack.c.h.s8.bf16 %v759
        %v1600 = vunpack.c.h.s8.bf16 %v760
        %v1601 = vunpack.c.h.s8.bf16 %v761
        %v1602 = vunpack.c.l.s8.bf16 %v762
        %v1603 = vunpack.c.l.s8.bf16 %v763
        %v1604 = vunpack.c.l.s8.bf16 %v764
        %v1605 = vunpack.c.l.s8.bf16 %v765
        %v1606 = vunpack.c.l.s8.bf16 %v766
        %v1607 = vunpack.c.l.s8.bf16 %v767
        %v1608 = vunpack.c.l.s8.bf16 %v768
        %v1609 = vunpack.c.l.s8.bf16 %v769
        %v1610 = vunpack.c.h.s8.bf16 %v762
        %v1611 = vunpack.c.h.s8.bf16 %v763
        %v1612 = vunpack.c.h.s8.bf16 %v764
        %v1613 = vunpack.c.h.s8.bf16 %v765
        %v1614 = vunpack.c.h.s8.bf16 %v766
        %v1615 = vunpack.c.h.s8.bf16 %v767
        %v1616 = vunpack.c.h.s8.bf16 %v768
        %v1617 = vunpack.c.h.s8.bf16 %v769
        %v1618 = vunpack.c.l.s8.bf16 %v770
        %v1619 = vunpack.c.l.s8.bf16 %v771
        %v1620 = vunpack.c.l.s8.bf16 %v772
        %v1621 = vunpack.c.l.s8.bf16 %v773
        %v1622 = vunpack.c.l.s8.bf16 %v774
        %v1623 = vunpack.c.l.s8.bf16 %v775
        %v1624 = vunpack.c.l.s8.bf16 %v776
        %v1625 = vunpack.c.l.s8.bf16 %v777
        %v1626 = vunpack.c.h.s8.bf16 %v770
        %v1627 = vunpack.c.h.s8.bf16 %v771
        %v1628 = vunpack.c.h.s8.bf16 %v772
        %v1629 = vunpack.c.h.s8.bf16 %v773
        %v1630 = vunpack.c.h.s8.bf16 %v774
        %v1631 = vunpack.c.h.s8.bf16 %v775
        %v1632 = vunpack.c.h.s8.bf16 %v776
        %v1633 = vunpack.c.h.s8.bf16 %v777
        %v1634 = vunpack.c.l.s8.bf16 %v778
        %v1635 = vunpack.c.l.s8.bf16 %v779
        %v1636 = vunpack.c.l.s8.bf16 %v780
        %v1637 = vunpack.c.l.s8.bf16 %v781
        %v1638 = vunpack.c.l.s8.bf16 %v782
        %v1639 = vunpack.c.l.s8.bf16 %v783
        %v1640 = vunpack.c.l.s8.bf16 %v784
        %v1641 = vunpack.c.l.s8.bf16 %v785
        %v1642 = vunpack.c.h.s8.bf16 %v778
        %v1643 = vunpack.c.h.s8.bf16 %v779
        %v1644 = vunpack.c.h.s8.bf16 %v780
        %v1645 = vunpack.c.h.s8.bf16 %v781
        %v1646 = vunpack.c.h.s8.bf16 %v782
        %v1647 = vunpack.c.h.s8.bf16 %v783
        %v1648 = vunpack.c.h.s8.bf16 %v784
        %v1649 = vunpack.c.h.s8.bf16 %v785
        %v1650 = vunpack.c.l.s8.bf16 %v786
        %v1651 = vunpack.c.l.s8.bf16 %v787
        %v1652 = vunpack.c.l.s8.bf16 %v788
        %v1653 = vunpack.c.l.s8.bf16 %v789
        %v1654 = vunpack.c.l.s8.bf16 %v790
        %v1655 = vunpack.c.l.s8.bf16 %v791
        %v1656 = vunpack.c.l.s8.bf16 %v792
        %v1657 = vunpack.c.l.s8.bf16 %v793
        %v1658 = vunpack.c.h.s8.bf16 %v786
        %v1659 = vunpack.c.h.s8.bf16 %v787
        %v1660 = vunpack.c.h.s8.bf16 %v788
        %v1661 = vunpack.c.h.s8.bf16 %v789
        %v1662 = vunpack.c.h.s8.bf16 %v790
        %v1663 = vunpack.c.h.s8.bf16 %v791
        %v1664 = vunpack.c.h.s8.bf16 %v792
        %v1665 = vunpack.c.h.s8.bf16 %v793
        %v1666 = vunpack.c.l.s8.bf16 %v794
        %v1667 = vunpack.c.l.s8.bf16 %v795
        %v1668 = vunpack.c.l.s8.bf16 %v796
        %v1669 = vunpack.c.l.s8.bf16 %v797
        %v1670 = vunpack.c.l.s8.bf16 %v798
        %v1671 = vunpack.c.l.s8.bf16 %v799
        %v1672 = vunpack.c.l.s8.bf16 %v800
        %v1673 = vunpack.c.l.s8.bf16 %v801
        %v1674 = vunpack.c.h.s8.bf16 %v794
        %v1675 = vunpack.c.h.s8.bf16 %v795
        %v1676 = vunpack.c.h.s8.bf16 %v796
        %v1677 = vunpack.c.h.s8.bf16 %v797
        %v1678 = vunpack.c.h.s8.bf16 %v798
        %v1679 = vunpack.c.h.s8.bf16 %v799
        %v1680 = vunpack.c.h.s8.bf16 %v800
        %v1681 = vunpack.c.h.s8.bf16 %v801
        %v1682 = vunpack.c.l.s8.bf16 %v802
        %v1683 = vunpack.c.l.s8.bf16 %v803
        %v1684 = vunpack.c.l.s8.bf16 %v804
        %v1685 = vunpack.c.l.s8.bf16 %v805
        %v1686 = vunpack.c.l.s8.bf16 %v806
        %v1687 = vunpack.c.l.s8.bf16 %v807
        %v1688 = vunpack.c.l.s8.bf16 %v808
        %v1689 = vunpack.c.l.s8.bf16 %v809
        %v1690 = vunpack.c.h.s8.bf16 %v802
        %v1691 = vunpack.c.h.s8.bf16 %v803
        %v1692 = vunpack.c.h.s8.bf16 %v804
        %v1693 = vunpack.c.h.s8.bf16 %v805
        %v1694 = vunpack.c.h.s8.bf16 %v806
        %v1695 = vunpack.c.h.s8.bf16 %v807
        %v1696 = vunpack.c.h.s8.bf16 %v808
        %v1697 = vunpack.c.h.s8.bf16 %v809
        %v1698 = vunpack.c.l.s8.bf16 %v810
        %v1699 = vunpack.c.l.s8.bf16 %v811
        %v1700 = vunpack.c.l.s8.bf16 %v812
        %v1701 = vunpack.c.l.s8.bf16 %v813
        %v1702 = vunpack.c.l.s8.bf16 %v814
        %v1703 = vunpack.c.l.s8.bf16 %v815
        %v1704 = vunpack.c.l.s8.bf16 %v816
        %v1705 = vunpack.c.l.s8.bf16 %v817
        %v1706 = vunpack.c.h.s8.bf16 %v810
        %v1707 = vunpack.c.h.s8.bf16 %v811
        %v1708 = vunpack.c.h.s8.bf16 %v812
        %v1709 = vunpack.c.h.s8.bf16 %v813
        %v1710 = vunpack.c.h.s8.bf16 %v814
        %v1711 = vunpack.c.h.s8.bf16 %v815
        %v1712 = vunpack.c.h.s8.bf16 %v816
        %v1713 = vunpack.c.h.s8.bf16 %v817
        %v1714 = vunpack.c.l.s8.bf16 %v818
        %v1715 = vunpack.c.l.s8.bf16 %v819
        %v1716 = vunpack.c.l.s8.bf16 %v820
        %v1717 = vunpack.c.l.s8.bf16 %v821
        %v1718 = vunpack.c.l.s8.bf16 %v822
        %v1719 = vunpack.c.l.s8.bf16 %v823
        %v1720 = vunpack.c.l.s8.bf16 %v824
        %v1721 = vunpack.c.l.s8.bf16 %v825
        %v1722 = vunpack.c.h.s8.bf16 %v818
        %v1723 = vunpack.c.h.s8.bf16 %v819
        %v1724 = vunpack.c.h.s8.bf16 %v820
        %v1725 = vunpack.c.h.s8.bf16 %v821
        %v1726 = vunpack.c.h.s8.bf16 %v822
        %v1727 = vunpack.c.h.s8.bf16 %v823
        %v1728 = vunpack.c.h.s8.bf16 %v824
        %v1729 = vunpack.c.h.s8.bf16 %v825
        %v1730 = vunpack.c.l.s8.bf16 %v826
        %v1731 = vunpack.c.l.s8.bf16 %v827
        %v1732 = vunpack.c.l.s8.bf16 %v828
        %v1733 = vunpack.c.l.s8.bf16 %v829
        %v1734 = vunpack.c.l.s8.bf16 %v830
        %v1735 = vunpack.c.l.s8.bf16 %v831
        %v1736 = vunpack.c.l.s8.bf16 %v832
        %v1737 = vunpack.c.l.s8.bf16 %v833
        %v1738 = vunpack.c.h.s8.bf16 %v826
        %v1739 = vunpack.c.h.s8.bf16 %v827
        %v1740 = vunpack.c.h.s8.bf16 %v828
        %v1741 = vunpack.c.h.s8.bf16 %v829
        %v1742 = vunpack.c.h.s8.bf16 %v830
        %v1743 = vunpack.c.h.s8.bf16 %v831
        %v1744 = vunpack.c.h.s8.bf16 %v832
        %v1745 = vunpack.c.h.s8.bf16 %v833
        %v1746 = vunpack.c.l.s8.bf16 %v834
        %v1747 = vunpack.c.l.s8.bf16 %v835
        %v1748 = vunpack.c.l.s8.bf16 %v836
        %v1749 = vunpack.c.l.s8.bf16 %v837
        %v1750 = vunpack.c.l.s8.bf16 %v838
        %v1751 = vunpack.c.l.s8.bf16 %v839
        %v1752 = vunpack.c.l.s8.bf16 %v840
        %v1753 = vunpack.c.l.s8.bf16 %v841
        %v1754 = vunpack.c.h.s8.bf16 %v834
        %v1755 = vunpack.c.h.s8.bf16 %v835
        %v1756 = vunpack.c.h.s8.bf16 %v836
        %v1757 = vunpack.c.h.s8.bf16 %v837
        %v1758 = vunpack.c.h.s8.bf16 %v838
        %v1759 = vunpack.c.h.s8.bf16 %v839
        %v1760 = vunpack.c.h.s8.bf16 %v840
        %v1761 = vunpack.c.h.s8.bf16 %v841
        %v1762 = vunpack.c.l.s8.bf16 %v842
        %v1763 = vunpack.c.l.s8.bf16 %v843
        %v1764 = vunpack.c.l.s8.bf16 %v844
        %v1765 = vunpack.c.l.s8.bf16 %v845
        %v1766 = vunpack.c.l.s8.bf16 %v846
        %v1767 = vunpack.c.l.s8.bf16 %v847
        %v1768 = vunpack.c.l.s8.bf16 %v848
        %v1769 = vunpack.c.l.s8.bf16 %v849
        %v1770 = vunpack.c.h.s8.bf16 %v842
        %v1771 = vunpack.c.h.s8.bf16 %v843
        %v1772 = vunpack.c.h.s8.bf16 %v844
        %v1773 = vunpack.c.h.s8.bf16 %v845
        %v1774 = vunpack.c.h.s8.bf16 %v846
        %v1775 = vunpack.c.h.s8.bf16 %v847
        %v1776 = vunpack.c.h.s8.bf16 %v848
        %v1777 = vunpack.c.h.s8.bf16 %v849
        %v1778 = vunpack.c.l.s8.bf16 %v850
        %v1779 = vunpack.c.l.s8.bf16 %v851
        %v1780 = vunpack.c.l.s8.bf16 %v852
        %v1781 = vunpack.c.l.s8.bf16 %v853
        %v1782 = vunpack.c.l.s8.bf16 %v854
        %v1783 = vunpack.c.l.s8.bf16 %v855
        %v1784 = vunpack.c.l.s8.bf16 %v856
        %v1785 = vunpack.c.l.s8.bf16 %v857
        %v1786 = vunpack.c.h.s8.bf16 %v850
        %v1787 = vunpack.c.h.s8.bf16 %v851
        %v1788 = vunpack.c.h.s8.bf16 %v852
        %v1789 = vunpack.c.h.s8.bf16 %v853
        %v1790 = vunpack.c.h.s8.bf16 %v854
        %v1791 = vunpack.c.h.s8.bf16 %v855
        %v1792 = vunpack.c.h.s8.bf16 %v856
        %v1793 = vunpack.c.h.s8.bf16 %v857
        %v1794 = vunpack.c.l.s8.bf16 %v858
        %v1795 = vunpack.c.l.s8.bf16 %v859
        %v1796 = vunpack.c.l.s8.bf16 %v860
        %v1797 = vunpack.c.l.s8.bf16 %v861
        %v1798 = vunpack.c.l.s8.bf16 %v862
        %v1799 = vunpack.c.l.s8.bf16 %v863
        %v1800 = vunpack.c.l.s8.bf16 %v864
        %v1801 = vunpack.c.l.s8.bf16 %v865
        %v1802 = vunpack.c.h.s8.bf16 %v858
        %v1803 = vunpack.c.h.s8.bf16 %v859
        %v1804 = vunpack.c.h.s8.bf16 %v860
        %v1805 = vunpack.c.h.s8.bf16 %v861
        %v1806 = vunpack.c.h.s8.bf16 %v862
        %v1807 = vunpack.c.h.s8.bf16 %v863
        %v1808 = vunpack.c.h.s8.bf16 %v864
        %v1809 = vunpack.c.h.s8.bf16 %v865
        %v1810 = vunpack.c.l.s8.bf16 %v866
        %v1811 = vunpack.c.l.s8.bf16 %v867
        %v1812 = vunpack.c.l.s8.bf16 %v868
        %v1813 = vunpack.c.l.s8.bf16 %v869
        %v1814 = vunpack.c.l.s8.bf16 %v870
        %v1815 = vunpack.c.l.s8.bf16 %v871
        %v1816 = vunpack.c.l.s8.bf16 %v872
        %v1817 = vunpack.c.l.s8.bf16 %v873
        %v1818 = vunpack.c.h.s8.bf16 %v866
        %v1819 = vunpack.c.h.s8.bf16 %v867
        %v1820 = vunpack.c.h.s8.bf16 %v868
        %v1821 = vunpack.c.h.s8.bf16 %v869
        %v1822 = vunpack.c.h.s8.bf16 %v870
        %v1823 = vunpack.c.h.s8.bf16 %v871
        %v1824 = vunpack.c.h.s8.bf16 %v872
        %v1825 = vunpack.c.h.s8.bf16 %v873
        %v1826 = vunpack.c.l.s8.bf16 %v874
        %v1827 = vunpack.c.l.s8.bf16 %v875
        %v1828 = vunpack.c.l.s8.bf16 %v876
        %v1829 = vunpack.c.l.s8.bf16 %v877
        %v1830 = vunpack.c.l.s8.bf16 %v878
        %v1831 = vunpack.c.l.s8.bf16 %v879
        %v1832 = vunpack.c.l.s8.bf16 %v880
        %v1833 = vunpack.c.l.s8.bf16 %v881
        %v1834 = vunpack.c.h.s8.bf16 %v874
        %v1835 = vunpack.c.h.s8.bf16 %v875
        %v1836 = vunpack.c.h.s8.bf16 %v876
        %v1837 = vunpack.c.h.s8.bf16 %v877
        %v1838 = vunpack.c.h.s8.bf16 %v878
        %v1839 = vunpack.c.h.s8.bf16 %v879
        %v1840 = vunpack.c.h.s8.bf16 %v880
        %v1841 = vunpack.c.h.s8.bf16 %v881
        %v1842 = vunpack.c.l.s8.bf16 %v882
        %v1843 = vunpack.c.l.s8.bf16 %v883
        %v1844 = vunpack.c.l.s8.bf16 %v884
        %v1845 = vunpack.c.l.s8.bf16 %v885
        %v1846 = vunpack.c.l.s8.bf16 %v886
        %v1847 = vunpack.c.l.s8.bf16 %v887
        %v1848 = vunpack.c.l.s8.bf16 %v888
        %v1849 = vunpack.c.l.s8.bf16 %v889
        %v1850 = vunpack.c.h.s8.bf16 %v882
        %v1851 = vunpack.c.h.s8.bf16 %v883
        %v1852 = vunpack.c.h.s8.bf16 %v884
        %v1853 = vunpack.c.h.s8.bf16 %v885
        %v1854 = vunpack.c.h.s8.bf16 %v886
        %v1855 = vunpack.c.h.s8.bf16 %v887
        %v1856 = vunpack.c.h.s8.bf16 %v888
        %v1857 = vunpack.c.h.s8.bf16 %v889
        %v1858 = vunpack.c.l.s8.bf16 %v890
        %v1859 = vunpack.c.l.s8.bf16 %v891
        %v1860 = vunpack.c.l.s8.bf16 %v892
        %v1861 = vunpack.c.l.s8.bf16 %v893
        %v1862 = vunpack.c.l.s8.bf16 %v894
        %v1863 = vunpack.c.l.s8.bf16 %v895
        %v1864 = vunpack.c.l.s8.bf16 %v896
        %v1865 = vunpack.c.l.s8.bf16 %v897
        %v1866 = vunpack.c.h.s8.bf16 %v890
        %v1867 = vunpack.c.h.s8.bf16 %v891
        %v1868 = vunpack.c.h.s8.bf16 %v892
        %v1869 = vunpack.c.h.s8.bf16 %v893
        %v1870 = vunpack.c.h.s8.bf16 %v894
        %v1871 = vunpack.c.h.s8.bf16 %v895
        %v1872 = vunpack.c.h.s8.bf16 %v896
        %v1873 = vunpack.c.h.s8.bf16 %v897
        %v1874 = vunpack.c.l.s8.bf16 %v898
        %v1875 = vunpack.c.l.s8.bf16 %v899
        %v1876 = vunpack.c.l.s8.bf16 %v900
        %v1877 = vunpack.c.l.s8.bf16 %v901
        %v1878 = vunpack.c.l.s8.bf16 %v902
        %v1879 = vunpack.c.l.s8.bf16 %v903
        %v1880 = vunpack.c.l.s8.bf16 %v904
        %v1881 = vunpack.c.l.s8.bf16 %v905
        %v1882 = vunpack.c.h.s8.bf16 %v898
        %v1883 = vunpack.c.h.s8.bf16 %v899
        %v1884 = vunpack.c.h.s8.bf16 %v900
        %v1885 = vunpack.c.h.s8.bf16 %v901
        %v1886 = vunpack.c.h.s8.bf16 %v902
        %v1887 = vunpack.c.h.s8.bf16 %v903
        %v1888 = vunpack.c.h.s8.bf16 %v904
        %v1889 = vunpack.c.h.s8.bf16 %v905
        %v1890 = vunpack.c.l.s8.bf16 %v906
        %v1891 = vunpack.c.l.s8.bf16 %v907
        %v1892 = vunpack.c.l.s8.bf16 %v908
        %v1893 = vunpack.c.l.s8.bf16 %v909
        %v1894 = vunpack.c.l.s8.bf16 %v910
        %v1895 = vunpack.c.l.s8.bf16 %v911
        %v1896 = vunpack.c.l.s8.bf16 %v912
        %v1897 = vunpack.c.l.s8.bf16 %v913
        %v1898 = vunpack.c.h.s8.bf16 %v906
        %v1899 = vunpack.c.h.s8.bf16 %v907
        %v1900 = vunpack.c.h.s8.bf16 %v908
        %v1901 = vunpack.c.h.s8.bf16 %v909
        %v1902 = vunpack.c.h.s8.bf16 %v910
        %v1903 = vunpack.c.h.s8.bf16 %v911
        %v1904 = vunpack.c.h.s8.bf16 %v912
        %v1905 = vunpack.c.h.s8.bf16 %v913
        %v1906 = vunpack.c.l.s8.bf16 %v914
        %v1907 = vunpack.c.l.s8.bf16 %v915
        %v1908 = vunpack.c.l.s8.bf16 %v916
        %v1909 = vunpack.c.l.s8.bf16 %v917
        %v1910 = vunpack.c.l.s8.bf16 %v918
        %v1911 = vunpack.c.l.s8.bf16 %v919
        %v1912 = vunpack.c.l.s8.bf16 %v920
        %v1913 = vunpack.c.l.s8.bf16 %v921
        %v1914 = vunpack.c.h.s8.bf16 %v914
        %v1915 = vunpack.c.h.s8.bf16 %v915
        %v1916 = vunpack.c.h.s8.bf16 %v916
        %v1917 = vunpack.c.h.s8.bf16 %v917
        %v1918 = vunpack.c.h.s8.bf16 %v918
        %v1919 = vunpack.c.h.s8.bf16 %v919
        %v1920 = vunpack.c.h.s8.bf16 %v920
        %v1921 = vunpack.c.h.s8.bf16 %v921
        %v1922 = vunpack.c.l.s8.bf16 %v922
        %v1923 = vunpack.c.l.s8.bf16 %v923
        %v1924 = vunpack.c.l.s8.bf16 %v924
        %v1925 = vunpack.c.l.s8.bf16 %v925
        %v1926 = vunpack.c.l.s8.bf16 %v926
        %v1927 = vunpack.c.l.s8.bf16 %v927
        %v1928 = vunpack.c.l.s8.bf16 %v928
        %v1929 = vunpack.c.l.s8.bf16 %v929
        %v1930 = vunpack.c.h.s8.bf16 %v922
        %v1931 = vunpack.c.h.s8.bf16 %v923
        %v1932 = vunpack.c.h.s8.bf16 %v924
        %v1933 = vunpack.c.h.s8.bf16 %v925
        %v1934 = vunpack.c.h.s8.bf16 %v926
        %v1935 = vunpack.c.h.s8.bf16 %v927
        %v1936 = vunpack.c.h.s8.bf16 %v928
        %v1937 = vunpack.c.h.s8.bf16 %v929
        %v1938 = vunpack.c.l.s8.bf16 %v930
        %v1939 = vunpack.c.l.s8.bf16 %v931
        %v1940 = vunpack.c.l.s8.bf16 %v932
        %v1941 = vunpack.c.l.s8.bf16 %v933
        %v1942 = vunpack.c.l.s8.bf16 %v934
        %v1943 = vunpack.c.l.s8.bf16 %v935
        %v1944 = vunpack.c.l.s8.bf16 %v936
        %v1945 = vunpack.c.l.s8.bf16 %v937
        %v1946 = vunpack.c.h.s8.bf16 %v930
        %v1947 = vunpack.c.h.s8.bf16 %v931
        %v1948 = vunpack.c.h.s8.bf16 %v932
        %v1949 = vunpack.c.h.s8.bf16 %v933
        %v1950 = vunpack.c.h.s8.bf16 %v934
        %v1951 = vunpack.c.h.s8.bf16 %v935
        %v1952 = vunpack.c.h.s8.bf16 %v936
        %v1953 = vunpack.c.h.s8.bf16 %v937
        %v1954 = vunpack.c.l.s8.bf16 %v938
        %v1955 = vunpack.c.l.s8.bf16 %v939
        %v1956 = vunpack.c.l.s8.bf16 %v940
        %v1957 = vunpack.c.l.s8.bf16 %v941
        %v1958 = vunpack.c.l.s8.bf16 %v942
        %v1959 = vunpack.c.l.s8.bf16 %v943
        %v1960 = vunpack.c.l.s8.bf16 %v944
        %v1961 = vunpack.c.l.s8.bf16 %v945
        %v1962 = vunpack.c.h.s8.bf16 %v938
        %v1963 = vunpack.c.h.s8.bf16 %v939
        %v1964 = vunpack.c.h.s8.bf16 %v940
        %v1965 = vunpack.c.h.s8.bf16 %v941
        %v1966 = vunpack.c.h.s8.bf16 %v942
        %v1967 = vunpack.c.h.s8.bf16 %v943
        %v1968 = vunpack.c.h.s8.bf16 %v944
        %v1969 = vunpack.c.h.s8.bf16 %v945
        %1970 = vmatprep.subr.bf16.mxu0 %v947
        %1971 = vmatpush1.bf16.msra.mxu0 %v946
        %1972 = vmatprep.subr.bf16.mxu0 %v955
        %1973 = vmatpush1.bf16.msra.mxu0 %v954
        %1974 = vmatprep.subr.bf16.mxu0 %v963
        %1975 = vmatpush1.bf16.msra.mxu0 %v962
        %1976 = vmatprep.subr.bf16.mxu0 %v971
        %1977 = vmatpush1.bf16.msra.mxu0 %v970
        %1978 = vmatprep.subr.bf16.mxu0 %v979
        %1979 = vmatpush1.bf16.msra.mxu0 %v978
        %1980 = vmatprep.subr.bf16.mxu0 %v987
        %1981 = vmatpush1.bf16.msra.mxu0 %v986
        %1982 = vmatprep.subr.bf16.mxu0 %v995
        %1983 = vmatpush1.bf16.msra.mxu0 %v994
        %1984 = vmatprep.subr.bf16.mxu0 %v1003
        %1985 = vmatpush1.bf16.msra.mxu0 %v1002
        %1986 = vmatprep.subr.bf16.mxu0 %v1011
        %1987 = vmatpush1.bf16.msra.mxu0 %v1010
        %1988 = vmatprep.subr.bf16.mxu0 %v1019
        %1989 = vmatpush1.bf16.msra.mxu0 %v1018
        %1990 = vmatprep.subr.bf16.mxu0 %v1027
        %1991 = vmatpush1.bf16.msra.mxu0 %v1026
        %1992 = vmatprep.subr.bf16.mxu0 %v1035
        %1993 = vmatpush1.bf16.msra.mxu0 %v1034
        %1994 = vmatprep.subr.bf16.mxu0 %v1043
        %1995 = vmatpush1.bf16.msra.mxu0 %v1042
        %1996 = vmatprep.subr.bf16.mxu0 %v1051
        %1997 = vmatpush1.bf16.msra.mxu0 %v1050
        %1998 = vmatprep.subr.bf16.mxu0 %v1059
        %1999 = vmatpush1.bf16.msra.mxu0 %v1058
        %2000 = vmatprep.subr.bf16.mxu0 %v1067
        %2001 = vmatpush1.bf16.msra.mxu0 %v1066
        %2002 = vmatprep.mubr.bf16.mxu0 %v419
        %2003 = vmatmul.mubr.bf16.gmra.mrb[0].mxu0 %v418
        %v2004 = vpop.f32.mrb[0].mxu0
        %v2005 = vadd.f32 0.0, %v2004
        %v2006 = vpop.f32.mrb[0].mxu0
        %v2007 = vadd.f32 0.0, %v2006
        %v2008 = vpop.f32.mrb[0].mxu0
        %v2009 = vpop.f32.mrb[0].mxu0
        %2010 = vdwg.mxu0
        %2011 = vmatprep.subr.bf16.mxu0 %v1075
        %2012 = vmatpush1.bf16.msra.mxu0 %v1074
        %2013 = vmatprep.subr.bf16.mxu0 %v1083
        %2014 = vmatpush1.bf16.msra.mxu0 %v1082
        %2015 = vmatprep.subr.bf16.mxu0 %v1091
        %2016 = vmatpush1.bf16.msra.mxu0 %v1090
        %2017 = vmatprep.subr.bf16.mxu0 %v1099
        %2018 = vmatpush1.bf16.msra.mxu0 %v1098
        %2019 = vmatprep.subr.bf16.mxu0 %v1107
        %2020 = vmatpush1.bf16.msra.mxu0 %v1106
        %2021 = vmatprep.subr.bf16.mxu0 %v1115
        %2022 = vmatpush1.bf16.msra.mxu0 %v1114
        %2023 = vmatprep.subr.bf16.mxu0 %v1123
        %2024 = vmatpush1.bf16.msra.mxu0 %v1122
        %2025 = vmatprep.subr.bf16.mxu0 %v1131
        %2026 = vmatpush1.bf16.msra.mxu0 %v1130
        %2027 = vmatprep.subr.bf16.mxu0 %v1139
        %2028 = vmatpush1.bf16.msra.mxu0 %v1138
        %2029 = vmatprep.subr.bf16.mxu0 %v1147
        %2030 = vmatpush1.bf16.msra.mxu0 %v1146
        %2031 = vmatprep.subr.bf16.mxu0 %v1155
        %2032 = vmatpush1.bf16.msra.mxu0 %v1154
        %2033 = vmatprep.subr.bf16.mxu0 %v1163
        %2034 = vmatpush1.bf16.msra.mxu0 %v1162
        %2035 = vmatprep.subr.bf16.mxu0 %v1171
        %2036 = vmatpush1.bf16.msra.mxu0 %v1170
        %2037 = vmatprep.subr.bf16.mxu0 %v1179
        %2038 = vmatpush1.bf16.msra.mxu0 %v1178
        %2039 = vmatprep.subr.bf16.mxu0 %v1187
        %2040 = vmatpush1.bf16.msra.mxu0 %v1186
        %2041 = vmatprep.subr.bf16.mxu0 %v1195
        %2042 = vmatpush1.bf16.msra.mxu0 %v1194
        %2043 = vmatprep.mubr.bf16.mxu0 %v421
        %2044 = vmatmul.mubr.bf16.gmra.mrb[0].mxu0 %v420
        %v2045 = vpop.f32.mrb[0].mxu0
        %v2046 = vadd.f32 %v2005, %v2045
        %v2047 = vpop.f32.mrb[0].mxu0
        %v2048 = vadd.f32 %v2007, %v2047
        %v2049 = vpop.f32.mrb[0].mxu0
        %v2050 = vpop.f32.mrb[0].mxu0
        %2051 = vdwg.mxu0
        %2052 = vmatprep.subr.bf16.mxu0 %v1203
        %2053 = vmatpush1.bf16.msra.mxu0 %v1202
        %2054 = vmatprep.subr.bf16.mxu0 %v1211
        %2055 = vmatpush1.bf16.msra.mxu0 %v1210
        %2056 = vmatprep.subr.bf16.mxu0 %v1219
        %2057 = vmatpush1.bf16.msra.mxu0 %v1218
        %2058 = vmatprep.subr.bf16.mxu0 %v1227
        %2059 = vmatpush1.bf16.msra.mxu0 %v1226
        %2060 = vmatprep.subr.bf16.mxu0 %v1235
        %2061 = vmatpush1.bf16.msra.mxu0 %v1234
        %2062 = vmatprep.subr.bf16.mxu0 %v1243
        %2063 = vmatpush1.bf16.msra.mxu0 %v1242
        %2064 = vmatprep.subr.bf16.mxu0 %v1251
        %2065 = vmatpush1.bf16.msra.mxu0 %v1250
        %2066 = vmatprep.subr.bf16.mxu0 %v1259
        %2067 = vmatpush1.bf16.msra.mxu0 %v1258
        %2068 = vmatprep.subr.bf16.mxu0 %v1267
        %2069 = vmatpush1.bf16.msra.mxu0 %v1266
        %2070 = vmatprep.subr.bf16.mxu0 %v1275
        %2071 = vmatpush1.bf16.msra.mxu0 %v1274
        %2072 = vmatprep.subr.bf16.mxu0 %v1283
        %2073 = vmatpush1.bf16.msra.mxu0 %v1282
        %2074 = vmatprep.subr.bf16.mxu0 %v1291
        %2075 = vmatpush1.bf16.msra.mxu0 %v1290
        %2076 = vmatprep.subr.bf16.mxu0 %v1299
        %2077 = vmatpush1.bf16.msra.mxu0 %v1298
        %2078 = vmatprep.subr.bf16.mxu0 %v1307
        %2079 = vmatpush1.bf16.msra.mxu0 %v1306
        %2080 = vmatprep.subr.bf16.mxu0 %v1315
        %2081 = vmatpush1.bf16.msra.mxu0 %v1314
        %2082 = vmatprep.subr.bf16.mxu0 %v1323
        %2083 = vmatpush1.bf16.msra.mxu0 %v1322
        %2084 = vmatprep.mubr.bf16.mxu0 %v423
        %2085 = vmatmul.mubr.bf16.gmra.mrb[0].mxu0 %v422
        %v2086 = vpop.f32.mrb[0].mxu0
        %v2087 = vadd.f32 %v2046, %v2086
        %v2088 = vpop.f32.mrb[0].mxu0
        %v2089 = vadd.f32 %v2048, %v2088
        %v2090 = vpop.f32.mrb[0].mxu0
        %v2091 = vpop.f32.mrb[0].mxu0
        %2092 = vdwg.mxu0
        %2093 = vmatprep.subr.bf16.mxu0 %v1331
        %2094 = vmatpush1.bf16.msra.mxu0 %v1330
        %2095 = vmatprep.subr.bf16.mxu0 %v1339
        %2096 = vmatpush1.bf16.msra.mxu0 %v1338
        %2097 = vmatprep.subr.bf16.mxu0 %v1347
        %2098 = vmatpush1.bf16.msra.mxu0 %v1346
        %2099 = vmatprep.subr.bf16.mxu0 %v1355
        %2100 = vmatpush1.bf16.msra.mxu0 %v1354
        %2101 = vmatprep.subr.bf16.mxu0 %v1363
        %2102 = vmatpush1.bf16.msra.mxu0 %v1362
        %2103 = vmatprep.subr.bf16.mxu0 %v1371
        %2104 = vmatpush1.bf16.msra.mxu0 %v1370
        %2105 = vmatprep.subr.bf16.mxu0 %v1379
        %2106 = vmatpush1.bf16.msra.mxu0 %v1378
        %2107 = vmatprep.subr.bf16.mxu0 %v1387
        %2108 = vmatpush1.bf16.msra.mxu0 %v1386
        %2109 = vmatprep.subr.bf16.mxu0 %v1395
        %2110 = vmatpush1.bf16.msra.mxu0 %v1394
        %2111 = vmatprep.subr.bf16.mxu0 %v1403
        %2112 = vmatpush1.bf16.msra.mxu0 %v1402
        %2113 = vmatprep.subr.bf16.mxu0 %v1411
        %2114 = vmatpush1.bf16.msra.mxu0 %v1410
        %2115 = vmatprep.subr.bf16.mxu0 %v1419
        %2116 = vmatpush1.bf16.msra.mxu0 %v1418
        %2117 = vmatprep.subr.bf16.mxu0 %v1427
        %2118 = vmatpush1.bf16.msra.mxu0 %v1426
        %2119 = vmatprep.subr.bf16.mxu0 %v1435
        %2120 = vmatpush1.bf16.msra.mxu0 %v1434
        %2121 = vmatprep.subr.bf16.mxu0 %v1443
        %2122 = vmatpush1.bf16.msra.mxu0 %v1442
        %2123 = vmatprep.subr.bf16.mxu0 %v1451
        %2124 = vmatpush1.bf16.msra.mxu0 %v1450
        %2125 = vmatprep.mubr.bf16.mxu0 %v425
        %2126 = vmatmul.mubr.bf16.gmra.mrb[0].mxu0 %v424
        %v2127 = vpop.f32.mrb[0].mxu0
        %v2128 = vadd.f32 %v2087, %v2127
        %v2129 = vpop.f32.mrb[0].mxu0
        %v2130 = vadd.f32 %v2089, %v2129
        %v2131 = vpop.f32.mrb[0].mxu0
        %v2132 = vpop.f32.mrb[0].mxu0
        %2133 = vdwg.mxu0
        %2134 = vmatprep.subr.bf16.mxu0 %v1459
        %2135 = vmatpush1.bf16.msra.mxu0 %v1458
        %2136 = vmatprep.subr.bf16.mxu0 %v1467
        %2137 = vmatpush1.bf16.msra.mxu0 %v1466
        %2138 = vmatprep.subr.bf16.mxu0 %v1475
        %2139 = vmatpush1.bf16.msra.mxu0 %v1474
        %2140 = vmatprep.subr.bf16.mxu0 %v1483
        %2141 = vmatpush1.bf16.msra.mxu0 %v1482
        %2142 = vmatprep.subr.bf16.mxu0 %v1491
        %2143 = vmatpush1.bf16.msra.mxu0 %v1490
        %2144 = vmatprep.subr.bf16.mxu0 %v1499
        %2145 = vmatpush1.bf16.msra.mxu0 %v1498
        %2146 = vmatprep.subr.bf16.mxu0 %v1507
        %2147 = vmatpush1.bf16.msra.mxu0 %v1506
        %2148 = vmatprep.subr.bf16.mxu0 %v1515
        %2149 = vmatpush1.bf16.msra.mxu0 %v1514
        %2150 = vmatprep.subr.bf16.mxu0 %v1523
        %2151 = vmatpush1.bf16.msra.mxu0 %v1522
        %2152 = vmatprep.subr.bf16.mxu0 %v1531
        %2153 = vmatpush1.bf16.msra.mxu0 %v1530
        %2154 = vmatprep.subr.bf16.mxu0 %v1539
        %2155 = vmatpush1.bf16.msra.mxu0 %v1538
        %2156 = vmatprep.subr.bf16.mxu0 %v1547
        %2157 = vmatpush1.bf16.msra.mxu0 %v1546
        %2158 = vmatprep.subr.bf16.mxu0 %v1555
        %2159 = vmatpush1.bf16.msra.mxu0 %v1554
        %2160 = vmatprep.subr.bf16.mxu0 %v1563
        %2161 = vmatpush1.bf16.msra.mxu0 %v1562
        %2162 = vmatprep.subr.bf16.mxu0 %v1571
        %2163 = vmatpush1.bf16.msra.mxu0 %v1570
        %2164 = vmatprep.subr.bf16.mxu0 %v1579
        %2165 = vmatpush1.bf16.msra.mxu0 %v1578
        %2166 = vmatprep.mubr.bf16.mxu0 %v427
        %2167 = vmatmul.mubr.bf16.gmra.mrb[0].mxu0 %v426
        %v2168 = vpop.f32.mrb[0].mxu0
        %v2169 = vadd.f32 %v2128, %v2168
        %v2170 = vpop.f32.mrb[0].mxu0
        %v2171 = vadd.f32 %v2130, %v2170
        %v2172 = vpop.f32.mrb[0].mxu0
        %v2173 = vpop.f32.mrb[0].mxu0
        %2174 = vdwg.mxu0
        %2175 = vmatprep.subr.bf16.mxu0 %v1587
        %2176 = vmatpush1.bf16.msra.mxu0 %v1586
        %2177 = vmatprep.subr.bf16.mxu0 %v1595
        %2178 = vmatpush1.bf16.msra.mxu0 %v1594
        %2179 = vmatprep.subr.bf16.mxu0 %v1603
        %2180 = vmatpush1.bf16.msra.mxu0 %v1602
        %2181 = vmatprep.subr.bf16.mxu0 %v1611
        %2182 = vmatpush1.bf16.msra.mxu0 %v1610
        %2183 = vmatprep.subr.bf16.mxu0 %v1619
        %2184 = vmatpush1.bf16.msra.mxu0 %v1618
        %2185 = vmatprep.subr.bf16.mxu0 %v1627
        %2186 = vmatpush1.bf16.msra.mxu0 %v1626
        %2187 = vmatprep.subr.bf16.mxu0 %v1635
        %2188 = vmatpush1.bf16.msra.mxu0 %v1634
        %2189 = vmatprep.subr.bf16.mxu0 %v1643
        %2190 = vmatpush1.bf16.msra.mxu0 %v1642
        %2191 = vmatprep.subr.bf16.mxu0 %v1651
        %2192 = vmatpush1.bf16.msra.mxu0 %v1650
        %2193 = vmatprep.subr.bf16.mxu0 %v1659
        %2194 = vmatpush1.bf16.msra.mxu0 %v1658
        %2195 = vmatprep.subr.bf16.mxu0 %v1667
        %2196 = vmatpush1.bf16.msra.mxu0 %v1666
        %2197 = vmatprep.subr.bf16.mxu0 %v1675
        %2198 = vmatpush1.bf16.msra.mxu0 %v1674
        %2199 = vmatprep.subr.bf16.mxu0 %v1683
        %2200 = vmatpush1.bf16.msra.mxu0 %v1682
        %2201 = vmatprep.subr.bf16.mxu0 %v1691
        %2202 = vmatpush1.bf16.msra.mxu0 %v1690
        %2203 = vmatprep.subr.bf16.mxu0 %v1699
        %2204 = vmatpush1.bf16.msra.mxu0 %v1698
        %2205 = vmatprep.subr.bf16.mxu0 %v1707
        %2206 = vmatpush1.bf16.msra.mxu0 %v1706
        %2207 = vmatprep.mubr.bf16.mxu0 %v429
        %2208 = vmatmul.mubr.bf16.gmra.mrb[0].mxu0 %v428
        %v2209 = vpop.f32.mrb[0].mxu0
        %v2210 = vadd.f32 %v2169, %v2209
        %v2211 = vpop.f32.mrb[0].mxu0
        %v2212 = vadd.f32 %v2171, %v2211
        %v2213 = vpop.f32.mrb[0].mxu0
        %v2214 = vpop.f32.mrb[0].mxu0
        %2215 = vdwg.mxu0
        %2216 = vmatprep.subr.bf16.mxu0 %v1715
        %2217 = vmatpush1.bf16.msra.mxu0 %v1714
        %2218 = vmatprep.subr.bf16.mxu0 %v1723
        %2219 = vmatpush1.bf16.msra.mxu0 %v1722
        %2220 = vmatprep.subr.bf16.mxu0 %v1731
        %2221 = vmatpush1.bf16.msra.mxu0 %v1730
        %2222 = vmatprep.subr.bf16.mxu0 %v1739
        %2223 = vmatpush1.bf16.msra.mxu0 %v1738
        %2224 = vmatprep.subr.bf16.mxu0 %v1747
        %2225 = vmatpush1.bf16.msra.mxu0 %v1746
        %2226 = vmatprep.subr.bf16.mxu0 %v1755
        %2227 = vmatpush1.bf16.msra.mxu0 %v1754
        %2228 = vmatprep.subr.bf16.mxu0 %v1763
        %2229 = vmatpush1.bf16.msra.mxu0 %v1762
        %2230 = vmatprep.subr.bf16.mxu0 %v1771
        %2231 = vmatpush1.bf16.msra.mxu0 %v1770
        %2232 = vmatprep.subr.bf16.mxu0 %v1779
        %2233 = vmatpush1.bf16.msra.mxu0 %v1778
        %2234 = vmatprep.subr.bf16.mxu0 %v1787
        %2235 = vmatpush1.bf16.msra.mxu0 %v1786
        %2236 = vmatprep.subr.bf16.mxu0 %v1795
        %2237 = vmatpush1.bf16.msra.mxu0 %v1794
        %2238 = vmatprep.subr.bf16.mxu0 %v1803
        %2239 = vmatpush1.bf16.msra.mxu0 %v1802
        %2240 = vmatprep.subr.bf16.mxu0 %v1811
        %2241 = vmatpush1.bf16.msra.mxu0 %v1810
        %2242 = vmatprep.subr.bf16.mxu0 %v1819
        %2243 = vmatpush1.bf16.msra.mxu0 %v1818
        %2244 = vmatprep.subr.bf16.mxu0 %v1827
        %2245 = vmatpush1.bf16.msra.mxu0 %v1826
        %2246 = vmatprep.subr.bf16.mxu0 %v1835
        %2247 = vmatpush1.bf16.msra.mxu0 %v1834
        %2248 = vmatprep.mubr.bf16.mxu0 %v431
        %2249 = vmatmul.mubr.bf16.gmra.mrb[0].mxu0 %v430
        %v2250 = vpop.f32.mrb[0].mxu0
        %v2251 = vadd.f32 %v2210, %v2250
        %v2252 = vpop.f32.mrb[0].mxu0
        %v2253 = vadd.f32 %v2212, %v2252
        %v2254 = vpop.f32.mrb[0].mxu0
        %v2255 = vpop.f32.mrb[0].mxu0
        %2256 = vdwg.mxu0
        %2257 = vmatprep.subr.bf16.mxu0 %v1843
        %2258 = vmatpush1.bf16.msra.mxu0 %v1842
        %2259 = vmatprep.subr.bf16.mxu0 %v1851
        %2260 = vmatpush1.bf16.msra.mxu0 %v1850
        %2261 = vmatprep.subr.bf16.mxu0 %v1859
        %2262 = vmatpush1.bf16.msra.mxu0 %v1858
        %2263 = vmatprep.subr.bf16.mxu0 %v1867
        %2264 = vmatpush1.bf16.msra.mxu0 %v1866
        %2265 = vmatprep.subr.bf16.mxu0 %v1875
        %2266 = vmatpush1.bf16.msra.mxu0 %v1874
        %2267 = vmatprep.subr.bf16.mxu0 %v1883
        %2268 = vmatpush1.bf16.msra.mxu0 %v1882
        %2269 = vmatprep.subr.bf16.mxu0 %v1891
        %2270 = vmatpush1.bf16.msra.mxu0 %v1890
        %2271 = vmatprep.subr.bf16.mxu0 %v1899
        %2272 = vmatpush1.bf16.msra.mxu0 %v1898
        %2273 = vmatprep.subr.bf16.mxu0 %v1907
        %2274 = vmatpush1.bf16.msra.mxu0 %v1906
        %2275 = vmatprep.subr.bf16.mxu0 %v1915
        %2276 = vmatpush1.bf16.msra.mxu0 %v1914
        %2277 = vmatprep.subr.bf16.mxu0 %v1923
        %2278 = vmatpush1.bf16.msra.mxu0 %v1922
        %2279 = vmatprep.subr.bf16.mxu0 %v1931
        %2280 = vmatpush1.bf16.msra.mxu0 %v1930
        %2281 = vmatprep.subr.bf16.mxu0 %v1939
        %2282 = vmatpush1.bf16.msra.mxu0 %v1938
        %2283 = vmatprep.subr.bf16.mxu0 %v1947
        %2284 = vmatpush1.bf16.msra.mxu0 %v1946
        %2285 = vmatprep.subr.bf16.mxu0 %v1955
        %2286 = vmatpush1.bf16.msra.mxu0 %v1954
        %2287 = vmatprep.subr.bf16.mxu0 %v1963
        %2288 = vmatpush1.bf16.msra.mxu0 %v1962
        %2289 = vmatprep.mubr.bf16.mxu0 %v433
        %2290 = vmatmul.mubr.bf16.gmra.mrb[0].mxu0 %v432
        %v2291 = vpop.f32.mrb[0].mxu0
        %v2292 = vadd.f32 %v2251, %v2291
        %v2293 = vpop.f32.mrb[0].mxu0
        %v2294 = vadd.f32 %v2253, %v2293
        %v2295 = vpop.f32.mrb[0].mxu0
        %v2296 = vpop.f32.mrb[0].mxu0
        %2297 = vdwg.mxu0
        %2298 = vmatprep.subr.bf16.mxu0 %v949
        %2299 = vmatpush1.bf16.msra.mxu0 %v948
        %2300 = vmatprep.subr.bf16.mxu0 %v957
        %2301 = vmatpush1.bf16.msra.mxu0 %v956
        %2302 = vmatprep.subr.bf16.mxu0 %v965
        %2303 = vmatpush1.bf16.msra.mxu0 %v964
        %2304 = vmatprep.subr.bf16.mxu0 %v973
        %2305 = vmatpush1.bf16.msra.mxu0 %v972
        %2306 = vmatprep.subr.bf16.mxu0 %v981
        %2307 = vmatpush1.bf16.msra.mxu0 %v980
        %2308 = vmatprep.subr.bf16.mxu0 %v989
        %2309 = vmatpush1.bf16.msra.mxu0 %v988
        %2310 = vmatprep.subr.bf16.mxu0 %v997
        %2311 = vmatpush1.bf16.msra.mxu0 %v996
        %2312 = vmatprep.subr.bf16.mxu0 %v1005
        %2313 = vmatpush1.bf16.msra.mxu0 %v1004
        %2314 = vmatprep.subr.bf16.mxu0 %v1013
        %2315 = vmatpush1.bf16.msra.mxu0 %v1012
        %2316 = vmatprep.subr.bf16.mxu0 %v1021
        %2317 = vmatpush1.bf16.msra.mxu0 %v1020
        %2318 = vmatprep.subr.bf16.mxu0 %v1029
        %2319 = vmatpush1.bf16.msra.mxu0 %v1028
        %2320 = vmatprep.subr.bf16.mxu0 %v1037
        %2321 = vmatpush1.bf16.msra.mxu0 %v1036
        %2322 = vmatprep.subr.bf16.mxu0 %v1045
        %2323 = vmatpush1.bf16.msra.mxu0 %v1044
        %2324 = vmatprep.subr.bf16.mxu0 %v1053
        %2325 = vmatpush1.bf16.msra.mxu0 %v1052
        %2326 = vmatprep.subr.bf16.mxu0 %v1061
        %2327 = vmatpush1.bf16.msra.mxu0 %v1060
        %2328 = vmatprep.subr.bf16.mxu0 %v1069
        %2329 = vmatpush1.bf16.msra.mxu0 %v1068
        %2330 = vmatprep.mubr.bf16.mxu0 %v419
        %2331 = vmatmul.mubr.bf16.gmra.mrb[0].mxu0 %v418
        %v2332 = vpop.f32.mrb[0].mxu0
        %v2333 = vadd.f32 0.0, %v2332
        %v2334 = vpop.f32.mrb[0].mxu0
        %v2335 = vadd.f32 0.0, %v2334
        %v2336 = vpop.f32.mrb[0].mxu0
        %v2337 = vpop.f32.mrb[0].mxu0
        %2338 = vdwg.mxu0
        %2339 = vmatprep.subr.bf16.mxu0 %v1077
        %2340 = vmatpush1.bf16.msra.mxu0 %v1076
        %2341 = vmatprep.subr.bf16.mxu0 %v1085
        %2342 = vmatpush1.bf16.msra.mxu0 %v1084
        %2343 = vmatprep.subr.bf16.mxu0 %v1093
        %2344 = vmatpush1.bf16.msra.mxu0 %v1092
        %2345 = vmatprep.subr.bf16.mxu0 %v1101
        %2346 = vmatpush1.bf16.msra.mxu0 %v1100
        %2347 = vmatprep.subr.bf16.mxu0 %v1109
        %2348 = vmatpush1.bf16.msra.mxu0 %v1108
        %2349 = vmatprep.subr.bf16.mxu0 %v1117
        %2350 = vmatpush1.bf16.msra.mxu0 %v1116
        %2351 = vmatprep.subr.bf16.mxu0 %v1125
        %2352 = vmatpush1.bf16.msra.mxu0 %v1124
        %2353 = vmatprep.subr.bf16.mxu0 %v1133
        %2354 = vmatpush1.bf16.msra.mxu0 %v1132
        %2355 = vmatprep.subr.bf16.mxu0 %v1141
        %2356 = vmatpush1.bf16.msra.mxu0 %v1140
        %2357 = vmatprep.subr.bf16.mxu0 %v1149
        %2358 = vmatpush1.bf16.msra.mxu0 %v1148
        %2359 = vmatprep.subr.bf16.mxu0 %v1157
        %2360 = vmatpush1.bf16.msra.mxu0 %v1156
        %2361 = vmatprep.subr.bf16.mxu0 %v1165
        %2362 = vmatpush1.bf16.msra.mxu0 %v1164
        %2363 = vmatprep.subr.bf16.mxu0 %v1173
        %2364 = vmatpush1.bf16.msra.mxu0 %v1172
        %2365 = vmatprep.subr.bf16.mxu0 %v1181
        %2366 = vmatpush1.bf16.msra.mxu0 %v1180
        %2367 = vmatprep.subr.bf16.mxu0 %v1189
        %2368 = vmatpush1.bf16.msra.mxu0 %v1188
        %2369 = vmatprep.subr.bf16.mxu0 %v1197
        %2370 = vmatpush1.bf16.msra.mxu0 %v1196
        %2371 = vmatprep.mubr.bf16.mxu0 %v421
        %2372 = vmatmul.mubr.bf16.gmra.mrb[0].mxu0 %v420
        %v2373 = vpop.f32.mrb[0].mxu0
        %v2374 = vadd.f32 %v2333, %v2373
        %v2375 = vpop.f32.mrb[0].mxu0
        %v2376 = vadd.f32 %v2335, %v2375
        %v2377 = vpop.f32.mrb[0].mxu0
        %v2378 = vpop.f32.mrb[0].mxu0
        %2379 = vdwg.mxu0
        %2380 = vmatprep.subr.bf16.mxu0 %v1205
        %2381 = vmatpush1.bf16.msra.mxu0 %v1204
        %2382 = vmatprep.subr.bf16.mxu0 %v1213
        %2383 = vmatpush1.bf16.msra.mxu0 %v1212
        %2384 = vmatprep.subr.bf16.mxu0 %v1221
        %2385 = vmatpush1.bf16.msra.mxu0 %v1220
        %2386 = vmatprep.subr.bf16.mxu0 %v1229
        %2387 = vmatpush1.bf16.msra.mxu0 %v1228
        %2388 = vmatprep.subr.bf16.mxu0 %v1237
        %2389 = vmatpush1.bf16.msra.mxu0 %v1236
        %2390 = vmatprep.subr.bf16.mxu0 %v1245
        %2391 = vmatpush1.bf16.msra.mxu0 %v1244
        %2392 = vmatprep.subr.bf16.mxu0 %v1253
        %2393 = vmatpush1.bf16.msra.mxu0 %v1252
        %2394 = vmatprep.subr.bf16.mxu0 %v1261
        %2395 = vmatpush1.bf16.msra.mxu0 %v1260
        %2396 = vmatprep.subr.bf16.mxu0 %v1269
        %2397 = vmatpush1.bf16.msra.mxu0 %v1268
        %2398 = vmatprep.subr.bf16.mxu0 %v1277
        %2399 = vmatpush1.bf16.msra.mxu0 %v1276
        %2400 = vmatprep.subr.bf16.mxu0 %v1285
        %2401 = vmatpush1.bf16.msra.mxu0 %v1284
        %2402 = vmatprep.subr.bf16.mxu0 %v1293
        %2403 = vmatpush1.bf16.msra.mxu0 %v1292
        %2404 = vmatprep.subr.bf16.mxu0 %v1301
        %2405 = vmatpush1.bf16.msra.mxu0 %v1300
        %2406 = vmatprep.subr.bf16.mxu0 %v1309
        %2407 = vmatpush1.bf16.msra.mxu0 %v1308
        %2408 = vmatprep.subr.bf16.mxu0 %v1317
        %2409 = vmatpush1.bf16.msra.mxu0 %v1316
        %2410 = vmatprep.subr.bf16.mxu0 %v1325
        %2411 = vmatpush1.bf16.msra.mxu0 %v1324
        %2412 = vmatprep.mubr.bf16.mxu0 %v423
        %2413 = vmatmul.mubr.bf16.gmra.mrb[0].mxu0 %v422
        %v2414 = vpop.f32.mrb[0].mxu0
        %v2415 = vadd.f32 %v2374, %v2414
        %v2416 = vpop.f32.mrb[0].mxu0
        %v2417 = vadd.f32 %v2376, %v2416
        %v2418 = vpop.f32.mrb[0].mxu0
        %v2419 = vpop.f32.mrb[0].mxu0
        %2420 = vdwg.mxu0
        %2421 = vmatprep.subr.bf16.mxu0 %v1333
        %2422 = vmatpush1.bf16.msra.mxu0 %v1332
        %2423 = vmatprep.subr.bf16.mxu0 %v1341
        %2424 = vmatpush1.bf16.msra.mxu0 %v1340
        %2425 = vmatprep.subr.bf16.mxu0 %v1349
        %2426 = vmatpush1.bf16.msra.mxu0 %v1348
        %2427 = vmatprep.subr.bf16.mxu0 %v1357
        %2428 = vmatpush1.bf16.msra.mxu0 %v1356
        %2429 = vmatprep.subr.bf16.mxu0 %v1365
        %2430 = vmatpush1.bf16.msra.mxu0 %v1364
        %2431 = vmatprep.subr.bf16.mxu0 %v1373
        %2432 = vmatpush1.bf16.msra.mxu0 %v1372
        %2433 = vmatprep.subr.bf16.mxu0 %v1381
        %2434 = vmatpush1.bf16.msra.mxu0 %v1380
        %2435 = vmatprep.subr.bf16.mxu0 %v1389
        %2436 = vmatpush1.bf16.msra.mxu0 %v1388
        %2437 = vmatprep.subr.bf16.mxu0 %v1397
        %2438 = vmatpush1.bf16.msra.mxu0 %v1396
        %2439 = vmatprep.subr.bf16.mxu0 %v1405
        %2440 = vmatpush1.bf16.msra.mxu0 %v1404
        %2441 = vmatprep.subr.bf16.mxu0 %v1413
        %2442 = vmatpush1.bf16.msra.mxu0 %v1412
        %2443 = vmatprep.subr.bf16.mxu0 %v1421
        %2444 = vmatpush1.bf16.msra.mxu0 %v1420
        %2445 = vmatprep.subr.bf16.mxu0 %v1429
        %2446 = vmatpush1.bf16.msra.mxu0 %v1428
        %2447 = vmatprep.subr.bf16.mxu0 %v1437
        %2448 = vmatpush1.bf16.msra.mxu0 %v1436
        %2449 = vmatprep.subr.bf16.mxu0 %v1445
        %2450 = vmatpush1.bf16.msra.mxu0 %v1444
        %2451 = vmatprep.subr.bf16.mxu0 %v1453
        %2452 = vmatpush1.bf16.msra.mxu0 %v1452
        %2453 = vmatprep.mubr.bf16.mxu0 %v425
        %2454 = vmatmul.mubr.bf16.gmra.mrb[0].mxu0 %v424
        %v2455 = vpop.f32.mrb[0].mxu0
        %v2456 = vadd.f32 %v2415, %v2455
        %v2457 = vpop.f32.mrb[0].mxu0
        %v2458 = vadd.f32 %v2417, %v2457
        %v2459 = vpop.f32.mrb[0].mxu0
        %v2460 = vpop.f32.mrb[0].mxu0
        %2461 = vdwg.mxu0
        %2462 = vmatprep.subr.bf16.mxu0 %v1461
        %2463 = vmatpush1.bf16.msra.mxu0 %v1460
        %2464 = vmatprep.subr.bf16.mxu0 %v1469
        %2465 = vmatpush1.bf16.msra.mxu0 %v1468
        %2466 = vmatprep.subr.bf16.mxu0 %v1477
        %2467 = vmatpush1.bf16.msra.mxu0 %v1476
        %2468 = vmatprep.subr.bf16.mxu0 %v1485
        %2469 = vmatpush1.bf16.msra.mxu0 %v1484
        %2470 = vmatprep.subr.bf16.mxu0 %v1493
        %2471 = vmatpush1.bf16.msra.mxu0 %v1492
        %2472 = vmatprep.subr.bf16.mxu0 %v1501
        %2473 = vmatpush1.bf16.msra.mxu0 %v1500
        %2474 = vmatprep.subr.bf16.mxu0 %v1509
        %2475 = vmatpush1.bf16.msra.mxu0 %v1508
        %2476 = vmatprep.subr.bf16.mxu0 %v1517
        %2477 = vmatpush1.bf16.msra.mxu0 %v1516
        %2478 = vmatprep.subr.bf16.mxu0 %v1525
        %2479 = vmatpush1.bf16.msra.mxu0 %v1524
        %2480 = vmatprep.subr.bf16.mxu0 %v1533
        %2481 = vmatpush1.bf16.msra.mxu0 %v1532
        %2482 = vmatprep.subr.bf16.mxu0 %v1541
        %2483 = vmatpush1.bf16.msra.mxu0 %v1540
        %2484 = vmatprep.subr.bf16.mxu0 %v1549
        %2485 = vmatpush1.bf16.msra.mxu0 %v1548
        %2486 = vmatprep.subr.bf16.mxu0 %v1557
        %2487 = vmatpush1.bf16.msra.mxu0 %v1556
        %2488 = vmatprep.subr.bf16.mxu0 %v1565
        %2489 = vmatpush1.bf16.msra.mxu0 %v1564
        %2490 = vmatprep.subr.bf16.mxu0 %v1573
        %2491 = vmatpush1.bf16.msra.mxu0 %v1572
        %2492 = vmatprep.subr.bf16.mxu0 %v1581
        %2493 = vmatpush1.bf16.msra.mxu0 %v1580
        %2494 = vmatprep.mubr.bf16.mxu0 %v427
        %2495 = vmatmul.mubr.bf16.gmra.mrb[0].mxu0 %v426
        %v2496 = vpop.f32.mrb[0].mxu0
        %v2497 = vadd.f32 %v2456, %v2496
        %v2498 = vpop.f32.mrb[0].mxu0
        %v2499 = vadd.f32 %v2458, %v2498
        %v2500 = vpop.f32.mrb[0].mxu0
        %v2501 = vpop.f32.mrb[0].mxu0
        %2502 = vdwg.mxu0
        %2503 = vmatprep.subr.bf16.mxu0 %v1589
        %2504 = vmatpush1.bf16.msra.mxu0 %v1588
        %2505 = vmatprep.subr.bf16.mxu0 %v1597
        %2506 = vmatpush1.bf16.msra.mxu0 %v1596
        %2507 = vmatprep.subr.bf16.mxu0 %v1605
        %2508 = vmatpush1.bf16.msra.mxu0 %v1604
        %2509 = vmatprep.subr.bf16.mxu0 %v1613
        %2510 = vmatpush1.bf16.msra.mxu0 %v1612
        %2511 = vmatprep.subr.bf16.mxu0 %v1621
        %2512 = vmatpush1.bf16.msra.mxu0 %v1620
        %2513 = vmatprep.subr.bf16.mxu0 %v1629
        %2514 = vmatpush1.bf16.msra.mxu0 %v1628
        %2515 = vmatprep.subr.bf16.mxu0 %v1637
        %2516 = vmatpush1.bf16.msra.mxu0 %v1636
        %2517 = vmatprep.subr.bf16.mxu0 %v1645
        %2518 = vmatpush1.bf16.msra.mxu0 %v1644
        %2519 = vmatprep.subr.bf16.mxu0 %v1653
        %2520 = vmatpush1.bf16.msra.mxu0 %v1652
        %2521 = vmatprep.subr.bf16.mxu0 %v1661
        %2522 = vmatpush1.bf16.msra.mxu0 %v1660
        %2523 = vmatprep.subr.bf16.mxu0 %v1669
        %2524 = vmatpush1.bf16.msra.mxu0 %v1668
        %2525 = vmatprep.subr.bf16.mxu0 %v1677
        %2526 = vmatpush1.bf16.msra.mxu0 %v1676
        %2527 = vmatprep.subr.bf16.mxu0 %v1685
        %2528 = vmatpush1.bf16.msra.mxu0 %v1684
        %2529 = vmatprep.subr.bf16.mxu0 %v1693
        %2530 = vmatpush1.bf16.msra.mxu0 %v1692
        %2531 = vmatprep.subr.bf16.mxu0 %v1701
        %2532 = vmatpush1.bf16.msra.mxu0 %v1700
        %2533 = vmatprep.subr.bf16.mxu0 %v1709
        %2534 = vmatpush1.bf16.msra.mxu0 %v1708
        %2535 = vmatprep.mubr.bf16.mxu0 %v429
        %2536 = vmatmul.mubr.bf16.gmra.mrb[0].mxu0 %v428
        %v2537 = vpop.f32.mrb[0].mxu0
        %v2538 = vadd.f32 %v2497, %v2537
        %v2539 = vpop.f32.mrb[0].mxu0
        %v2540 = vadd.f32 %v2499, %v2539
        %v2541 = vpop.f32.mrb[0].mxu0
        %v2542 = vpop.f32.mrb[0].mxu0
        %2543 = vdwg.mxu0
        %2544 = vmatprep.subr.bf16.mxu0 %v1717
        %2545 = vmatpush1.bf16.msra.mxu0 %v1716
        %2546 = vmatprep.subr.bf16.mxu0 %v1725
        %2547 = vmatpush1.bf16.msra.mxu0 %v1724
        %2548 = vmatprep.subr.bf16.mxu0 %v1733
        %2549 = vmatpush1.bf16.msra.mxu0 %v1732
        %2550 = vmatprep.subr.bf16.mxu0 %v1741
        %2551 = vmatpush1.bf16.msra.mxu0 %v1740
        %2552 = vmatprep.subr.bf16.mxu0 %v1749
        %2553 = vmatpush1.bf16.msra.mxu0 %v1748
        %2554 = vmatprep.subr.bf16.mxu0 %v1757
        %2555 = vmatpush1.bf16.msra.mxu0 %v1756
        %2556 = vmatprep.subr.bf16.mxu0 %v1765
        %2557 = vmatpush1.bf16.msra.mxu0 %v1764
        %2558 = vmatprep.subr.bf16.mxu0 %v1773
        %2559 = vmatpush1.bf16.msra.mxu0 %v1772
        %2560 = vmatprep.subr.bf16.mxu0 %v1781
        %2561 = vmatpush1.bf16.msra.mxu0 %v1780
        %2562 = vmatprep.subr.bf16.mxu0 %v1789
        %2563 = vmatpush1.bf16.msra.mxu0 %v1788
        %2564 = vmatprep.subr.bf16.mxu0 %v1797
        %2565 = vmatpush1.bf16.msra.mxu0 %v1796
        %2566 = vmatprep.subr.bf16.mxu0 %v1805
        %2567 = vmatpush1.bf16.msra.mxu0 %v1804
        %2568 = vmatprep.subr.bf16.mxu0 %v1813
        %2569 = vmatpush1.bf16.msra.mxu0 %v1812
        %2570 = vmatprep.subr.bf16.mxu0 %v1821
        %2571 = vmatpush1.bf16.msra.mxu0 %v1820
        %2572 = vmatprep.subr.bf16.mxu0 %v1829
        %2573 = vmatpush1.bf16.msra.mxu0 %v1828
        %2574 = vmatprep.subr.bf16.mxu0 %v1837
        %2575 = vmatpush1.bf16.msra.mxu0 %v1836
        %2576 = vmatprep.mubr.bf16.mxu0 %v431
        %2577 = vmatmul.mubr.bf16.gmra.mrb[0].mxu0 %v430
        %v2578 = vpop.f32.mrb[0].mxu0
        %v2579 = vadd.f32 %v2538, %v2578
        %v2580 = vpop.f32.mrb[0].mxu0
        %v2581 = vadd.f32 %v2540, %v2580
        %v2582 = vpop.f32.mrb[0].mxu0
        %v2583 = vpop.f32.mrb[0].mxu0
        %2584 = vdwg.mxu0
        %2585 = vmatprep.subr.bf16.mxu0 %v1845
        %2586 = vmatpush1.bf16.msra.mxu0 %v1844
        %2587 = vmatprep.subr.bf16.mxu0 %v1853
        %2588 = vmatpush1.bf16.msra.mxu0 %v1852
        %2589 = vmatprep.subr.bf16.mxu0 %v1861
        %2590 = vmatpush1.bf16.msra.mxu0 %v1860
        %2591 = vmatprep.subr.bf16.mxu0 %v1869
        %2592 = vmatpush1.bf16.msra.mxu0 %v1868
        %2593 = vmatprep.subr.bf16.mxu0 %v1877
        %2594 = vmatpush1.bf16.msra.mxu0 %v1876
        %2595 = vmatprep.subr.bf16.mxu0 %v1885
        %2596 = vmatpush1.bf16.msra.mxu0 %v1884
        %2597 = vmatprep.subr.bf16.mxu0 %v1893
        %2598 = vmatpush1.bf16.msra.mxu0 %v1892
        %2599 = vmatprep.subr.bf16.mxu0 %v1901
        %2600 = vmatpush1.bf16.msra.mxu0 %v1900
        %2601 = vmatprep.subr.bf16.mxu0 %v1909
        %2602 = vmatpush1.bf16.msra.mxu0 %v1908
        %2603 = vmatprep.subr.bf16.mxu0 %v1917
        %2604 = vmatpush1.bf16.msra.mxu0 %v1916
        %2605 = vmatprep.subr.bf16.mxu0 %v1925
        %2606 = vmatpush1.bf16.msra.mxu0 %v1924
        %2607 = vmatprep.subr.bf16.mxu0 %v1933
        %2608 = vmatpush1.bf16.msra.mxu0 %v1932
        %2609 = vmatprep.subr.bf16.mxu0 %v1941
        %2610 = vmatpush1.bf16.msra.mxu0 %v1940
        %2611 = vmatprep.subr.bf16.mxu0 %v1949
        %2612 = vmatpush1.bf16.msra.mxu0 %v1948
        %2613 = vmatprep.subr.bf16.mxu0 %v1957
        %2614 = vmatpush1.bf16.msra.mxu0 %v1956
        %2615 = vmatprep.subr.bf16.mxu0 %v1965
        %2616 = vmatpush1.bf16.msra.mxu0 %v1964
        %2617 = vmatprep.mubr.bf16.mxu0 %v433
        %2618 = vmatmul.mubr.bf16.gmra.mrb[0].mxu0 %v432
        %v2619 = vpop.f32.mrb[0].mxu0
        %v2620 = vadd.f32 %v2579, %v2619
        %v2621 = vpop.f32.mrb[0].mxu0
        %v2622 = vadd.f32 %v2581, %v2621
        %v2623 = vpop.f32.mrb[0].mxu0
        %v2624 = vpop.f32.mrb[0].mxu0
        %2625 = vdwg.mxu0
        %2626 = vmatprep.subr.bf16.mxu0 %v951
        %2627 = vmatpush1.bf16.msra.mxu0 %v950
        %2628 = vmatprep.subr.bf16.mxu0 %v959
        %2629 = vmatpush1.bf16.msra.mxu0 %v958
        %2630 = vmatprep.subr.bf16.mxu0 %v967
        %2631 = vmatpush1.bf16.msra.mxu0 %v966
        %2632 = vmatprep.subr.bf16.mxu0 %v975
        %2633 = vmatpush1.bf16.msra.mxu0 %v974
        %2634 = vmatprep.subr.bf16.mxu0 %v983
        %2635 = vmatpush1.bf16.msra.mxu0 %v982
        %2636 = vmatprep.subr.bf16.mxu0 %v991
        %2637 = vmatpush1.bf16.msra.mxu0 %v990
        %2638 = vmatprep.subr.bf16.mxu0 %v999
        %2639 = vmatpush1.bf16.msra.mxu0 %v998
        %2640 = vmatprep.subr.bf16.mxu0 %v1007
        %2641 = vmatpush1.bf16.msra.mxu0 %v1006
        %2642 = vmatprep.subr.bf16.mxu0 %v1015
        %2643 = vmatpush1.bf16.msra.mxu0 %v1014
        %2644 = vmatprep.subr.bf16.mxu0 %v1023
        %2645 = vmatpush1.bf16.msra.mxu0 %v1022
        %2646 = vmatprep.subr.bf16.mxu0 %v1031
        %2647 = vmatpush1.bf16.msra.mxu0 %v1030
        %2648 = vmatprep.subr.bf16.mxu0 %v1039
        %2649 = vmatpush1.bf16.msra.mxu0 %v1038
        %2650 = vmatprep.subr.bf16.mxu0 %v1047
        %2651 = vmatpush1.bf16.msra.mxu0 %v1046
        %2652 = vmatprep.subr.bf16.mxu0 %v1055
        %2653 = vmatpush1.bf16.msra.mxu0 %v1054
        %2654 = vmatprep.subr.bf16.mxu0 %v1063
        %2655 = vmatpush1.bf16.msra.mxu0 %v1062
        %2656 = vmatprep.subr.bf16.mxu0 %v1071
        %2657 = vmatpush1.bf16.msra.mxu0 %v1070
        %2658 = vmatprep.mubr.bf16.mxu0 %v419
        %2659 = vmatmul.mubr.bf16.gmra.mrb[0].mxu0 %v418
        %v2660 = vpop.f32.mrb[0].mxu0
        %v2661 = vadd.f32 0.0, %v2660
        %v2662 = vpop.f32.mrb[0].mxu0
        %v2663 = vadd.f32 0.0, %v2662
        %v2664 = vpop.f32.mrb[0].mxu0
        %v2665 = vpop.f32.mrb[0].mxu0
        %2666 = vdwg.mxu0
        %2667 = vmatprep.subr.bf16.mxu0 %v1079
        %2668 = vmatpush1.bf16.msra.mxu0 %v1078
        %2669 = vmatprep.subr.bf16.mxu0 %v1087
        %2670 = vmatpush1.bf16.msra.mxu0 %v1086
        %2671 = vmatprep.subr.bf16.mxu0 %v1095
        %2672 = vmatpush1.bf16.msra.mxu0 %v1094
        %2673 = vmatprep.subr.bf16.mxu0 %v1103
        %2674 = vmatpush1.bf16.msra.mxu0 %v1102
        %2675 = vmatprep.subr.bf16.mxu0 %v1111
        %2676 = vmatpush1.bf16.msra.mxu0 %v1110
        %2677 = vmatprep.subr.bf16.mxu0 %v1119
        %2678 = vmatpush1.bf16.msra.mxu0 %v1118
        %2679 = vmatprep.subr.bf16.mxu0 %v1127
        %2680 = vmatpush1.bf16.msra.mxu0 %v1126
        %2681 = vmatprep.subr.bf16.mxu0 %v1135
        %2682 = vmatpush1.bf16.msra.mxu0 %v1134
        %2683 = vmatprep.subr.bf16.mxu0 %v1143
        %2684 = vmatpush1.bf16.msra.mxu0 %v1142
        %2685 = vmatprep.subr.bf16.mxu0 %v1151
        %2686 = vmatpush1.bf16.msra.mxu0 %v1150
        %2687 = vmatprep.subr.bf16.mxu0 %v1159
        %2688 = vmatpush1.bf16.msra.mxu0 %v1158
        %2689 = vmatprep.subr.bf16.mxu0 %v1167
        %2690 = vmatpush1.bf16.msra.mxu0 %v1166
        %2691 = vmatprep.subr.bf16.mxu0 %v1175
        %2692 = vmatpush1.bf16.msra.mxu0 %v1174
        %2693 = vmatprep.subr.bf16.mxu0 %v1183
        %2694 = vmatpush1.bf16.msra.mxu0 %v1182
        %2695 = vmatprep.subr.bf16.mxu0 %v1191
        %2696 = vmatpush1.bf16.msra.mxu0 %v1190
        %2697 = vmatprep.subr.bf16.mxu0 %v1199
        %2698 = vmatpush1.bf16.msra.mxu0 %v1198
        %2699 = vmatprep.mubr.bf16.mxu0 %v421
        %2700 = vmatmul.mubr.bf16.gmra.mrb[0].mxu0 %v420
        %v2701 = vpop.f32.mrb[0].mxu0
        %v2702 = vadd.f32 %v2661, %v2701
        %v2703 = vpop.f32.mrb[0].mxu0
        %v2704 = vadd.f32 %v2663, %v2703
        %v2705 = vpop.f32.mrb[0].mxu0
        %v2706 = vpop.f32.mrb[0].mxu0
        %2707 = vdwg.mxu0
        %2708 = vmatprep.subr.bf16.mxu0 %v1207
        %2709 = vmatpush1.bf16.msra.mxu0 %v1206
        %2710 = vmatprep.subr.bf16.mxu0 %v1215
        %2711 = vmatpush1.bf16.msra.mxu0 %v1214
        %2712 = vmatprep.subr.bf16.mxu0 %v1223
        %2713 = vmatpush1.bf16.msra.mxu0 %v1222
        %2714 = vmatprep.subr.bf16.mxu0 %v1231
        %2715 = vmatpush1.bf16.msra.mxu0 %v1230
        %2716 = vmatprep.subr.bf16.mxu0 %v1239
        %2717 = vmatpush1.bf16.msra.mxu0 %v1238
        %2718 = vmatprep.subr.bf16.mxu0 %v1247
        %2719 = vmatpush1.bf16.msra.mxu0 %v1246
        %2720 = vmatprep.subr.bf16.mxu0 %v1255
        %2721 = vmatpush1.bf16.msra.mxu0 %v1254
        %2722 = vmatprep.subr.bf16.mxu0 %v1263
        %2723 = vmatpush1.bf16.msra.mxu0 %v1262
        %2724 = vmatprep.subr.bf16.mxu0 %v1271
        %2725 = vmatpush1.bf16.msra.mxu0 %v1270
        %2726 = vmatprep.subr.bf16.mxu0 %v1279
        %2727 = vmatpush1.bf16.msra.mxu0 %v1278
        %2728 = vmatprep.subr.bf16.mxu0 %v1287
        %2729 = vmatpush1.bf16.msra.mxu0 %v1286
        %2730 = vmatprep.subr.bf16.mxu0 %v1295
        %2731 = vmatpush1.bf16.msra.mxu0 %v1294
        %2732 = vmatprep.subr.bf16.mxu0 %v1303
        %2733 = vmatpush1.bf16.msra.mxu0 %v1302
        %2734 = vmatprep.subr.bf16.mxu0 %v1311
        %2735 = vmatpush1.bf16.msra.mxu0 %v1310
        %2736 = vmatprep.subr.bf16.mxu0 %v1319
        %2737 = vmatpush1.bf16.msra.mxu0 %v1318
        %2738 = vmatprep.subr.bf16.mxu0 %v1327
        %2739 = vmatpush1.bf16.msra.mxu0 %v1326
        %2740 = vmatprep.mubr.bf16.mxu0 %v423
        %2741 = vmatmul.mubr.bf16.gmra.mrb[0].mxu0 %v422
        %v2742 = vpop.f32.mrb[0].mxu0
        %v2743 = vadd.f32 %v2702, %v2742
        %v2744 = vpop.f32.mrb[0].mxu0
        %v2745 = vadd.f32 %v2704, %v2744
        %v2746 = vpop.f32.mrb[0].mxu0
        %v2747 = vpop.f32.mrb[0].mxu0
        %2748 = vdwg.mxu0
        %2749 = vmatprep.subr.bf16.mxu0 %v1335
        %2750 = vmatpush1.bf16.msra.mxu0 %v1334
        %2751 = vmatprep.subr.bf16.mxu0 %v1343
        %2752 = vmatpush1.bf16.msra.mxu0 %v1342
        %2753 = vmatprep.subr.bf16.mxu0 %v1351
        %2754 = vmatpush1.bf16.msra.mxu0 %v1350
        %2755 = vmatprep.subr.bf16.mxu0 %v1359
        %2756 = vmatpush1.bf16.msra.mxu0 %v1358
        %2757 = vmatprep.subr.bf16.mxu0 %v1367
        %2758 = vmatpush1.bf16.msra.mxu0 %v1366
        %2759 = vmatprep.subr.bf16.mxu0 %v1375
        %2760 = vmatpush1.bf16.msra.mxu0 %v1374
        %2761 = vmatprep.subr.bf16.mxu0 %v1383
        %2762 = vmatpush1.bf16.msra.mxu0 %v1382
        %2763 = vmatprep.subr.bf16.mxu0 %v1391
        %2764 = vmatpush1.bf16.msra.mxu0 %v1390
        %2765 = vmatprep.subr.bf16.mxu0 %v1399
        %2766 = vmatpush1.bf16.msra.mxu0 %v1398
        %2767 = vmatprep.subr.bf16.mxu0 %v1407
        %2768 = vmatpush1.bf16.msra.mxu0 %v1406
        %2769 = vmatprep.subr.bf16.mxu0 %v1415
        %2770 = vmatpush1.bf16.msra.mxu0 %v1414
        %2771 = vmatprep.subr.bf16.mxu0 %v1423
        %2772 = vmatpush1.bf16.msra.mxu0 %v1422
        %2773 = vmatprep.subr.bf16.mxu0 %v1431
        %2774 = vmatpush1.bf16.msra.mxu0 %v1430
        %2775 = vmatprep.subr.bf16.mxu0 %v1439
        %2776 = vmatpush1.bf16.msra.mxu0 %v1438
        %2777 = vmatprep.subr.bf16.mxu0 %v1447
        %2778 = vmatpush1.bf16.msra.mxu0 %v1446
        %2779 = vmatprep.subr.bf16.mxu0 %v1455
        %2780 = vmatpush1.bf16.msra.mxu0 %v1454
        %2781 = vmatprep.mubr.bf16.mxu0 %v425
        %2782 = vmatmul.mubr.bf16.gmra.mrb[0].mxu0 %v424
        %v2783 = vpop.f32.mrb[0].mxu0
        %v2784 = vadd.f32 %v2743, %v2783
        %v2785 = vpop.f32.mrb[0].mxu0
        %v2786 = vadd.f32 %v2745, %v2785
        %v2787 = vpop.f32.mrb[0].mxu0
        %v2788 = vpop.f32.mrb[0].mxu0
        %2789 = vdwg.mxu0
        %2790 = vmatprep.subr.bf16.mxu0 %v1463
        %2791 = vmatpush1.bf16.msra.mxu0 %v1462
        %2792 = vmatprep.subr.bf16.mxu0 %v1471
        %2793 = vmatpush1.bf16.msra.mxu0 %v1470
        %2794 = vmatprep.subr.bf16.mxu0 %v1479
        %2795 = vmatpush1.bf16.msra.mxu0 %v1478
        %2796 = vmatprep.subr.bf16.mxu0 %v1487
        %2797 = vmatpush1.bf16.msra.mxu0 %v1486
        %2798 = vmatprep.subr.bf16.mxu0 %v1495
        %2799 = vmatpush1.bf16.msra.mxu0 %v1494
        %2800 = vmatprep.subr.bf16.mxu0 %v1503
        %2801 = vmatpush1.bf16.msra.mxu0 %v1502
        %2802 = vmatprep.subr.bf16.mxu0 %v1511
        %2803 = vmatpush1.bf16.msra.mxu0 %v1510
        %2804 = vmatprep.subr.bf16.mxu0 %v1519
        %2805 = vmatpush1.bf16.msra.mxu0 %v1518
        %2806 = vmatprep.subr.bf16.mxu0 %v1527
        %2807 = vmatpush1.bf16.msra.mxu0 %v1526
        %2808 = vmatprep.subr.bf16.mxu0 %v1535
        %2809 = vmatpush1.bf16.msra.mxu0 %v1534
        %2810 = vmatprep.subr.bf16.mxu0 %v1543
        %2811 = vmatpush1.bf16.msra.mxu0 %v1542
        %2812 = vmatprep.subr.bf16.mxu0 %v1551
        %2813 = vmatpush1.bf16.msra.mxu0 %v1550
        %2814 = vmatprep.subr.bf16.mxu0 %v1559
        %2815 = vmatpush1.bf16.msra.mxu0 %v1558
        %2816 = vmatprep.subr.bf16.mxu0 %v1567
        %2817 = vmatpush1.bf16.msra.mxu0 %v1566
        %2818 = vmatprep.subr.bf16.mxu0 %v1575
        %2819 = vmatpush1.bf16.msra.mxu0 %v1574
        %2820 = vmatprep.subr.bf16.mxu0 %v1583
        %2821 = vmatpush1.bf16.msra.mxu0 %v1582
        %2822 = vmatprep.mubr.bf16.mxu0 %v427
        %2823 = vmatmul.mubr.bf16.gmra.mrb[0].mxu0 %v426
        %v2824 = vpop.f32.mrb[0].mxu0
        %v2825 = vadd.f32 %v2784, %v2824
        %v2826 = vpop.f32.mrb[0].mxu0
        %v2827 = vadd.f32 %v2786, %v2826
        %v2828 = vpop.f32.mrb[0].mxu0
        %v2829 = vpop.f32.mrb[0].mxu0
        %2830 = vdwg.mxu0
        %2831 = vmatprep.subr.bf16.mxu0 %v1591
        %2832 = vmatpush1.bf16.msra.mxu0 %v1590
        %2833 = vmatprep.subr.bf16.mxu0 %v1599
        %2834 = vmatpush1.bf16.msra.mxu0 %v1598
        %2835 = vmatprep.subr.bf16.mxu0 %v1607
        %2836 = vmatpush1.bf16.msra.mxu0 %v1606
        %2837 = vmatprep.subr.bf16.mxu0 %v1615
        %2838 = vmatpush1.bf16.msra.mxu0 %v1614
        %2839 = vmatprep.subr.bf16.mxu0 %v1623
        %2840 = vmatpush1.bf16.msra.mxu0 %v1622
        %2841 = vmatprep.subr.bf16.mxu0 %v1631
        %2842 = vmatpush1.bf16.msra.mxu0 %v1630
        %2843 = vmatprep.subr.bf16.mxu0 %v1639
        %2844 = vmatpush1.bf16.msra.mxu0 %v1638
        %2845 = vmatprep.subr.bf16.mxu0 %v1647
        %2846 = vmatpush1.bf16.msra.mxu0 %v1646
        %2847 = vmatprep.subr.bf16.mxu0 %v1655
        %2848 = vmatpush1.bf16.msra.mxu0 %v1654
        %2849 = vmatprep.subr.bf16.mxu0 %v1663
        %2850 = vmatpush1.bf16.msra.mxu0 %v1662
        %2851 = vmatprep.subr.bf16.mxu0 %v1671
        %2852 = vmatpush1.bf16.msra.mxu0 %v1670
        %2853 = vmatprep.subr.bf16.mxu0 %v1679
        %2854 = vmatpush1.bf16.msra.mxu0 %v1678
        %2855 = vmatprep.subr.bf16.mxu0 %v1687
        %2856 = vmatpush1.bf16.msra.mxu0 %v1686
        %2857 = vmatprep.subr.bf16.mxu0 %v1695
        %2858 = vmatpush1.bf16.msra.mxu0 %v1694
        %2859 = vmatprep.subr.bf16.mxu0 %v1703
        %2860 = vmatpush1.bf16.msra.mxu0 %v1702
        %2861 = vmatprep.subr.bf16.mxu0 %v1711
        %2862 = vmatpush1.bf16.msra.mxu0 %v1710
        %2863 = vmatprep.mubr.bf16.mxu0 %v429
        %2864 = vmatmul.mubr.bf16.gmra.mrb[0].mxu0 %v428
        %v2865 = vpop.f32.mrb[0].mxu0
        %v2866 = vadd.f32 %v2825, %v2865
        %v2867 = vpop.f32.mrb[0].mxu0
        %v2868 = vadd.f32 %v2827, %v2867
        %v2869 = vpop.f32.mrb[0].mxu0
        %v2870 = vpop.f32.mrb[0].mxu0
        %2871 = vdwg.mxu0
        %2872 = vmatprep.subr.bf16.mxu0 %v1719
        %2873 = vmatpush1.bf16.msra.mxu0 %v1718
        %2874 = vmatprep.subr.bf16.mxu0 %v1727
        %2875 = vmatpush1.bf16.msra.mxu0 %v1726
        %2876 = vmatprep.subr.bf16.mxu0 %v1735
        %2877 = vmatpush1.bf16.msra.mxu0 %v1734
        %2878 = vmatprep.subr.bf16.mxu0 %v1743
        %2879 = vmatpush1.bf16.msra.mxu0 %v1742
        %2880 = vmatprep.subr.bf16.mxu0 %v1751
        %2881 = vmatpush1.bf16.msra.mxu0 %v1750
        %2882 = vmatprep.subr.bf16.mxu0 %v1759
        %2883 = vmatpush1.bf16.msra.mxu0 %v1758
        %2884 = vmatprep.subr.bf16.mxu0 %v1767
        %2885 = vmatpush1.bf16.msra.mxu0 %v1766
        %2886 = vmatprep.subr.bf16.mxu0 %v1775
        %2887 = vmatpush1.bf16.msra.mxu0 %v1774
        %2888 = vmatprep.subr.bf16.mxu0 %v1783
        %2889 = vmatpush1.bf16.msra.mxu0 %v1782
        %2890 = vmatprep.subr.bf16.mxu0 %v1791
        %2891 = vmatpush1.bf16.msra.mxu0 %v1790
        %2892 = vmatprep.subr.bf16.mxu0 %v1799
        %2893 = vmatpush1.bf16.msra.mxu0 %v1798
        %2894 = vmatprep.subr.bf16.mxu0 %v1807
        %2895 = vmatpush1.bf16.msra.mxu0 %v1806
        %2896 = vmatprep.subr.bf16.mxu0 %v1815
        %2897 = vmatpush1.bf16.msra.mxu0 %v1814
        %2898 = vmatprep.subr.bf16.mxu0 %v1823
        %2899 = vmatpush1.bf16.msra.mxu0 %v1822
        %2900 = vmatprep.subr.bf16.mxu0 %v1831
        %2901 = vmatpush1.bf16.msra.mxu0 %v1830
        %2902 = vmatprep.subr.bf16.mxu0 %v1839
        %2903 = vmatpush1.bf16.msra.mxu0 %v1838
        %2904 = vmatprep.mubr.bf16.mxu0 %v431
        %2905 = vmatmul.mubr.bf16.gmra.mrb[0].mxu0 %v430
        %v2906 = vpop.f32.mrb[0].mxu0
        %v2907 = vadd.f32 %v2866, %v2906
        %v2908 = vpop.f32.mrb[0].mxu0
        %v2909 = vadd.f32 %v2868, %v2908
        %v2910 = vpop.f32.mrb[0].mxu0
        %v2911 = vpop.f32.mrb[0].mxu0
        %2912 = vdwg.mxu0
        %2913 = vmatprep.subr.bf16.mxu0 %v1847
        %2914 = vmatpush1.bf16.msra.mxu0 %v1846
        %2915 = vmatprep.subr.bf16.mxu0 %v1855
        %2916 = vmatpush1.bf16.msra.mxu0 %v1854
        %2917 = vmatprep.subr.bf16.mxu0 %v1863
        %2918 = vmatpush1.bf16.msra.mxu0 %v1862
        %2919 = vmatprep.subr.bf16.mxu0 %v1871
        %2920 = vmatpush1.bf16.msra.mxu0 %v1870
        %2921 = vmatprep.subr.bf16.mxu0 %v1879
        %2922 = vmatpush1.bf16.msra.mxu0 %v1878
        %2923 = vmatprep.subr.bf16.mxu0 %v1887
        %2924 = vmatpush1.bf16.msra.mxu0 %v1886
        %2925 = vmatprep.subr.bf16.mxu0 %v1895
        %2926 = vmatpush1.bf16.msra.mxu0 %v1894
        %2927 = vmatprep.subr.bf16.mxu0 %v1903
        %2928 = vmatpush1.bf16.msra.mxu0 %v1902
        %2929 = vmatprep.subr.bf16.mxu0 %v1911
        %2930 = vmatpush1.bf16.msra.mxu0 %v1910
        %2931 = vmatprep.subr.bf16.mxu0 %v1919
        %2932 = vmatpush1.bf16.msra.mxu0 %v1918
        %2933 = vmatprep.subr.bf16.mxu0 %v1927
        %2934 = vmatpush1.bf16.msra.mxu0 %v1926
        %2935 = vmatprep.subr.bf16.mxu0 %v1935
        %2936 = vmatpush1.bf16.msra.mxu0 %v1934
        %2937 = vmatprep.subr.bf16.mxu0 %v1943
        %2938 = vmatpush1.bf16.msra.mxu0 %v1942
        %2939 = vmatprep.subr.bf16.mxu0 %v1951
        %2940 = vmatpush1.bf16.msra.mxu0 %v1950
        %2941 = vmatprep.subr.bf16.mxu0 %v1959
        %2942 = vmatpush1.bf16.msra.mxu0 %v1958
        %2943 = vmatprep.subr.bf16.mxu0 %v1967
        %2944 = vmatpush1.bf16.msra.mxu0 %v1966
        %2945 = vmatprep.mubr.bf16.mxu0 %v433
        %2946 = vmatmul.mubr.bf16.gmra.mrb[0].mxu0 %v432
        %v2947 = vpop.f32.mrb[0].mxu0
        %v2948 = vadd.f32 %v2907, %v2947
        %v2949 = vpop.f32.mrb[0].mxu0
        %v2950 = vadd.f32 %v2909, %v2949
        %v2951 = vpop.f32.mrb[0].mxu0
        %v2952 = vpop.f32.mrb[0].mxu0
        %2953 = vdwg.mxu0
        %2954 = vmatprep.subr.bf16.mxu0 %v953
        %2955 = vmatpush1.bf16.msra.mxu0 %v952
        %2956 = vmatprep.subr.bf16.mxu0 %v961
        %2957 = vmatpush1.bf16.msra.mxu0 %v960
        %2958 = vmatprep.subr.bf16.mxu0 %v969
        %2959 = vmatpush1.bf16.msra.mxu0 %v968
        %2960 = vmatprep.subr.bf16.mxu0 %v977
        %2961 = vmatpush1.bf16.msra.mxu0 %v976
        %2962 = vmatprep.subr.bf16.mxu0 %v985
        %2963 = vmatpush1.bf16.msra.mxu0 %v984
        %2964 = vmatprep.subr.bf16.mxu0 %v993
        %2965 = vmatpush1.bf16.msra.mxu0 %v992
        %2966 = vmatprep.subr.bf16.mxu0 %v1001
        %2967 = vmatpush1.bf16.msra.mxu0 %v1000
        %2968 = vmatprep.subr.bf16.mxu0 %v1009
        %2969 = vmatpush1.bf16.msra.mxu0 %v1008
        %2970 = vmatprep.subr.bf16.mxu0 %v1017
        %2971 = vmatpush1.bf16.msra.mxu0 %v1016
        %2972 = vmatprep.subr.bf16.mxu0 %v1025
        %2973 = vmatpush1.bf16.msra.mxu0 %v1024
        %2974 = vmatprep.subr.bf16.mxu0 %v1033
        %2975 = vmatpush1.bf16.msra.mxu0 %v1032
        %2976 = vmatprep.subr.bf16.mxu0 %v1041
        %2977 = vmatpush1.bf16.msra.mxu0 %v1040
        %2978 = vmatprep.subr.bf16.mxu0 %v1049
        %2979 = vmatpush1.bf16.msra.mxu0 %v1048
        %2980 = vmatprep.subr.bf16.mxu0 %v1057
        %2981 = vmatpush1.bf16.msra.mxu0 %v1056
        %2982 = vmatprep.subr.bf16.mxu0 %v1065
        %2983 = vmatpush1.bf16.msra.mxu0 %v1064
        %2984 = vmatprep.subr.bf16.mxu0 %v1073
        %2985 = vmatpush1.bf16.msra.mxu0 %v1072
        %2986 = vmatprep.mubr.bf16.mxu0 %v419
        %2987 = vmatmul.mubr.bf16.gmra.mrb[0].mxu0 %v418
        %v2988 = vpop.f32.mrb[0].mxu0
        %v2989 = vadd.f32 0.0, %v2988
        %v2990 = vpop.f32.mrb[0].mxu0
        %v2991 = vadd.f32 0.0, %v2990
        %v2992 = vpop.f32.mrb[0].mxu0
        %v2993 = vpop.f32.mrb[0].mxu0
        %2994 = vdwg.mxu0
        %2995 = vmatprep.subr.bf16.mxu0 %v1081
        %2996 = vmatpush1.bf16.msra.mxu0 %v1080
        %2997 = vmatprep.subr.bf16.mxu0 %v1089
        %2998 = vmatpush1.bf16.msra.mxu0 %v1088
        %2999 = vmatprep.subr.bf16.mxu0 %v1097
        %3000 = vmatpush1.bf16.msra.mxu0 %v1096
        %3001 = vmatprep.subr.bf16.mxu0 %v1105
        %3002 = vmatpush1.bf16.msra.mxu0 %v1104
        %3003 = vmatprep.subr.bf16.mxu0 %v1113
        %3004 = vmatpush1.bf16.msra.mxu0 %v1112
        %3005 = vmatprep.subr.bf16.mxu0 %v1121
        %3006 = vmatpush1.bf16.msra.mxu0 %v1120
        %3007 = vmatprep.subr.bf16.mxu0 %v1129
        %3008 = vmatpush1.bf16.msra.mxu0 %v1128
        %3009 = vmatprep.subr.bf16.mxu0 %v1137
        %3010 = vmatpush1.bf16.msra.mxu0 %v1136
        %3011 = vmatprep.subr.bf16.mxu0 %v1145
        %3012 = vmatpush1.bf16.msra.mxu0 %v1144
        %3013 = vmatprep.subr.bf16.mxu0 %v1153
        %3014 = vmatpush1.bf16.msra.mxu0 %v1152
        %3015 = vmatprep.subr.bf16.mxu0 %v1161
        %3016 = vmatpush1.bf16.msra.mxu0 %v1160
        %3017 = vmatprep.subr.bf16.mxu0 %v1169
        %3018 = vmatpush1.bf16.msra.mxu0 %v1168
        %3019 = vmatprep.subr.bf16.mxu0 %v1177
        %3020 = vmatpush1.bf16.msra.mxu0 %v1176
        %3021 = vmatprep.subr.bf16.mxu0 %v1185
        %3022 = vmatpush1.bf16.msra.mxu0 %v1184
        %3023 = vmatprep.subr.bf16.mxu0 %v1193
        %3024 = vmatpush1.bf16.msra.mxu0 %v1192
        %3025 = vmatprep.subr.bf16.mxu0 %v1201
        %3026 = vmatpush1.bf16.msra.mxu0 %v1200
        %3027 = vmatprep.mubr.bf16.mxu0 %v421
        %3028 = vmatmul.mubr.bf16.gmra.mrb[0].mxu0 %v420
        %v3029 = vpop.f32.mrb[0].mxu0
        %v3030 = vadd.f32 %v2989, %v3029
        %v3031 = vpop.f32.mrb[0].mxu0
        %v3032 = vadd.f32 %v2991, %v3031
        %v3033 = vpop.f32.mrb[0].mxu0
        %v3034 = vpop.f32.mrb[0].mxu0
        %3035 = vdwg.mxu0
        %3036 = vmatprep.subr.bf16.mxu0 %v1209
        %3037 = vmatpush1.bf16.msra.mxu0 %v1208
        %3038 = vmatprep.subr.bf16.mxu0 %v1217
        %3039 = vmatpush1.bf16.msra.mxu0 %v1216
        %3040 = vmatprep.subr.bf16.mxu0 %v1225
        %3041 = vmatpush1.bf16.msra.mxu0 %v1224
        %3042 = vmatprep.subr.bf16.mxu0 %v1233
        %3043 = vmatpush1.bf16.msra.mxu0 %v1232
        %3044 = vmatprep.subr.bf16.mxu0 %v1241
        %3045 = vmatpush1.bf16.msra.mxu0 %v1240
        %3046 = vmatprep.subr.bf16.mxu0 %v1249
        %3047 = vmatpush1.bf16.msra.mxu0 %v1248
        %3048 = vmatprep.subr.bf16.mxu0 %v1257
        %3049 = vmatpush1.bf16.msra.mxu0 %v1256
        %3050 = vmatprep.subr.bf16.mxu0 %v1265
        %3051 = vmatpush1.bf16.msra.mxu0 %v1264
        %3052 = vmatprep.subr.bf16.mxu0 %v1273
        %3053 = vmatpush1.bf16.msra.mxu0 %v1272
        %3054 = vmatprep.subr.bf16.mxu0 %v1281
        %3055 = vmatpush1.bf16.msra.mxu0 %v1280
        %3056 = vmatprep.subr.bf16.mxu0 %v1289
        %3057 = vmatpush1.bf16.msra.mxu0 %v1288
        %3058 = vmatprep.subr.bf16.mxu0 %v1297
        %3059 = vmatpush1.bf16.msra.mxu0 %v1296
        %3060 = vmatprep.subr.bf16.mxu0 %v1305
        %3061 = vmatpush1.bf16.msra.mxu0 %v1304
        %3062 = vmatprep.subr.bf16.mxu0 %v1313
        %3063 = vmatpush1.bf16.msra.mxu0 %v1312
        %3064 = vmatprep.subr.bf16.mxu0 %v1321
        %3065 = vmatpush1.bf16.msra.mxu0 %v1320
        %3066 = vmatprep.subr.bf16.mxu0 %v1329
        %3067 = vmatpush1.bf16.msra.mxu0 %v1328
        %3068 = vmatprep.mubr.bf16.mxu0 %v423
        %3069 = vmatmul.mubr.bf16.gmra.mrb[0].mxu0 %v422
        %v3070 = vpop.f32.mrb[0].mxu0
        %v3071 = vadd.f32 %v3030, %v3070
        %v3072 = vpop.f32.mrb[0].mxu0
        %v3073 = vadd.f32 %v3032, %v3072
        %v3074 = vpop.f32.mrb[0].mxu0
        %v3075 = vpop.f32.mrb[0].mxu0
        %3076 = vdwg.mxu0
        %3077 = vmatprep.subr.bf16.mxu0 %v1337
        %3078 = vmatpush1.bf16.msra.mxu0 %v1336
        %3079 = vmatprep.subr.bf16.mxu0 %v1345
        %3080 = vmatpush1.bf16.msra.mxu0 %v1344
        %3081 = vmatprep.subr.bf16.mxu0 %v1353
        %3082 = vmatpush1.bf16.msra.mxu0 %v1352
        %3083 = vmatprep.subr.bf16.mxu0 %v1361
        %3084 = vmatpush1.bf16.msra.mxu0 %v1360
        %3085 = vmatprep.subr.bf16.mxu0 %v1369
        %3086 = vmatpush1.bf16.msra.mxu0 %v1368
        %3087 = vmatprep.subr.bf16.mxu0 %v1377
        %3088 = vmatpush1.bf16.msra.mxu0 %v1376
        %3089 = vmatprep.subr.bf16.mxu0 %v1385
        %3090 = vmatpush1.bf16.msra.mxu0 %v1384
        %3091 = vmatprep.subr.bf16.mxu0 %v1393
        %3092 = vmatpush1.bf16.msra.mxu0 %v1392
        %3093 = vmatprep.subr.bf16.mxu0 %v1401
        %3094 = vmatpush1.bf16.msra.mxu0 %v1400
        %3095 = vmatprep.subr.bf16.mxu0 %v1409
        %3096 = vmatpush1.bf16.msra.mxu0 %v1408
        %3097 = vmatprep.subr.bf16.mxu0 %v1417
        %3098 = vmatpush1.bf16.msra.mxu0 %v1416
        %3099 = vmatprep.subr.bf16.mxu0 %v1425
        %3100 = vmatpush1.bf16.msra.mxu0 %v1424
        %3101 = vmatprep.subr.bf16.mxu0 %v1433
        %3102 = vmatpush1.bf16.msra.mxu0 %v1432
        %3103 = vmatprep.subr.bf16.mxu0 %v1441
        %3104 = vmatpush1.bf16.msra.mxu0 %v1440
        %3105 = vmatprep.subr.bf16.mxu0 %v1449
        %3106 = vmatpush1.bf16.msra.mxu0 %v1448
        %3107 = vmatprep.subr.bf16.mxu0 %v1457
        %3108 = vmatpush1.bf16.msra.mxu0 %v1456
        %3109 = vmatprep.mubr.bf16.mxu0 %v425
        %3110 = vmatmul.mubr.bf16.gmra.mrb[0].mxu0 %v424
        %v3111 = vpop.f32.mrb[0].mxu0
        %v3112 = vadd.f32 %v3071, %v3111
        %v3113 = vpop.f32.mrb[0].mxu0
        %v3114 = vadd.f32 %v3073, %v3113
        %v3115 = vpop.f32.mrb[0].mxu0
        %v3116 = vpop.f32.mrb[0].mxu0
        %3117 = vdwg.mxu0
        %3118 = vmatprep.subr.bf16.mxu0 %v1465
        %3119 = vmatpush1.bf16.msra.mxu0 %v1464
        %3120 = vmatprep.subr.bf16.mxu0 %v1473
        %3121 = vmatpush1.bf16.msra.mxu0 %v1472
        %3122 = vmatprep.subr.bf16.mxu0 %v1481
        %3123 = vmatpush1.bf16.msra.mxu0 %v1480
        %3124 = vmatprep.subr.bf16.mxu0 %v1489
        %3125 = vmatpush1.bf16.msra.mxu0 %v1488
        %3126 = vmatprep.subr.bf16.mxu0 %v1497
        %3127 = vmatpush1.bf16.msra.mxu0 %v1496
        %3128 = vmatprep.subr.bf16.mxu0 %v1505
        %3129 = vmatpush1.bf16.msra.mxu0 %v1504
        %3130 = vmatprep.subr.bf16.mxu0 %v1513
        %3131 = vmatpush1.bf16.msra.mxu0 %v1512
        %3132 = vmatprep.subr.bf16.mxu0 %v1521
        %3133 = vmatpush1.bf16.msra.mxu0 %v1520
        %3134 = vmatprep.subr.bf16.mxu0 %v1529
        %3135 = vmatpush1.bf16.msra.mxu0 %v1528
        %3136 = vmatprep.subr.bf16.mxu0 %v1537
        %3137 = vmatpush1.bf16.msra.mxu0 %v1536
        %3138 = vmatprep.subr.bf16.mxu0 %v1545
        %3139 = vmatpush1.bf16.msra.mxu0 %v1544
        %3140 = vmatprep.subr.bf16.mxu0 %v1553
        %3141 = vmatpush1.bf16.msra.mxu0 %v1552
        %3142 = vmatprep.subr.bf16.mxu0 %v1561
        %3143 = vmatpush1.bf16.msra.mxu0 %v1560
        %3144 = vmatprep.subr.bf16.mxu0 %v1569
        %3145 = vmatpush1.bf16.msra.mxu0 %v1568
        %3146 = vmatprep.subr.bf16.mxu0 %v1577
        %3147 = vmatpush1.bf16.msra.mxu0 %v1576
        %3148 = vmatprep.subr.bf16.mxu0 %v1585
        %3149 = vmatpush1.bf16.msra.mxu0 %v1584
        %3150 = vmatprep.mubr.bf16.mxu0 %v427
        %3151 = vmatmul.mubr.bf16.gmra.mrb[0].mxu0 %v426
        %v3152 = vpop.f32.mrb[0].mxu0
        %v3153 = vadd.f32 %v3112, %v3152
        %v3154 = vpop.f32.mrb[0].mxu0
        %v3155 = vadd.f32 %v3114, %v3154
        %v3156 = vpop.f32.mrb[0].mxu0
        %v3157 = vpop.f32.mrb[0].mxu0
        %3158 = vdwg.mxu0
        %3159 = vmatprep.subr.bf16.mxu0 %v1593
        %3160 = vmatpush1.bf16.msra.mxu0 %v1592
        %3161 = vmatprep.subr.bf16.mxu0 %v1601
        %3162 = vmatpush1.bf16.msra.mxu0 %v1600
        %3163 = vmatprep.subr.bf16.mxu0 %v1609
        %3164 = vmatpush1.bf16.msra.mxu0 %v1608
        %3165 = vmatprep.subr.bf16.mxu0 %v1617
        %3166 = vmatpush1.bf16.msra.mxu0 %v1616
        %3167 = vmatprep.subr.bf16.mxu0 %v1625
        %3168 = vmatpush1.bf16.msra.mxu0 %v1624
        %3169 = vmatprep.subr.bf16.mxu0 %v1633
        %3170 = vmatpush1.bf16.msra.mxu0 %v1632
        %3171 = vmatprep.subr.bf16.mxu0 %v1641
        %3172 = vmatpush1.bf16.msra.mxu0 %v1640
        %3173 = vmatprep.subr.bf16.mxu0 %v1649
        %3174 = vmatpush1.bf16.msra.mxu0 %v1648
        %3175 = vmatprep.subr.bf16.mxu0 %v1657
        %3176 = vmatpush1.bf16.msra.mxu0 %v1656
        %3177 = vmatprep.subr.bf16.mxu0 %v1665
        %3178 = vmatpush1.bf16.msra.mxu0 %v1664
        %3179 = vmatprep.subr.bf16.mxu0 %v1673
        %3180 = vmatpush1.bf16.msra.mxu0 %v1672
        %3181 = vmatprep.subr.bf16.mxu0 %v1681
        %3182 = vmatpush1.bf16.msra.mxu0 %v1680
        %3183 = vmatprep.subr.bf16.mxu0 %v1689
        %3184 = vmatpush1.bf16.msra.mxu0 %v1688
        %3185 = vmatprep.subr.bf16.mxu0 %v1697
        %3186 = vmatpush1.bf16.msra.mxu0 %v1696
        %3187 = vmatprep.subr.bf16.mxu0 %v1705
        %3188 = vmatpush1.bf16.msra.mxu0 %v1704
        %3189 = vmatprep.subr.bf16.mxu0 %v1713
        %3190 = vmatpush1.bf16.msra.mxu0 %v1712
        %3191 = vmatprep.mubr.bf16.mxu0 %v429
        %3192 = vmatmul.mubr.bf16.gmra.mrb[0].mxu0 %v428
        %v3193 = vpop.f32.mrb[0].mxu0
        %v3194 = vadd.f32 %v3153, %v3193
        %v3195 = vpop.f32.mrb[0].mxu0
        %v3196 = vadd.f32 %v3155, %v3195
        %v3197 = vpop.f32.mrb[0].mxu0
        %v3198 = vpop.f32.mrb[0].mxu0
        %3199 = vdwg.mxu0
        %3200 = vmatprep.subr.bf16.mxu0 %v1721
        %3201 = vmatpush1.bf16.msra.mxu0 %v1720
        %3202 = vmatprep.subr.bf16.mxu0 %v1729
        %3203 = vmatpush1.bf16.msra.mxu0 %v1728
        %3204 = vmatprep.subr.bf16.mxu0 %v1737
        %3205 = vmatpush1.bf16.msra.mxu0 %v1736
        %3206 = vmatprep.subr.bf16.mxu0 %v1745
        %3207 = vmatpush1.bf16.msra.mxu0 %v1744
        %3208 = vmatprep.subr.bf16.mxu0 %v1753
        %3209 = vmatpush1.bf16.msra.mxu0 %v1752
        %3210 = vmatprep.subr.bf16.mxu0 %v1761
        %3211 = vmatpush1.bf16.msra.mxu0 %v1760
        %3212 = vmatprep.subr.bf16.mxu0 %v1769
        %3213 = vmatpush1.bf16.msra.mxu0 %v1768
        %3214 = vmatprep.subr.bf16.mxu0 %v1777
        %3215 = vmatpush1.bf16.msra.mxu0 %v1776
        %3216 = vmatprep.subr.bf16.mxu0 %v1785
        %3217 = vmatpush1.bf16.msra.mxu0 %v1784
        %3218 = vmatprep.subr.bf16.mxu0 %v1793
        %3219 = vmatpush1.bf16.msra.mxu0 %v1792
        %3220 = vmatprep.subr.bf16.mxu0 %v1801
        %3221 = vmatpush1.bf16.msra.mxu0 %v1800
        %3222 = vmatprep.subr.bf16.mxu0 %v1809
        %3223 = vmatpush1.bf16.msra.mxu0 %v1808
        %3224 = vmatprep.subr.bf16.mxu0 %v1817
        %3225 = vmatpush1.bf16.msra.mxu0 %v1816
        %3226 = vmatprep.subr.bf16.mxu0 %v1825
        %3227 = vmatpush1.bf16.msra.mxu0 %v1824
        %3228 = vmatprep.subr.bf16.mxu0 %v1833
        %3229 = vmatpush1.bf16.msra.mxu0 %v1832
        %3230 = vmatprep.subr.bf16.mxu0 %v1841
        %3231 = vmatpush1.bf16.msra.mxu0 %v1840
        %3232 = vmatprep.mubr.bf16.mxu0 %v431
        %3233 = vmatmul.mubr.bf16.gmra.mrb[0].mxu0 %v430
        %v3234 = vpop.f32.mrb[0].mxu0
        %v3235 = vadd.f32 %v3194, %v3234
        %v3236 = vpop.f32.mrb[0].mxu0
        %v3237 = vadd.f32 %v3196, %v3236
        %v3238 = vpop.f32.mrb[0].mxu0
        %v3239 = vpop.f32.mrb[0].mxu0
        %3240 = vdwg.mxu0
        %3241 = vmatprep.subr.bf16.mxu0 %v1849
        %3242 = vmatpush1.bf16.msra.mxu0 %v1848
        %3243 = vmatprep.subr.bf16.mxu0 %v1857
        %3244 = vmatpush1.bf16.msra.mxu0 %v1856
        %3245 = vmatprep.subr.bf16.mxu0 %v1865
        %3246 = vmatpush1.bf16.msra.mxu0 %v1864
        %3247 = vmatprep.subr.bf16.mxu0 %v1873
        %3248 = vmatpush1.bf16.msra.mxu0 %v1872
        %3249 = vmatprep.subr.bf16.mxu0 %v1881
        %3250 = vmatpush1.bf16.msra.mxu0 %v1880
        %3251 = vmatprep.subr.bf16.mxu0 %v1889
        %3252 = vmatpush1.bf16.msra.mxu0 %v1888
        %3253 = vmatprep.subr.bf16.mxu0 %v1897
        %3254 = vmatpush1.bf16.msra.mxu0 %v1896
        %3255 = vmatprep.subr.bf16.mxu0 %v1905
        %3256 = vmatpush1.bf16.msra.mxu0 %v1904
        %3257 = vmatprep.subr.bf16.mxu0 %v1913
        %3258 = vmatpush1.bf16.msra.mxu0 %v1912
        %3259 = vmatprep.subr.bf16.mxu0 %v1921
        %3260 = vmatpush1.bf16.msra.mxu0 %v1920
        %3261 = vmatprep.subr.bf16.mxu0 %v1929
        %3262 = vmatpush1.bf16.msra.mxu0 %v1928
        %3263 = vmatprep.subr.bf16.mxu0 %v1937
        %3264 = vmatpush1.bf16.msra.mxu0 %v1936
        %3265 = vmatprep.subr.bf16.mxu0 %v1945
        %3266 = vmatpush1.bf16.msra.mxu0 %v1944
        %3267 = vmatprep.subr.bf16.mxu0 %v1953
        %3268 = vmatpush1.bf16.msra.mxu0 %v1952
        %3269 = vmatprep.subr.bf16.mxu0 %v1961
        %3270 = vmatpush1.bf16.msra.mxu0 %v1960
        %3271 = vmatprep.subr.bf16.mxu0 %v1969
        %3272 = vmatpush1.bf16.msra.mxu0 %v1968
        %3273 = vmatprep.mubr.bf16.mxu0 %v433
        %3274 = vmatmul.mubr.bf16.gmra.mrb[0].mxu0 %v432
        %v3275 = vpop.f32.mrb[0].mxu0
        %v3276 = vadd.f32 %v3235, %v3275
        %v3277 = vpop.f32.mrb[0].mxu0
        %v3278 = vadd.f32 %v3237, %v3277
        %v3279 = vpop.f32.mrb[0].mxu0
        %v3280 = vpop.f32.mrb[0].mxu0
        %3281 = vdwg.mxu0
        %v3290 = vcombine.low %v2292, %v2294
        %v3291 = vcombine.low %v2620, %v2622
        %v3293 = vunpack.c.l.s4 1983009808
        %v3294 = vunpack.c.0.s8 %v3293
        %v3295 = vlaneseq
        %v3296 = vshrl.u32 %v3295, 7
        %v3297 = vsub.s32 %v3294, %v3296
        %v3298 = vrot.slane %v3290, %v3297
        %v3300 = vunpack.c.l.s4 1983009808
        %v3301 = vunpack.c.0.s8 %v3300
        %v3302 = vlaneseq
        %v3303 = vshrl.u32 %v3302, 7
        %v3304 = vsub.s32 %v3301, %v3303
        %v3305 = vrot.slane %v3291, %v3304
        %v3306 = vcombine.low %v3298, %v3305
        %v3307 = vcombine.low %v2948, %v2950
        %v3308 = vcombine.low %v3276, %v3278
        %v3310 = vunpack.c.l.s4 1983009808
        %v3311 = vunpack.c.0.s8 %v3310
        %v3312 = vlaneseq
        %v3313 = vshrl.u32 %v3312, 7
        %v3314 = vsub.s32 %v3311, %v3313
        %v3315 = vrot.slane %v3307, %v3314
        %v3317 = vunpack.c.l.s4 1983009808
        %v3318 = vunpack.c.0.s8 %v3317
        %v3319 = vlaneseq
        %v3320 = vshrl.u32 %v3319, 7
        %v3321 = vsub.s32 %v3318, %v3320
        %v3322 = vrot.slane %v3308, %v3321
        %v3323 = vcombine.low %v3315, %v3322
        %v3326 = vadd.f32 %v328, %v3306
        %v3327 = vadd.f32 %v329, %v3323
        %3328 = vst [vmem:[%s311] sm:$0xff] %v3326
        %3329 = vst [vmem:[%s311 + $0x8] sm:$0xff] %v3327
        %p3330 = scmp.eq.s32.totalorder %s26, 3
        // Predicated region
        $region53: #{gsr_forward_pallas.4} parent=35 // pred_check
          %p3331 = pneg %p3330
        $region54: #{gsr_forward_pallas.4} parent=35 // pred_check_branch
          %3333 = sbr.rel (%p3331) target = $region56
        $region55: #{gsr_forward_pallas.4} parent=35 // pred_region
          %v3334 = vld [vmem:[%s311] sm:$0xff]
          %v3335 = vld [vmem:[%s311 + $0x8] sm:$0xff]
          %v3336 = vld [vmem:[%s259] sm:$0xff]
          %v3338 = vlaneseq
          %v3339 = vshrl.u32 %v3338, 7
          %v3340 = vsub.s32 0, %v3339
          %v3341 = vrot.slane %v3336, %v3340
          %v3342 = vlaneseq
          %v3343 = vshrl.u32 %v3342, 7
          %v3344 = vsub.s32 1, %v3343
          %v3345 = vrot.slane %v3336, %v3344
          %v3346 = vlaneseq
          %v3347 = vshrl.u32 %v3346, 7
          %v3348 = vsub.s32 2, %v3347
          %v3349 = vrot.slane %v3336, %v3348
          %v3350 = vlaneseq
          %v3351 = vshrl.u32 %v3350, 7
          %v3352 = vsub.s32 3, %v3351
          %v3353 = vrot.slane %v3336, %v3352
          %v3354 = vlaneseq
          %v3355 = vshrl.u32 %v3354, 7
          %v3356 = vsub.s32 4, %v3355
          %v3357 = vrot.slane %v3336, %v3356
          %v3358 = vlaneseq
          %v3359 = vshrl.u32 %v3358, 7
          %v3360 = vsub.s32 5, %v3359
          %v3361 = vrot.slane %v3336, %v3360
          %v3362 = vlaneseq
          %v3363 = vshrl.u32 %v3362, 7
          %v3364 = vsub.s32 6, %v3363
          %v3365 = vrot.slane %v3336, %v3364
          %v3366 = vlaneseq
          %v3367 = vshrl.u32 %v3366, 7
          %v3368 = vsub.s32 7, %v3367
          %v3369 = vrot.slane %v3336, %v3368
          %v3370 = vcombine.low %v3341, %v3345
          %v3371 = vcombine.low %v3349, %v3353
          %v3373 = vunpack.c.l.s4 1983009808
          %v3374 = vunpack.c.0.s8 %v3373
          %v3375 = vlaneseq
          %v3376 = vshrl.u32 %v3375, 7
          %v3377 = vsub.s32 %v3374, %v3376
          %v3378 = vrot.slane %v3370, %v3377
          %v3380 = vunpack.c.l.s4 1983009808
          %v3381 = vunpack.c.0.s8 %v3380
          %v3382 = vlaneseq
          %v3383 = vshrl.u32 %v3382, 7
          %v3384 = vsub.s32 %v3381, %v3383
          %v3385 = vrot.slane %v3371, %v3384
          %v3386 = vcombine.low %v3378, %v3385
          %v3387 = vcombine.low %v3357, %v3361
          %v3388 = vcombine.low %v3365, %v3369
          %v3390 = vunpack.c.l.s4 1983009808
          %v3391 = vunpack.c.0.s8 %v3390
          %v3392 = vlaneseq
          %v3393 = vshrl.u32 %v3392, 7
          %v3394 = vsub.s32 %v3391, %v3393
          %v3395 = vrot.slane %v3387, %v3394
          %v3397 = vunpack.c.l.s4 1983009808
          %v3398 = vunpack.c.0.s8 %v3397
          %v3399 = vlaneseq
          %v3400 = vshrl.u32 %v3399, 7
          %v3401 = vsub.s32 %v3398, %v3400
          %v3402 = vrot.slane %v3388, %v3401
          %v3403 = vcombine.low %v3395, %v3402
          %v3406 = vmul.f32 %v3334, %v3386
          %v3407 = vmul.f32 %v3335, %v3403
          %v3408 = vld [vmem:[%s268] sm:$0xff]
          %v3410 = vlaneseq
          %v3411 = vshrl.u32 %v3410, 7
          %v3412 = vsub.s32 0, %v3411
          %v3413 = vrot.slane %v3408, %v3412
          %v3414 = vlaneseq
          %v3415 = vshrl.u32 %v3414, 7
          %v3416 = vsub.s32 1, %v3415
          %v3417 = vrot.slane %v3408, %v3416
          %v3418 = vlaneseq
          %v3419 = vshrl.u32 %v3418, 7
          %v3420 = vsub.s32 2, %v3419
          %v3421 = vrot.slane %v3408, %v3420
          %v3422 = vlaneseq
          %v3423 = vshrl.u32 %v3422, 7
          %v3424 = vsub.s32 3, %v3423
          %v3425 = vrot.slane %v3408, %v3424
          %v3426 = vlaneseq
          %v3427 = vshrl.u32 %v3426, 7
          %v3428 = vsub.s32 4, %v3427
          %v3429 = vrot.slane %v3408, %v3428
          %v3430 = vlaneseq
          %v3431 = vshrl.u32 %v3430, 7
          %v3432 = vsub.s32 5, %v3431
          %v3433 = vrot.slane %v3408, %v3432
          %v3434 = vlaneseq
          %v3435 = vshrl.u32 %v3434, 7
          %v3436 = vsub.s32 6, %v3435
          %v3437 = vrot.slane %v3408, %v3436
          %v3438 = vlaneseq
          %v3439 = vshrl.u32 %v3438, 7
          %v3440 = vsub.s32 7, %v3439
          %v3441 = vrot.slane %v3408, %v3440
          %v3442 = vcombine.low %v3413, %v3417
          %v3443 = vcombine.low %v3421, %v3425
          %v3445 = vunpack.c.l.s4 1983009808
          %v3446 = vunpack.c.0.s8 %v3445
          %v3447 = vlaneseq
          %v3448 = vshrl.u32 %v3447, 7
          %v3449 = vsub.s32 %v3446, %v3448
          %v3450 = vrot.slane %v3442, %v3449
          %v3452 = vunpack.c.l.s4 1983009808
          %v3453 = vunpack.c.0.s8 %v3452
          %v3454 = vlaneseq
          %v3455 = vshrl.u32 %v3454, 7
          %v3456 = vsub.s32 %v3453, %v3455
          %v3457 = vrot.slane %v3443, %v3456
          %v3458 = vcombine.low %v3450, %v3457
          %v3459 = vcombine.low %v3429, %v3433
          %v3460 = vcombine.low %v3437, %v3441
          %v3462 = vunpack.c.l.s4 1983009808
          %v3463 = vunpack.c.0.s8 %v3462
          %v3464 = vlaneseq
          %v3465 = vshrl.u32 %v3464, 7
          %v3466 = vsub.s32 %v3463, %v3465
          %v3467 = vrot.slane %v3459, %v3466
          %v3469 = vunpack.c.l.s4 1983009808
          %v3470 = vunpack.c.0.s8 %v3469
          %v3471 = vlaneseq
          %v3472 = vshrl.u32 %v3471, 7
          %v3473 = vsub.s32 %v3470, %v3472
          %v3474 = vrot.slane %v3460, %v3473
          %v3475 = vcombine.low %v3467, %v3474
          %v3478 = vadd.f32 %v3406, %v3458
          %v3479 = vadd.f32 %v3407, %v3475
          %v3480 = vmax.f32 %v3478, 0.0
          %v3481 = vmax.f32 %v3479, 0.0
          %3482 = vst [vmem:[%s311] sm:$0xff] %v3480
          %3483 = vst [vmem:[%s311 + $0x8] sm:$0xff] %v3481
        $region56: #{gsr_forward_pallas.4} parent=35 // pred_fallthru
          _
        %s3484 = smul.u32 8, %s25
        %p3485 = scmp.lt.s32.totalorder %s3484, 15
        %s3486 = scalar_select %p3485, %s3484, 15
        %s3487 = smul.addr %s3486, 2
        %s3488 = scalar_lea.vmem %s4, %s3487
        // Predicated region
        $region57: #{gsr_forward_pallas.4} parent=35 // pred_check
          %p3489 = pneg %p152
        $region58: #{gsr_forward_pallas.4} parent=35 // pred_check_branch
          %3491 = sbr.rel (%p3489) target = $region60
        $region59: #{gsr_forward_pallas.4} parent=35 // pred_region
          %s3492 = smul.u32 8, %s25
        $region60: #{gsr_forward_pallas.4} parent=35 // pred_fallthru
          _
      $region36: #{gsr_forward_pallas.4} parent=5 // pred_fallthru
        _
      %p3493 = scmp.le.s32.totalorder 2, %s16
      // Predicated region
      $region61: #{gsr_forward_pallas.4} parent=5 // pred_check
        %p3494 = pneg %p3493
      $region62: #{gsr_forward_pallas.4} parent=5 // pred_check_branch
        %3496 = sbr.rel (%p3494) target = $region64
      $region63: #{gsr_forward_pallas.4} parent=5 // pred_region
        %s3497 = ssub.s32 %s16, 2
        // Predicated region
        $region65: #{gsr_forward_pallas.4} parent=63 // pred_check
          %p3498 = pneg %p158
        $region66: #{gsr_forward_pallas.4} parent=63 // pred_check_branch
          %3500 = sbr.rel (%p3498) target = $region68
        $region67: #{gsr_forward_pallas.4} parent=63 // pred_region
          %s3501 = smul.u32 8, %s27
          %p3502 = scmp.lt.s32.totalorder %s3501, 15
          %s3503 = scalar_select %p3502, %s3501, 15
          %s3504 = smul.addr %s3503, 2
          %s3505 = scalar_lea.vmem %s4, %s3504
        $region68: #{gsr_forward_pallas.4} parent=63 // pred_fallthru
          _
      $region64: #{gsr_forward_pallas.4} parent=5 // pred_fallthru
        _
    $region6: #{gsr_forward_pallas.4} parent=1 // loop_footer
      %s20 = sadd.s32 1, %s16
    $region7: #{gsr_forward_pallas.4} parent=1 // loop_footer_branch
      %15 = sbr.rel target = $region3
    $region8: #{gsr_forward_pallas.4} parent=1 // loop_exit
      _
    %3506 = vsyncpa [#allocation3], 1
    %s3507 = scalar_lea.sflag [#allocation3], 1
    %3508 = vsyncpa %s3507, 1
    %3509 = vsyncpa [#allocation5], 1
    %s3510 = scalar_lea.sflag [#allocation5], 1
    %3511 = vsyncpa %s3510, 1

// kernel: gsr_forward_pallas.5
$region0: #{gsr_forward_pallas.5}
  #allocation0 [shape = 'u32[]', space=smem, size = 0x4, offset = 0x4, fixed_abs, tag = 'smem constant byte address 0x4 - core index']
  #allocation1 [shape = 'u32[144,128]{1,0:T(1,128)}', space=vmem, size = 0x12000, scoped, tag = 'internal scratch']
  %s0 = inlined_call_operand.vmem [shape: f32[2,2048], index: 0, kind: input, shape index: {}]
  %s1 = inlined_call_operand.vmem [shape: bf16[2048,512], index: 1, kind: input, shape index: {}]
  %s2 = inlined_call_operand.vmem [shape: f32[1,512], index: 2, kind: input, shape index: {}]
  %s3 = inlined_call_operand.vmem [shape: f32[512,128], index: 3, kind: input, shape index: {}]
  %s4 = inlined_call_operand.vmem [shape: f32[1,128], index: 4, kind: input, shape index: {}]
  %s5 = inlined_call_operand.vmem [shape: f32[128,128], index: 5, kind: input, shape index: {}]
  %s6 = inlined_call_operand.vmem [shape: f32[1,128], index: 6, kind: input, shape index: {}]
  %s7 = inlined_call_operand.hbm [shape: f32[2,128], index: 7, kind: output, shape index: {}]
  %s8 = sld [smem:[#allocation0]]
  $region38: #{gsr_forward_pallas.5} parent=0
    _
  %s10 = ssub.s32 1, %s8
  %s11 = scalar_select 0, %s10, %s8
  $region1: #{gsr_forward_pallas.5} parent=0
    #allocation2 [shape = 'u8[1024]{0}', space=vmem, size = 0x400, scoped, tag = 'output window, operand 0, single buffered']
    #allocation3 [shape = 's32[1]{0}', space=sflag, size = 0x4, scoped, tag = 'scoped memory for gsr_forward_pallas.5']
    %12 = vsyncpa [#allocation3], 0
    // Predicated region
    $region2: #{gsr_forward_pallas.5} parent=1 // pred_check
      _
    $region3: #{gsr_forward_pallas.5} parent=1 // pred_check_branch
      %14 = sbr.rel (0) target = $region5
    $region4: #{gsr_forward_pallas.5} parent=1 // pred_region
      _
    $region5: #{gsr_forward_pallas.5} parent=1 // pred_fallthru
      _
    // Predicated region
    $region6: #{gsr_forward_pallas.5} parent=1 // pred_check
      _
    $region7: #{gsr_forward_pallas.5} parent=1 // pred_check_branch
      %16 = sbr.rel (0) target = $region9
    $region8: #{gsr_forward_pallas.5} parent=1 // pred_region
      _
    $region9: #{gsr_forward_pallas.5} parent=1 // pred_fallthru
      _
    // Predicated region
    $region10: #{gsr_forward_pallas.5} parent=1 // pred_check
      _
    $region11: #{gsr_forward_pallas.5} parent=1 // pred_check_branch
      %18 = sbr.rel (0) target = $region13
    $region12: #{gsr_forward_pallas.5} parent=1 // pred_region
      _
    $region13: #{gsr_forward_pallas.5} parent=1 // pred_fallthru
      _
    // Predicated region
    $region14: #{gsr_forward_pallas.5} parent=1 // pred_check
      _
    $region15: #{gsr_forward_pallas.5} parent=1 // pred_check_branch
      %20 = sbr.rel (0) target = $region17
    $region16: #{gsr_forward_pallas.5} parent=1 // pred_region
      _
    $region17: #{gsr_forward_pallas.5} parent=1 // pred_fallthru
      _
    // Predicated region
    $region18: #{gsr_forward_pallas.5} parent=1 // pred_check
      _
    $region19: #{gsr_forward_pallas.5} parent=1 // pred_check_branch
      %22 = sbr.rel (0) target = $region21
    $region20: #{gsr_forward_pallas.5} parent=1 // pred_region
      _
    $region21: #{gsr_forward_pallas.5} parent=1 // pred_fallthru
      _
    // Predicated region
    $region22: #{gsr_forward_pallas.5} parent=1 // pred_check
      _
    $region23: #{gsr_forward_pallas.5} parent=1 // pred_check_branch
      %24 = sbr.rel (0) target = $region25
    $region24: #{gsr_forward_pallas.5} parent=1 // pred_region
      _
    $region25: #{gsr_forward_pallas.5} parent=1 // pred_fallthru
      _
    // Predicated region
    $region26: #{gsr_forward_pallas.5} parent=1 // pred_check
      _
    $region27: #{gsr_forward_pallas.5} parent=1 // pred_check_branch
      %26 = sbr.rel (0) target = $region29
    $region28: #{gsr_forward_pallas.5} parent=1 // pred_region
      _
    $region29: #{gsr_forward_pallas.5} parent=1 // pred_fallthru
      _
    %v27 = vld [vmem:[%s0] sm:$0xff]
    %v28 = vld [vmem:[%s0 + $0x8] sm:$0xff]
    %v29 = vld [vmem:[%s0 + $0x10] sm:$0xff]
    %v30 = vld [vmem:[%s0 + $0x18] sm:$0xff]
    %v35 = vcombine.high %v27, %v27
    %v37 = vunpack.c.l.s4 1983009808
    %v38 = vunpack.c.0.s8 %v37
    %v39 = vlaneseq
    %v40 = vshrl.u32 %v39, 7
    %v41 = vsub.s32 %v38, %v40
    %v42 = vrot.slane %v27, %v41
    %v44 = vunpack.c.l.s4 1983009808
    %v45 = vunpack.c.0.s8 %v44
    %v46 = vlaneseq
    %v47 = vshrl.u32 %v46, 7
    %v48 = vsub.s32 %v45, %v47
    %v49 = vrot.slane %v35, %v48
    %v50 = vcombine.high %v42, %v42
    %v51 = vcombine.high %v49, %v49
    %v52 = vcombine.high %v28, %v28
    %v54 = vunpack.c.l.s4 1983009808
    %v55 = vunpack.c.0.s8 %v54
    %v56 = vlaneseq
    %v57 = vshrl.u32 %v56, 7
    %v58 = vsub.s32 %v55, %v57
    %v59 = vrot.slane %v28, %v58
    %v61 = vunpack.c.l.s4 1983009808
    %v62 = vunpack.c.0.s8 %v61
    %v63 = vlaneseq
    %v64 = vshrl.u32 %v63, 7
    %v65 = vsub.s32 %v62, %v64
    %v66 = vrot.slane %v52, %v65
    %v67 = vcombine.high %v59, %v59
    %v68 = vcombine.high %v66, %v66
    %v69 = vcombine.high %v29, %v29
    %v71 = vunpack.c.l.s4 1983009808
    %v72 = vunpack.c.0.s8 %v71
    %v73 = vlaneseq
    %v74 = vshrl.u32 %v73, 7
    %v75 = vsub.s32 %v72, %v74
    %v76 = vrot.slane %v29, %v75
    %v78 = vunpack.c.l.s4 1983009808
    %v79 = vunpack.c.0.s8 %v78
    %v80 = vlaneseq
    %v81 = vshrl.u32 %v80, 7
    %v82 = vsub.s32 %v79, %v81
    %v83 = vrot.slane %v69, %v82
    %v84 = vcombine.high %v76, %v76
    %v85 = vcombine.high %v83, %v83
    %v86 = vcombine.high %v30, %v30
    %v88 = vunpack.c.l.s4 1983009808
    %v89 = vunpack.c.0.s8 %v88
    %v90 = vlaneseq
    %v91 = vshrl.u32 %v90, 7
    %v92 = vsub.s32 %v89, %v91
    %v93 = vrot.slane %v30, %v92
    %v95 = vunpack.c.l.s4 1983009808
    %v96 = vunpack.c.0.s8 %v95
    %v97 = vlaneseq
    %v98 = vshrl.u32 %v97, 7
    %v99 = vsub.s32 %v96, %v98
    %v100 = vrot.slane %v86, %v99
    %v101 = vcombine.high %v93, %v93
    %v102 = vcombine.high %v100, %v100
    %v119 = vpack.c.bf16 %v42, %v42
    %v120 = vpack.c.bf16 %v50, %v50
    %v121 = vpack.c.bf16 %v49, %v49
    %v122 = vpack.c.bf16 %v51, %v51
    %v123 = vpack.c.bf16 %v59, %v59
    %v124 = vpack.c.bf16 %v67, %v67
    %v125 = vpack.c.bf16 %v66, %v66
    %v126 = vpack.c.bf16 %v68, %v68
    %v127 = vpack.c.bf16 %v76, %v76
    %v128 = vpack.c.bf16 %v84, %v84
    %v129 = vpack.c.bf16 %v83, %v83
    %v130 = vpack.c.bf16 %v85, %v85
    %v131 = vpack.c.bf16 %v93, %v93
    %v132 = vpack.c.bf16 %v101, %v101
    %v133 = vpack.c.bf16 %v100, %v100
    %v134 = vpack.c.bf16 %v102, %v102
    %v135 = vld [vmem:[%s1] sm:$0xff]
    %v136 = vld [vmem:[%s1 + $0x8] sm:$0xff]
    %v137 = vld [vmem:[%s1 + $0x10] sm:$0xff]
    %v138 = vld [vmem:[%s1 + $0x18] sm:$0xff]
    %v139 = vld [vmem:[%s1 + $0x20] sm:$0xff]
    %v140 = vld [vmem:[%s1 + $0x28] sm:$0xff]
    %v141 = vld [vmem:[%s1 + $0x30] sm:$0xff]
    %v142 = vld [vmem:[%s1 + $0x38] sm:$0xff]
    %v143 = vld [vmem:[%s1 + $0x40] sm:$0xff]
    %v144 = vld [vmem:[%s1 + $0x48] sm:$0xff]
    %v145 = vld [vmem:[%s1 + $0x50] sm:$0xff]
    %v146 = vld [vmem:[%s1 + $0x58] sm:$0xff]
    %v147 = vld [vmem:[%s1 + $0x60] sm:$0xff]
    %v148 = vld [vmem:[%s1 + $0x68] sm:$0xff]
    %v149 = vld [vmem:[%s1 + $0x70] sm:$0xff]
    %v150 = vld [vmem:[%s1 + $0x78] sm:$0xff]
    %v151 = vld [vmem:[%s1 + $0x80] sm:$0xff]
    %v152 = vld [vmem:[%s1 + $0x88] sm:$0xff]
    %v153 = vld [vmem:[%s1 + $0x90] sm:$0xff]
    %v154 = vld [vmem:[%s1 + $0x98] sm:$0xff]
    %v155 = vld [vmem:[%s1 + $0xa0] sm:$0xff]
    %v156 = vld [vmem:[%s1 + $0xa8] sm:$0xff]
    %v157 = vld [vmem:[%s1 + $0xb0] sm:$0xff]
    %v158 = vld [vmem:[%s1 + $0xb8] sm:$0xff]
    %v159 = vld [vmem:[%s1 + $0xc0] sm:$0xff]
    %v160 = vld [vmem:[%s1 + $0xc8] sm:$0xff]
    %v161 = vld [vmem:[%s1 + $0xd0] sm:$0xff]
    %v162 = vld [vmem:[%s1 + $0xd8] sm:$0xff]
    %v163 = vld [vmem:[%s1 + $0xe0] sm:$0xff]
    %v164 = vld [vmem:[%s1 + $0xe8] sm:$0xff]
    %v165 = vld [vmem:[%s1 + $0xf0] sm:$0xff]
    %v166 = vld [vmem:[%s1 + $0xf8] sm:$0xff]
    %v167 = vld [vmem:[%s1 + $0x100] sm:$0xff]
    %v168 = vld [vmem:[%s1 + $0x108] sm:$0xff]
    %v169 = vld [vmem:[%s1 + $0x110] sm:$0xff]
    %v170 = vld [vmem:[%s1 + $0x118] sm:$0xff]
    %v171 = vld [vmem:[%s1 + $0x120] sm:$0xff]
    %v172 = vld [vmem:[%s1 + $0x128] sm:$0xff]
    %v173 = vld [vmem:[%s1 + $0x130] sm:$0xff]
    %v174 = vld [vmem:[%s1 + $0x138] sm:$0xff]
    %v175 = vld [vmem:[%s1 + $0x140] sm:$0xff]
    %v176 = vld [vmem:[%s1 + $0x148] sm:$0xff]
    %v177 = vld [vmem:[%s1 + $0x150] sm:$0xff]
    %v178 = vld [vmem:[%s1 + $0x158] sm:$0xff]
    %v179 = vld [vmem:[%s1 + $0x160] sm:$0xff]
    %v180 = vld [vmem:[%s1 + $0x168] sm:$0xff]
    %v181 = vld [vmem:[%s1 + $0x170] sm:$0xff]
    %v182 = vld [vmem:[%s1 + $0x178] sm:$0xff]
    %v183 = vld [vmem:[%s1 + $0x180] sm:$0xff]
    %v184 = vld [vmem:[%s1 + $0x188] sm:$0xff]
    %v185 = vld [vmem:[%s1 + $0x190] sm:$0xff]
    %v186 = vld [vmem:[%s1 + $0x198] sm:$0xff]
    %v187 = vld [vmem:[%s1 + $0x1a0] sm:$0xff]
    %v188 = vld [vmem:[%s1 + $0x1a8] sm:$0xff]
    %v189 = vld [vmem:[%s1 + $0x1b0] sm:$0xff]
    %v190 = vld [vmem:[%s1 + $0x1b8] sm:$0xff]
    %v191 = vld [vmem:[%s1 + $0x1c0] sm:$0xff]
    %v192 = vld [vmem:[%s1 + $0x1c8] sm:$0xff]
    %v193 = vld [vmem:[%s1 + $0x1d0] sm:$0xff]
    %v194 = vld [vmem:[%s1 + $0x1d8] sm:$0xff]
    %v195 = vld [vmem:[%s1 + $0x1e0] sm:$0xff]
    %v196 = vld [vmem:[%s1 + $0x1e8] sm:$0xff]
    %v197 = vld [vmem:[%s1 + $0x1f0] sm:$0xff]
    %v198 = vld [vmem:[%s1 + $0x1f8] sm:$0xff]
    %v199 = vld [vmem:[%s1 + $0x200] sm:$0xff]
    %v200 = vld [vmem:[%s1 + $0x208] sm:$0xff]
    %v201 = vld [vmem:[%s1 + $0x210] sm:$0xff]
    %v202 = vld [vmem:[%s1 + $0x218] sm:$0xff]
    %v203 = vld [vmem:[%s1 + $0x220] sm:$0xff]
    %v204 = vld [vmem:[%s1 + $0x228] sm:$0xff]
    %v205 = vld [vmem:[%s1 + $0x230] sm:$0xff]
    %v206 = vld [vmem:[%s1 + $0x238] sm:$0xff]
    %v207 = vld [vmem:[%s1 + $0x240] sm:$0xff]
    %v208 = vld [vmem:[%s1 + $0x248] sm:$0xff]
    %v209 = vld [vmem:[%s1 + $0x250] sm:$0xff]
    %v210 = vld [vmem:[%s1 + $0x258] sm:$0xff]
    %v211 = vld [vmem:[%s1 + $0x260] sm:$0xff]
    %v212 = vld [vmem:[%s1 + $0x268] sm:$0xff]
    %v213 = vld [vmem:[%s1 + $0x270] sm:$0xff]
    %v214 = vld [vmem:[%s1 + $0x278] sm:$0xff]
    %v215 = vld [vmem:[%s1 + $0x280] sm:$0xff]
    %v216 = vld [vmem:[%s1 + $0x288] sm:$0xff]
    %v217 = vld [vmem:[%s1 + $0x290] sm:$0xff]
    %v218 = vld [vmem:[%s1 + $0x298] sm:$0xff]
    %v219 = vld [vmem:[%s1 + $0x2a0] sm:$0xff]
    %v220 = vld [vmem:[%s1 + $0x2a8] sm:$0xff]
    %v221 = vld [vmem:[%s1 + $0x2b0] sm:$0xff]
    %v222 = vld [vmem:[%s1 + $0x2b8] sm:$0xff]
    %v223 = vld [vmem:[%s1 + $0x2c0] sm:$0xff]
    %v224 = vld [vmem:[%s1 + $0x2c8] sm:$0xff]
    %v225 = vld [vmem:[%s1 + $0x2d0] sm:$0xff]
    %v226 = vld [vmem:[%s1 + $0x2d8] sm:$0xff]
    %v227 = vld [vmem:[%s1 + $0x2e0] sm:$0xff]
    %v228 = vld [vmem:[%s1 + $0x2e8] sm:$0xff]
    %v229 = vld [vmem:[%s1 + $0x2f0] sm:$0xff]
    %v230 = vld [vmem:[%s1 + $0x2f8] sm:$0xff]
    %v231 = vld [vmem:[%s1 + $0x300] sm:$0xff]
    %v232 = vld [vmem:[%s1 + $0x308] sm:$0xff]
    %v233 = vld [vmem:[%s1 + $0x310] sm:$0xff]
    %v234 = vld [vmem:[%s1 + $0x318] sm:$0xff]
    %v235 = vld [vmem:[%s1 + $0x320] sm:$0xff]
    %v236 = vld [vmem:[%s1 + $0x328] sm:$0xff]
    %v237 = vld [vmem:[%s1 + $0x330] sm:$0xff]
    %v238 = vld [vmem:[%s1 + $0x338] sm:$0xff]
    %v239 = vld [vmem:[%s1 + $0x340] sm:$0xff]
    %v240 = vld [vmem:[%s1 + $0x348] sm:$0xff]
    %v241 = vld [vmem:[%s1 + $0x350] sm:$0xff]
    %v242 = vld [vmem:[%s1 + $0x358] sm:$0xff]
    %v243 = vld [vmem:[%s1 + $0x360] sm:$0xff]
    %v244 = vld [vmem:[%s1 + $0x368] sm:$0xff]
    %v245 = vld [vmem:[%s1 + $0x370] sm:$0xff]
    %v246 = vld [vmem:[%s1 + $0x378] sm:$0xff]
    %v247 = vld [vmem:[%s1 + $0x380] sm:$0xff]
    %v248 = vld [vmem:[%s1 + $0x388] sm:$0xff]
    %v249 = vld [vmem:[%s1 + $0x390] sm:$0xff]
    %v250 = vld [vmem:[%s1 + $0x398] sm:$0xff]
    %v251 = vld [vmem:[%s1 + $0x3a0] sm:$0xff]
    %v252 = vld [vmem:[%s1 + $0x3a8] sm:$0xff]
    %v253 = vld [vmem:[%s1 + $0x3b0] sm:$0xff]
    %v254 = vld [vmem:[%s1 + $0x3b8] sm:$0xff]
    %v255 = vld [vmem:[%s1 + $0x3c0] sm:$0xff]
    %v256 = vld [vmem:[%s1 + $0x3c8] sm:$0xff]
    %v257 = vld [vmem:[%s1 + $0x3d0] sm:$0xff]
    %v258 = vld [vmem:[%s1 + $0x3d8] sm:$0xff]
    %v259 = vld [vmem:[%s1 + $0x3e0] sm:$0xff]
    %v260 = vld [vmem:[%s1 + $0x3e8] sm:$0xff]
    %v261 = vld [vmem:[%s1 + $0x3f0] sm:$0xff]
    %v262 = vld [vmem:[%s1 + $0x3f8] sm:$0xff]
    %v263 = vld [vmem:[%s1 + $0x400] sm:$0xff]
    %v264 = vld [vmem:[%s1 + $0x408] sm:$0xff]
    %v265 = vld [vmem:[%s1 + $0x410] sm:$0xff]
    %v266 = vld [vmem:[%s1 + $0x418] sm:$0xff]
    %v267 = vld [vmem:[%s1 + $0x420] sm:$0xff]
    %v268 = vld [vmem:[%s1 + $0x428] sm:$0xff]
    %v269 = vld [vmem:[%s1 + $0x430] sm:$0xff]
    %v270 = vld [vmem:[%s1 + $0x438] sm:$0xff]
    %v271 = vld [vmem:[%s1 + $0x440] sm:$0xff]
    %v272 = vld [vmem:[%s1 + $0x448] sm:$0xff]
    %v273 = vld [vmem:[%s1 + $0x450] sm:$0xff]
    %v274 = vld [vmem:[%s1 + $0x458] sm:$0xff]
    %v275 = vld [vmem:[%s1 + $0x460] sm:$0xff]
    %v276 = vld [vmem:[%s1 + $0x468] sm:$0xff]
    %v277 = vld [vmem:[%s1 + $0x470] sm:$0xff]
    %v278 = vld [vmem:[%s1 + $0x478] sm:$0xff]
    %v279 = vld [vmem:[%s1 + $0x480] sm:$0xff]
    %v280 = vld [vmem:[%s1 + $0x488] sm:$0xff]
    %v281 = vld [vmem:[%s1 + $0x490] sm:$0xff]
    %v282 = vld [vmem:[%s1 + $0x498] sm:$0xff]
    %v283 = vld [vmem:[%s1 + $0x4a0] sm:$0xff]
    %v284 = vld [vmem:[%s1 + $0x4a8] sm:$0xff]
    %v285 = vld [vmem:[%s1 + $0x4b0] sm:$0xff]
    %v286 = vld [vmem:[%s1 + $0x4b8] sm:$0xff]
    %v287 = vld [vmem:[%s1 + $0x4c0] sm:$0xff]
    %v288 = vld [vmem:[%s1 + $0x4c8] sm:$0xff]
    %v289 = vld [vmem:[%s1 + $0x4d0] sm:$0xff]
    %v290 = vld [vmem:[%s1 + $0x4d8] sm:$0xff]
    %v291 = vld [vmem:[%s1 + $0x4e0] sm:$0xff]
    %v292 = vld [vmem:[%s1 + $0x4e8] sm:$0xff]
    %v293 = vld [vmem:[%s1 + $0x4f0] sm:$0xff]
    %v294 = vld [vmem:[%s1 + $0x4f8] sm:$0xff]
    %v295 = vld [vmem:[%s1 + $0x500] sm:$0xff]
    %v296 = vld [vmem:[%s1 + $0x508] sm:$0xff]
    %v297 = vld [vmem:[%s1 + $0x510] sm:$0xff]
    %v298 = vld [vmem:[%s1 + $0x518] sm:$0xff]
    %v299 = vld [vmem:[%s1 + $0x520] sm:$0xff]
    %v300 = vld [vmem:[%s1 + $0x528] sm:$0xff]
    %v301 = vld [vmem:[%s1 + $0x530] sm:$0xff]
    %v302 = vld [vmem:[%s1 + $0x538] sm:$0xff]
    %v303 = vld [vmem:[%s1 + $0x540] sm:$0xff]
    %v304 = vld [vmem:[%s1 + $0x548] sm:$0xff]
    %v305 = vld [vmem:[%s1 + $0x550] sm:$0xff]
    %v306 = vld [vmem:[%s1 + $0x558] sm:$0xff]
    %v307 = vld [vmem:[%s1 + $0x560] sm:$0xff]
    %v308 = vld [vmem:[%s1 + $0x568] sm:$0xff]
    %v309 = vld [vmem:[%s1 + $0x570] sm:$0xff]
    %v310 = vld [vmem:[%s1 + $0x578] sm:$0xff]
    %v311 = vld [vmem:[%s1 + $0x580] sm:$0xff]
    %v312 = vld [vmem:[%s1 + $0x588] sm:$0xff]
    %v313 = vld [vmem:[%s1 + $0x590] sm:$0xff]
    %v314 = vld [vmem:[%s1 + $0x598] sm:$0xff]
    %v315 = vld [vmem:[%s1 + $0x5a0] sm:$0xff]
    %v316 = vld [vmem:[%s1 + $0x5a8] sm:$0xff]
    %v317 = vld [vmem:[%s1 + $0x5b0] sm:$0xff]
    %v318 = vld [vmem:[%s1 + $0x5b8] sm:$0xff]
    %v319 = vld [vmem:[%s1 + $0x5c0] sm:$0xff]
    %v320 = vld [vmem:[%s1 + $0x5c8] sm:$0xff]
    %v321 = vld [vmem:[%s1 + $0x5d0] sm:$0xff]
    %v322 = vld [vmem:[%s1 + $0x5d8] sm:$0xff]
    %v323 = vld [vmem:[%s1 + $0x5e0] sm:$0xff]
    %v324 = vld [vmem:[%s1 + $0x5e8] sm:$0xff]
    %v325 = vld [vmem:[%s1 + $0x5f0] sm:$0xff]
    %v326 = vld [vmem:[%s1 + $0x5f8] sm:$0xff]
    %v327 = vld [vmem:[%s1 + $0x600] sm:$0xff]
    %v328 = vld [vmem:[%s1 + $0x608] sm:$0xff]
    %v329 = vld [vmem:[%s1 + $0x610] sm:$0xff]
    %v330 = vld [vmem:[%s1 + $0x618] sm:$0xff]
    %v331 = vld [vmem:[%s1 + $0x620] sm:$0xff]
    %v332 = vld [vmem:[%s1 + $0x628] sm:$0xff]
    %v333 = vld [vmem:[%s1 + $0x630] sm:$0xff]
    %v334 = vld [vmem:[%s1 + $0x638] sm:$0xff]
    %v335 = vld [vmem:[%s1 + $0x640] sm:$0xff]
    %v336 = vld [vmem:[%s1 + $0x648] sm:$0xff]
    %v337 = vld [vmem:[%s1 + $0x650] sm:$0xff]
    %v338 = vld [vmem:[%s1 + $0x658] sm:$0xff]
    %v339 = vld [vmem:[%s1 + $0x660] sm:$0xff]
    %v340 = vld [vmem:[%s1 + $0x668] sm:$0xff]
    %v341 = vld [vmem:[%s1 + $0x670] sm:$0xff]
    %v342 = vld [vmem:[%s1 + $0x678] sm:$0xff]
    %v343 = vld [vmem:[%s1 + $0x680] sm:$0xff]
    %v344 = vld [vmem:[%s1 + $0x688] sm:$0xff]
    %v345 = vld [vmem:[%s1 + $0x690] sm:$0xff]
    %v346 = vld [vmem:[%s1 + $0x698] sm:$0xff]
    %v347 = vld [vmem:[%s1 + $0x6a0] sm:$0xff]
    %v348 = vld [vmem:[%s1 + $0x6a8] sm:$0xff]
    %v349 = vld [vmem:[%s1 + $0x6b0] sm:$0xff]
    %v350 = vld [vmem:[%s1 + $0x6b8] sm:$0xff]
    %v351 = vld [vmem:[%s1 + $0x6c0] sm:$0xff]
    %v352 = vld [vmem:[%s1 + $0x6c8] sm:$0xff]
    %v353 = vld [vmem:[%s1 + $0x6d0] sm:$0xff]
    %v354 = vld [vmem:[%s1 + $0x6d8] sm:$0xff]
    %v355 = vld [vmem:[%s1 + $0x6e0] sm:$0xff]
    %v356 = vld [vmem:[%s1 + $0x6e8] sm:$0xff]
    %v357 = vld [vmem:[%s1 + $0x6f0] sm:$0xff]
    %v358 = vld [vmem:[%s1 + $0x6f8] sm:$0xff]
    %v359 = vld [vmem:[%s1 + $0x700] sm:$0xff]
    %v360 = vld [vmem:[%s1 + $0x708] sm:$0xff]
    %v361 = vld [vmem:[%s1 + $0x710] sm:$0xff]
    %v362 = vld [vmem:[%s1 + $0x718] sm:$0xff]
    %v363 = vld [vmem:[%s1 + $0x720] sm:$0xff]
    %v364 = vld [vmem:[%s1 + $0x728] sm:$0xff]
    %v365 = vld [vmem:[%s1 + $0x730] sm:$0xff]
    %v366 = vld [vmem:[%s1 + $0x738] sm:$0xff]
    %v367 = vld [vmem:[%s1 + $0x740] sm:$0xff]
    %v368 = vld [vmem:[%s1 + $0x748] sm:$0xff]
    %v369 = vld [vmem:[%s1 + $0x750] sm:$0xff]
    %v370 = vld [vmem:[%s1 + $0x758] sm:$0xff]
    %v371 = vld [vmem:[%s1 + $0x760] sm:$0xff]
    %v372 = vld [vmem:[%s1 + $0x768] sm:$0xff]
    %v373 = vld [vmem:[%s1 + $0x770] sm:$0xff]
    %v374 = vld [vmem:[%s1 + $0x778] sm:$0xff]
    %v375 = vld [vmem:[%s1 + $0x780] sm:$0xff]
    %v376 = vld [vmem:[%s1 + $0x788] sm:$0xff]
    %v377 = vld [vmem:[%s1 + $0x790] sm:$0xff]
    %v378 = vld [vmem:[%s1 + $0x798] sm:$0xff]
    %v379 = vld [vmem:[%s1 + $0x7a0] sm:$0xff]
    %v380 = vld [vmem:[%s1 + $0x7a8] sm:$0xff]
    %v381 = vld [vmem:[%s1 + $0x7b0] sm:$0xff]
    %v382 = vld [vmem:[%s1 + $0x7b8] sm:$0xff]
    %v383 = vld [vmem:[%s1 + $0x7c0] sm:$0xff]
    %v384 = vld [vmem:[%s1 + $0x7c8] sm:$0xff]
    %v385 = vld [vmem:[%s1 + $0x7d0] sm:$0xff]
    %v386 = vld [vmem:[%s1 + $0x7d8] sm:$0xff]
    %v387 = vld [vmem:[%s1 + $0x7e0] sm:$0xff]
    %v388 = vld [vmem:[%s1 + $0x7e8] sm:$0xff]
    %v389 = vld [vmem:[%s1 + $0x7f0] sm:$0xff]
    %v390 = vld [vmem:[%s1 + $0x7f8] sm:$0xff]
    %v391 = vld [vmem:[%s1 + $0x800] sm:$0xff]
    %v392 = vld [vmem:[%s1 + $0x808] sm:$0xff]
    %v393 = vld [vmem:[%s1 + $0x810] sm:$0xff]
    %v394 = vld [vmem:[%s1 + $0x818] sm:$0xff]
    %v395 = vld [vmem:[%s1 + $0x820] sm:$0xff]
    %v396 = vld [vmem:[%s1 + $0x828] sm:$0xff]
    %v397 = vld [vmem:[%s1 + $0x830] sm:$0xff]
    %v398 = vld [vmem:[%s1 + $0x838] sm:$0xff]
    %v399 = vld [vmem:[%s1 + $0x840] sm:$0xff]
    %v400 = vld [vmem:[%s1 + $0x848] sm:$0xff]
    %v401 = vld [vmem:[%s1 + $0x850] sm:$0xff]
    %v402 = vld [vmem:[%s1 + $0x858] sm:$0xff]
    %v403 = vld [vmem:[%s1 + $0x860] sm:$0xff]
    %v404 = vld [vmem:[%s1 + $0x868] sm:$0xff]
    %v405 = vld [vmem:[%s1 + $0x870] sm:$0xff]
    %v406 = vld [vmem:[%s1 + $0x878] sm:$0xff]
    %v407 = vld [vmem:[%s1 + $0x880] sm:$0xff]
    %v408 = vld [vmem:[%s1 + $0x888] sm:$0xff]
    %v409 = vld [vmem:[%s1 + $0x890] sm:$0xff]
    %v410 = vld [vmem:[%s1 + $0x898] sm:$0xff]
    %v411 = vld [vmem:[%s1 + $0x8a0] sm:$0xff]
    %v412 = vld [vmem:[%s1 + $0x8a8] sm:$0xff]
    %v413 = vld [vmem:[%s1 + $0x8b0] sm:$0xff]
    %v414 = vld [vmem:[%s1 + $0x8b8] sm:$0xff]
    %v415 = vld [vmem:[%s1 + $0x8c0] sm:$0xff]
    %v416 = vld [vmem:[%s1 + $0x8c8] sm:$0xff]
    %v417 = vld [vmem:[%s1 + $0x8d0] sm:$0xff]
    %v418 = vld [vmem:[%s1 + $0x8d8] sm:$0xff]
    %v419 = vld [vmem:[%s1 + $0x8e0] sm:$0xff]
    %v420 = vld [vmem:[%s1 + $0x8e8] sm:$0xff]
    %v421 = vld [vmem:[%s1 + $0x8f0] sm:$0xff]
    %v422 = vld [vmem:[%s1 + $0x8f8] sm:$0xff]
    %v423 = vld [vmem:[%s1 + $0x900] sm:$0xff]
    %v424 = vld [vmem:[%s1 + $0x908] sm:$0xff]
    %v425 = vld [vmem:[%s1 + $0x910] sm:$0xff]
    %v426 = vld [vmem:[%s1 + $0x918] sm:$0xff]
    %v427 = vld [vmem:[%s1 + $0x920] sm:$0xff]
    %v428 = vld [vmem:[%s1 + $0x928] sm:$0xff]
    %v429 = vld [vmem:[%s1 + $0x930] sm:$0xff]
    %v430 = vld [vmem:[%s1 + $0x938] sm:$0xff]
    %v431 = vld [vmem:[%s1 + $0x940] sm:$0xff]
    %v432 = vld [vmem:[%s1 + $0x948] sm:$0xff]
    %v433 = vld [vmem:[%s1 + $0x950] sm:$0xff]
    %v434 = vld [vmem:[%s1 + $0x958] sm:$0xff]
    %v435 = vld [vmem:[%s1 + $0x960] sm:$0xff]
    %v436 = vld [vmem:[%s1 + $0x968] sm:$0xff]
    %v437 = vld [vmem:[%s1 + $0x970] sm:$0xff]
    %v438 = vld [vmem:[%s1 + $0x978] sm:$0xff]
    %v439 = vld [vmem:[%s1 + $0x980] sm:$0xff]
    %v440 = vld [vmem:[%s1 + $0x988] sm:$0xff]
    %v441 = vld [vmem:[%s1 + $0x990] sm:$0xff]
    %v442 = vld [vmem:[%s1 + $0x998] sm:$0xff]
    %v443 = vld [vmem:[%s1 + $0x9a0] sm:$0xff]
    %v444 = vld [vmem:[%s1 + $0x9a8] sm:$0xff]
    %v445 = vld [vmem:[%s1 + $0x9b0] sm:$0xff]
    %v446 = vld [vmem:[%s1 + $0x9b8] sm:$0xff]
    %v447 = vld [vmem:[%s1 + $0x9c0] sm:$0xff]
    %v448 = vld [vmem:[%s1 + $0x9c8] sm:$0xff]
    %v449 = vld [vmem:[%s1 + $0x9d0] sm:$0xff]
    %v450 = vld [vmem:[%s1 + $0x9d8] sm:$0xff]
    %v451 = vld [vmem:[%s1 + $0x9e0] sm:$0xff]
    %v452 = vld [vmem:[%s1 + $0x9e8] sm:$0xff]
    %v453 = vld [vmem:[%s1 + $0x9f0] sm:$0xff]
    %v454 = vld [vmem:[%s1 + $0x9f8] sm:$0xff]
    %v455 = vld [vmem:[%s1 + $0xa00] sm:$0xff]
    %v456 = vld [vmem:[%s1 + $0xa08] sm:$0xff]
    %v457 = vld [vmem:[%s1 + $0xa10] sm:$0xff]
    %v458 = vld [vmem:[%s1 + $0xa18] sm:$0xff]
    %v459 = vld [vmem:[%s1 + $0xa20] sm:$0xff]
    %v460 = vld [vmem:[%s1 + $0xa28] sm:$0xff]
    %v461 = vld [vmem:[%s1 + $0xa30] sm:$0xff]
    %v462 = vld [vmem:[%s1 + $0xa38] sm:$0xff]
    %v463 = vld [vmem:[%s1 + $0xa40] sm:$0xff]
    %v464 = vld [vmem:[%s1 + $0xa48] sm:$0xff]
    %v465 = vld [vmem:[%s1 + $0xa50] sm:$0xff]
    %v466 = vld [vmem:[%s1 + $0xa58] sm:$0xff]
    %v467 = vld [vmem:[%s1 + $0xa60] sm:$0xff]
    %v468 = vld [vmem:[%s1 + $0xa68] sm:$0xff]
    %v469 = vld [vmem:[%s1 + $0xa70] sm:$0xff]
    %v470 = vld [vmem:[%s1 + $0xa78] sm:$0xff]
    %v471 = vld [vmem:[%s1 + $0xa80] sm:$0xff]
    %v472 = vld [vmem:[%s1 + $0xa88] sm:$0xff]
    %v473 = vld [vmem:[%s1 + $0xa90] sm:$0xff]
    %v474 = vld [vmem:[%s1 + $0xa98] sm:$0xff]
    %v475 = vld [vmem:[%s1 + $0xaa0] sm:$0xff]
    %v476 = vld [vmem:[%s1 + $0xaa8] sm:$0xff]
    %v477 = vld [vmem:[%s1 + $0xab0] sm:$0xff]
    %v478 = vld [vmem:[%s1 + $0xab8] sm:$0xff]
    %v479 = vld [vmem:[%s1 + $0xac0] sm:$0xff]
    %v480 = vld [vmem:[%s1 + $0xac8] sm:$0xff]
    %v481 = vld [vmem:[%s1 + $0xad0] sm:$0xff]
    %v482 = vld [vmem:[%s1 + $0xad8] sm:$0xff]
    %v483 = vld [vmem:[%s1 + $0xae0] sm:$0xff]
    %v484 = vld [vmem:[%s1 + $0xae8] sm:$0xff]
    %v485 = vld [vmem:[%s1 + $0xaf0] sm:$0xff]
    %v486 = vld [vmem:[%s1 + $0xaf8] sm:$0xff]
    %v487 = vld [vmem:[%s1 + $0xb00] sm:$0xff]
    %v488 = vld [vmem:[%s1 + $0xb08] sm:$0xff]
    %v489 = vld [vmem:[%s1 + $0xb10] sm:$0xff]
    %v490 = vld [vmem:[%s1 + $0xb18] sm:$0xff]
    %v491 = vld [vmem:[%s1 + $0xb20] sm:$0xff]
    %v492 = vld [vmem:[%s1 + $0xb28] sm:$0xff]
    %v493 = vld [vmem:[%s1 + $0xb30] sm:$0xff]
    %v494 = vld [vmem:[%s1 + $0xb38] sm:$0xff]
    %v495 = vld [vmem:[%s1 + $0xb40] sm:$0xff]
    %v496 = vld [vmem:[%s1 + $0xb48] sm:$0xff]
    %v497 = vld [vmem:[%s1 + $0xb50] sm:$0xff]
    %v498 = vld [vmem:[%s1 + $0xb58] sm:$0xff]
    %v499 = vld [vmem:[%s1 + $0xb60] sm:$0xff]
    %v500 = vld [vmem:[%s1 + $0xb68] sm:$0xff]
    %v501 = vld [vmem:[%s1 + $0xb70] sm:$0xff]
    %v502 = vld [vmem:[%s1 + $0xb78] sm:$0xff]
    %v503 = vld [vmem:[%s1 + $0xb80] sm:$0xff]
    %v504 = vld [vmem:[%s1 + $0xb88] sm:$0xff]
    %v505 = vld [vmem:[%s1 + $0xb90] sm:$0xff]
    %v506 = vld [vmem:[%s1 + $0xb98] sm:$0xff]
    %v507 = vld [vmem:[%s1 + $0xba0] sm:$0xff]
    %v508 = vld [vmem:[%s1 + $0xba8] sm:$0xff]
    %v509 = vld [vmem:[%s1 + $0xbb0] sm:$0xff]
    %v510 = vld [vmem:[%s1 + $0xbb8] sm:$0xff]
    %v511 = vld [vmem:[%s1 + $0xbc0] sm:$0xff]
    %v512 = vld [vmem:[%s1 + $0xbc8] sm:$0xff]
    %v513 = vld [vmem:[%s1 + $0xbd0] sm:$0xff]
    %v514 = vld [vmem:[%s1 + $0xbd8] sm:$0xff]
    %v515 = vld [vmem:[%s1 + $0xbe0] sm:$0xff]
    %v516 = vld [vmem:[%s1 + $0xbe8] sm:$0xff]
    %v517 = vld [vmem:[%s1 + $0xbf0] sm:$0xff]
    %v518 = vld [vmem:[%s1 + $0xbf8] sm:$0xff]
    %v519 = vld [vmem:[%s1 + $0xc00] sm:$0xff]
    %v520 = vld [vmem:[%s1 + $0xc08] sm:$0xff]
    %v521 = vld [vmem:[%s1 + $0xc10] sm:$0xff]
    %v522 = vld [vmem:[%s1 + $0xc18] sm:$0xff]
    %v523 = vld [vmem:[%s1 + $0xc20] sm:$0xff]
    %v524 = vld [vmem:[%s1 + $0xc28] sm:$0xff]
    %v525 = vld [vmem:[%s1 + $0xc30] sm:$0xff]
    %v526 = vld [vmem:[%s1 + $0xc38] sm:$0xff]
    %v527 = vld [vmem:[%s1 + $0xc40] sm:$0xff]
    %v528 = vld [vmem:[%s1 + $0xc48] sm:$0xff]
    %v529 = vld [vmem:[%s1 + $0xc50] sm:$0xff]
    %v530 = vld [vmem:[%s1 + $0xc58] sm:$0xff]
    %v531 = vld [vmem:[%s1 + $0xc60] sm:$0xff]
    %v532 = vld [vmem:[%s1 + $0xc68] sm:$0xff]
    %v533 = vld [vmem:[%s1 + $0xc70] sm:$0xff]
    %v534 = vld [vmem:[%s1 + $0xc78] sm:$0xff]
    %v535 = vld [vmem:[%s1 + $0xc80] sm:$0xff]
    %v536 = vld [vmem:[%s1 + $0xc88] sm:$0xff]
    %v537 = vld [vmem:[%s1 + $0xc90] sm:$0xff]
    %v538 = vld [vmem:[%s1 + $0xc98] sm:$0xff]
    %v539 = vld [vmem:[%s1 + $0xca0] sm:$0xff]
    %v540 = vld [vmem:[%s1 + $0xca8] sm:$0xff]
    %v541 = vld [vmem:[%s1 + $0xcb0] sm:$0xff]
    %v542 = vld [vmem:[%s1 + $0xcb8] sm:$0xff]
    %v543 = vld [vmem:[%s1 + $0xcc0] sm:$0xff]
    %v544 = vld [vmem:[%s1 + $0xcc8] sm:$0xff]
    %v545 = vld [vmem:[%s1 + $0xcd0] sm:$0xff]
    %v546 = vld [vmem:[%s1 + $0xcd8] sm:$0xff]
    %v547 = vld [vmem:[%s1 + $0xce0] sm:$0xff]
    %v548 = vld [vmem:[%s1 + $0xce8] sm:$0xff]
    %v549 = vld [vmem:[%s1 + $0xcf0] sm:$0xff]
    %v550 = vld [vmem:[%s1 + $0xcf8] sm:$0xff]
    %v551 = vld [vmem:[%s1 + $0xd00] sm:$0xff]
    %v552 = vld [vmem:[%s1 + $0xd08] sm:$0xff]
    %v553 = vld [vmem:[%s1 + $0xd10] sm:$0xff]
    %v554 = vld [vmem:[%s1 + $0xd18] sm:$0xff]
    %v555 = vld [vmem:[%s1 + $0xd20] sm:$0xff]
    %v556 = vld [vmem:[%s1 + $0xd28] sm:$0xff]
    %v557 = vld [vmem:[%s1 + $0xd30] sm:$0xff]
    %v558 = vld [vmem:[%s1 + $0xd38] sm:$0xff]
    %v559 = vld [vmem:[%s1 + $0xd40] sm:$0xff]
    %v560 = vld [vmem:[%s1 + $0xd48] sm:$0xff]
    %v561 = vld [vmem:[%s1 + $0xd50] sm:$0xff]
    %v562 = vld [vmem:[%s1 + $0xd58] sm:$0xff]
    %v563 = vld [vmem:[%s1 + $0xd60] sm:$0xff]
    %v564 = vld [vmem:[%s1 + $0xd68] sm:$0xff]
    %v565 = vld [vmem:[%s1 + $0xd70] sm:$0xff]
    %v566 = vld [vmem:[%s1 + $0xd78] sm:$0xff]
    %v567 = vld [vmem:[%s1 + $0xd80] sm:$0xff]
    %v568 = vld [vmem:[%s1 + $0xd88] sm:$0xff]
    %v569 = vld [vmem:[%s1 + $0xd90] sm:$0xff]
    %v570 = vld [vmem:[%s1 + $0xd98] sm:$0xff]
    %v571 = vld [vmem:[%s1 + $0xda0] sm:$0xff]
    %v572 = vld [vmem:[%s1 + $0xda8] sm:$0xff]
    %v573 = vld [vmem:[%s1 + $0xdb0] sm:$0xff]
    %v574 = vld [vmem:[%s1 + $0xdb8] sm:$0xff]
    %v575 = vld [vmem:[%s1 + $0xdc0] sm:$0xff]
    %v576 = vld [vmem:[%s1 + $0xdc8] sm:$0xff]
    %v577 = vld [vmem:[%s1 + $0xdd0] sm:$0xff]
    %v578 = vld [vmem:[%s1 + $0xdd8] sm:$0xff]
    %v579 = vld [vmem:[%s1 + $0xde0] sm:$0xff]
    %v580 = vld [vmem:[%s1 + $0xde8] sm:$0xff]
    %v581 = vld [vmem:[%s1 + $0xdf0] sm:$0xff]
    %v582 = vld [vmem:[%s1 + $0xdf8] sm:$0xff]
    %v583 = vld [vmem:[%s1 + $0xe00] sm:$0xff]
    %v584 = vld [vmem:[%s1 + $0xe08] sm:$0xff]
    %v585 = vld [vmem:[%s1 + $0xe10] sm:$0xff]
    %v586 = vld [vmem:[%s1 + $0xe18] sm:$0xff]
    %v587 = vld [vmem:[%s1 + $0xe20] sm:$0xff]
    %v588 = vld [vmem:[%s1 + $0xe28] sm:$0xff]
    %v589 = vld [vmem:[%s1 + $0xe30] sm:$0xff]
    %v590 = vld [vmem:[%s1 + $0xe38] sm:$0xff]
    %v591 = vld [vmem:[%s1 + $0xe40] sm:$0xff]
    %v592 = vld [vmem:[%s1 + $0xe48] sm:$0xff]
    %v593 = vld [vmem:[%s1 + $0xe50] sm:$0xff]
    %v594 = vld [vmem:[%s1 + $0xe58] sm:$0xff]
    %v595 = vld [vmem:[%s1 + $0xe60] sm:$0xff]
    %v596 = vld [vmem:[%s1 + $0xe68] sm:$0xff]
    %v597 = vld [vmem:[%s1 + $0xe70] sm:$0xff]
    %v598 = vld [vmem:[%s1 + $0xe78] sm:$0xff]
    %v599 = vld [vmem:[%s1 + $0xe80] sm:$0xff]
    %v600 = vld [vmem:[%s1 + $0xe88] sm:$0xff]
    %v601 = vld [vmem:[%s1 + $0xe90] sm:$0xff]
    %v602 = vld [vmem:[%s1 + $0xe98] sm:$0xff]
    %v603 = vld [vmem:[%s1 + $0xea0] sm:$0xff]
    %v604 = vld [vmem:[%s1 + $0xea8] sm:$0xff]
    %v605 = vld [vmem:[%s1 + $0xeb0] sm:$0xff]
    %v606 = vld [vmem:[%s1 + $0xeb8] sm:$0xff]
    %v607 = vld [vmem:[%s1 + $0xec0] sm:$0xff]
    %v608 = vld [vmem:[%s1 + $0xec8] sm:$0xff]
    %v609 = vld [vmem:[%s1 + $0xed0] sm:$0xff]
    %v610 = vld [vmem:[%s1 + $0xed8] sm:$0xff]
    %v611 = vld [vmem:[%s1 + $0xee0] sm:$0xff]
    %v612 = vld [vmem:[%s1 + $0xee8] sm:$0xff]
    %v613 = vld [vmem:[%s1 + $0xef0] sm:$0xff]
    %v614 = vld [vmem:[%s1 + $0xef8] sm:$0xff]
    %v615 = vld [vmem:[%s1 + $0xf00] sm:$0xff]
    %v616 = vld [vmem:[%s1 + $0xf08] sm:$0xff]
    %v617 = vld [vmem:[%s1 + $0xf10] sm:$0xff]
    %v618 = vld [vmem:[%s1 + $0xf18] sm:$0xff]
    %v619 = vld [vmem:[%s1 + $0xf20] sm:$0xff]
    %v620 = vld [vmem:[%s1 + $0xf28] sm:$0xff]
    %v621 = vld [vmem:[%s1 + $0xf30] sm:$0xff]
    %v622 = vld [vmem:[%s1 + $0xf38] sm:$0xff]
    %v623 = vld [vmem:[%s1 + $0xf40] sm:$0xff]
    %v624 = vld [vmem:[%s1 + $0xf48] sm:$0xff]
    %v625 = vld [vmem:[%s1 + $0xf50] sm:$0xff]
    %v626 = vld [vmem:[%s1 + $0xf58] sm:$0xff]
    %v627 = vld [vmem:[%s1 + $0xf60] sm:$0xff]
    %v628 = vld [vmem:[%s1 + $0xf68] sm:$0xff]
    %v629 = vld [vmem:[%s1 + $0xf70] sm:$0xff]
    %v630 = vld [vmem:[%s1 + $0xf78] sm:$0xff]
    %v631 = vld [vmem:[%s1 + $0xf80] sm:$0xff]
    %v632 = vld [vmem:[%s1 + $0xf88] sm:$0xff]
    %v633 = vld [vmem:[%s1 + $0xf90] sm:$0xff]
    %v634 = vld [vmem:[%s1 + $0xf98] sm:$0xff]
    %v635 = vld [vmem:[%s1 + $0xfa0] sm:$0xff]
    %v636 = vld [vmem:[%s1 + $0xfa8] sm:$0xff]
    %v637 = vld [vmem:[%s1 + $0xfb0] sm:$0xff]
    %v638 = vld [vmem:[%s1 + $0xfb8] sm:$0xff]
    %v639 = vld [vmem:[%s1 + $0xfc0] sm:$0xff]
    %v640 = vld [vmem:[%s1 + $0xfc8] sm:$0xff]
    %v641 = vld [vmem:[%s1 + $0xfd0] sm:$0xff]
    %v642 = vld [vmem:[%s1 + $0xfd8] sm:$0xff]
    %v643 = vld [vmem:[%s1 + $0xfe0] sm:$0xff]
    %v644 = vld [vmem:[%s1 + $0xfe8] sm:$0xff]
    %v645 = vld [vmem:[%s1 + $0xff0] sm:$0xff]
    %v646 = vld [vmem:[%s1 + $0xff8] sm:$0xff]
    %v647 = vld [vmem:[%s2] sm:$0xf]
    %v649 = vlaneseq
    %v650 = vshrl.u32 %v649, 7
    %v651 = vsub.s32 0, %v650
    %v652 = vrot.slane %v647, %v651
    %v653 = vlaneseq
    %v654 = vshrl.u32 %v653, 7
    %v655 = vsub.s32 1, %v654
    %v656 = vrot.slane %v647, %v655
    %v657 = vlaneseq
    %v658 = vshrl.u32 %v657, 7
    %v659 = vsub.s32 2, %v658
    %v660 = vrot.slane %v647, %v659
    %v661 = vlaneseq
    %v662 = vshrl.u32 %v661, 7
    %v663 = vsub.s32 3, %v662
    %v664 = vrot.slane %v647, %v663
    %v1181 = vunpack.c.l.b16 %v135
    %v1182 = vunpack.c.h.b16 %v135
    %v1183 = vunpack.c.l.b16 %v136
    %v1184 = vunpack.c.h.b16 %v136
    %v1185 = vunpack.c.l.b16 %v137
    %v1186 = vunpack.c.h.b16 %v137
    %v1187 = vunpack.c.l.b16 %v138
    %v1188 = vunpack.c.h.b16 %v138
    %v1189 = vunpack.c.l.b16 %v139
    %v1190 = vunpack.c.h.b16 %v139
    %v1191 = vunpack.c.l.b16 %v140
    %v1192 = vunpack.c.h.b16 %v140
    %v1193 = vunpack.c.l.b16 %v141
    %v1194 = vunpack.c.h.b16 %v141
    %v1195 = vunpack.c.l.b16 %v142
    %v1196 = vunpack.c.h.b16 %v142
    %v1197 = vunpack.c.l.b16 %v143
    %v1198 = vunpack.c.h.b16 %v143
    %v1199 = vunpack.c.l.b16 %v144
    %v1200 = vunpack.c.h.b16 %v144
    %v1201 = vunpack.c.l.b16 %v145
    %v1202 = vunpack.c.h.b16 %v145
    %v1203 = vunpack.c.l.b16 %v146
    %v1204 = vunpack.c.h.b16 %v146
    %v1205 = vunpack.c.l.b16 %v147
    %v1206 = vunpack.c.h.b16 %v147
    %v1207 = vunpack.c.l.b16 %v148
    %v1208 = vunpack.c.h.b16 %v148
    %v1209 = vunpack.c.l.b16 %v149
    %v1210 = vunpack.c.h.b16 %v149
    %v1211 = vunpack.c.l.b16 %v150
    %v1212 = vunpack.c.h.b16 %v150
    %v1213 = vunpack.c.l.b16 %v151
    %v1214 = vunpack.c.h.b16 %v151
    %v1215 = vunpack.c.l.b16 %v152
    %v1216 = vunpack.c.h.b16 %v152
    %v1217 = vunpack.c.l.b16 %v153
    %v1218 = vunpack.c.h.b16 %v153
    %v1219 = vunpack.c.l.b16 %v154
    %v1220 = vunpack.c.h.b16 %v154
    %v1221 = vunpack.c.l.b16 %v155
    %v1222 = vunpack.c.h.b16 %v155
    %v1223 = vunpack.c.l.b16 %v156
    %v1224 = vunpack.c.h.b16 %v156
    %v1225 = vunpack.c.l.b16 %v157
    %v1226 = vunpack.c.h.b16 %v157
    %v1227 = vunpack.c.l.b16 %v158
    %v1228 = vunpack.c.h.b16 %v158
    %v1229 = vunpack.c.l.b16 %v159
    %v1230 = vunpack.c.h.b16 %v159
    %v1231 = vunpack.c.l.b16 %v160
    %v1232 = vunpack.c.h.b16 %v160
    %v1233 = vunpack.c.l.b16 %v161
    %v1234 = vunpack.c.h.b16 %v161
    %v1235 = vunpack.c.l.b16 %v162
    %v1236 = vunpack.c.h.b16 %v162
    %v1237 = vunpack.c.l.b16 %v163
    %v1238 = vunpack.c.h.b16 %v163
    %v1239 = vunpack.c.l.b16 %v164
    %v1240 = vunpack.c.h.b16 %v164
    %v1241 = vunpack.c.l.b16 %v165
    %v1242 = vunpack.c.h.b16 %v165
    %v1243 = vunpack.c.l.b16 %v166
    %v1244 = vunpack.c.h.b16 %v166
    %v1245 = vunpack.c.l.b16 %v167
    %v1246 = vunpack.c.h.b16 %v167
    %v1247 = vunpack.c.l.b16 %v168
    %v1248 = vunpack.c.h.b16 %v168
    %v1249 = vunpack.c.l.b16 %v169
    %v1250 = vunpack.c.h.b16 %v169
    %v1251 = vunpack.c.l.b16 %v170
    %v1252 = vunpack.c.h.b16 %v170
    %v1253 = vunpack.c.l.b16 %v171
    %v1254 = vunpack.c.h.b16 %v171
    %v1255 = vunpack.c.l.b16 %v172
    %v1256 = vunpack.c.h.b16 %v172
    %v1257 = vunpack.c.l.b16 %v173
    %v1258 = vunpack.c.h.b16 %v173
    %v1259 = vunpack.c.l.b16 %v174
    %v1260 = vunpack.c.h.b16 %v174
    %v1261 = vunpack.c.l.b16 %v175
    %v1262 = vunpack.c.h.b16 %v175
    %v1263 = vunpack.c.l.b16 %v176
    %v1264 = vunpack.c.h.b16 %v176
    %v1265 = vunpack.c.l.b16 %v177
    %v1266 = vunpack.c.h.b16 %v177
    %v1267 = vunpack.c.l.b16 %v178
    %v1268 = vunpack.c.h.b16 %v178
    %v1269 = vunpack.c.l.b16 %v179
    %v1270 = vunpack.c.h.b16 %v179
    %v1271 = vunpack.c.l.b16 %v180
    %v1272 = vunpack.c.h.b16 %v180
    %v1273 = vunpack.c.l.b16 %v181
    %v1274 = vunpack.c.h.b16 %v181
    %v1275 = vunpack.c.l.b16 %v182
    %v1276 = vunpack.c.h.b16 %v182
    %v1277 = vunpack.c.l.b16 %v183
    %v1278 = vunpack.c.h.b16 %v183
    %v1279 = vunpack.c.l.b16 %v184
    %v1280 = vunpack.c.h.b16 %v184
    %v1281 = vunpack.c.l.b16 %v185
    %v1282 = vunpack.c.h.b16 %v185
    %v1283 = vunpack.c.l.b16 %v186
    %v1284 = vunpack.c.h.b16 %v186
    %v1285 = vunpack.c.l.b16 %v187
    %v1286 = vunpack.c.h.b16 %v187
    %v1287 = vunpack.c.l.b16 %v188
    %v1288 = vunpack.c.h.b16 %v188
    %v1289 = vunpack.c.l.b16 %v189
    %v1290 = vunpack.c.h.b16 %v189
    %v1291 = vunpack.c.l.b16 %v190
    %v1292 = vunpack.c.h.b16 %v190
    %v1293 = vunpack.c.l.b16 %v191
    %v1294 = vunpack.c.h.b16 %v191
    %v1295 = vunpack.c.l.b16 %v192
    %v1296 = vunpack.c.h.b16 %v192
    %v1297 = vunpack.c.l.b16 %v193
    %v1298 = vunpack.c.h.b16 %v193
    %v1299 = vunpack.c.l.b16 %v194
    %v1300 = vunpack.c.h.b16 %v194
    %v1301 = vunpack.c.l.b16 %v195
    %v1302 = vunpack.c.h.b16 %v195
    %v1303 = vunpack.c.l.b16 %v196
    %v1304 = vunpack.c.h.b16 %v196
    %v1305 = vunpack.c.l.b16 %v197
    %v1306 = vunpack.c.h.b16 %v197
    %v1307 = vunpack.c.l.b16 %v198
    %v1308 = vunpack.c.h.b16 %v198
    %v1309 = vunpack.c.l.b16 %v199
    %v1310 = vunpack.c.h.b16 %v199
    %v1311 = vunpack.c.l.b16 %v200
    %v1312 = vunpack.c.h.b16 %v200
    %v1313 = vunpack.c.l.b16 %v201
    %v1314 = vunpack.c.h.b16 %v201
    %v1315 = vunpack.c.l.b16 %v202
    %v1316 = vunpack.c.h.b16 %v202
    %v1317 = vunpack.c.l.b16 %v203
    %v1318 = vunpack.c.h.b16 %v203
    %v1319 = vunpack.c.l.b16 %v204
    %v1320 = vunpack.c.h.b16 %v204
    %v1321 = vunpack.c.l.b16 %v205
    %v1322 = vunpack.c.h.b16 %v205
    %v1323 = vunpack.c.l.b16 %v206
    %v1324 = vunpack.c.h.b16 %v206
    %v1325 = vunpack.c.l.b16 %v207
    %v1326 = vunpack.c.h.b16 %v207
    %v1327 = vunpack.c.l.b16 %v208
    %v1328 = vunpack.c.h.b16 %v208
    %v1329 = vunpack.c.l.b16 %v209
    %v1330 = vunpack.c.h.b16 %v209
    %v1331 = vunpack.c.l.b16 %v210
    %v1332 = vunpack.c.h.b16 %v210
    %v1333 = vunpack.c.l.b16 %v211
    %v1334 = vunpack.c.h.b16 %v211
    %v1335 = vunpack.c.l.b16 %v212
    %v1336 = vunpack.c.h.b16 %v212
    %v1337 = vunpack.c.l.b16 %v213
    %v1338 = vunpack.c.h.b16 %v213
    %v1339 = vunpack.c.l.b16 %v214
    %v1340 = vunpack.c.h.b16 %v214
    %v1341 = vunpack.c.l.b16 %v215
    %v1342 = vunpack.c.h.b16 %v215
    %v1343 = vunpack.c.l.b16 %v216
    %v1344 = vunpack.c.h.b16 %v216
    %v1345 = vunpack.c.l.b16 %v217
    %v1346 = vunpack.c.h.b16 %v217
    %v1347 = vunpack.c.l.b16 %v218
    %v1348 = vunpack.c.h.b16 %v218
    %v1349 = vunpack.c.l.b16 %v219
    %v1350 = vunpack.c.h.b16 %v219
    %v1351 = vunpack.c.l.b16 %v220
    %v1352 = vunpack.c.h.b16 %v220
    %v1353 = vunpack.c.l.b16 %v221
    %v1354 = vunpack.c.h.b16 %v221
    %v1355 = vunpack.c.l.b16 %v222
    %v1356 = vunpack.c.h.b16 %v222
    %v1357 = vunpack.c.l.b16 %v223
    %v1358 = vunpack.c.h.b16 %v223
    %v1359 = vunpack.c.l.b16 %v224
    %v1360 = vunpack.c.h.b16 %v224
    %v1361 = vunpack.c.l.b16 %v225
    %v1362 = vunpack.c.h.b16 %v225
    %v1363 = vunpack.c.l.b16 %v226
    %v1364 = vunpack.c.h.b16 %v226
    %v1365 = vunpack.c.l.b16 %v227
    %v1366 = vunpack.c.h.b16 %v227
    %v1367 = vunpack.c.l.b16 %v228
    %v1368 = vunpack.c.h.b16 %v228
    %v1369 = vunpack.c.l.b16 %v229
    %v1370 = vunpack.c.h.b16 %v229
    %v1371 = vunpack.c.l.b16 %v230
    %v1372 = vunpack.c.h.b16 %v230
    %v1373 = vunpack.c.l.b16 %v231
    %v1374 = vunpack.c.h.b16 %v231
    %v1375 = vunpack.c.l.b16 %v232
    %v1376 = vunpack.c.h.b16 %v232
    %v1377 = vunpack.c.l.b16 %v233
    %v1378 = vunpack.c.h.b16 %v233
    %v1379 = vunpack.c.l.b16 %v234
    %v1380 = vunpack.c.h.b16 %v234
    %v1381 = vunpack.c.l.b16 %v235
    %v1382 = vunpack.c.h.b16 %v235
    %v1383 = vunpack.c.l.b16 %v236
    %v1384 = vunpack.c.h.b16 %v236
    %v1385 = vunpack.c.l.b16 %v237
    %v1386 = vunpack.c.h.b16 %v237
    %v1387 = vunpack.c.l.b16 %v238
    %v1388 = vunpack.c.h.b16 %v238
    %v1389 = vunpack.c.l.b16 %v239
    %v1390 = vunpack.c.h.b16 %v239
    %v1391 = vunpack.c.l.b16 %v240
    %v1392 = vunpack.c.h.b16 %v240
    %v1393 = vunpack.c.l.b16 %v241
    %v1394 = vunpack.c.h.b16 %v241
    %v1395 = vunpack.c.l.b16 %v242
    %v1396 = vunpack.c.h.b16 %v242
    %v1397 = vunpack.c.l.b16 %v243
    %v1398 = vunpack.c.h.b16 %v243
    %v1399 = vunpack.c.l.b16 %v244
    %v1400 = vunpack.c.h.b16 %v244
    %v1401 = vunpack.c.l.b16 %v245
    %v1402 = vunpack.c.h.b16 %v245
    %v1403 = vunpack.c.l.b16 %v246
    %v1404 = vunpack.c.h.b16 %v246
    %v1405 = vunpack.c.l.b16 %v247
    %v1406 = vunpack.c.h.b16 %v247
    %v1407 = vunpack.c.l.b16 %v248
    %v1408 = vunpack.c.h.b16 %v248
    %v1409 = vunpack.c.l.b16 %v249
    %v1410 = vunpack.c.h.b16 %v249
    %v1411 = vunpack.c.l.b16 %v250
    %v1412 = vunpack.c.h.b16 %v250
    %v1413 = vunpack.c.l.b16 %v251
    %v1414 = vunpack.c.h.b16 %v251
    %v1415 = vunpack.c.l.b16 %v252
    %v1416 = vunpack.c.h.b16 %v252
    %v1417 = vunpack.c.l.b16 %v253
    %v1418 = vunpack.c.h.b16 %v253
    %v1419 = vunpack.c.l.b16 %v254
    %v1420 = vunpack.c.h.b16 %v254
    %v1421 = vunpack.c.l.b16 %v255
    %v1422 = vunpack.c.h.b16 %v255
    %v1423 = vunpack.c.l.b16 %v256
    %v1424 = vunpack.c.h.b16 %v256
    %v1425 = vunpack.c.l.b16 %v257
    %v1426 = vunpack.c.h.b16 %v257
    %v1427 = vunpack.c.l.b16 %v258
    %v1428 = vunpack.c.h.b16 %v258
    %v1429 = vunpack.c.l.b16 %v259
    %v1430 = vunpack.c.h.b16 %v259
    %v1431 = vunpack.c.l.b16 %v260
    %v1432 = vunpack.c.h.b16 %v260
    %v1433 = vunpack.c.l.b16 %v261
    %v1434 = vunpack.c.h.b16 %v261
    %v1435 = vunpack.c.l.b16 %v262
    %v1436 = vunpack.c.h.b16 %v262
    %v1437 = vunpack.c.l.b16 %v263
    %v1438 = vunpack.c.h.b16 %v263
    %v1439 = vunpack.c.l.b16 %v264
    %v1440 = vunpack.c.h.b16 %v264
    %v1441 = vunpack.c.l.b16 %v265
    %v1442 = vunpack.c.h.b16 %v265
    %v1443 = vunpack.c.l.b16 %v266
    %v1444 = vunpack.c.h.b16 %v266
    %v1445 = vunpack.c.l.b16 %v267
    %v1446 = vunpack.c.h.b16 %v267
    %v1447 = vunpack.c.l.b16 %v268
    %v1448 = vunpack.c.h.b16 %v268
    %v1449 = vunpack.c.l.b16 %v269
    %v1450 = vunpack.c.h.b16 %v269
    %v1451 = vunpack.c.l.b16 %v270
    %v1452 = vunpack.c.h.b16 %v270
    %v1453 = vunpack.c.l.b16 %v271
    %v1454 = vunpack.c.h.b16 %v271
    %v1455 = vunpack.c.l.b16 %v272
    %v1456 = vunpack.c.h.b16 %v272
    %v1457 = vunpack.c.l.b16 %v273
    %v1458 = vunpack.c.h.b16 %v273
    %v1459 = vunpack.c.l.b16 %v274
    %v1460 = vunpack.c.h.b16 %v274
    %v1461 = vunpack.c.l.b16 %v275
    %v1462 = vunpack.c.h.b16 %v275
    %v1463 = vunpack.c.l.b16 %v276
    %v1464 = vunpack.c.h.b16 %v276
    %v1465 = vunpack.c.l.b16 %v277
    %v1466 = vunpack.c.h.b16 %v277
    %v1467 = vunpack.c.l.b16 %v278
    %v1468 = vunpack.c.h.b16 %v278
    %v1469 = vunpack.c.l.b16 %v279
    %v1470 = vunpack.c.h.b16 %v279
    %v1471 = vunpack.c.l.b16 %v280
    %v1472 = vunpack.c.h.b16 %v280
    %v1473 = vunpack.c.l.b16 %v281
    %v1474 = vunpack.c.h.b16 %v281
    %v1475 = vunpack.c.l.b16 %v282
    %v1476 = vunpack.c.h.b16 %v282
    %v1477 = vunpack.c.l.b16 %v283
    %v1478 = vunpack.c.h.b16 %v283
    %v1479 = vunpack.c.l.b16 %v284
    %v1480 = vunpack.c.h.b16 %v284
    %v1481 = vunpack.c.l.b16 %v285
    %v1482 = vunpack.c.h.b16 %v285
    %v1483 = vunpack.c.l.b16 %v286
    %v1484 = vunpack.c.h.b16 %v286
    %v1485 = vunpack.c.l.b16 %v287
    %v1486 = vunpack.c.h.b16 %v287
    %v1487 = vunpack.c.l.b16 %v288
    %v1488 = vunpack.c.h.b16 %v288
    %v1489 = vunpack.c.l.b16 %v289
    %v1490 = vunpack.c.h.b16 %v289
    %v1491 = vunpack.c.l.b16 %v290
    %v1492 = vunpack.c.h.b16 %v290
    %v1493 = vunpack.c.l.b16 %v291
    %v1494 = vunpack.c.h.b16 %v291
    %v1495 = vunpack.c.l.b16 %v292
    %v1496 = vunpack.c.h.b16 %v292
    %v1497 = vunpack.c.l.b16 %v293
    %v1498 = vunpack.c.h.b16 %v293
    %v1499 = vunpack.c.l.b16 %v294
    %v1500 = vunpack.c.h.b16 %v294
    %v1501 = vunpack.c.l.b16 %v295
    %v1502 = vunpack.c.h.b16 %v295
    %v1503 = vunpack.c.l.b16 %v296
    %v1504 = vunpack.c.h.b16 %v296
    %v1505 = vunpack.c.l.b16 %v297
    %v1506 = vunpack.c.h.b16 %v297
    %v1507 = vunpack.c.l.b16 %v298
    %v1508 = vunpack.c.h.b16 %v298
    %v1509 = vunpack.c.l.b16 %v299
    %v1510 = vunpack.c.h.b16 %v299
    %v1511 = vunpack.c.l.b16 %v300
    %v1512 = vunpack.c.h.b16 %v300
    %v1513 = vunpack.c.l.b16 %v301
    %v1514 = vunpack.c.h.b16 %v301
    %v1515 = vunpack.c.l.b16 %v302
    %v1516 = vunpack.c.h.b16 %v302
    %v1517 = vunpack.c.l.b16 %v303
    %v1518 = vunpack.c.h.b16 %v303
    %v1519 = vunpack.c.l.b16 %v304
    %v1520 = vunpack.c.h.b16 %v304
    %v1521 = vunpack.c.l.b16 %v305
    %v1522 = vunpack.c.h.b16 %v305
    %v1523 = vunpack.c.l.b16 %v306
    %v1524 = vunpack.c.h.b16 %v306
    %v1525 = vunpack.c.l.b16 %v307
    %v1526 = vunpack.c.h.b16 %v307
    %v1527 = vunpack.c.l.b16 %v308
    %v1528 = vunpack.c.h.b16 %v308
    %v1529 = vunpack.c.l.b16 %v309
    %v1530 = vunpack.c.h.b16 %v309
    %v1531 = vunpack.c.l.b16 %v310
    %v1532 = vunpack.c.h.b16 %v310
    %v1533 = vunpack.c.l.b16 %v311
    %v1534 = vunpack.c.h.b16 %v311
    %v1535 = vunpack.c.l.b16 %v312
    %v1536 = vunpack.c.h.b16 %v312
    %v1537 = vunpack.c.l.b16 %v313
    %v1538 = vunpack.c.h.b16 %v313
    %v1539 = vunpack.c.l.b16 %v314
    %v1540 = vunpack.c.h.b16 %v314
    %v1541 = vunpack.c.l.b16 %v315
    %v1542 = vunpack.c.h.b16 %v315
    %v1543 = vunpack.c.l.b16 %v316
    %v1544 = vunpack.c.h.b16 %v316
    %v1545 = vunpack.c.l.b16 %v317
    %v1546 = vunpack.c.h.b16 %v317
    %v1547 = vunpack.c.l.b16 %v318
    %v1548 = vunpack.c.h.b16 %v318
    %v1549 = vunpack.c.l.b16 %v319
    %v1550 = vunpack.c.h.b16 %v319
    %v1551 = vunpack.c.l.b16 %v320
    %v1552 = vunpack.c.h.b16 %v320
    %v1553 = vunpack.c.l.b16 %v321
    %v1554 = vunpack.c.h.b16 %v321
    %v1555 = vunpack.c.l.b16 %v322
    %v1556 = vunpack.c.h.b16 %v322
    %v1557 = vunpack.c.l.b16 %v323
    %v1558 = vunpack.c.h.b16 %v323
    %v1559 = vunpack.c.l.b16 %v324
    %v1560 = vunpack.c.h.b16 %v324
    %v1561 = vunpack.c.l.b16 %v325
    %v1562 = vunpack.c.h.b16 %v325
    %v1563 = vunpack.c.l.b16 %v326
    %v1564 = vunpack.c.h.b16 %v326
    %v1565 = vunpack.c.l.b16 %v327
    %v1566 = vunpack.c.h.b16 %v327
    %v1567 = vunpack.c.l.b16 %v328
    %v1568 = vunpack.c.h.b16 %v328
    %v1569 = vunpack.c.l.b16 %v329
    %v1570 = vunpack.c.h.b16 %v329
    %v1571 = vunpack.c.l.b16 %v330
    %v1572 = vunpack.c.h.b16 %v330
    %v1573 = vunpack.c.l.b16 %v331
    %v1574 = vunpack.c.h.b16 %v331
    %v1575 = vunpack.c.l.b16 %v332
    %v1576 = vunpack.c.h.b16 %v332
    %v1577 = vunpack.c.l.b16 %v333
    %v1578 = vunpack.c.h.b16 %v333
    %v1579 = vunpack.c.l.b16 %v334
    %v1580 = vunpack.c.h.b16 %v334
    %v1581 = vunpack.c.l.b16 %v335
    %v1582 = vunpack.c.h.b16 %v335
    %v1583 = vunpack.c.l.b16 %v336
    %v1584 = vunpack.c.h.b16 %v336
    %v1585 = vunpack.c.l.b16 %v337
    %v1586 = vunpack.c.h.b16 %v337
    %v1587 = vunpack.c.l.b16 %v338
    %v1588 = vunpack.c.h.b16 %v338
    %v1589 = vunpack.c.l.b16 %v339
    %v1590 = vunpack.c.h.b16 %v339
    %v1591 = vunpack.c.l.b16 %v340
    %v1592 = vunpack.c.h.b16 %v340
    %v1593 = vunpack.c.l.b16 %v341
    %v1594 = vunpack.c.h.b16 %v341
    %v1595 = vunpack.c.l.b16 %v342
    %v1596 = vunpack.c.h.b16 %v342
    %v1597 = vunpack.c.l.b16 %v343
    %v1598 = vunpack.c.h.b16 %v343
    %v1599 = vunpack.c.l.b16 %v344
    %v1600 = vunpack.c.h.b16 %v344
    %v1601 = vunpack.c.l.b16 %v345
    %v1602 = vunpack.c.h.b16 %v345
    %v1603 = vunpack.c.l.b16 %v346
    %v1604 = vunpack.c.h.b16 %v346
    %v1605 = vunpack.c.l.b16 %v347
    %v1606 = vunpack.c.h.b16 %v347
    %v1607 = vunpack.c.l.b16 %v348
    %v1608 = vunpack.c.h.b16 %v348
    %v1609 = vunpack.c.l.b16 %v349
    %v1610 = vunpack.c.h.b16 %v349
    %v1611 = vunpack.c.l.b16 %v350
    %v1612 = vunpack.c.h.b16 %v350
    %v1613 = vunpack.c.l.b16 %v351
    %v1614 = vunpack.c.h.b16 %v351
    %v1615 = vunpack.c.l.b16 %v352
    %v1616 = vunpack.c.h.b16 %v352
    %v1617 = vunpack.c.l.b16 %v353
    %v1618 = vunpack.c.h.b16 %v353
    %v1619 = vunpack.c.l.b16 %v354
    %v1620 = vunpack.c.h.b16 %v354
    %v1621 = vunpack.c.l.b16 %v355
    %v1622 = vunpack.c.h.b16 %v355
    %v1623 = vunpack.c.l.b16 %v356
    %v1624 = vunpack.c.h.b16 %v356
    %v1625 = vunpack.c.l.b16 %v357
    %v1626 = vunpack.c.h.b16 %v357
    %v1627 = vunpack.c.l.b16 %v358
    %v1628 = vunpack.c.h.b16 %v358
    %v1629 = vunpack.c.l.b16 %v359
    %v1630 = vunpack.c.h.b16 %v359
    %v1631 = vunpack.c.l.b16 %v360
    %v1632 = vunpack.c.h.b16 %v360
    %v1633 = vunpack.c.l.b16 %v361
    %v1634 = vunpack.c.h.b16 %v361
    %v1635 = vunpack.c.l.b16 %v362
    %v1636 = vunpack.c.h.b16 %v362
    %v1637 = vunpack.c.l.b16 %v363
    %v1638 = vunpack.c.h.b16 %v363
    %v1639 = vunpack.c.l.b16 %v364
    %v1640 = vunpack.c.h.b16 %v364
    %v1641 = vunpack.c.l.b16 %v365
    %v1642 = vunpack.c.h.b16 %v365
    %v1643 = vunpack.c.l.b16 %v366
    %v1644 = vunpack.c.h.b16 %v366
    %v1645 = vunpack.c.l.b16 %v367
    %v1646 = vunpack.c.h.b16 %v367
    %v1647 = vunpack.c.l.b16 %v368
    %v1648 = vunpack.c.h.b16 %v368
    %v1649 = vunpack.c.l.b16 %v369
    %v1650 = vunpack.c.h.b16 %v369
    %v1651 = vunpack.c.l.b16 %v370
    %v1652 = vunpack.c.h.b16 %v370
    %v1653 = vunpack.c.l.b16 %v371
    %v1654 = vunpack.c.h.b16 %v371
    %v1655 = vunpack.c.l.b16 %v372
    %v1656 = vunpack.c.h.b16 %v372
    %v1657 = vunpack.c.l.b16 %v373
    %v1658 = vunpack.c.h.b16 %v373
    %v1659 = vunpack.c.l.b16 %v374
    %v1660 = vunpack.c.h.b16 %v374
    %v1661 = vunpack.c.l.b16 %v375
    %v1662 = vunpack.c.h.b16 %v375
    %v1663 = vunpack.c.l.b16 %v376
    %v1664 = vunpack.c.h.b16 %v376
    %v1665 = vunpack.c.l.b16 %v377
    %v1666 = vunpack.c.h.b16 %v377
    %v1667 = vunpack.c.l.b16 %v378
    %v1668 = vunpack.c.h.b16 %v378
    %v1669 = vunpack.c.l.b16 %v379
    %v1670 = vunpack.c.h.b16 %v379
    %v1671 = vunpack.c.l.b16 %v380
    %v1672 = vunpack.c.h.b16 %v380
    %v1673 = vunpack.c.l.b16 %v381
    %v1674 = vunpack.c.h.b16 %v381
    %v1675 = vunpack.c.l.b16 %v382
    %v1676 = vunpack.c.h.b16 %v382
    %v1677 = vunpack.c.l.b16 %v383
    %v1678 = vunpack.c.h.b16 %v383
    %v1679 = vunpack.c.l.b16 %v384
    %v1680 = vunpack.c.h.b16 %v384
    %v1681 = vunpack.c.l.b16 %v385
    %v1682 = vunpack.c.h.b16 %v385
    %v1683 = vunpack.c.l.b16 %v386
    %v1684 = vunpack.c.h.b16 %v386
    %v1685 = vunpack.c.l.b16 %v387
    %v1686 = vunpack.c.h.b16 %v387
    %v1687 = vunpack.c.l.b16 %v388
    %v1688 = vunpack.c.h.b16 %v388
    %v1689 = vunpack.c.l.b16 %v389
    %v1690 = vunpack.c.h.b16 %v389
    %v1691 = vunpack.c.l.b16 %v390
    %v1692 = vunpack.c.h.b16 %v390
    %v1693 = vunpack.c.l.b16 %v391
    %v1694 = vunpack.c.h.b16 %v391
    %v1695 = vunpack.c.l.b16 %v392
    %v1696 = vunpack.c.h.b16 %v392
    %v1697 = vunpack.c.l.b16 %v393
    %v1698 = vunpack.c.h.b16 %v393
    %v1699 = vunpack.c.l.b16 %v394
    %v1700 = vunpack.c.h.b16 %v394
    %v1701 = vunpack.c.l.b16 %v395
    %v1702 = vunpack.c.h.b16 %v395
    %v1703 = vunpack.c.l.b16 %v396
    %v1704 = vunpack.c.h.b16 %v396
    %v1705 = vunpack.c.l.b16 %v397
    %v1706 = vunpack.c.h.b16 %v397
    %v1707 = vunpack.c.l.b16 %v398
    %v1708 = vunpack.c.h.b16 %v398
    %v1709 = vunpack.c.l.b16 %v399
    %v1710 = vunpack.c.h.b16 %v399
    %v1711 = vunpack.c.l.b16 %v400
    %v1712 = vunpack.c.h.b16 %v400
    %v1713 = vunpack.c.l.b16 %v401
    %v1714 = vunpack.c.h.b16 %v401
    %v1715 = vunpack.c.l.b16 %v402
    %v1716 = vunpack.c.h.b16 %v402
    %v1717 = vunpack.c.l.b16 %v403
    %v1718 = vunpack.c.h.b16 %v403
    %v1719 = vunpack.c.l.b16 %v404
    %v1720 = vunpack.c.h.b16 %v404
    %v1721 = vunpack.c.l.b16 %v405
    %v1722 = vunpack.c.h.b16 %v405
    %v1723 = vunpack.c.l.b16 %v406
    %v1724 = vunpack.c.h.b16 %v406
    %v1725 = vunpack.c.l.b16 %v407
    %v1726 = vunpack.c.h.b16 %v407
    %v1727 = vunpack.c.l.b16 %v408
    %v1728 = vunpack.c.h.b16 %v408
    %v1729 = vunpack.c.l.b16 %v409
    %v1730 = vunpack.c.h.b16 %v409
    %v1731 = vunpack.c.l.b16 %v410
    %v1732 = vunpack.c.h.b16 %v410
    %v1733 = vunpack.c.l.b16 %v411
    %v1734 = vunpack.c.h.b16 %v411
    %v1735 = vunpack.c.l.b16 %v412
    %v1736 = vunpack.c.h.b16 %v412
    %v1737 = vunpack.c.l.b16 %v413
    %v1738 = vunpack.c.h.b16 %v413
    %v1739 = vunpack.c.l.b16 %v414
    %v1740 = vunpack.c.h.b16 %v414
    %v1741 = vunpack.c.l.b16 %v415
    %v1742 = vunpack.c.h.b16 %v415
    %v1743 = vunpack.c.l.b16 %v416
    %v1744 = vunpack.c.h.b16 %v416
    %v1745 = vunpack.c.l.b16 %v417
    %v1746 = vunpack.c.h.b16 %v417
    %v1747 = vunpack.c.l.b16 %v418
    %v1748 = vunpack.c.h.b16 %v418
    %v1749 = vunpack.c.l.b16 %v419
    %v1750 = vunpack.c.h.b16 %v419
    %v1751 = vunpack.c.l.b16 %v420
    %v1752 = vunpack.c.h.b16 %v420
    %v1753 = vunpack.c.l.b16 %v421
    %v1754 = vunpack.c.h.b16 %v421
    %v1755 = vunpack.c.l.b16 %v422
    %v1756 = vunpack.c.h.b16 %v422
    %v1757 = vunpack.c.l.b16 %v423
    %v1758 = vunpack.c.h.b16 %v423
    %v1759 = vunpack.c.l.b16 %v424
    %v1760 = vunpack.c.h.b16 %v424
    %v1761 = vunpack.c.l.b16 %v425
    %v1762 = vunpack.c.h.b16 %v425
    %v1763 = vunpack.c.l.b16 %v426
    %v1764 = vunpack.c.h.b16 %v426
    %v1765 = vunpack.c.l.b16 %v427
    %v1766 = vunpack.c.h.b16 %v427
    %v1767 = vunpack.c.l.b16 %v428
    %v1768 = vunpack.c.h.b16 %v428
    %v1769 = vunpack.c.l.b16 %v429
    %v1770 = vunpack.c.h.b16 %v429
    %v1771 = vunpack.c.l.b16 %v430
    %v1772 = vunpack.c.h.b16 %v430
    %v1773 = vunpack.c.l.b16 %v431
    %v1774 = vunpack.c.h.b16 %v431
    %v1775 = vunpack.c.l.b16 %v432
    %v1776 = vunpack.c.h.b16 %v432
    %v1777 = vunpack.c.l.b16 %v433
    %v1778 = vunpack.c.h.b16 %v433
    %v1779 = vunpack.c.l.b16 %v434
    %v1780 = vunpack.c.h.b16 %v434
    %v1781 = vunpack.c.l.b16 %v435
    %v1782 = vunpack.c.h.b16 %v435
    %v1783 = vunpack.c.l.b16 %v436
    %v1784 = vunpack.c.h.b16 %v436
    %v1785 = vunpack.c.l.b16 %v437
    %v1786 = vunpack.c.h.b16 %v437
    %v1787 = vunpack.c.l.b16 %v438
    %v1788 = vunpack.c.h.b16 %v438
    %v1789 = vunpack.c.l.b16 %v439
    %v1790 = vunpack.c.h.b16 %v439
    %v1791 = vunpack.c.l.b16 %v440
    %v1792 = vunpack.c.h.b16 %v440
    %v1793 = vunpack.c.l.b16 %v441
    %v1794 = vunpack.c.h.b16 %v441
    %v1795 = vunpack.c.l.b16 %v442
    %v1796 = vunpack.c.h.b16 %v442
    %v1797 = vunpack.c.l.b16 %v443
    %v1798 = vunpack.c.h.b16 %v443
    %v1799 = vunpack.c.l.b16 %v444
    %v1800 = vunpack.c.h.b16 %v444
    %v1801 = vunpack.c.l.b16 %v445
    %v1802 = vunpack.c.h.b16 %v445
    %v1803 = vunpack.c.l.b16 %v446
    %v1804 = vunpack.c.h.b16 %v446
    %v1805 = vunpack.c.l.b16 %v447
    %v1806 = vunpack.c.h.b16 %v447
    %v1807 = vunpack.c.l.b16 %v448
    %v1808 = vunpack.c.h.b16 %v448
    %v1809 = vunpack.c.l.b16 %v449
    %v1810 = vunpack.c.h.b16 %v449
    %v1811 = vunpack.c.l.b16 %v450
    %v1812 = vunpack.c.h.b16 %v450
    %v1813 = vunpack.c.l.b16 %v451
    %v1814 = vunpack.c.h.b16 %v451
    %v1815 = vunpack.c.l.b16 %v452
    %v1816 = vunpack.c.h.b16 %v452
    %v1817 = vunpack.c.l.b16 %v453
    %v1818 = vunpack.c.h.b16 %v453
    %v1819 = vunpack.c.l.b16 %v454
    %v1820 = vunpack.c.h.b16 %v454
    %v1821 = vunpack.c.l.b16 %v455
    %v1822 = vunpack.c.h.b16 %v455
    %v1823 = vunpack.c.l.b16 %v456
    %v1824 = vunpack.c.h.b16 %v456
    %v1825 = vunpack.c.l.b16 %v457
    %v1826 = vunpack.c.h.b16 %v457
    %v1827 = vunpack.c.l.b16 %v458
    %v1828 = vunpack.c.h.b16 %v458
    %v1829 = vunpack.c.l.b16 %v459
    %v1830 = vunpack.c.h.b16 %v459
    %v1831 = vunpack.c.l.b16 %v460
    %v1832 = vunpack.c.h.b16 %v460
    %v1833 = vunpack.c.l.b16 %v461
    %v1834 = vunpack.c.h.b16 %v461
    %v1835 = vunpack.c.l.b16 %v462
    %v1836 = vunpack.c.h.b16 %v462
    %v1837 = vunpack.c.l.b16 %v463
    %v1838 = vunpack.c.h.b16 %v463
    %v1839 = vunpack.c.l.b16 %v464
    %v1840 = vunpack.c.h.b16 %v464
    %v1841 = vunpack.c.l.b16 %v465
    %v1842 = vunpack.c.h.b16 %v465
    %v1843 = vunpack.c.l.b16 %v466
    %v1844 = vunpack.c.h.b16 %v466
    %v1845 = vunpack.c.l.b16 %v467
    %v1846 = vunpack.c.h.b16 %v467
    %v1847 = vunpack.c.l.b16 %v468
    %v1848 = vunpack.c.h.b16 %v468
    %v1849 = vunpack.c.l.b16 %v469
    %v1850 = vunpack.c.h.b16 %v469
    %v1851 = vunpack.c.l.b16 %v470
    %v1852 = vunpack.c.h.b16 %v470
    %v1853 = vunpack.c.l.b16 %v471
    %v1854 = vunpack.c.h.b16 %v471
    %v1855 = vunpack.c.l.b16 %v472
    %v1856 = vunpack.c.h.b16 %v472
    %v1857 = vunpack.c.l.b16 %v473
    %v1858 = vunpack.c.h.b16 %v473
    %v1859 = vunpack.c.l.b16 %v474
    %v1860 = vunpack.c.h.b16 %v474
    %v1861 = vunpack.c.l.b16 %v475
    %v1862 = vunpack.c.h.b16 %v475
    %v1863 = vunpack.c.l.b16 %v476
    %v1864 = vunpack.c.h.b16 %v476
    %v1865 = vunpack.c.l.b16 %v477
    %v1866 = vunpack.c.h.b16 %v477
    %v1867 = vunpack.c.l.b16 %v478
    %v1868 = vunpack.c.h.b16 %v478
    %v1869 = vunpack.c.l.b16 %v479
    %v1870 = vunpack.c.h.b16 %v479
    %v1871 = vunpack.c.l.b16 %v480
    %v1872 = vunpack.c.h.b16 %v480
    %v1873 = vunpack.c.l.b16 %v481
    %v1874 = vunpack.c.h.b16 %v481
    %v1875 = vunpack.c.l.b16 %v482
    %v1876 = vunpack.c.h.b16 %v482
    %v1877 = vunpack.c.l.b16 %v483
    %v1878 = vunpack.c.h.b16 %v483
    %v1879 = vunpack.c.l.b16 %v484
    %v1880 = vunpack.c.h.b16 %v484
    %v1881 = vunpack.c.l.b16 %v485
    %v1882 = vunpack.c.h.b16 %v485
    %v1883 = vunpack.c.l.b16 %v486
    %v1884 = vunpack.c.h.b16 %v486
    %v1885 = vunpack.c.l.b16 %v487
    %v1886 = vunpack.c.h.b16 %v487
    %v1887 = vunpack.c.l.b16 %v488
    %v1888 = vunpack.c.h.b16 %v488
    %v1889 = vunpack.c.l.b16 %v489
    %v1890 = vunpack.c.h.b16 %v489
    %v1891 = vunpack.c.l.b16 %v490
    %v1892 = vunpack.c.h.b16 %v490
    %v1893 = vunpack.c.l.b16 %v491
    %v1894 = vunpack.c.h.b16 %v491
    %v1895 = vunpack.c.l.b16 %v492
    %v1896 = vunpack.c.h.b16 %v492
    %v1897 = vunpack.c.l.b16 %v493
    %v1898 = vunpack.c.h.b16 %v493
    %v1899 = vunpack.c.l.b16 %v494
    %v1900 = vunpack.c.h.b16 %v494
    %v1901 = vunpack.c.l.b16 %v495
    %v1902 = vunpack.c.h.b16 %v495
    %v1903 = vunpack.c.l.b16 %v496
    %v1904 = vunpack.c.h.b16 %v496
    %v1905 = vunpack.c.l.b16 %v497
    %v1906 = vunpack.c.h.b16 %v497
    %v1907 = vunpack.c.l.b16 %v498
    %v1908 = vunpack.c.h.b16 %v498
    %v1909 = vunpack.c.l.b16 %v499
    %v1910 = vunpack.c.h.b16 %v499
    %v1911 = vunpack.c.l.b16 %v500
    %v1912 = vunpack.c.h.b16 %v500
    %v1913 = vunpack.c.l.b16 %v501
    %v1914 = vunpack.c.h.b16 %v501
    %v1915 = vunpack.c.l.b16 %v502
    %v1916 = vunpack.c.h.b16 %v502
    %v1917 = vunpack.c.l.b16 %v503
    %v1918 = vunpack.c.h.b16 %v503
    %v1919 = vunpack.c.l.b16 %v504
    %v1920 = vunpack.c.h.b16 %v504
    %v1921 = vunpack.c.l.b16 %v505
    %v1922 = vunpack.c.h.b16 %v505
    %v1923 = vunpack.c.l.b16 %v506
    %v1924 = vunpack.c.h.b16 %v506
    %v1925 = vunpack.c.l.b16 %v507
    %v1926 = vunpack.c.h.b16 %v507
    %v1927 = vunpack.c.l.b16 %v508
    %v1928 = vunpack.c.h.b16 %v508
    %v1929 = vunpack.c.l.b16 %v509
    %v1930 = vunpack.c.h.b16 %v509
    %v1931 = vunpack.c.l.b16 %v510
    %v1932 = vunpack.c.h.b16 %v510
    %v1933 = vunpack.c.l.b16 %v511
    %v1934 = vunpack.c.h.b16 %v511
    %v1935 = vunpack.c.l.b16 %v512
    %v1936 = vunpack.c.h.b16 %v512
    %v1937 = vunpack.c.l.b16 %v513
    %v1938 = vunpack.c.h.b16 %v513
    %v1939 = vunpack.c.l.b16 %v514
    %v1940 = vunpack.c.h.b16 %v514
    %v1941 = vunpack.c.l.b16 %v515
    %v1942 = vunpack.c.h.b16 %v515
    %v1943 = vunpack.c.l.b16 %v516
    %v1944 = vunpack.c.h.b16 %v516
    %v1945 = vunpack.c.l.b16 %v517
    %v1946 = vunpack.c.h.b16 %v517
    %v1947 = vunpack.c.l.b16 %v518
    %v1948 = vunpack.c.h.b16 %v518
    %v1949 = vunpack.c.l.b16 %v519
    %v1950 = vunpack.c.h.b16 %v519
    %v1951 = vunpack.c.l.b16 %v520
    %v1952 = vunpack.c.h.b16 %v520
    %v1953 = vunpack.c.l.b16 %v521
    %v1954 = vunpack.c.h.b16 %v521
    %v1955 = vunpack.c.l.b16 %v522
    %v1956 = vunpack.c.h.b16 %v522
    %v1957 = vunpack.c.l.b16 %v523
    %v1958 = vunpack.c.h.b16 %v523
    %v1959 = vunpack.c.l.b16 %v524
    %v1960 = vunpack.c.h.b16 %v524
    %v1961 = vunpack.c.l.b16 %v525
    %v1962 = vunpack.c.h.b16 %v525
    %v1963 = vunpack.c.l.b16 %v526
    %v1964 = vunpack.c.h.b16 %v526
    %v1965 = vunpack.c.l.b16 %v527
    %v1966 = vunpack.c.h.b16 %v527
    %v1967 = vunpack.c.l.b16 %v528
    %v1968 = vunpack.c.h.b16 %v528
    %v1969 = vunpack.c.l.b16 %v529
    %v1970 = vunpack.c.h.b16 %v529
    %v1971 = vunpack.c.l.b16 %v530
    %v1972 = vunpack.c.h.b16 %v530
    %v1973 = vunpack.c.l.b16 %v531
    %v1974 = vunpack.c.h.b16 %v531
    %v1975 = vunpack.c.l.b16 %v532
    %v1976 = vunpack.c.h.b16 %v532
    %v1977 = vunpack.c.l.b16 %v533
    %v1978 = vunpack.c.h.b16 %v533
    %v1979 = vunpack.c.l.b16 %v534
    %v1980 = vunpack.c.h.b16 %v534
    %v1981 = vunpack.c.l.b16 %v535
    %v1982 = vunpack.c.h.b16 %v535
    %v1983 = vunpack.c.l.b16 %v536
    %v1984 = vunpack.c.h.b16 %v536
    %v1985 = vunpack.c.l.b16 %v537
    %v1986 = vunpack.c.h.b16 %v537
    %v1987 = vunpack.c.l.b16 %v538
    %v1988 = vunpack.c.h.b16 %v538
    %v1989 = vunpack.c.l.b16 %v539
    %v1990 = vunpack.c.h.b16 %v539
    %v1991 = vunpack.c.l.b16 %v540
    %v1992 = vunpack.c.h.b16 %v540
    %v1993 = vunpack.c.l.b16 %v541
    %v1994 = vunpack.c.h.b16 %v541
    %v1995 = vunpack.c.l.b16 %v542
    %v1996 = vunpack.c.h.b16 %v542
    %v1997 = vunpack.c.l.b16 %v543
    %v1998 = vunpack.c.h.b16 %v543
    %v1999 = vunpack.c.l.b16 %v544
    %v2000 = vunpack.c.h.b16 %v544
    %v2001 = vunpack.c.l.b16 %v545
    %v2002 = vunpack.c.h.b16 %v545
    %v2003 = vunpack.c.l.b16 %v546
    %v2004 = vunpack.c.h.b16 %v546
    %v2005 = vunpack.c.l.b16 %v547
    %v2006 = vunpack.c.h.b16 %v547
    %v2007 = vunpack.c.l.b16 %v548
    %v2008 = vunpack.c.h.b16 %v548
    %v2009 = vunpack.c.l.b16 %v549
    %v2010 = vunpack.c.h.b16 %v549
    %v2011 = vunpack.c.l.b16 %v550
    %v2012 = vunpack.c.h.b16 %v550
    %v2013 = vunpack.c.l.b16 %v551
    %v2014 = vunpack.c.h.b16 %v551
    %v2015 = vunpack.c.l.b16 %v552
    %v2016 = vunpack.c.h.b16 %v552
    %v2017 = vunpack.c.l.b16 %v553
    %v2018 = vunpack.c.h.b16 %v553
    %v2019 = vunpack.c.l.b16 %v554
    %v2020 = vunpack.c.h.b16 %v554
    %v2021 = vunpack.c.l.b16 %v555
    %v2022 = vunpack.c.h.b16 %v555
    %v2023 = vunpack.c.l.b16 %v556
    %v2024 = vunpack.c.h.b16 %v556
    %v2025 = vunpack.c.l.b16 %v557
    %v2026 = vunpack.c.h.b16 %v557
    %v2027 = vunpack.c.l.b16 %v558
    %v2028 = vunpack.c.h.b16 %v558
    %v2029 = vunpack.c.l.b16 %v559
    %v2030 = vunpack.c.h.b16 %v559
    %v2031 = vunpack.c.l.b16 %v560
    %v2032 = vunpack.c.h.b16 %v560
    %v2033 = vunpack.c.l.b16 %v561
    %v2034 = vunpack.c.h.b16 %v561
    %v2035 = vunpack.c.l.b16 %v562
    %v2036 = vunpack.c.h.b16 %v562
    %v2037 = vunpack.c.l.b16 %v563
    %v2038 = vunpack.c.h.b16 %v563
    %v2039 = vunpack.c.l.b16 %v564
    %v2040 = vunpack.c.h.b16 %v564
    %v2041 = vunpack.c.l.b16 %v565
    %v2042 = vunpack.c.h.b16 %v565
    %v2043 = vunpack.c.l.b16 %v566
    %v2044 = vunpack.c.h.b16 %v566
    %v2045 = vunpack.c.l.b16 %v567
    %v2046 = vunpack.c.h.b16 %v567
    %v2047 = vunpack.c.l.b16 %v568
    %v2048 = vunpack.c.h.b16 %v568
    %v2049 = vunpack.c.l.b16 %v569
    %v2050 = vunpack.c.h.b16 %v569
    %v2051 = vunpack.c.l.b16 %v570
    %v2052 = vunpack.c.h.b16 %v570
    %v2053 = vunpack.c.l.b16 %v571
    %v2054 = vunpack.c.h.b16 %v571
    %v2055 = vunpack.c.l.b16 %v572
    %v2056 = vunpack.c.h.b16 %v572
    %v2057 = vunpack.c.l.b16 %v573
    %v2058 = vunpack.c.h.b16 %v573
    %v2059 = vunpack.c.l.b16 %v574
    %v2060 = vunpack.c.h.b16 %v574
    %v2061 = vunpack.c.l.b16 %v575
    %v2062 = vunpack.c.h.b16 %v575
    %v2063 = vunpack.c.l.b16 %v576
    %v2064 = vunpack.c.h.b16 %v576
    %v2065 = vunpack.c.l.b16 %v577
    %v2066 = vunpack.c.h.b16 %v577
    %v2067 = vunpack.c.l.b16 %v578
    %v2068 = vunpack.c.h.b16 %v578
    %v2069 = vunpack.c.l.b16 %v579
    %v2070 = vunpack.c.h.b16 %v579
    %v2071 = vunpack.c.l.b16 %v580
    %v2072 = vunpack.c.h.b16 %v580
    %v2073 = vunpack.c.l.b16 %v581
    %v2074 = vunpack.c.h.b16 %v581
    %v2075 = vunpack.c.l.b16 %v582
    %v2076 = vunpack.c.h.b16 %v582
    %v2077 = vunpack.c.l.b16 %v583
    %v2078 = vunpack.c.h.b16 %v583
    %v2079 = vunpack.c.l.b16 %v584
    %v2080 = vunpack.c.h.b16 %v584
    %v2081 = vunpack.c.l.b16 %v585
    %v2082 = vunpack.c.h.b16 %v585
    %v2083 = vunpack.c.l.b16 %v586
    %v2084 = vunpack.c.h.b16 %v586
    %v2085 = vunpack.c.l.b16 %v587
    %v2086 = vunpack.c.h.b16 %v587
    %v2087 = vunpack.c.l.b16 %v588
    %v2088 = vunpack.c.h.b16 %v588
    %v2089 = vunpack.c.l.b16 %v589
    %v2090 = vunpack.c.h.b16 %v589
    %v2091 = vunpack.c.l.b16 %v590
    %v2092 = vunpack.c.h.b16 %v590
    %v2093 = vunpack.c.l.b16 %v591
    %v2094 = vunpack.c.h.b16 %v591
    %v2095 = vunpack.c.l.b16 %v592
    %v2096 = vunpack.c.h.b16 %v592
    %v2097 = vunpack.c.l.b16 %v593
    %v2098 = vunpack.c.h.b16 %v593
    %v2099 = vunpack.c.l.b16 %v594
    %v2100 = vunpack.c.h.b16 %v594
    %v2101 = vunpack.c.l.b16 %v595
    %v2102 = vunpack.c.h.b16 %v595
    %v2103 = vunpack.c.l.b16 %v596
    %v2104 = vunpack.c.h.b16 %v596
    %v2105 = vunpack.c.l.b16 %v597
    %v2106 = vunpack.c.h.b16 %v597
    %v2107 = vunpack.c.l.b16 %v598
    %v2108 = vunpack.c.h.b16 %v598
    %v2109 = vunpack.c.l.b16 %v599
    %v2110 = vunpack.c.h.b16 %v599
    %v2111 = vunpack.c.l.b16 %v600
    %v2112 = vunpack.c.h.b16 %v600
    %v2113 = vunpack.c.l.b16 %v601
    %v2114 = vunpack.c.h.b16 %v601
    %v2115 = vunpack.c.l.b16 %v602
    %v2116 = vunpack.c.h.b16 %v602
    %v2117 = vunpack.c.l.b16 %v603
    %v2118 = vunpack.c.h.b16 %v603
    %v2119 = vunpack.c.l.b16 %v604
    %v2120 = vunpack.c.h.b16 %v604
    %v2121 = vunpack.c.l.b16 %v605
    %v2122 = vunpack.c.h.b16 %v605
    %v2123 = vunpack.c.l.b16 %v606
    %v2124 = vunpack.c.h.b16 %v606
    %v2125 = vunpack.c.l.b16 %v607
    %v2126 = vunpack.c.h.b16 %v607
    %v2127 = vunpack.c.l.b16 %v608
    %v2128 = vunpack.c.h.b16 %v608
    %v2129 = vunpack.c.l.b16 %v609
    %v2130 = vunpack.c.h.b16 %v609
    %v2131 = vunpack.c.l.b16 %v610
    %v2132 = vunpack.c.h.b16 %v610
    %v2133 = vunpack.c.l.b16 %v611
    %v2134 = vunpack.c.h.b16 %v611
    %v2135 = vunpack.c.l.b16 %v612
    %v2136 = vunpack.c.h.b16 %v612
    %v2137 = vunpack.c.l.b16 %v613
    %v2138 = vunpack.c.h.b16 %v613
    %v2139 = vunpack.c.l.b16 %v614
    %v2140 = vunpack.c.h.b16 %v614
    %v2141 = vunpack.c.l.b16 %v615
    %v2142 = vunpack.c.h.b16 %v615
    %v2143 = vunpack.c.l.b16 %v616
    %v2144 = vunpack.c.h.b16 %v616
    %v2145 = vunpack.c.l.b16 %v617
    %v2146 = vunpack.c.h.b16 %v617
    %v2147 = vunpack.c.l.b16 %v618
    %v2148 = vunpack.c.h.b16 %v618
    %v2149 = vunpack.c.l.b16 %v619
    %v2150 = vunpack.c.h.b16 %v619
    %v2151 = vunpack.c.l.b16 %v620
    %v2152 = vunpack.c.h.b16 %v620
    %v2153 = vunpack.c.l.b16 %v621
    %v2154 = vunpack.c.h.b16 %v621
    %v2155 = vunpack.c.l.b16 %v622
    %v2156 = vunpack.c.h.b16 %v622
    %v2157 = vunpack.c.l.b16 %v623
    %v2158 = vunpack.c.h.b16 %v623
    %v2159 = vunpack.c.l.b16 %v624
    %v2160 = vunpack.c.h.b16 %v624
    %v2161 = vunpack.c.l.b16 %v625
    %v2162 = vunpack.c.h.b16 %v625
    %v2163 = vunpack.c.l.b16 %v626
    %v2164 = vunpack.c.h.b16 %v626
    %v2165 = vunpack.c.l.b16 %v627
    %v2166 = vunpack.c.h.b16 %v627
    %v2167 = vunpack.c.l.b16 %v628
    %v2168 = vunpack.c.h.b16 %v628
    %v2169 = vunpack.c.l.b16 %v629
    %v2170 = vunpack.c.h.b16 %v629
    %v2171 = vunpack.c.l.b16 %v630
    %v2172 = vunpack.c.h.b16 %v630
    %v2173 = vunpack.c.l.b16 %v631
    %v2174 = vunpack.c.h.b16 %v631
    %v2175 = vunpack.c.l.b16 %v632
    %v2176 = vunpack.c.h.b16 %v632
    %v2177 = vunpack.c.l.b16 %v633
    %v2178 = vunpack.c.h.b16 %v633
    %v2179 = vunpack.c.l.b16 %v634
    %v2180 = vunpack.c.h.b16 %v634
    %v2181 = vunpack.c.l.b16 %v635
    %v2182 = vunpack.c.h.b16 %v635
    %v2183 = vunpack.c.l.b16 %v636
    %v2184 = vunpack.c.h.b16 %v636
    %v2185 = vunpack.c.l.b16 %v637
    %v2186 = vunpack.c.h.b16 %v637
    %v2187 = vunpack.c.l.b16 %v638
    %v2188 = vunpack.c.h.b16 %v638
    %v2189 = vunpack.c.l.b16 %v639
    %v2190 = vunpack.c.h.b16 %v639
    %v2191 = vunpack.c.l.b16 %v640
    %v2192 = vunpack.c.h.b16 %v640
    %v2193 = vunpack.c.l.b16 %v641
    %v2194 = vunpack.c.h.b16 %v641
    %v2195 = vunpack.c.l.b16 %v642
    %v2196 = vunpack.c.h.b16 %v642
    %v2197 = vunpack.c.l.b16 %v643
    %v2198 = vunpack.c.h.b16 %v643
    %v2199 = vunpack.c.l.b16 %v644
    %v2200 = vunpack.c.h.b16 %v644
    %v2201 = vunpack.c.l.b16 %v645
    %v2202 = vunpack.c.h.b16 %v645
    %v2203 = vunpack.c.l.b16 %v646
    %v2204 = vunpack.c.h.b16 %v646
    %v2205 = vpack.c.b16 %v1185, %v1181
    %v2206 = vpack.c.b16 %v1186, %v1182
    %v2207 = vpack.c.b16 %v1187, %v1183
    %v2208 = vpack.c.b16 %v1188, %v1184
    %v2209 = vpack.c.b16 %v1193, %v1189
    %v2210 = vpack.c.b16 %v1194, %v1190
    %v2211 = vpack.c.b16 %v1195, %v1191
    %v2212 = vpack.c.b16 %v1196, %v1192
    %v2213 = vpack.c.b16 %v1201, %v1197
    %v2214 = vpack.c.b16 %v1202, %v1198
    %v2215 = vpack.c.b16 %v1203, %v1199
    %v2216 = vpack.c.b16 %v1204, %v1200
    %v2217 = vpack.c.b16 %v1209, %v1205
    %v2218 = vpack.c.b16 %v1210, %v1206
    %v2219 = vpack.c.b16 %v1211, %v1207
    %v2220 = vpack.c.b16 %v1212, %v1208
    %v2221 = vpack.c.b16 %v1217, %v1213
    %v2222 = vpack.c.b16 %v1218, %v1214
    %v2223 = vpack.c.b16 %v1219, %v1215
    %v2224 = vpack.c.b16 %v1220, %v1216
    %v2225 = vpack.c.b16 %v1225, %v1221
    %v2226 = vpack.c.b16 %v1226, %v1222
    %v2227 = vpack.c.b16 %v1227, %v1223
    %v2228 = vpack.c.b16 %v1228, %v1224
    %v2229 = vpack.c.b16 %v1233, %v1229
    %v2230 = vpack.c.b16 %v1234, %v1230
    %v2231 = vpack.c.b16 %v1235, %v1231
    %v2232 = vpack.c.b16 %v1236, %v1232
    %v2233 = vpack.c.b16 %v1241, %v1237
    %v2234 = vpack.c.b16 %v1242, %v1238
    %v2235 = vpack.c.b16 %v1243, %v1239
    %v2236 = vpack.c.b16 %v1244, %v1240
    %v2237 = vpack.c.b16 %v1249, %v1245
    %v2238 = vpack.c.b16 %v1250, %v1246
    %v2239 = vpack.c.b16 %v1251, %v1247
    %v2240 = vpack.c.b16 %v1252, %v1248
    %v2241 = vpack.c.b16 %v1257, %v1253
    %v2242 = vpack.c.b16 %v1258, %v1254
    %v2243 = vpack.c.b16 %v1259, %v1255
    %v2244 = vpack.c.b16 %v1260, %v1256
    %v2245 = vpack.c.b16 %v1265, %v1261
    %v2246 = vpack.c.b16 %v1266, %v1262
    %v2247 = vpack.c.b16 %v1267, %v1263
    %v2248 = vpack.c.b16 %v1268, %v1264
    %v2249 = vpack.c.b16 %v1273, %v1269
    %v2250 = vpack.c.b16 %v1274, %v1270
    %v2251 = vpack.c.b16 %v1275, %v1271
    %v2252 = vpack.c.b16 %v1276, %v1272
    %v2253 = vpack.c.b16 %v1281, %v1277
    %v2254 = vpack.c.b16 %v1282, %v1278
    %v2255 = vpack.c.b16 %v1283, %v1279
    %v2256 = vpack.c.b16 %v1284, %v1280
    %v2257 = vpack.c.b16 %v1289, %v1285
    %v2258 = vpack.c.b16 %v1290, %v1286
    %v2259 = vpack.c.b16 %v1291, %v1287
    %v2260 = vpack.c.b16 %v1292, %v1288
    %v2261 = vpack.c.b16 %v1297, %v1293
    %v2262 = vpack.c.b16 %v1298, %v1294
    %v2263 = vpack.c.b16 %v1299, %v1295
    %v2264 = vpack.c.b16 %v1300, %v1296
    %v2265 = vpack.c.b16 %v1305, %v1301
    %v2266 = vpack.c.b16 %v1306, %v1302
    %v2267 = vpack.c.b16 %v1307, %v1303
    %v2268 = vpack.c.b16 %v1308, %v1304
    %v2269 = vpack.c.b16 %v1313, %v1309
    %v2270 = vpack.c.b16 %v1314, %v1310
    %v2271 = vpack.c.b16 %v1315, %v1311
    %v2272 = vpack.c.b16 %v1316, %v1312
    %v2273 = vpack.c.b16 %v1321, %v1317
    %v2274 = vpack.c.b16 %v1322, %v1318
    %v2275 = vpack.c.b16 %v1323, %v1319
    %v2276 = vpack.c.b16 %v1324, %v1320
    %v2277 = vpack.c.b16 %v1329, %v1325
    %v2278 = vpack.c.b16 %v1330, %v1326
    %v2279 = vpack.c.b16 %v1331, %v1327
    %v2280 = vpack.c.b16 %v1332, %v1328
    %v2281 = vpack.c.b16 %v1337, %v1333
    %v2282 = vpack.c.b16 %v1338, %v1334
    %v2283 = vpack.c.b16 %v1339, %v1335
    %v2284 = vpack.c.b16 %v1340, %v1336
    %v2285 = vpack.c.b16 %v1345, %v1341
    %v2286 = vpack.c.b16 %v1346, %v1342
    %v2287 = vpack.c.b16 %v1347, %v1343
    %v2288 = vpack.c.b16 %v1348, %v1344
    %v2289 = vpack.c.b16 %v1353, %v1349
    %v2290 = vpack.c.b16 %v1354, %v1350
    %v2291 = vpack.c.b16 %v1355, %v1351
    %v2292 = vpack.c.b16 %v1356, %v1352
    %v2293 = vpack.c.b16 %v1361, %v1357
    %v2294 = vpack.c.b16 %v1362, %v1358
    %v2295 = vpack.c.b16 %v1363, %v1359
    %v2296 = vpack.c.b16 %v1364, %v1360
    %v2297 = vpack.c.b16 %v1369, %v1365
    %v2298 = vpack.c.b16 %v1370, %v1366
    %v2299 = vpack.c.b16 %v1371, %v1367
    %v2300 = vpack.c.b16 %v1372, %v1368
    %v2301 = vpack.c.b16 %v1377, %v1373
    %v2302 = vpack.c.b16 %v1378, %v1374
    %v2303 = vpack.c.b16 %v1379, %v1375
    %v2304 = vpack.c.b16 %v1380, %v1376
    %v2305 = vpack.c.b16 %v1385, %v1381
    %v2306 = vpack.c.b16 %v1386, %v1382
    %v2307 = vpack.c.b16 %v1387, %v1383
    %v2308 = vpack.c.b16 %v1388, %v1384
    %v2309 = vpack.c.b16 %v1393, %v1389
    %v2310 = vpack.c.b16 %v1394, %v1390
    %v2311 = vpack.c.b16 %v1395, %v1391
    %v2312 = vpack.c.b16 %v1396, %v1392
    %v2313 = vpack.c.b16 %v1401, %v1397
    %v2314 = vpack.c.b16 %v1402, %v1398
    %v2315 = vpack.c.b16 %v1403, %v1399
    %v2316 = vpack.c.b16 %v1404, %v1400
    %v2317 = vpack.c.b16 %v1409, %v1405
    %v2318 = vpack.c.b16 %v1410, %v1406
    %v2319 = vpack.c.b16 %v1411, %v1407
    %v2320 = vpack.c.b16 %v1412, %v1408
    %v2321 = vpack.c.b16 %v1417, %v1413
    %v2322 = vpack.c.b16 %v1418, %v1414
    %v2323 = vpack.c.b16 %v1419, %v1415
    %v2324 = vpack.c.b16 %v1420, %v1416
    %v2325 = vpack.c.b16 %v1425, %v1421
    %v2326 = vpack.c.b16 %v1426, %v1422
    %v2327 = vpack.c.b16 %v1427, %v1423
    %v2328 = vpack.c.b16 %v1428, %v1424
    %v2329 = vpack.c.b16 %v1433, %v1429
    %v2330 = vpack.c.b16 %v1434, %v1430
    %v2331 = vpack.c.b16 %v1435, %v1431
    %v2332 = vpack.c.b16 %v1436, %v1432
    %v2333 = vpack.c.b16 %v1441, %v1437
    %v2334 = vpack.c.b16 %v1442, %v1438
    %v2335 = vpack.c.b16 %v1443, %v1439
    %v2336 = vpack.c.b16 %v1444, %v1440
    %v2337 = vpack.c.b16 %v1449, %v1445
    %v2338 = vpack.c.b16 %v1450, %v1446
    %v2339 = vpack.c.b16 %v1451, %v1447
    %v2340 = vpack.c.b16 %v1452, %v1448
    %v2341 = vpack.c.b16 %v1457, %v1453
    %v2342 = vpack.c.b16 %v1458, %v1454
    %v2343 = vpack.c.b16 %v1459, %v1455
    %v2344 = vpack.c.b16 %v1460, %v1456
    %v2345 = vpack.c.b16 %v1465, %v1461
    %v2346 = vpack.c.b16 %v1466, %v1462
    %v2347 = vpack.c.b16 %v1467, %v1463
    %v2348 = vpack.c.b16 %v1468, %v1464
    %v2349 = vpack.c.b16 %v1473, %v1469
    %v2350 = vpack.c.b16 %v1474, %v1470
    %v2351 = vpack.c.b16 %v1475, %v1471
    %v2352 = vpack.c.b16 %v1476, %v1472
    %v2353 = vpack.c.b16 %v1481, %v1477
    %v2354 = vpack.c.b16 %v1482, %v1478
    %v2355 = vpack.c.b16 %v1483, %v1479
    %v2356 = vpack.c.b16 %v1484, %v1480
    %v2357 = vpack.c.b16 %v1489, %v1485
    %v2358 = vpack.c.b16 %v1490, %v1486
    %v2359 = vpack.c.b16 %v1491, %v1487
    %v2360 = vpack.c.b16 %v1492, %v1488
    %v2361 = vpack.c.b16 %v1497, %v1493
    %v2362 = vpack.c.b16 %v1498, %v1494
    %v2363 = vpack.c.b16 %v1499, %v1495
    %v2364 = vpack.c.b16 %v1500, %v1496
    %v2365 = vpack.c.b16 %v1505, %v1501
    %v2366 = vpack.c.b16 %v1506, %v1502
    %v2367 = vpack.c.b16 %v1507, %v1503
    %v2368 = vpack.c.b16 %v1508, %v1504
    %v2369 = vpack.c.b16 %v1513, %v1509
    %v2370 = vpack.c.b16 %v1514, %v1510
    %v2371 = vpack.c.b16 %v1515, %v1511
    %v2372 = vpack.c.b16 %v1516, %v1512
    %v2373 = vpack.c.b16 %v1521, %v1517
    %v2374 = vpack.c.b16 %v1522, %v1518
    %v2375 = vpack.c.b16 %v1523, %v1519
    %v2376 = vpack.c.b16 %v1524, %v1520
    %v2377 = vpack.c.b16 %v1529, %v1525
    %v2378 = vpack.c.b16 %v1530, %v1526
    %v2379 = vpack.c.b16 %v1531, %v1527
    %v2380 = vpack.c.b16 %v1532, %v1528
    %v2381 = vpack.c.b16 %v1537, %v1533
    %v2382 = vpack.c.b16 %v1538, %v1534
    %v2383 = vpack.c.b16 %v1539, %v1535
    %v2384 = vpack.c.b16 %v1540, %v1536
    %v2385 = vpack.c.b16 %v1545, %v1541
    %v2386 = vpack.c.b16 %v1546, %v1542
    %v2387 = vpack.c.b16 %v1547, %v1543
    %v2388 = vpack.c.b16 %v1548, %v1544
    %v2389 = vpack.c.b16 %v1553, %v1549
    %v2390 = vpack.c.b16 %v1554, %v1550
    %v2391 = vpack.c.b16 %v1555, %v1551
    %v2392 = vpack.c.b16 %v1556, %v1552
    %v2393 = vpack.c.b16 %v1561, %v1557
    %v2394 = vpack.c.b16 %v1562, %v1558
    %v2395 = vpack.c.b16 %v1563, %v1559
    %v2396 = vpack.c.b16 %v1564, %v1560
    %v2397 = vpack.c.b16 %v1569, %v1565
    %v2398 = vpack.c.b16 %v1570, %v1566
    %v2399 = vpack.c.b16 %v1571, %v1567
    %v2400 = vpack.c.b16 %v1572, %v1568
    %v2401 = vpack.c.b16 %v1577, %v1573
    %v2402 = vpack.c.b16 %v1578, %v1574
    %v2403 = vpack.c.b16 %v1579, %v1575
    %v2404 = vpack.c.b16 %v1580, %v1576
    %v2405 = vpack.c.b16 %v1585, %v1581
    %v2406 = vpack.c.b16 %v1586, %v1582
    %v2407 = vpack.c.b16 %v1587, %v1583
    %v2408 = vpack.c.b16 %v1588, %v1584
    %v2409 = vpack.c.b16 %v1593, %v1589
    %v2410 = vpack.c.b16 %v1594, %v1590
    %v2411 = vpack.c.b16 %v1595, %v1591
    %v2412 = vpack.c.b16 %v1596, %v1592
    %v2413 = vpack.c.b16 %v1601, %v1597
    %v2414 = vpack.c.b16 %v1602, %v1598
    %v2415 = vpack.c.b16 %v1603, %v1599
    %v2416 = vpack.c.b16 %v1604, %v1600
    %v2417 = vpack.c.b16 %v1609, %v1605
    %v2418 = vpack.c.b16 %v1610, %v1606
    %v2419 = vpack.c.b16 %v1611, %v1607
    %v2420 = vpack.c.b16 %v1612, %v1608
    %v2421 = vpack.c.b16 %v1617, %v1613
    %v2422 = vpack.c.b16 %v1618, %v1614
    %v2423 = vpack.c.b16 %v1619, %v1615
    %v2424 = vpack.c.b16 %v1620, %v1616
    %v2425 = vpack.c.b16 %v1625, %v1621
    %v2426 = vpack.c.b16 %v1626, %v1622
    %v2427 = vpack.c.b16 %v1627, %v1623
    %v2428 = vpack.c.b16 %v1628, %v1624
    %v2429 = vpack.c.b16 %v1633, %v1629
    %v2430 = vpack.c.b16 %v1634, %v1630
    %v2431 = vpack.c.b16 %v1635, %v1631
    %v2432 = vpack.c.b16 %v1636, %v1632
    %v2433 = vpack.c.b16 %v1641, %v1637
    %v2434 = vpack.c.b16 %v1642, %v1638
    %v2435 = vpack.c.b16 %v1643, %v1639
    %v2436 = vpack.c.b16 %v1644, %v1640
    %v2437 = vpack.c.b16 %v1649, %v1645
    %v2438 = vpack.c.b16 %v1650, %v1646
    %v2439 = vpack.c.b16 %v1651, %v1647
    %v2440 = vpack.c.b16 %v1652, %v1648
    %v2441 = vpack.c.b16 %v1657, %v1653
    %v2442 = vpack.c.b16 %v1658, %v1654
    %v2443 = vpack.c.b16 %v1659, %v1655
    %v2444 = vpack.c.b16 %v1660, %v1656
    %v2445 = vpack.c.b16 %v1665, %v1661
    %v2446 = vpack.c.b16 %v1666, %v1662
    %v2447 = vpack.c.b16 %v1667, %v1663
    %v2448 = vpack.c.b16 %v1668, %v1664
    %v2449 = vpack.c.b16 %v1673, %v1669
    %v2450 = vpack.c.b16 %v1674, %v1670
    %v2451 = vpack.c.b16 %v1675, %v1671
    %v2452 = vpack.c.b16 %v1676, %v1672
    %v2453 = vpack.c.b16 %v1681, %v1677
    %v2454 = vpack.c.b16 %v1682, %v1678
    %v2455 = vpack.c.b16 %v1683, %v1679
    %v2456 = vpack.c.b16 %v1684, %v1680
    %v2457 = vpack.c.b16 %v1689, %v1685
    %v2458 = vpack.c.b16 %v1690, %v1686
    %v2459 = vpack.c.b16 %v1691, %v1687
    %v2460 = vpack.c.b16 %v1692, %v1688
    %v2461 = vpack.c.b16 %v1697, %v1693
    %v2462 = vpack.c.b16 %v1698, %v1694
    %v2463 = vpack.c.b16 %v1699, %v1695
    %v2464 = vpack.c.b16 %v1700, %v1696
    %v2465 = vpack.c.b16 %v1705, %v1701
    %v2466 = vpack.c.b16 %v1706, %v1702
    %v2467 = vpack.c.b16 %v1707, %v1703
    %v2468 = vpack.c.b16 %v1708, %v1704
    %v2469 = vpack.c.b16 %v1713, %v1709
    %v2470 = vpack.c.b16 %v1714, %v1710
    %v2471 = vpack.c.b16 %v1715, %v1711
    %v2472 = vpack.c.b16 %v1716, %v1712
    %v2473 = vpack.c.b16 %v1721, %v1717
    %v2474 = vpack.c.b16 %v1722, %v1718
    %v2475 = vpack.c.b16 %v1723, %v1719
    %v2476 = vpack.c.b16 %v1724, %v1720
    %v2477 = vpack.c.b16 %v1729, %v1725
    %v2478 = vpack.c.b16 %v1730, %v1726
    %v2479 = vpack.c.b16 %v1731, %v1727
    %v2480 = vpack.c.b16 %v1732, %v1728
    %v2481 = vpack.c.b16 %v1737, %v1733
    %v2482 = vpack.c.b16 %v1738, %v1734
    %v2483 = vpack.c.b16 %v1739, %v1735
    %v2484 = vpack.c.b16 %v1740, %v1736
    %v2485 = vpack.c.b16 %v1745, %v1741
    %v2486 = vpack.c.b16 %v1746, %v1742
    %v2487 = vpack.c.b16 %v1747, %v1743
    %v2488 = vpack.c.b16 %v1748, %v1744
    %v2489 = vpack.c.b16 %v1753, %v1749
    %v2490 = vpack.c.b16 %v1754, %v1750
    %v2491 = vpack.c.b16 %v1755, %v1751
    %v2492 = vpack.c.b16 %v1756, %v1752
    %v2493 = vpack.c.b16 %v1761, %v1757
    %v2494 = vpack.c.b16 %v1762, %v1758
    %v2495 = vpack.c.b16 %v1763, %v1759
    %v2496 = vpack.c.b16 %v1764, %v1760
    %v2497 = vpack.c.b16 %v1769, %v1765
    %v2498 = vpack.c.b16 %v1770, %v1766
    %v2499 = vpack.c.b16 %v1771, %v1767
    %v2500 = vpack.c.b16 %v1772, %v1768
    %v2501 = vpack.c.b16 %v1777, %v1773
    %v2502 = vpack.c.b16 %v1778, %v1774
    %v2503 = vpack.c.b16 %v1779, %v1775
    %v2504 = vpack.c.b16 %v1780, %v1776
    %v2505 = vpack.c.b16 %v1785, %v1781
    %v2506 = vpack.c.b16 %v1786, %v1782
    %v2507 = vpack.c.b16 %v1787, %v1783
    %v2508 = vpack.c.b16 %v1788, %v1784
    %v2509 = vpack.c.b16 %v1793, %v1789
    %v2510 = vpack.c.b16 %v1794, %v1790
    %v2511 = vpack.c.b16 %v1795, %v1791
    %v2512 = vpack.c.b16 %v1796, %v1792
    %v2513 = vpack.c.b16 %v1801, %v1797
    %v2514 = vpack.c.b16 %v1802, %v1798
    %v2515 = vpack.c.b16 %v1803, %v1799
    %v2516 = vpack.c.b16 %v1804, %v1800
    %v2517 = vpack.c.b16 %v1809, %v1805
    %v2518 = vpack.c.b16 %v1810, %v1806
    %v2519 = vpack.c.b16 %v1811, %v1807
    %v2520 = vpack.c.b16 %v1812, %v1808
    %v2521 = vpack.c.b16 %v1817, %v1813
    %v2522 = vpack.c.b16 %v1818, %v1814
    %v2523 = vpack.c.b16 %v1819, %v1815
    %v2524 = vpack.c.b16 %v1820, %v1816
    %v2525 = vpack.c.b16 %v1825, %v1821
    %v2526 = vpack.c.b16 %v1826, %v1822
    %v2527 = vpack.c.b16 %v1827, %v1823
    %v2528 = vpack.c.b16 %v1828, %v1824
    %v2529 = vpack.c.b16 %v1833, %v1829
    %v2530 = vpack.c.b16 %v1834, %v1830
    %v2531 = vpack.c.b16 %v1835, %v1831
    %v2532 = vpack.c.b16 %v1836, %v1832
    %v2533 = vpack.c.b16 %v1841, %v1837
    %v2534 = vpack.c.b16 %v1842, %v1838
    %v2535 = vpack.c.b16 %v1843, %v1839
    %v2536 = vpack.c.b16 %v1844, %v1840
    %v2537 = vpack.c.b16 %v1849, %v1845
    %v2538 = vpack.c.b16 %v1850, %v1846
    %v2539 = vpack.c.b16 %v1851, %v1847
    %v2540 = vpack.c.b16 %v1852, %v1848
    %v2541 = vpack.c.b16 %v1857, %v1853
    %v2542 = vpack.c.b16 %v1858, %v1854
    %v2543 = vpack.c.b16 %v1859, %v1855
    %v2544 = vpack.c.b16 %v1860, %v1856
    %v2545 = vpack.c.b16 %v1865, %v1861
    %v2546 = vpack.c.b16 %v1866, %v1862
    %v2547 = vpack.c.b16 %v1867, %v1863
    %v2548 = vpack.c.b16 %v1868, %v1864
    %v2549 = vpack.c.b16 %v1873, %v1869
    %v2550 = vpack.c.b16 %v1874, %v1870
    %v2551 = vpack.c.b16 %v1875, %v1871
    %v2552 = vpack.c.b16 %v1876, %v1872
    %v2553 = vpack.c.b16 %v1881, %v1877
    %v2554 = vpack.c.b16 %v1882, %v1878
    %v2555 = vpack.c.b16 %v1883, %v1879
    %v2556 = vpack.c.b16 %v1884, %v1880
    %v2557 = vpack.c.b16 %v1889, %v1885
    %v2558 = vpack.c.b16 %v1890, %v1886
    %v2559 = vpack.c.b16 %v1891, %v1887
    %v2560 = vpack.c.b16 %v1892, %v1888
    %v2561 = vpack.c.b16 %v1897, %v1893
    %v2562 = vpack.c.b16 %v1898, %v1894
    %v2563 = vpack.c.b16 %v1899, %v1895
    %v2564 = vpack.c.b16 %v1900, %v1896
    %v2565 = vpack.c.b16 %v1905, %v1901
    %v2566 = vpack.c.b16 %v1906, %v1902
    %v2567 = vpack.c.b16 %v1907, %v1903
    %v2568 = vpack.c.b16 %v1908, %v1904
    %v2569 = vpack.c.b16 %v1913, %v1909
    %v2570 = vpack.c.b16 %v1914, %v1910
    %v2571 = vpack.c.b16 %v1915, %v1911
    %v2572 = vpack.c.b16 %v1916, %v1912
    %v2573 = vpack.c.b16 %v1921, %v1917
    %v2574 = vpack.c.b16 %v1922, %v1918
    %v2575 = vpack.c.b16 %v1923, %v1919
    %v2576 = vpack.c.b16 %v1924, %v1920
    %v2577 = vpack.c.b16 %v1929, %v1925
    %v2578 = vpack.c.b16 %v1930, %v1926
    %v2579 = vpack.c.b16 %v1931, %v1927
    %v2580 = vpack.c.b16 %v1932, %v1928
    %v2581 = vpack.c.b16 %v1937, %v1933
    %v2582 = vpack.c.b16 %v1938, %v1934
    %v2583 = vpack.c.b16 %v1939, %v1935
    %v2584 = vpack.c.b16 %v1940, %v1936
    %v2585 = vpack.c.b16 %v1945, %v1941
    %v2586 = vpack.c.b16 %v1946, %v1942
    %v2587 = vpack.c.b16 %v1947, %v1943
    %v2588 = vpack.c.b16 %v1948, %v1944
    %v2589 = vpack.c.b16 %v1953, %v1949
    %v2590 = vpack.c.b16 %v1954, %v1950
    %v2591 = vpack.c.b16 %v1955, %v1951
    %v2592 = vpack.c.b16 %v1956, %v1952
    %v2593 = vpack.c.b16 %v1961, %v1957
    %v2594 = vpack.c.b16 %v1962, %v1958
    %v2595 = vpack.c.b16 %v1963, %v1959
    %v2596 = vpack.c.b16 %v1964, %v1960
    %v2597 = vpack.c.b16 %v1969, %v1965
    %v2598 = vpack.c.b16 %v1970, %v1966
    %v2599 = vpack.c.b16 %v1971, %v1967
    %v2600 = vpack.c.b16 %v1972, %v1968
    %v2601 = vpack.c.b16 %v1977, %v1973
    %v2602 = vpack.c.b16 %v1978, %v1974
    %v2603 = vpack.c.b16 %v1979, %v1975
    %v2604 = vpack.c.b16 %v1980, %v1976
    %v2605 = vpack.c.b16 %v1985, %v1981
    %v2606 = vpack.c.b16 %v1986, %v1982
    %v2607 = vpack.c.b16 %v1987, %v1983
    %v2608 = vpack.c.b16 %v1988, %v1984
    %v2609 = vpack.c.b16 %v1993, %v1989
    %v2610 = vpack.c.b16 %v1994, %v1990
    %v2611 = vpack.c.b16 %v1995, %v1991
    %v2612 = vpack.c.b16 %v1996, %v1992
    %v2613 = vpack.c.b16 %v2001, %v1997
    %v2614 = vpack.c.b16 %v2002, %v1998
    %v2615 = vpack.c.b16 %v2003, %v1999
    %v2616 = vpack.c.b16 %v2004, %v2000
    %v2617 = vpack.c.b16 %v2009, %v2005
    %v2618 = vpack.c.b16 %v2010, %v2006
    %v2619 = vpack.c.b16 %v2011, %v2007
    %v2620 = vpack.c.b16 %v2012, %v2008
    %v2621 = vpack.c.b16 %v2017, %v2013
    %v2622 = vpack.c.b16 %v2018, %v2014
    %v2623 = vpack.c.b16 %v2019, %v2015
    %v2624 = vpack.c.b16 %v2020, %v2016
    %v2625 = vpack.c.b16 %v2025, %v2021
    %v2626 = vpack.c.b16 %v2026, %v2022
    %v2627 = vpack.c.b16 %v2027, %v2023
    %v2628 = vpack.c.b16 %v2028, %v2024
    %v2629 = vpack.c.b16 %v2033, %v2029
    %v2630 = vpack.c.b16 %v2034, %v2030
    %v2631 = vpack.c.b16 %v2035, %v2031
    %v2632 = vpack.c.b16 %v2036, %v2032
    %v2633 = vpack.c.b16 %v2041, %v2037
    %v2634 = vpack.c.b16 %v2042, %v2038
    %v2635 = vpack.c.b16 %v2043, %v2039
    %v2636 = vpack.c.b16 %v2044, %v2040
    %v2637 = vpack.c.b16 %v2049, %v2045
    %v2638 = vpack.c.b16 %v2050, %v2046
    %v2639 = vpack.c.b16 %v2051, %v2047
    %v2640 = vpack.c.b16 %v2052, %v2048
    %v2641 = vpack.c.b16 %v2057, %v2053
    %v2642 = vpack.c.b16 %v2058, %v2054
    %v2643 = vpack.c.b16 %v2059, %v2055
    %v2644 = vpack.c.b16 %v2060, %v2056
    %v2645 = vpack.c.b16 %v2065, %v2061
    %v2646 = vpack.c.b16 %v2066, %v2062
    %v2647 = vpack.c.b16 %v2067, %v2063
    %v2648 = vpack.c.b16 %v2068, %v2064
    %v2649 = vpack.c.b16 %v2073, %v2069
    %v2650 = vpack.c.b16 %v2074, %v2070
    %v2651 = vpack.c.b16 %v2075, %v2071
    %v2652 = vpack.c.b16 %v2076, %v2072
    %v2653 = vpack.c.b16 %v2081, %v2077
    %v2654 = vpack.c.b16 %v2082, %v2078
    %v2655 = vpack.c.b16 %v2083, %v2079
    %v2656 = vpack.c.b16 %v2084, %v2080
    %v2657 = vpack.c.b16 %v2089, %v2085
    %v2658 = vpack.c.b16 %v2090, %v2086
    %v2659 = vpack.c.b16 %v2091, %v2087
    %v2660 = vpack.c.b16 %v2092, %v2088
    %v2661 = vpack.c.b16 %v2097, %v2093
    %v2662 = vpack.c.b16 %v2098, %v2094
    %v2663 = vpack.c.b16 %v2099, %v2095
    %v2664 = vpack.c.b16 %v2100, %v2096
    %v2665 = vpack.c.b16 %v2105, %v2101
    %v2666 = vpack.c.b16 %v2106, %v2102
    %v2667 = vpack.c.b16 %v2107, %v2103
    %v2668 = vpack.c.b16 %v2108, %v2104
    %v2669 = vpack.c.b16 %v2113, %v2109
    %v2670 = vpack.c.b16 %v2114, %v2110
    %v2671 = vpack.c.b16 %v2115, %v2111
    %v2672 = vpack.c.b16 %v2116, %v2112
    %v2673 = vpack.c.b16 %v2121, %v2117
    %v2674 = vpack.c.b16 %v2122, %v2118
    %v2675 = vpack.c.b16 %v2123, %v2119
    %v2676 = vpack.c.b16 %v2124, %v2120
    %v2677 = vpack.c.b16 %v2129, %v2125
    %v2678 = vpack.c.b16 %v2130, %v2126
    %v2679 = vpack.c.b16 %v2131, %v2127
    %v2680 = vpack.c.b16 %v2132, %v2128
    %v2681 = vpack.c.b16 %v2137, %v2133
    %v2682 = vpack.c.b16 %v2138, %v2134
    %v2683 = vpack.c.b16 %v2139, %v2135
    %v2684 = vpack.c.b16 %v2140, %v2136
    %v2685 = vpack.c.b16 %v2145, %v2141
    %v2686 = vpack.c.b16 %v2146, %v2142
    %v2687 = vpack.c.b16 %v2147, %v2143
    %v2688 = vpack.c.b16 %v2148, %v2144
    %v2689 = vpack.c.b16 %v2153, %v2149
    %v2690 = vpack.c.b16 %v2154, %v2150
    %v2691 = vpack.c.b16 %v2155, %v2151
    %v2692 = vpack.c.b16 %v2156, %v2152
    %v2693 = vpack.c.b16 %v2161, %v2157
    %v2694 = vpack.c.b16 %v2162, %v2158
    %v2695 = vpack.c.b16 %v2163, %v2159
    %v2696 = vpack.c.b16 %v2164, %v2160
    %v2697 = vpack.c.b16 %v2169, %v2165
    %v2698 = vpack.c.b16 %v2170, %v2166
    %v2699 = vpack.c.b16 %v2171, %v2167
    %v2700 = vpack.c.b16 %v2172, %v2168
    %v2701 = vpack.c.b16 %v2177, %v2173
    %v2702 = vpack.c.b16 %v2178, %v2174
    %v2703 = vpack.c.b16 %v2179, %v2175
    %v2704 = vpack.c.b16 %v2180, %v2176
    %v2705 = vpack.c.b16 %v2185, %v2181
    %v2706 = vpack.c.b16 %v2186, %v2182
    %v2707 = vpack.c.b16 %v2187, %v2183
    %v2708 = vpack.c.b16 %v2188, %v2184
    %v2709 = vpack.c.b16 %v2193, %v2189
    %v2710 = vpack.c.b16 %v2194, %v2190
    %v2711 = vpack.c.b16 %v2195, %v2191
    %v2712 = vpack.c.b16 %v2196, %v2192
    %v2713 = vpack.c.b16 %v2201, %v2197
    %v2714 = vpack.c.b16 %v2202, %v2198
    %v2715 = vpack.c.b16 %v2203, %v2199
    %v2716 = vpack.c.b16 %v2204, %v2200
    %3229 = vmatprep.subr.bf16.mxu0 %v2206
    %3230 = vmatpush1.bf16.msra.mxu0 %v2205
    %3231 = vmatprep.subr.bf16.mxu0 %v2210
    %3232 = vmatpush1.bf16.msra.mxu0 %v2209
    %3233 = vmatprep.subr.bf16.mxu0 %v2214
    %3234 = vmatpush1.bf16.msra.mxu0 %v2213
    %3235 = vmatprep.subr.bf16.mxu0 %v2218
    %3236 = vmatpush1.bf16.msra.mxu0 %v2217
    %3237 = vmatprep.subr.bf16.mxu0 %v2222
    %3238 = vmatpush1.bf16.msra.mxu0 %v2221
    %3239 = vmatprep.subr.bf16.mxu0 %v2226
    %3240 = vmatpush1.bf16.msra.mxu0 %v2225
    %3241 = vmatprep.subr.bf16.mxu0 %v2230
    %3242 = vmatpush1.bf16.msra.mxu0 %v2229
    %3243 = vmatprep.subr.bf16.mxu0 %v2234
    %3244 = vmatpush1.bf16.msra.mxu0 %v2233
    %3245 = vmatprep.subr.bf16.mxu0 %v2238
    %3246 = vmatpush1.bf16.msra.mxu0 %v2237
    %3247 = vmatprep.subr.bf16.mxu0 %v2242
    %3248 = vmatpush1.bf16.msra.mxu0 %v2241
    %3249 = vmatprep.subr.bf16.mxu0 %v2246
    %3250 = vmatpush1.bf16.msra.mxu0 %v2245
    %3251 = vmatprep.subr.bf16.mxu0 %v2250
    %3252 = vmatpush1.bf16.msra.mxu0 %v2249
    %3253 = vmatprep.subr.bf16.mxu0 %v2254
    %3254 = vmatpush1.bf16.msra.mxu0 %v2253
    %3255 = vmatprep.subr.bf16.mxu0 %v2258
    %3256 = vmatpush1.bf16.msra.mxu0 %v2257
    %3257 = vmatprep.subr.bf16.mxu0 %v2262
    %3258 = vmatpush1.bf16.msra.mxu0 %v2261
    %3259 = vmatprep.subr.bf16.mxu0 %v2266
    %3260 = vmatpush1.bf16.msra.mxu0 %v2265
    %3261 = vmatprep.mubr.bf16.mxu0 %v120
    %3262 = vmatmul.mubr.bf16.gmra.mrb[0].mxu0 %v119
    %v3263 = vpop.f32.mrb[0].mxu0
    %v3264 = vadd.f32 %v652, %v3263
    %v3265 = vpop.f32.mrb[0].mxu0
    %v3266 = vadd.f32 %v656, %v3265
    %v3267 = vpop.f32.mrb[0].mxu0
    %v3268 = vpop.f32.mrb[0].mxu0
    %3269 = vdwg.mxu0
    %3270 = vmatprep.subr.bf16.mxu0 %v2270
    %3271 = vmatpush1.bf16.msra.mxu0 %v2269
    %3272 = vmatprep.subr.bf16.mxu0 %v2274
    %3273 = vmatpush1.bf16.msra.mxu0 %v2273
    %3274 = vmatprep.subr.bf16.mxu0 %v2278
    %3275 = vmatpush1.bf16.msra.mxu0 %v2277
    %3276 = vmatprep.subr.bf16.mxu0 %v2282
    %3277 = vmatpush1.bf16.msra.mxu0 %v2281
    %3278 = vmatprep.subr.bf16.mxu0 %v2286
    %3279 = vmatpush1.bf16.msra.mxu0 %v2285
    %3280 = vmatprep.subr.bf16.mxu0 %v2290
    %3281 = vmatpush1.bf16.msra.mxu0 %v2289
    %3282 = vmatprep.subr.bf16.mxu0 %v2294
    %3283 = vmatpush1.bf16.msra.mxu0 %v2293
    %3284 = vmatprep.subr.bf16.mxu0 %v2298
    %3285 = vmatpush1.bf16.msra.mxu0 %v2297
    %3286 = vmatprep.subr.bf16.mxu0 %v2302
    %3287 = vmatpush1.bf16.msra.mxu0 %v2301
    %3288 = vmatprep.subr.bf16.mxu0 %v2306
    %3289 = vmatpush1.bf16.msra.mxu0 %v2305
    %3290 = vmatprep.subr.bf16.mxu0 %v2310
    %3291 = vmatpush1.bf16.msra.mxu0 %v2309
    %3292 = vmatprep.subr.bf16.mxu0 %v2314
    %3293 = vmatpush1.bf16.msra.mxu0 %v2313
    %3294 = vmatprep.subr.bf16.mxu0 %v2318
    %3295 = vmatpush1.bf16.msra.mxu0 %v2317
    %3296 = vmatprep.subr.bf16.mxu0 %v2322
    %3297 = vmatpush1.bf16.msra.mxu0 %v2321
    %3298 = vmatprep.subr.bf16.mxu0 %v2326
    %3299 = vmatpush1.bf16.msra.mxu0 %v2325
    %3300 = vmatprep.subr.bf16.mxu0 %v2330
    %3301 = vmatpush1.bf16.msra.mxu0 %v2329
    %3302 = vmatprep.mubr.bf16.mxu0 %v122
    %3303 = vmatmul.mubr.bf16.gmra.mrb[0].mxu0 %v121
    %v3304 = vpop.f32.mrb[0].mxu0
    %v3305 = vadd.f32 %v3264, %v3304
    %v3306 = vpop.f32.mrb[0].mxu0
    %v3307 = vadd.f32 %v3266, %v3306
    %v3308 = vpop.f32.mrb[0].mxu0
    %v3309 = vpop.f32.mrb[0].mxu0
    %3310 = vdwg.mxu0
    %3311 = vmatprep.subr.bf16.mxu0 %v2334
    %3312 = vmatpush1.bf16.msra.mxu0 %v2333
    %3313 = vmatprep.subr.bf16.mxu0 %v2338
    %3314 = vmatpush1.bf16.msra.mxu0 %v2337
    %3315 = vmatprep.subr.bf16.mxu0 %v2342
    %3316 = vmatpush1.bf16.msra.mxu0 %v2341
    %3317 = vmatprep.subr.bf16.mxu0 %v2346
    %3318 = vmatpush1.bf16.msra.mxu0 %v2345
    %3319 = vmatprep.subr.bf16.mxu0 %v2350
    %3320 = vmatpush1.bf16.msra.mxu0 %v2349
    %3321 = vmatprep.subr.bf16.mxu0 %v2354
    %3322 = vmatpush1.bf16.msra.mxu0 %v2353
    %3323 = vmatprep.subr.bf16.mxu0 %v2358
    %3324 = vmatpush1.bf16.msra.mxu0 %v2357
    %3325 = vmatprep.subr.bf16.mxu0 %v2362
    %3326 = vmatpush1.bf16.msra.mxu0 %v2361
    %3327 = vmatprep.subr.bf16.mxu0 %v2366
    %3328 = vmatpush1.bf16.msra.mxu0 %v2365
    %3329 = vmatprep.subr.bf16.mxu0 %v2370
    %3330 = vmatpush1.bf16.msra.mxu0 %v2369
    %3331 = vmatprep.subr.bf16.mxu0 %v2374
    %3332 = vmatpush1.bf16.msra.mxu0 %v2373
    %3333 = vmatprep.subr.bf16.mxu0 %v2378
    %3334 = vmatpush1.bf16.msra.mxu0 %v2377
    %3335 = vmatprep.subr.bf16.mxu0 %v2382
    %3336 = vmatpush1.bf16.msra.mxu0 %v2381
    %3337 = vmatprep.subr.bf16.mxu0 %v2386
    %3338 = vmatpush1.bf16.msra.mxu0 %v2385
    %3339 = vmatprep.subr.bf16.mxu0 %v2390
    %3340 = vmatpush1.bf16.msra.mxu0 %v2389
    %3341 = vmatprep.subr.bf16.mxu0 %v2394
    %3342 = vmatpush1.bf16.msra.mxu0 %v2393
    %3343 = vmatprep.mubr.bf16.mxu0 %v124
    %3344 = vmatmul.mubr.bf16.gmra.mrb[0].mxu0 %v123
    %v3345 = vpop.f32.mrb[0].mxu0
    %v3346 = vadd.f32 %v3305, %v3345
    %v3347 = vpop.f32.mrb[0].mxu0
    %v3348 = vadd.f32 %v3307, %v3347
    %v3349 = vpop.f32.mrb[0].mxu0
    %v3350 = vpop.f32.mrb[0].mxu0
    %3351 = vdwg.mxu0
    %3352 = vmatprep.subr.bf16.mxu0 %v2398
    %3353 = vmatpush1.bf16.msra.mxu0 %v2397
    %3354 = vmatprep.subr.bf16.mxu0 %v2402
    %3355 = vmatpush1.bf16.msra.mxu0 %v2401
    %3356 = vmatprep.subr.bf16.mxu0 %v2406
    %3357 = vmatpush1.bf16.msra.mxu0 %v2405
    %3358 = vmatprep.subr.bf16.mxu0 %v2410
    %3359 = vmatpush1.bf16.msra.mxu0 %v2409
    %3360 = vmatprep.subr.bf16.mxu0 %v2414
    %3361 = vmatpush1.bf16.msra.mxu0 %v2413
    %3362 = vmatprep.subr.bf16.mxu0 %v2418
    %3363 = vmatpush1.bf16.msra.mxu0 %v2417
    %3364 = vmatprep.subr.bf16.mxu0 %v2422
    %3365 = vmatpush1.bf16.msra.mxu0 %v2421
    %3366 = vmatprep.subr.bf16.mxu0 %v2426
    %3367 = vmatpush1.bf16.msra.mxu0 %v2425
    %3368 = vmatprep.subr.bf16.mxu0 %v2430
    %3369 = vmatpush1.bf16.msra.mxu0 %v2429
    %3370 = vmatprep.subr.bf16.mxu0 %v2434
    %3371 = vmatpush1.bf16.msra.mxu0 %v2433
    %3372 = vmatprep.subr.bf16.mxu0 %v2438
    %3373 = vmatpush1.bf16.msra.mxu0 %v2437
    %3374 = vmatprep.subr.bf16.mxu0 %v2442
    %3375 = vmatpush1.bf16.msra.mxu0 %v2441
    %3376 = vmatprep.subr.bf16.mxu0 %v2446
    %3377 = vmatpush1.bf16.msra.mxu0 %v2445
    %3378 = vmatprep.subr.bf16.mxu0 %v2450
    %3379 = vmatpush1.bf16.msra.mxu0 %v2449
    %3380 = vmatprep.subr.bf16.mxu0 %v2454
    %3381 = vmatpush1.bf16.msra.mxu0 %v2453
    %3382 = vmatprep.subr.bf16.mxu0 %v2458
    %3383 = vmatpush1.bf16.msra.mxu0 %v2457
    %3384 = vmatprep.mubr.bf16.mxu0 %v126
    %3385 = vmatmul.mubr.bf16.gmra.mrb[0].mxu0 %v125
    %v3386 = vpop.f32.mrb[0].mxu0
    %v3387 = vadd.f32 %v3346, %v3386
    %v3388 = vpop.f32.mrb[0].mxu0
    %v3389 = vadd.f32 %v3348, %v3388
    %v3390 = vpop.f32.mrb[0].mxu0
    %v3391 = vpop.f32.mrb[0].mxu0
    %3392 = vdwg.mxu0
    %3393 = vmatprep.subr.bf16.mxu0 %v2462
    %3394 = vmatpush1.bf16.msra.mxu0 %v2461
    %3395 = vmatprep.subr.bf16.mxu0 %v2466
    %3396 = vmatpush1.bf16.msra.mxu0 %v2465
    %3397 = vmatprep.subr.bf16.mxu0 %v2470
    %3398 = vmatpush1.bf16.msra.mxu0 %v2469
    %3399 = vmatprep.subr.bf16.mxu0 %v2474
    %3400 = vmatpush1.bf16.msra.mxu0 %v2473
    %3401 = vmatprep.subr.bf16.mxu0 %v2478
    %3402 = vmatpush1.bf16.msra.mxu0 %v2477
    %3403 = vmatprep.subr.bf16.mxu0 %v2482
    %3404 = vmatpush1.bf16.msra.mxu0 %v2481
    %3405 = vmatprep.subr.bf16.mxu0 %v2486
    %3406 = vmatpush1.bf16.msra.mxu0 %v2485
    %3407 = vmatprep.subr.bf16.mxu0 %v2490
    %3408 = vmatpush1.bf16.msra.mxu0 %v2489
    %3409 = vmatprep.subr.bf16.mxu0 %v2494
    %3410 = vmatpush1.bf16.msra.mxu0 %v2493
    %3411 = vmatprep.subr.bf16.mxu0 %v2498
    %3412 = vmatpush1.bf16.msra.mxu0 %v2497
    %3413 = vmatprep.subr.bf16.mxu0 %v2502
    %3414 = vmatpush1.bf16.msra.mxu0 %v2501
    %3415 = vmatprep.subr.bf16.mxu0 %v2506
    %3416 = vmatpush1.bf16.msra.mxu0 %v2505
    %3417 = vmatprep.subr.bf16.mxu0 %v2510
    %3418 = vmatpush1.bf16.msra.mxu0 %v2509
    %3419 = vmatprep.subr.bf16.mxu0 %v2514
    %3420 = vmatpush1.bf16.msra.mxu0 %v2513
    %3421 = vmatprep.subr.bf16.mxu0 %v2518
    %3422 = vmatpush1.bf16.msra.mxu0 %v2517
    %3423 = vmatprep.subr.bf16.mxu0 %v2522
    %3424 = vmatpush1.bf16.msra.mxu0 %v2521
    %3425 = vmatprep.mubr.bf16.mxu0 %v128
    %3426 = vmatmul.mubr.bf16.gmra.mrb[0].mxu0 %v127
    %v3427 = vpop.f32.mrb[0].mxu0
    %v3428 = vadd.f32 %v3387, %v3427
    %v3429 = vpop.f32.mrb[0].mxu0
    %v3430 = vadd.f32 %v3389, %v3429
    %v3431 = vpop.f32.mrb[0].mxu0
    %v3432 = vpop.f32.mrb[0].mxu0
    %3433 = vdwg.mxu0
    %3434 = vmatprep.subr.bf16.mxu0 %v2526
    %3435 = vmatpush1.bf16.msra.mxu0 %v2525
    %3436 = vmatprep.subr.bf16.mxu0 %v2530
    %3437 = vmatpush1.bf16.msra.mxu0 %v2529
    %3438 = vmatprep.subr.bf16.mxu0 %v2534
    %3439 = vmatpush1.bf16.msra.mxu0 %v2533
    %3440 = vmatprep.subr.bf16.mxu0 %v2538
    %3441 = vmatpush1.bf16.msra.mxu0 %v2537
    %3442 = vmatprep.subr.bf16.mxu0 %v2542
    %3443 = vmatpush1.bf16.msra.mxu0 %v2541
    %3444 = vmatprep.subr.bf16.mxu0 %v2546
    %3445 = vmatpush1.bf16.msra.mxu0 %v2545
    %3446 = vmatprep.subr.bf16.mxu0 %v2550
    %3447 = vmatpush1.bf16.msra.mxu0 %v2549
    %3448 = vmatprep.subr.bf16.mxu0 %v2554
    %3449 = vmatpush1.bf16.msra.mxu0 %v2553
    %3450 = vmatprep.subr.bf16.mxu0 %v2558
    %3451 = vmatpush1.bf16.msra.mxu0 %v2557
    %3452 = vmatprep.subr.bf16.mxu0 %v2562
    %3453 = vmatpush1.bf16.msra.mxu0 %v2561
    %3454 = vmatprep.subr.bf16.mxu0 %v2566
    %3455 = vmatpush1.bf16.msra.mxu0 %v2565
    %3456 = vmatprep.subr.bf16.mxu0 %v2570
    %3457 = vmatpush1.bf16.msra.mxu0 %v2569
    %3458 = vmatprep.subr.bf16.mxu0 %v2574
    %3459 = vmatpush1.bf16.msra.mxu0 %v2573
    %3460 = vmatprep.subr.bf16.mxu0 %v2578
    %3461 = vmatpush1.bf16.msra.mxu0 %v2577
    %3462 = vmatprep.subr.bf16.mxu0 %v2582
    %3463 = vmatpush1.bf16.msra.mxu0 %v2581
    %3464 = vmatprep.subr.bf16.mxu0 %v2586
    %3465 = vmatpush1.bf16.msra.mxu0 %v2585
    %3466 = vmatprep.mubr.bf16.mxu0 %v130
    %3467 = vmatmul.mubr.bf16.gmra.mrb[0].mxu0 %v129
    %v3468 = vpop.f32.mrb[0].mxu0
    %v3469 = vadd.f32 %v3428, %v3468
    %v3470 = vpop.f32.mrb[0].mxu0
    %v3471 = vadd.f32 %v3430, %v3470
    %v3472 = vpop.f32.mrb[0].mxu0
    %v3473 = vpop.f32.mrb[0].mxu0
    %3474 = vdwg.mxu0
    %3475 = vmatprep.subr.bf16.mxu0 %v2590
    %3476 = vmatpush1.bf16.msra.mxu0 %v2589
    %3477 = vmatprep.subr.bf16.mxu0 %v2594
    %3478 = vmatpush1.bf16.msra.mxu0 %v2593
    %3479 = vmatprep.subr.bf16.mxu0 %v2598
    %3480 = vmatpush1.bf16.msra.mxu0 %v2597
    %3481 = vmatprep.subr.bf16.mxu0 %v2602
    %3482 = vmatpush1.bf16.msra.mxu0 %v2601
    %3483 = vmatprep.subr.bf16.mxu0 %v2606
    %3484 = vmatpush1.bf16.msra.mxu0 %v2605
    %3485 = vmatprep.subr.bf16.mxu0 %v2610
    %3486 = vmatpush1.bf16.msra.mxu0 %v2609
    %3487 = vmatprep.subr.bf16.mxu0 %v2614
    %3488 = vmatpush1.bf16.msra.mxu0 %v2613
    %3489 = vmatprep.subr.bf16.mxu0 %v2618
    %3490 = vmatpush1.bf16.msra.mxu0 %v2617
    %3491 = vmatprep.subr.bf16.mxu0 %v2622
    %3492 = vmatpush1.bf16.msra.mxu0 %v2621
    %3493 = vmatprep.subr.bf16.mxu0 %v2626
    %3494 = vmatpush1.bf16.msra.mxu0 %v2625
    %3495 = vmatprep.subr.bf16.mxu0 %v2630
    %3496 = vmatpush1.bf16.msra.mxu0 %v2629
    %3497 = vmatprep.subr.bf16.mxu0 %v2634
    %3498 = vmatpush1.bf16.msra.mxu0 %v2633
    %3499 = vmatprep.subr.bf16.mxu0 %v2638
    %3500 = vmatpush1.bf16.msra.mxu0 %v2637
    %3501 = vmatprep.subr.bf16.mxu0 %v2642
    %3502 = vmatpush1.bf16.msra.mxu0 %v2641
    %3503 = vmatprep.subr.bf16.mxu0 %v2646
    %3504 = vmatpush1.bf16.msra.mxu0 %v2645
    %3505 = vmatprep.subr.bf16.mxu0 %v2650
    %3506 = vmatpush1.bf16.msra.mxu0 %v2649
    %3507 = vmatprep.mubr.bf16.mxu0 %v132
    %3508 = vmatmul.mubr.bf16.gmra.mrb[0].mxu0 %v131
    %v3509 = vpop.f32.mrb[0].mxu0
    %v3510 = vadd.f32 %v3469, %v3509
    %v3511 = vpop.f32.mrb[0].mxu0
    %v3512 = vadd.f32 %v3471, %v3511
    %v3513 = vpop.f32.mrb[0].mxu0
    %v3514 = vpop.f32.mrb[0].mxu0
    %3515 = vdwg.mxu0
    %3516 = vmatprep.subr.bf16.mxu0 %v2654
    %3517 = vmatpush1.bf16.msra.mxu0 %v2653
    %3518 = vmatprep.subr.bf16.mxu0 %v2658
    %3519 = vmatpush1.bf16.msra.mxu0 %v2657
    %3520 = vmatprep.subr.bf16.mxu0 %v2662
    %3521 = vmatpush1.bf16.msra.mxu0 %v2661
    %3522 = vmatprep.subr.bf16.mxu0 %v2666
    %3523 = vmatpush1.bf16.msra.mxu0 %v2665
    %3524 = vmatprep.subr.bf16.mxu0 %v2670
    %3525 = vmatpush1.bf16.msra.mxu0 %v2669
    %3526 = vmatprep.subr.bf16.mxu0 %v2674
    %3527 = vmatpush1.bf16.msra.mxu0 %v2673
    %3528 = vmatprep.subr.bf16.mxu0 %v2678
    %3529 = vmatpush1.bf16.msra.mxu0 %v2677
    %3530 = vmatprep.subr.bf16.mxu0 %v2682
    %3531 = vmatpush1.bf16.msra.mxu0 %v2681
    %3532 = vmatprep.subr.bf16.mxu0 %v2686
    %3533 = vmatpush1.bf16.msra.mxu0 %v2685
    %3534 = vmatprep.subr.bf16.mxu0 %v2690
    %3535 = vmatpush1.bf16.msra.mxu0 %v2689
    %3536 = vmatprep.subr.bf16.mxu0 %v2694
    %3537 = vmatpush1.bf16.msra.mxu0 %v2693
    %3538 = vmatprep.subr.bf16.mxu0 %v2698
    %3539 = vmatpush1.bf16.msra.mxu0 %v2697
    %3540 = vmatprep.subr.bf16.mxu0 %v2702
    %3541 = vmatpush1.bf16.msra.mxu0 %v2701
    %3542 = vmatprep.subr.bf16.mxu0 %v2706
    %3543 = vmatpush1.bf16.msra.mxu0 %v2705
    %3544 = vmatprep.subr.bf16.mxu0 %v2710
    %3545 = vmatpush1.bf16.msra.mxu0 %v2709
    %3546 = vmatprep.subr.bf16.mxu0 %v2714
    %3547 = vmatpush1.bf16.msra.mxu0 %v2713
    %3548 = vmatprep.mubr.bf16.mxu0 %v134
    %3549 = vmatmul.mubr.bf16.gmra.mrb[0].mxu0 %v133
    %v3550 = vpop.f32.mrb[0].mxu0
    %v3551 = vadd.f32 %v3510, %v3550
    %v3552 = vpop.f32.mrb[0].mxu0
    %v3553 = vadd.f32 %v3512, %v3552
    %v3554 = vpop.f32.mrb[0].mxu0
    %v3555 = vpop.f32.mrb[0].mxu0
    %3556 = vdwg.mxu0
    %3557 = vmatprep.subr.bf16.mxu0 %v2208
    %3558 = vmatpush1.bf16.msra.mxu0 %v2207
    %3559 = vmatprep.subr.bf16.mxu0 %v2212
    %3560 = vmatpush1.bf16.msra.mxu0 %v2211
    %3561 = vmatprep.subr.bf16.mxu0 %v2216
    %3562 = vmatpush1.bf16.msra.mxu0 %v2215
    %3563 = vmatprep.subr.bf16.mxu0 %v2220
    %3564 = vmatpush1.bf16.msra.mxu0 %v2219
    %3565 = vmatprep.subr.bf16.mxu0 %v2224
    %3566 = vmatpush1.bf16.msra.mxu0 %v2223
    %3567 = vmatprep.subr.bf16.mxu0 %v2228
    %3568 = vmatpush1.bf16.msra.mxu0 %v2227
    %3569 = vmatprep.subr.bf16.mxu0 %v2232
    %3570 = vmatpush1.bf16.msra.mxu0 %v2231
    %3571 = vmatprep.subr.bf16.mxu0 %v2236
    %3572 = vmatpush1.bf16.msra.mxu0 %v2235
    %3573 = vmatprep.subr.bf16.mxu0 %v2240
    %3574 = vmatpush1.bf16.msra.mxu0 %v2239
    %3575 = vmatprep.subr.bf16.mxu0 %v2244
    %3576 = vmatpush1.bf16.msra.mxu0 %v2243
    %3577 = vmatprep.subr.bf16.mxu0 %v2248
    %3578 = vmatpush1.bf16.msra.mxu0 %v2247
    %3579 = vmatprep.subr.bf16.mxu0 %v2252
    %3580 = vmatpush1.bf16.msra.mxu0 %v2251
    %3581 = vmatprep.subr.bf16.mxu0 %v2256
    %3582 = vmatpush1.bf16.msra.mxu0 %v2255
    %3583 = vmatprep.subr.bf16.mxu0 %v2260
    %3584 = vmatpush1.bf16.msra.mxu0 %v2259
    %3585 = vmatprep.subr.bf16.mxu0 %v2264
    %3586 = vmatpush1.bf16.msra.mxu0 %v2263
    %3587 = vmatprep.subr.bf16.mxu0 %v2268
    %3588 = vmatpush1.bf16.msra.mxu0 %v2267
    %3589 = vmatprep.mubr.bf16.mxu0 %v120
    %3590 = vmatmul.mubr.bf16.gmra.mrb[0].mxu0 %v119
    %v3591 = vpop.f32.mrb[0].mxu0
    %v3592 = vadd.f32 %v660, %v3591
    %v3593 = vpop.f32.mrb[0].mxu0
    %v3594 = vadd.f32 %v664, %v3593
    %v3595 = vpop.f32.mrb[0].mxu0
    %v3596 = vpop.f32.mrb[0].mxu0
    %3597 = vdwg.mxu0
    %3598 = vmatprep.subr.bf16.mxu0 %v2272
    %3599 = vmatpush1.bf16.msra.mxu0 %v2271
    %3600 = vmatprep.subr.bf16.mxu0 %v2276
    %3601 = vmatpush1.bf16.msra.mxu0 %v2275
    %3602 = vmatprep.subr.bf16.mxu0 %v2280
    %3603 = vmatpush1.bf16.msra.mxu0 %v2279
    %3604 = vmatprep.subr.bf16.mxu0 %v2284
    %3605 = vmatpush1.bf16.msra.mxu0 %v2283
    %3606 = vmatprep.subr.bf16.mxu0 %v2288
    %3607 = vmatpush1.bf16.msra.mxu0 %v2287
    %3608 = vmatprep.subr.bf16.mxu0 %v2292
    %3609 = vmatpush1.bf16.msra.mxu0 %v2291
    %3610 = vmatprep.subr.bf16.mxu0 %v2296
    %3611 = vmatpush1.bf16.msra.mxu0 %v2295
    %3612 = vmatprep.subr.bf16.mxu0 %v2300
    %3613 = vmatpush1.bf16.msra.mxu0 %v2299
    %3614 = vmatprep.subr.bf16.mxu0 %v2304
    %3615 = vmatpush1.bf16.msra.mxu0 %v2303
    %3616 = vmatprep.subr.bf16.mxu0 %v2308
    %3617 = vmatpush1.bf16.msra.mxu0 %v2307
    %3618 = vmatprep.subr.bf16.mxu0 %v2312
    %3619 = vmatpush1.bf16.msra.mxu0 %v2311
    %3620 = vmatprep.subr.bf16.mxu0 %v2316
    %3621 = vmatpush1.bf16.msra.mxu0 %v2315
    %3622 = vmatprep.subr.bf16.mxu0 %v2320
    %3623 = vmatpush1.bf16.msra.mxu0 %v2319
    %3624 = vmatprep.subr.bf16.mxu0 %v2324
    %3625 = vmatpush1.bf16.msra.mxu0 %v2323
    %3626 = vmatprep.subr.bf16.mxu0 %v2328
    %3627 = vmatpush1.bf16.msra.mxu0 %v2327
    %3628 = vmatprep.subr.bf16.mxu0 %v2332
    %3629 = vmatpush1.bf16.msra.mxu0 %v2331
    %3630 = vmatprep.mubr.bf16.mxu0 %v122
    %3631 = vmatmul.mubr.bf16.gmra.mrb[0].mxu0 %v121
    %v3632 = vpop.f32.mrb[0].mxu0
    %v3633 = vadd.f32 %v3592, %v3632
    %v3634 = vpop.f32.mrb[0].mxu0
    %v3635 = vadd.f32 %v3594, %v3634
    %v3636 = vpop.f32.mrb[0].mxu0
    %v3637 = vpop.f32.mrb[0].mxu0
    %3638 = vdwg.mxu0
    %3639 = vmatprep.subr.bf16.mxu0 %v2336
    %3640 = vmatpush1.bf16.msra.mxu0 %v2335
    %3641 = vmatprep.subr.bf16.mxu0 %v2340
    %3642 = vmatpush1.bf16.msra.mxu0 %v2339
    %3643 = vmatprep.subr.bf16.mxu0 %v2344
    %3644 = vmatpush1.bf16.msra.mxu0 %v2343
    %3645 = vmatprep.subr.bf16.mxu0 %v2348
    %3646 = vmatpush1.bf16.msra.mxu0 %v2347
    %3647 = vmatprep.subr.bf16.mxu0 %v2352
    %3648 = vmatpush1.bf16.msra.mxu0 %v2351
    %3649 = vmatprep.subr.bf16.mxu0 %v2356
    %3650 = vmatpush1.bf16.msra.mxu0 %v2355
    %3651 = vmatprep.subr.bf16.mxu0 %v2360
    %3652 = vmatpush1.bf16.msra.mxu0 %v2359
    %3653 = vmatprep.subr.bf16.mxu0 %v2364
    %3654 = vmatpush1.bf16.msra.mxu0 %v2363
    %3655 = vmatprep.subr.bf16.mxu0 %v2368
    %3656 = vmatpush1.bf16.msra.mxu0 %v2367
    %3657 = vmatprep.subr.bf16.mxu0 %v2372
    %3658 = vmatpush1.bf16.msra.mxu0 %v2371
    %3659 = vmatprep.subr.bf16.mxu0 %v2376
    %3660 = vmatpush1.bf16.msra.mxu0 %v2375
    %3661 = vmatprep.subr.bf16.mxu0 %v2380
    %3662 = vmatpush1.bf16.msra.mxu0 %v2379
    %3663 = vmatprep.subr.bf16.mxu0 %v2384
    %3664 = vmatpush1.bf16.msra.mxu0 %v2383
    %3665 = vmatprep.subr.bf16.mxu0 %v2388
    %3666 = vmatpush1.bf16.msra.mxu0 %v2387
    %3667 = vmatprep.subr.bf16.mxu0 %v2392
    %3668 = vmatpush1.bf16.msra.mxu0 %v2391
    %3669 = vmatprep.subr.bf16.mxu0 %v2396
    %3670 = vmatpush1.bf16.msra.mxu0 %v2395
    %3671 = vmatprep.mubr.bf16.mxu0 %v124
    %3672 = vmatmul.mubr.bf16.gmra.mrb[0].mxu0 %v123
    %v3673 = vpop.f32.mrb[0].mxu0
    %v3674 = vadd.f32 %v3633, %v3673
    %v3675 = vpop.f32.mrb[0].mxu0
    %v3676 = vadd.f32 %v3635, %v3675
    %v3677 = vpop.f32.mrb[0].mxu0
    %v3678 = vpop.f32.mrb[0].mxu0
    %3679 = vdwg.mxu0
    %3680 = vmatprep.subr.bf16.mxu0 %v2400
    %3681 = vmatpush1.bf16.msra.mxu0 %v2399
    %3682 = vmatprep.subr.bf16.mxu0 %v2404
    %3683 = vmatpush1.bf16.msra.mxu0 %v2403
    %3684 = vmatprep.subr.bf16.mxu0 %v2408
    %3685 = vmatpush1.bf16.msra.mxu0 %v2407
    %3686 = vmatprep.subr.bf16.mxu0 %v2412
    %3687 = vmatpush1.bf16.msra.mxu0 %v2411
    %3688 = vmatprep.subr.bf16.mxu0 %v2416
    %3689 = vmatpush1.bf16.msra.mxu0 %v2415
    %3690 = vmatprep.subr.bf16.mxu0 %v2420
    %3691 = vmatpush1.bf16.msra.mxu0 %v2419
    %3692 = vmatprep.subr.bf16.mxu0 %v2424
    %3693 = vmatpush1.bf16.msra.mxu0 %v2423
    %3694 = vmatprep.subr.bf16.mxu0 %v2428
    %3695 = vmatpush1.bf16.msra.mxu0 %v2427
    %3696 = vmatprep.subr.bf16.mxu0 %v2432
    %3697 = vmatpush1.bf16.msra.mxu0 %v2431
    %3698 = vmatprep.subr.bf16.mxu0 %v2436
    %3699 = vmatpush1.bf16.msra.mxu0 %v2435
    %3700 = vmatprep.subr.bf16.mxu0 %v2440
    %3701 = vmatpush1.bf16.msra.mxu0 %v2439
    %3702 = vmatprep.subr.bf16.mxu0 %v2444
    %3703 = vmatpush1.bf16.msra.mxu0 %v2443
    %3704 = vmatprep.subr.bf16.mxu0 %v2448
    %3705 = vmatpush1.bf16.msra.mxu0 %v2447
    %3706 = vmatprep.subr.bf16.mxu0 %v2452
    %3707 = vmatpush1.bf16.msra.mxu0 %v2451
    %3708 = vmatprep.subr.bf16.mxu0 %v2456
    %3709 = vmatpush1.bf16.msra.mxu0 %v2455
    %3710 = vmatprep.subr.bf16.mxu0 %v2460
    %3711 = vmatpush1.bf16.msra.mxu0 %v2459
    %3712 = vmatprep.mubr.bf16.mxu0 %v126
    %3713 = vmatmul.mubr.bf16.gmra.mrb[0].mxu0 %v125
    %v3714 = vpop.f32.mrb[0].mxu0
    %v3715 = vadd.f32 %v3674, %v3714
    %v3716 = vpop.f32.mrb[0].mxu0
    %v3717 = vadd.f32 %v3676, %v3716
    %v3718 = vpop.f32.mrb[0].mxu0
    %v3719 = vpop.f32.mrb[0].mxu0
    %3720 = vdwg.mxu0
    %3721 = vmatprep.subr.bf16.mxu0 %v2464
    %3722 = vmatpush1.bf16.msra.mxu0 %v2463
    %3723 = vmatprep.subr.bf16.mxu0 %v2468
    %3724 = vmatpush1.bf16.msra.mxu0 %v2467
    %3725 = vmatprep.subr.bf16.mxu0 %v2472
    %3726 = vmatpush1.bf16.msra.mxu0 %v2471
    %3727 = vmatprep.subr.bf16.mxu0 %v2476
    %3728 = vmatpush1.bf16.msra.mxu0 %v2475
    %3729 = vmatprep.subr.bf16.mxu0 %v2480
    %3730 = vmatpush1.bf16.msra.mxu0 %v2479
    %3731 = vmatprep.subr.bf16.mxu0 %v2484
    %3732 = vmatpush1.bf16.msra.mxu0 %v2483
    %3733 = vmatprep.subr.bf16.mxu0 %v2488
    %3734 = vmatpush1.bf16.msra.mxu0 %v2487
    %3735 = vmatprep.subr.bf16.mxu0 %v2492
    %3736 = vmatpush1.bf16.msra.mxu0 %v2491
    %3737 = vmatprep.subr.bf16.mxu0 %v2496
    %3738 = vmatpush1.bf16.msra.mxu0 %v2495
    %3739 = vmatprep.subr.bf16.mxu0 %v2500
    %3740 = vmatpush1.bf16.msra.mxu0 %v2499
    %3741 = vmatprep.subr.bf16.mxu0 %v2504
    %3742 = vmatpush1.bf16.msra.mxu0 %v2503
    %3743 = vmatprep.subr.bf16.mxu0 %v2508
    %3744 = vmatpush1.bf16.msra.mxu0 %v2507
    %3745 = vmatprep.subr.bf16.mxu0 %v2512
    %3746 = vmatpush1.bf16.msra.mxu0 %v2511
    %3747 = vmatprep.subr.bf16.mxu0 %v2516
    %3748 = vmatpush1.bf16.msra.mxu0 %v2515
    %3749 = vmatprep.subr.bf16.mxu0 %v2520
    %3750 = vmatpush1.bf16.msra.mxu0 %v2519
    %3751 = vmatprep.subr.bf16.mxu0 %v2524
    %3752 = vmatpush1.bf16.msra.mxu0 %v2523
    %3753 = vmatprep.mubr.bf16.mxu0 %v128
    %3754 = vmatmul.mubr.bf16.gmra.mrb[0].mxu0 %v127
    %v3755 = vpop.f32.mrb[0].mxu0
    %v3756 = vadd.f32 %v3715, %v3755
    %v3757 = vpop.f32.mrb[0].mxu0
    %v3758 = vadd.f32 %v3717, %v3757
    %v3759 = vpop.f32.mrb[0].mxu0
    %v3760 = vpop.f32.mrb[0].mxu0
    %3761 = vdwg.mxu0
    %3762 = vmatprep.subr.bf16.mxu0 %v2528
    %3763 = vmatpush1.bf16.msra.mxu0 %v2527
    %3764 = vmatprep.subr.bf16.mxu0 %v2532
    %3765 = vmatpush1.bf16.msra.mxu0 %v2531
    %3766 = vmatprep.subr.bf16.mxu0 %v2536
    %3767 = vmatpush1.bf16.msra.mxu0 %v2535
    %3768 = vmatprep.subr.bf16.mxu0 %v2540
    %3769 = vmatpush1.bf16.msra.mxu0 %v2539
    %3770 = vmatprep.subr.bf16.mxu0 %v2544
    %3771 = vmatpush1.bf16.msra.mxu0 %v2543
    %3772 = vmatprep.subr.bf16.mxu0 %v2548
    %3773 = vmatpush1.bf16.msra.mxu0 %v2547
    %3774 = vmatprep.subr.bf16.mxu0 %v2552
    %3775 = vmatpush1.bf16.msra.mxu0 %v2551
    %3776 = vmatprep.subr.bf16.mxu0 %v2556
    %3777 = vmatpush1.bf16.msra.mxu0 %v2555
    %3778 = vmatprep.subr.bf16.mxu0 %v2560
    %3779 = vmatpush1.bf16.msra.mxu0 %v2559
    %3780 = vmatprep.subr.bf16.mxu0 %v2564
    %3781 = vmatpush1.bf16.msra.mxu0 %v2563
    %3782 = vmatprep.subr.bf16.mxu0 %v2568
    %3783 = vmatpush1.bf16.msra.mxu0 %v2567
    %3784 = vmatprep.subr.bf16.mxu0 %v2572
    %3785 = vmatpush1.bf16.msra.mxu0 %v2571
    %3786 = vmatprep.subr.bf16.mxu0 %v2576
    %3787 = vmatpush1.bf16.msra.mxu0 %v2575
    %3788 = vmatprep.subr.bf16.mxu0 %v2580
    %3789 = vmatpush1.bf16.msra.mxu0 %v2579
    %3790 = vmatprep.subr.bf16.mxu0 %v2584
    %3791 = vmatpush1.bf16.msra.mxu0 %v2583
    %3792 = vmatprep.subr.bf16.mxu0 %v2588
    %3793 = vmatpush1.bf16.msra.mxu0 %v2587
    %3794 = vmatprep.mubr.bf16.mxu0 %v130
    %3795 = vmatmul.mubr.bf16.gmra.mrb[0].mxu0 %v129
    %v3796 = vpop.f32.mrb[0].mxu0
    %v3797 = vadd.f32 %v3756, %v3796
    %v3798 = vpop.f32.mrb[0].mxu0
    %v3799 = vadd.f32 %v3758, %v3798
    %v3800 = vpop.f32.mrb[0].mxu0
    %v3801 = vpop.f32.mrb[0].mxu0
    %3802 = vdwg.mxu0
    %3803 = vmatprep.subr.bf16.mxu0 %v2592
    %3804 = vmatpush1.bf16.msra.mxu0 %v2591
    %3805 = vmatprep.subr.bf16.mxu0 %v2596
    %3806 = vmatpush1.bf16.msra.mxu0 %v2595
    %3807 = vmatprep.subr.bf16.mxu0 %v2600
    %3808 = vmatpush1.bf16.msra.mxu0 %v2599
    %3809 = vmatprep.subr.bf16.mxu0 %v2604
    %3810 = vmatpush1.bf16.msra.mxu0 %v2603
    %3811 = vmatprep.subr.bf16.mxu0 %v2608
    %3812 = vmatpush1.bf16.msra.mxu0 %v2607
    %3813 = vmatprep.subr.bf16.mxu0 %v2612
    %3814 = vmatpush1.bf16.msra.mxu0 %v2611
    %3815 = vmatprep.subr.bf16.mxu0 %v2616
    %3816 = vmatpush1.bf16.msra.mxu0 %v2615
    %3817 = vmatprep.subr.bf16.mxu0 %v2620
    %3818 = vmatpush1.bf16.msra.mxu0 %v2619
    %3819 = vmatprep.subr.bf16.mxu0 %v2624
    %3820 = vmatpush1.bf16.msra.mxu0 %v2623
    %3821 = vmatprep.subr.bf16.mxu0 %v2628
    %3822 = vmatpush1.bf16.msra.mxu0 %v2627
    %3823 = vmatprep.subr.bf16.mxu0 %v2632
    %3824 = vmatpush1.bf16.msra.mxu0 %v2631
    %3825 = vmatprep.subr.bf16.mxu0 %v2636
    %3826 = vmatpush1.bf16.msra.mxu0 %v2635
    %3827 = vmatprep.subr.bf16.mxu0 %v2640
    %3828 = vmatpush1.bf16.msra.mxu0 %v2639
    %3829 = vmatprep.subr.bf16.mxu0 %v2644
    %3830 = vmatpush1.bf16.msra.mxu0 %v2643
    %3831 = vmatprep.subr.bf16.mxu0 %v2648
    %3832 = vmatpush1.bf16.msra.mxu0 %v2647
    %3833 = vmatprep.subr.bf16.mxu0 %v2652
    %3834 = vmatpush1.bf16.msra.mxu0 %v2651
    %3835 = vmatprep.mubr.bf16.mxu0 %v132
    %3836 = vmatmul.mubr.bf16.gmra.mrb[0].mxu0 %v131
    %v3837 = vpop.f32.mrb[0].mxu0
    %v3838 = vadd.f32 %v3797, %v3837
    %v3839 = vpop.f32.mrb[0].mxu0
    %v3840 = vadd.f32 %v3799, %v3839
    %v3841 = vpop.f32.mrb[0].mxu0
    %v3842 = vpop.f32.mrb[0].mxu0
    %3843 = vdwg.mxu0
    %3844 = vmatprep.subr.bf16.mxu0 %v2656
    %3845 = vmatpush1.bf16.msra.mxu0 %v2655
    %3846 = vmatprep.subr.bf16.mxu0 %v2660
    %3847 = vmatpush1.bf16.msra.mxu0 %v2659
    %3848 = vmatprep.subr.bf16.mxu0 %v2664
    %3849 = vmatpush1.bf16.msra.mxu0 %v2663
    %3850 = vmatprep.subr.bf16.mxu0 %v2668
    %3851 = vmatpush1.bf16.msra.mxu0 %v2667
    %3852 = vmatprep.subr.bf16.mxu0 %v2672
    %3853 = vmatpush1.bf16.msra.mxu0 %v2671
    %3854 = vmatprep.subr.bf16.mxu0 %v2676
    %3855 = vmatpush1.bf16.msra.mxu0 %v2675
    %3856 = vmatprep.subr.bf16.mxu0 %v2680
    %3857 = vmatpush1.bf16.msra.mxu0 %v2679
    %3858 = vmatprep.subr.bf16.mxu0 %v2684
    %3859 = vmatpush1.bf16.msra.mxu0 %v2683
    %3860 = vmatprep.subr.bf16.mxu0 %v2688
    %3861 = vmatpush1.bf16.msra.mxu0 %v2687
    %3862 = vmatprep.subr.bf16.mxu0 %v2692
    %3863 = vmatpush1.bf16.msra.mxu0 %v2691
    %3864 = vmatprep.subr.bf16.mxu0 %v2696
    %3865 = vmatpush1.bf16.msra.mxu0 %v2695
    %3866 = vmatprep.subr.bf16.mxu0 %v2700
    %3867 = vmatpush1.bf16.msra.mxu0 %v2699
    %3868 = vmatprep.subr.bf16.mxu0 %v2704
    %3869 = vmatpush1.bf16.msra.mxu0 %v2703
    %3870 = vmatprep.subr.bf16.mxu0 %v2708
    %3871 = vmatpush1.bf16.msra.mxu0 %v2707
    %3872 = vmatprep.subr.bf16.mxu0 %v2712
    %3873 = vmatpush1.bf16.msra.mxu0 %v2711
    %3874 = vmatprep.subr.bf16.mxu0 %v2716
    %3875 = vmatpush1.bf16.msra.mxu0 %v2715
    %3876 = vmatprep.mubr.bf16.mxu0 %v134
    %3877 = vmatmul.mubr.bf16.gmra.mrb[0].mxu0 %v133
    %v3878 = vpop.f32.mrb[0].mxu0
    %v3879 = vadd.f32 %v3838, %v3878
    %v3880 = vpop.f32.mrb[0].mxu0
    %v3881 = vadd.f32 %v3840, %v3880
    %v3882 = vpop.f32.mrb[0].mxu0
    %v3883 = vpop.f32.mrb[0].mxu0
    %3884 = vdwg.mxu0
    %v3885 = vmax.f32 %v3551, 0.0
    %v3886 = vmax.f32 %v3553, 0.0
    %v3887 = vmax.f32 %v3879, 0.0
    %v3888 = vmax.f32 %v3881, 0.0
    %v3889 = vld [vmem:[%s3] sm:$0xff]
    %v3890 = vld [vmem:[%s3 + $0x8] sm:$0xff]
    %v3891 = vld [vmem:[%s3 + $0x10] sm:$0xff]
    %v3892 = vld [vmem:[%s3 + $0x18] sm:$0xff]
    %v3893 = vld [vmem:[%s3 + $0x20] sm:$0xff]
    %v3894 = vld [vmem:[%s3 + $0x28] sm:$0xff]
    %v3895 = vld [vmem:[%s3 + $0x30] sm:$0xff]
    %v3896 = vld [vmem:[%s3 + $0x38] sm:$0xff]
    %v3897 = vld [vmem:[%s3 + $0x40] sm:$0xff]
    %v3898 = vld [vmem:[%s3 + $0x48] sm:$0xff]
    %v3899 = vld [vmem:[%s3 + $0x50] sm:$0xff]
    %v3900 = vld [vmem:[%s3 + $0x58] sm:$0xff]
    %v3901 = vld [vmem:[%s3 + $0x60] sm:$0xff]
    %v3902 = vld [vmem:[%s3 + $0x68] sm:$0xff]
    %v3903 = vld [vmem:[%s3 + $0x70] sm:$0xff]
    %v3904 = vld [vmem:[%s3 + $0x78] sm:$0xff]
    %v3905 = vld [vmem:[%s3 + $0x80] sm:$0xff]
    %v3906 = vld [vmem:[%s3 + $0x88] sm:$0xff]
    %v3907 = vld [vmem:[%s3 + $0x90] sm:$0xff]
    %v3908 = vld [vmem:[%s3 + $0x98] sm:$0xff]
    %v3909 = vld [vmem:[%s3 + $0xa0] sm:$0xff]
    %v3910 = vld [vmem:[%s3 + $0xa8] sm:$0xff]
    %v3911 = vld [vmem:[%s3 + $0xb0] sm:$0xff]
    %v3912 = vld [vmem:[%s3 + $0xb8] sm:$0xff]
    %v3913 = vld [vmem:[%s3 + $0xc0] sm:$0xff]
    %v3914 = vld [vmem:[%s3 + $0xc8] sm:$0xff]
    %v3915 = vld [vmem:[%s3 + $0xd0] sm:$0xff]
    %v3916 = vld [vmem:[%s3 + $0xd8] sm:$0xff]
    %v3917 = vld [vmem:[%s3 + $0xe0] sm:$0xff]
    %v3918 = vld [vmem:[%s3 + $0xe8] sm:$0xff]
    %v3919 = vld [vmem:[%s3 + $0xf0] sm:$0xff]
    %v3920 = vld [vmem:[%s3 + $0xf8] sm:$0xff]
    %v3921 = vld [vmem:[%s3 + $0x100] sm:$0xff]
    %v3922 = vld [vmem:[%s3 + $0x108] sm:$0xff]
    %v3923 = vld [vmem:[%s3 + $0x110] sm:$0xff]
    %v3924 = vld [vmem:[%s3 + $0x118] sm:$0xff]
    %v3925 = vld [vmem:[%s3 + $0x120] sm:$0xff]
    %v3926 = vld [vmem:[%s3 + $0x128] sm:$0xff]
    %v3927 = vld [vmem:[%s3 + $0x130] sm:$0xff]
    %v3928 = vld [vmem:[%s3 + $0x138] sm:$0xff]
    %v3929 = vld [vmem:[%s3 + $0x140] sm:$0xff]
    %v3930 = vld [vmem:[%s3 + $0x148] sm:$0xff]
    %v3931 = vld [vmem:[%s3 + $0x150] sm:$0xff]
    %v3932 = vld [vmem:[%s3 + $0x158] sm:$0xff]
    %v3933 = vld [vmem:[%s3 + $0x160] sm:$0xff]
    %v3934 = vld [vmem:[%s3 + $0x168] sm:$0xff]
    %v3935 = vld [vmem:[%s3 + $0x170] sm:$0xff]
    %v3936 = vld [vmem:[%s3 + $0x178] sm:$0xff]
    %v3937 = vld [vmem:[%s3 + $0x180] sm:$0xff]
    %v3938 = vld [vmem:[%s3 + $0x188] sm:$0xff]
    %v3939 = vld [vmem:[%s3 + $0x190] sm:$0xff]
    %v3940 = vld [vmem:[%s3 + $0x198] sm:$0xff]
    %v3941 = vld [vmem:[%s3 + $0x1a0] sm:$0xff]
    %v3942 = vld [vmem:[%s3 + $0x1a8] sm:$0xff]
    %v3943 = vld [vmem:[%s3 + $0x1b0] sm:$0xff]
    %v3944 = vld [vmem:[%s3 + $0x1b8] sm:$0xff]
    %v3945 = vld [vmem:[%s3 + $0x1c0] sm:$0xff]
    %v3946 = vld [vmem:[%s3 + $0x1c8] sm:$0xff]
    %v3947 = vld [vmem:[%s3 + $0x1d0] sm:$0xff]
    %v3948 = vld [vmem:[%s3 + $0x1d8] sm:$0xff]
    %v3949 = vld [vmem:[%s3 + $0x1e0] sm:$0xff]
    %v3950 = vld [vmem:[%s3 + $0x1e8] sm:$0xff]
    %v3951 = vld [vmem:[%s3 + $0x1f0] sm:$0xff]
    %v3952 = vld [vmem:[%s3 + $0x1f8] sm:$0xff]
    %v3953 = vld [vmem:[%s4] sm:$0x1]
    %v3955 = vlaneseq
    %v3956 = vshrl.u32 %v3955, 7
    %v3957 = vsub.s32 0, %v3956
    %v3958 = vrot.slane %v3953, %v3957
    %3960 = vmatprep.subr.mxu0 0.0
    %3961 = vmatpush1.msra.mxu0 %v3889
    %3962 = vmatprep.subr.mxu0 0.0
    %3963 = vmatpush1.msra.mxu0 %v3890
    %3964 = vmatprep.subr.mxu0 0.0
    %3965 = vmatpush1.msra.mxu0 %v3891
    %3966 = vmatprep.subr.mxu0 0.0
    %3967 = vmatpush1.msra.mxu0 %v3892
    %3968 = vmatprep.subr.mxu0 0.0
    %3969 = vmatpush1.msra.mxu0 %v3893
    %3970 = vmatprep.subr.mxu0 0.0
    %3971 = vmatpush1.msra.mxu0 %v3894
    %3972 = vmatprep.subr.mxu0 0.0
    %3973 = vmatpush1.msra.mxu0 %v3895
    %3974 = vmatprep.subr.mxu0 0.0
    %3975 = vmatpush1.msra.mxu0 %v3896
    %3976 = vmatprep.subr.mxu0 0.0
    %3977 = vmatpush1.msra.mxu0 %v3897
    %3978 = vmatprep.subr.mxu0 0.0
    %3979 = vmatpush1.msra.mxu0 %v3898
    %3980 = vmatprep.subr.mxu0 0.0
    %3981 = vmatpush1.msra.mxu0 %v3899
    %3982 = vmatprep.subr.mxu0 0.0
    %3983 = vmatpush1.msra.mxu0 %v3900
    %3984 = vmatprep.subr.mxu0 0.0
    %3985 = vmatpush1.msra.mxu0 %v3901
    %3986 = vmatprep.subr.mxu0 0.0
    %3987 = vmatpush1.msra.mxu0 %v3902
    %3988 = vmatprep.subr.mxu0 0.0
    %3989 = vmatpush1.msra.mxu0 %v3903
    %3990 = vmatprep.subr.mxu0 0.0
    %3991 = vmatpush1.msra.mxu0 %v3904
    %3992 = vmatprep.subr.mxu0 0.0
    %3993 = vmatpush1.msra.mxu0 %v3905
    %3994 = vmatprep.subr.mxu0 0.0
    %3995 = vmatpush1.msra.mxu0 %v3906
    %3996 = vmatprep.subr.mxu0 0.0
    %3997 = vmatpush1.msra.mxu0 %v3907
    %3998 = vmatprep.subr.mxu0 0.0
    %3999 = vmatpush1.msra.mxu0 %v3908
    %4000 = vmatprep.subr.mxu0 0.0
    %4001 = vmatpush1.msra.mxu0 %v3909
    %4002 = vmatprep.subr.mxu0 0.0
    %4003 = vmatpush1.msra.mxu0 %v3910
    %4004 = vmatprep.subr.mxu0 0.0
    %4005 = vmatpush1.msra.mxu0 %v3911
    %4006 = vmatprep.subr.mxu0 0.0
    %4007 = vmatpush1.msra.mxu0 %v3912
    %4008 = vmatprep.subr.mxu0 0.0
    %4009 = vmatpush1.msra.mxu0 %v3913
    %4010 = vmatprep.subr.mxu0 0.0
    %4011 = vmatpush1.msra.mxu0 %v3914
    %4012 = vmatprep.subr.mxu0 0.0
    %4013 = vmatpush1.msra.mxu0 %v3915
    %4014 = vmatprep.subr.mxu0 0.0
    %4015 = vmatpush1.msra.mxu0 %v3916
    %4016 = vmatprep.subr.mxu0 0.0
    %4017 = vmatpush1.msra.mxu0 %v3917
    %4018 = vmatprep.subr.mxu0 0.0
    %4019 = vmatpush1.msra.mxu0 %v3918
    %4020 = vmatprep.subr.mxu0 0.0
    %4021 = vmatpush1.msra.mxu0 %v3919
    %4022 = vmatprep.subr.mxu0 0.0
    %4023 = vmatpush1.msra.mxu0 %v3920
    %4024 = vmatprep.mubr.f32.mxu0 %v3886
    %4025 = vmatmul.mubr.f32.gmra.mrb[0].mxu0 %v3885
    %v4026 = vpop.f32.mrb[0].mxu0
    %v4027 = vadd.f32 %v3958, %v4026
    %v4028 = vpop.f32.mrb[0].mxu0
    %4029 = vdwg.mxu0
    %4030 = vmatprep.subr.mxu0 0.0
    %4031 = vmatpush1.msra.mxu0 %v3921
    %4032 = vmatprep.subr.mxu0 0.0
    %4033 = vmatpush1.msra.mxu0 %v3922
    %4034 = vmatprep.subr.mxu0 0.0
    %4035 = vmatpush1.msra.mxu0 %v3923
    %4036 = vmatprep.subr.mxu0 0.0
    %4037 = vmatpush1.msra.mxu0 %v3924
    %4038 = vmatprep.subr.mxu0 0.0
    %4039 = vmatpush1.msra.mxu0 %v3925
    %4040 = vmatprep.subr.mxu0 0.0
    %4041 = vmatpush1.msra.mxu0 %v3926
    %4042 = vmatprep.subr.mxu0 0.0
    %4043 = vmatpush1.msra.mxu0 %v3927
    %4044 = vmatprep.subr.mxu0 0.0
    %4045 = vmatpush1.msra.mxu0 %v3928
    %4046 = vmatprep.subr.mxu0 0.0
    %4047 = vmatpush1.msra.mxu0 %v3929
    %4048 = vmatprep.subr.mxu0 0.0
    %4049 = vmatpush1.msra.mxu0 %v3930
    %4050 = vmatprep.subr.mxu0 0.0
    %4051 = vmatpush1.msra.mxu0 %v3931
    %4052 = vmatprep.subr.mxu0 0.0
    %4053 = vmatpush1.msra.mxu0 %v3932
    %4054 = vmatprep.subr.mxu0 0.0
    %4055 = vmatpush1.msra.mxu0 %v3933
    %4056 = vmatprep.subr.mxu0 0.0
    %4057 = vmatpush1.msra.mxu0 %v3934
    %4058 = vmatprep.subr.mxu0 0.0
    %4059 = vmatpush1.msra.mxu0 %v3935
    %4060 = vmatprep.subr.mxu0 0.0
    %4061 = vmatpush1.msra.mxu0 %v3936
    %4062 = vmatprep.subr.mxu0 0.0
    %4063 = vmatpush1.msra.mxu0 %v3937
    %4064 = vmatprep.subr.mxu0 0.0
    %4065 = vmatpush1.msra.mxu0 %v3938
    %4066 = vmatprep.subr.mxu0 0.0
    %4067 = vmatpush1.msra.mxu0 %v3939
    %4068 = vmatprep.subr.mxu0 0.0
    %4069 = vmatpush1.msra.mxu0 %v3940
    %4070 = vmatprep.subr.mxu0 0.0
    %4071 = vmatpush1.msra.mxu0 %v3941
    %4072 = vmatprep.subr.mxu0 0.0
    %4073 = vmatpush1.msra.mxu0 %v3942
    %4074 = vmatprep.subr.mxu0 0.0
    %4075 = vmatpush1.msra.mxu0 %v3943
    %4076 = vmatprep.subr.mxu0 0.0
    %4077 = vmatpush1.msra.mxu0 %v3944
    %4078 = vmatprep.subr.mxu0 0.0
    %4079 = vmatpush1.msra.mxu0 %v3945
    %4080 = vmatprep.subr.mxu0 0.0
    %4081 = vmatpush1.msra.mxu0 %v3946
    %4082 = vmatprep.subr.mxu0 0.0
    %4083 = vmatpush1.msra.mxu0 %v3947
    %4084 = vmatprep.subr.mxu0 0.0
    %4085 = vmatpush1.msra.mxu0 %v3948
    %4086 = vmatprep.subr.mxu0 0.0
    %4087 = vmatpush1.msra.mxu0 %v3949
    %4088 = vmatprep.subr.mxu0 0.0
    %4089 = vmatpush1.msra.mxu0 %v3950
    %4090 = vmatprep.subr.mxu0 0.0
    %4091 = vmatpush1.msra.mxu0 %v3951
    %4092 = vmatprep.subr.mxu0 0.0
    %4093 = vmatpush1.msra.mxu0 %v3952
    %4094 = vmatprep.mubr.f32.mxu0 %v3888
    %4095 = vmatmul.mubr.f32.gmra.mrb[0].mxu0 %v3887
    %v4096 = vpop.f32.mrb[0].mxu0
    %v4097 = vadd.f32 %v4027, %v4096
    %v4098 = vpop.f32.mrb[0].mxu0
    %4099 = vdwg.mxu0
    %v4100 = vmax.f32 %v4097, 0.0
    %v4101 = vld [vmem:[%s5] sm:$0xff]
    %v4102 = vld [vmem:[%s5 + $0x8] sm:$0xff]
    %v4103 = vld [vmem:[%s5 + $0x10] sm:$0xff]
    %v4104 = vld [vmem:[%s5 + $0x18] sm:$0xff]
    %v4105 = vld [vmem:[%s5 + $0x20] sm:$0xff]
    %v4106 = vld [vmem:[%s5 + $0x28] sm:$0xff]
    %v4107 = vld [vmem:[%s5 + $0x30] sm:$0xff]
    %v4108 = vld [vmem:[%s5 + $0x38] sm:$0xff]
    %v4109 = vld [vmem:[%s5 + $0x40] sm:$0xff]
    %v4110 = vld [vmem:[%s5 + $0x48] sm:$0xff]
    %v4111 = vld [vmem:[%s5 + $0x50] sm:$0xff]
    %v4112 = vld [vmem:[%s5 + $0x58] sm:$0xff]
    %v4113 = vld [vmem:[%s5 + $0x60] sm:$0xff]
    %v4114 = vld [vmem:[%s5 + $0x68] sm:$0xff]
    %v4115 = vld [vmem:[%s5 + $0x70] sm:$0xff]
    %v4116 = vld [vmem:[%s5 + $0x78] sm:$0xff]
    %v4117 = vld [vmem:[%s6] sm:$0x1]
    %v4119 = vlaneseq
    %v4120 = vshrl.u32 %v4119, 7
    %v4121 = vsub.s32 0, %v4120
    %v4122 = vrot.slane %v4117, %v4121
    %4124 = vmatprep.subr.mxu0 0.0
    %4125 = vmatpush1.msra.mxu0 %v4101
    %4126 = vmatprep.subr.mxu0 0.0
    %4127 = vmatpush1.msra.mxu0 %v4102
    %4128 = vmatprep.subr.mxu0 0.0
    %4129 = vmatpush1.msra.mxu0 %v4103
    %4130 = vmatprep.subr.mxu0 0.0
    %4131 = vmatpush1.msra.mxu0 %v4104
    %4132 = vmatprep.subr.mxu0 0.0
    %4133 = vmatpush1.msra.mxu0 %v4105
    %4134 = vmatprep.subr.mxu0 0.0
    %4135 = vmatpush1.msra.mxu0 %v4106
    %4136 = vmatprep.subr.mxu0 0.0
    %4137 = vmatpush1.msra.mxu0 %v4107
    %4138 = vmatprep.subr.mxu0 0.0
    %4139 = vmatpush1.msra.mxu0 %v4108
    %4140 = vmatprep.subr.mxu0 0.0
    %4141 = vmatpush1.msra.mxu0 %v4109
    %4142 = vmatprep.subr.mxu0 0.0
    %4143 = vmatpush1.msra.mxu0 %v4110
    %4144 = vmatprep.subr.mxu0 0.0
    %4145 = vmatpush1.msra.mxu0 %v4111
    %4146 = vmatprep.subr.mxu0 0.0
    %4147 = vmatpush1.msra.mxu0 %v4112
    %4148 = vmatprep.subr.mxu0 0.0
    %4149 = vmatpush1.msra.mxu0 %v4113
    %4150 = vmatprep.subr.mxu0 0.0
    %4151 = vmatpush1.msra.mxu0 %v4114
    %4152 = vmatprep.subr.mxu0 0.0
    %4153 = vmatpush1.msra.mxu0 %v4115
    %4154 = vmatprep.subr.mxu0 0.0
    %4155 = vmatpush1.msra.mxu0 %v4116
    %4156 = vmatprep.subr.mxu0 0.0
    %4157 = vmatpush1.msra.mxu0 0.0
    %4158 = vmatprep.subr.mxu0 0.0
    %4159 = vmatpush1.msra.mxu0 0.0
    %4160 = vmatprep.subr.mxu0 0.0
    %4161 = vmatpush1.msra.mxu0 0.0
    %4162 = vmatprep.subr.mxu0 0.0
    %4163 = vmatpush1.msra.mxu0 0.0
    %4164 = vmatprep.subr.mxu0 0.0
    %4165 = vmatpush1.msra.mxu0 0.0
    %4166 = vmatprep.subr.mxu0 0.0
    %4167 = vmatpush1.msra.mxu0 0.0
    %4168 = vmatprep.subr.mxu0 0.0
    %4169 = vmatpush1.msra.mxu0 0.0
    %4170 = vmatprep.subr.mxu0 0.0
    %4171 = vmatpush1.msra.mxu0 0.0
    %4172 = vmatprep.subr.mxu0 0.0
    %4173 = vmatpush1.msra.mxu0 0.0
    %4174 = vmatprep.subr.mxu0 0.0
    %4175 = vmatpush1.msra.mxu0 0.0
    %4176 = vmatprep.subr.mxu0 0.0
    %4177 = vmatpush1.msra.mxu0 0.0
    %4178 = vmatprep.subr.mxu0 0.0
    %4179 = vmatpush1.msra.mxu0 0.0
    %4180 = vmatprep.subr.mxu0 0.0
    %4181 = vmatpush1.msra.mxu0 0.0
    %4182 = vmatprep.subr.mxu0 0.0
    %4183 = vmatpush1.msra.mxu0 0.0
    %4184 = vmatprep.subr.mxu0 0.0
    %4185 = vmatpush1.msra.mxu0 0.0
    %4186 = vmatprep.subr.mxu0 0.0
    %4187 = vmatpush1.msra.mxu0 0.0
    %4188 = vmatprep.mubr.f32.mxu0 0.0
    %4189 = vmatmul.mubr.f32.gmra.mrb[0].mxu0 %v4100
    %v4190 = vpop.f32.mrb[0].mxu0
    %v4191 = vadd.f32 %v4122, %v4190
    %v4192 = vpop.f32.mrb[0].mxu0
    %4193 = vdwg.mxu0
    %4194 = vst [vmem:[#allocation2] sm:$0x3] %v4191
    // Predicated region
    $region30: #{gsr_forward_pallas.5} parent=1 // pred_check
      _
    $region31: #{gsr_forward_pallas.5} parent=1 // pred_check_branch
      %4196 = sbr.rel (0) target = $region33
    $region32: #{gsr_forward_pallas.5} parent=1 // pred_region
      %s4198 = ssub.s32 32, 32
      %4199 = vsyncadd [#allocation3], %s4198
      %s4201 = sshll.u32 [#allocation2], 4
      %s4202 = int_to_ptr.vmem [resolvable:$true] %s4201
      %4204 = dma.vmem_to_hbm [thread:$0]  %s4202, 32, %s7, [#allocation3]
    $region33: #{gsr_forward_pallas.5} parent=1 // pred_fallthru
      _
    // Predicated region
    $region34: #{gsr_forward_pallas.5} parent=1 // pred_check
      _
    $region35: #{gsr_forward_pallas.5} parent=1 // pred_check_branch
      %4206 = sbr.rel (0) target = $region37
    $region36: #{gsr_forward_pallas.5} parent=1 // pred_region
      %4207 = dma.done [#allocation3], 32
    $region37: #{gsr_forward_pallas.5} parent=1 // pred_fallthru
      _
    %4208 = vsyncpa [#allocation3], 1

</llo_original>
